<compile_context>
chip_gen: v7x
topology: tpu7x:2x2x1
jax: 0.10.0
libtpu: 0.0.40
codegen_flags: <defaults>
</compile_context>

<pallas_src>
import functools

import jax
import jax.numpy as jnp
from jax.experimental import pallas as pl
from jax.experimental.pallas import tpu as pltpu


def _round_up(x, m):
    return ((x + m - 1) // m) * m


# ---------------------------------------------------------------------------
# Fused kernel: 1x1 conv (+BN1, ReLU) -> 3x3 conv (+BN2, ReLU) on a row strip.
# ---------------------------------------------------------------------------
def _fused_double_conv_kernel(xm_ref, xh_ref, w1_ref, w2_ref, s2_ref,
                              o_ref, h_ref):
    # xm_ref : (1, TH, wp, Cin+1)  main rows of the halo'd window (incl. ones ch)
    # xh_ref : (1, 2,  wp, Cin+1)  bottom 2 halo rows of the window
    # w1_ref : (Cin+1, Cmid)       1x1 weights, BN1 scale + bias/shift folded in
    # w2_ref : (9, Cmid, Cout)     3x3 weights (row-major taps), BN2 scale folded
    # s2_ref : (1, Cout)           BN2 shift (incl. conv2 bias), f32
    # o_ref  : (1, TH, W, Cout)    f32 output strip
    # h_ref  : VMEM ((TH+2)*wp + 16, Cmid)  flat fused intermediate + zero tail
    th = xm_ref.shape[1]
    wp = xm_ref.shape[2]
    cin = xm_ref.shape[3]
    cmid = h_ref.shape[1]
    w_out = o_ref.shape[2]
    cout = o_ref.shape[3]
    nmain = th * wp
    nh = (th + 2) * wp

    # ---- stage 1: 1x1 conv + ReLU over the whole halo'd strip ---------------
    # Bias/BN1 shift ride on the ones-channel, so padded positions (which are
    # all-zero, ones-channel included) come out *exactly* zero after the ReLU.
    w1 = w1_ref[...]
    xm = xm_ref[0].reshape(nmain, cin)
    hm = jnp.dot(xm, w1, preferred_element_type=jnp.float32)
    h_ref[pl.ds(0, nmain), :] = jnp.maximum(hm, 0.0).astype(h_ref.dtype)

    xh = xh_ref[0].reshape(2 * wp, cin)
    hh = jnp.dot(xh, w1, preferred_element_type=jnp.float32)
    h_ref[pl.ds(nmain, 2 * wp), :] = jnp.maximum(hh, 0.0).astype(h_ref.dtype)

    # Zero the scratch tail so flat taps that over-reach read exact zeros.
    h_ref[pl.ds(nh, 16), :] = jnp.zeros((16, cmid), h_ref.dtype)

    # ---- stage 2: 3x3 conv (pad=1) as 9 contiguous flat-row taps ------------
    # acc[r*wp + c] = sum_{dy,dx} h[(r+dy)*wp + (c+dx)] @ w2[dy,dx]
    # Valid output columns are c in [0, W); columns >= W are junk and dropped.
    acc = None
    for dy in range(3):
        for dx in range(3):
            tap = h_ref[pl.ds(dy * wp + dx, nmain), :]          # (TH*wp, Cmid)
            part = jnp.dot(tap, w2_ref[dy * 3 + dx],
                           preferred_element_type=jnp.float32)
            acc = part if acc is None else acc + part

    y = jnp.maximum(acc + s2_ref[...], 0.0)                     # (TH*wp, Cout)
    o_ref[0] = y.reshape(th, wp, cout)[:, :w_out, :].astype(o_ref.dtype)


# ---------------------------------------------------------------------------
# Parameter folding / tiling helpers
# ---------------------------------------------------------------------------
def _fold_bn(gamma, beta, mean, var, conv_bias, eps=1e-5):
    """Fold inference BatchNorm + conv bias into per-channel scale/shift."""
    scale = gamma / jnp.sqrt(var + eps)
    shift = beta + (conv_bias - mean) * scale
    return scale.reshape(1, -1), shift.reshape(1, -1)


def _vmem_capacity_bytes():
    try:
        return int(pltpu.get_tpu_info().vmem_capacity_bytes)
    except Exception:
        return 64 * 1024 * 1024        # safe for v5e/v6e/v7x


def _strip_vmem_bytes(th, wp, cin_a, cmid, cout, w_out, dsize):
    """Conservative per-strip working-set estimate (lane-padded in VMEM)."""
    lane = lambda c: _round_up(c, 128)
    r8 = lambda c: _round_up(c, 8)
    dbl_in = 2 * (th + 2) * wp * lane(cin_a) * dsize            # main+halo x2
    dbl_out = 2 * r8(th) * r8(w_out) * lane(cout) * 4           # output x2 (f32)
    wts = 2 * (r8(cin_a) * lane(cmid) + 9 * r8(cmid) * lane(cout)
               + 8 * lane(cout)) * dsize                        # weights x2
    h_scr = ((th + 2) * wp + 16) * lane(cmid) * dsize           # h scratch
    vals = th * wp * (lane(cmid) + 2 * lane(cout)) * 4          # f32 temporaries
    return dbl_in + dbl_out + wts + h_scr + vals


def _choose_row_tile(H, w_out, wp, cin_a, cmid, cout, dsize, budget_bytes):
    """Largest strip height (multiple of 8) whose working set fits the budget."""
    cap = min(_round_up(H, 8), 512)
    best = 8
    th = 8
    while th <= cap:
        if _strip_vmem_bytes(th, wp, cin_a, cmid, cout, w_out, dsize) \
                <= budget_bytes:
            best = th
        else:
            break
        th += 8
    return best


# ---------------------------------------------------------------------------
# Wrappers
# ---------------------------------------------------------------------------
def double_conv_forward_nhwc(x_nhwc, params, *, row_tile=None,
                             compute_dtype=jnp.bfloat16):
    """Fused double_conv on NHWC input; returns NHWC f32 output."""
    N, H, W, Cin = x_nhwc.shape
    w1 = params["w1"]                      # (mid, in+mid, 1, 1)  torch OIHW
    w2 = params["w2"]                      # (out, mid, 3, 3)     torch OIHW
    Cmid, Cout = w1.shape[0], w2.shape[0]

    scale1, shift1 = _fold_bn(params["bn1_gamma"], params["bn1_beta"],
                              params["bn1_mean"], params["bn1_var"],
                              params["b1"])
    scale2, shift2 = _fold_bn(params["bn2_gamma"], params["bn2_beta"],
                              params["bn2_mean"], params["bn2_var"],
                              params["b2"])

    # Fold BN1 scale into the 1x1 weights and BN1 shift (+conv1 bias) into an
    # extra input row driven by a ones-channel.
    w1_mat = jnp.transpose(w1[:, :, 0, 0], (1, 0)) * scale1     # (Cin, Cmid)
    w1_aug = jnp.concatenate([w1_mat, shift1], axis=0)          # (Cin+1, Cmid)
    # Fold BN2 scale into the 3x3 weights; shift2 stays as the f32 epilogue.
    w2_taps = (jnp.transpose(w2, (2, 3, 1, 0)) * scale2).reshape(9, Cmid, Cout)

    w1_aug = w1_aug.astype(compute_dtype)
    w2_taps = w2_taps.astype(compute_dtype)
    s2 = shift2.astype(jnp.float32)                             # (1, Cout)

    cin_a = Cin + 1
    wp = _round_up(W + 2, 16)               # padded width (sublane/pack friendly)
    dsize = jnp.dtype(compute_dtype).itemsize

    cap = _vmem_capacity_bytes()
    if row_tile is not None:
        th = max(8, _round_up(int(row_tile), 8))
    else:
        th = _choose_row_tile(H, W, wp, cin_a, Cmid, Cout, dsize,
                              int(cap * 0.60))
    n_strips = -(-H // th)
    hp = n_strips * th

    # One pad/cast pass builds the augmented padded input:
    #   channels: [x, ones]; rows: 1 top zero, bottom zeros to hp+1;
    #   cols: 1 left zero, right zeros to wp.  Pad positions are all-zero,
    #   ones-channel included, which makes the 3x3 zero padding exact.
    ones = jnp.ones((N, H, W, 1), x_nhwc.dtype)
    x_aug = jnp.concatenate([x_nhwc, ones], axis=-1).astype(compute_dtype)
    x_pad = jnp.pad(x_aug, ((0, 0), (1, hp + 1 - H), (1, wp - (W + 1)), (0, 0)))
    # x_pad: (N, hp+2, wp, cin_a)

    out = pl.pallas_call(
        _fused_double_conv_kernel,
        out_shape=jax.ShapeDtypeStruct((N, hp, W, Cout), jnp.float32),
        grid=(N, n_strips),
        in_specs=[
            # main th rows of strip s: padded rows [s*th, s*th+th)
            pl.BlockSpec((1, th, wp, cin_a), lambda n, s: (n, s, 0, 0)),
            # bottom 2-row halo: padded rows [(s+1)*th, (s+1)*th+2)
            pl.BlockSpec((1, 2, wp, cin_a),
                         lambda n, s: (n, (s + 1) * (th // 2), 0, 0)),
            pl.BlockSpec((cin_a, Cmid), lambda n, s: (0, 0)),
            pl.BlockSpec((9, Cmid, Cout), lambda n, s: (0, 0, 0)),
            pl.BlockSpec((1, Cout), lambda n, s: (0, 0)),
        ],
        out_specs=pl.BlockSpec((1, th, W, Cout), lambda n, s: (n, s, 0, 0)),
        scratch_shapes=[
            pltpu.VMEM(((th + 2) * wp + 16, Cmid), compute_dtype),
        ],
        compiler_params=pltpu.CompilerParams(
            dimension_semantics=("parallel", "parallel"),
            vmem_limit_bytes=int(cap * 0.82)),
    )(x_pad, x_pad, w1_aug, w2_taps, s2)

    return out[:, :H] if hp != H else out


def double_conv_forward(x_nchw, params, *, row_tile=None,
                        compute_dtype=jnp.bfloat16):
    """NCHW wrapper matching the PyTorch module interface."""
    x_nhwc = jnp.transpose(x_nchw, (0, 2, 3, 1))
    out_nhwc = double_conv_forward_nhwc(x_nhwc, params, row_tile=row_tile,
                                        compute_dtype=compute_dtype)
    return jnp.transpose(out_nhwc, (0, 3, 1, 2))


# ---------------------------------------------------------------------------
# Pure-JAX reference (for correctness check)
# ---------------------------------------------------------------------------
def _reference(x_nchw, params, eps=1e-5):
    def bn(y, g, b, m, v):
        g = g.reshape(1, -1, 1, 1)
        b = b.reshape(1, -1, 1, 1)
        m = m.reshape(1, -1, 1, 1)
        v = v.reshape(1, -1, 1, 1)
        return (y - m) / jnp.sqrt(v + eps) * g + b

    dn = jax.lax.conv_dimension_numbers(x_nchw.shape, params["w1"].shape,
                                        ("NCHW", "OIHW", "NCHW"))
    y = jax.lax.conv_general_dilated(x_nchw, params["w1"], (1, 1), "VALID",
                                     dimension_numbers=dn)
    y = y + params["b1"].reshape(1, -1, 1, 1)
    y = jnp.maximum(bn(y, params["bn1_gamma"], params["bn1_beta"],
                       params["bn1_mean"], params["bn1_var"]), 0.0)
    dn2 = jax.lax.conv_dimension_numbers(y.shape, params["w2"].shape,
                                         ("NCHW", "OIHW", "NCHW"))
    z = jax.lax.conv_general_dilated(y, params["w2"], (1, 1),
                                     ((1, 1), (1, 1)), dimension_numbers=dn2)
    z = z + params["b2"].reshape(1, -1, 1, 1)
    z = jnp.maximum(bn(z, params["bn2_gamma"], params["bn2_beta"],
                       params["bn2_mean"], params["bn2_var"]), 0.0)
    return z


def make_params(in_ch, mid_ch, out_ch, key):
    ks = jax.random.split(key, 4)
    cin = in_ch + mid_ch
    return {
        "w1": jax.random.normal(ks[0], (mid_ch, cin, 1, 1), jnp.float32) * 0.1,
        "b1": jax.random.normal(ks[1], (mid_ch,), jnp.float32) * 0.1,
        "w2": jax.random.normal(ks[2], (out_ch, mid_ch, 3, 3), jnp.float32) * 0.1,
        "b2": jax.random.normal(ks[3], (out_ch,), jnp.float32) * 0.1,
        "bn1_gamma": 1.0 + 0.05 * jnp.arange(mid_ch, dtype=jnp.float32),
        "bn1_beta": 0.02 * jnp.arange(mid_ch, dtype=jnp.float32),
        "bn1_mean": 0.01 * jnp.arange(mid_ch, dtype=jnp.float32),
        "bn1_var": 1.0 + 0.03 * jnp.arange(mid_ch, dtype=jnp.float32),
        "bn2_gamma": 1.0 + 0.05 * jnp.arange(out_ch, dtype=jnp.float32),
        "bn2_beta": 0.02 * jnp.arange(out_ch, dtype=jnp.float32),
        "bn2_mean": 0.01 * jnp.arange(out_ch, dtype=jnp.float32),
        "bn2_var": 1.0 + 0.03 * jnp.arange(out_ch, dtype=jnp.float32),
    }


if __name__ == "__main__":
    in_ch, mid_ch, out_ch = 4, 8, 6
    N, H, W = 2, 16, 16

    key = jax.random.PRNGKey(0)
    k_x, k_p = jax.random.split(key)
    x = jax.random.normal(k_x, (N, in_ch + mid_ch, H, W), jnp.float32)
    params = make_params(in_ch, mid_ch, out_ch, k_p)

    ref = _reference(x, params)

    # Exact-parity f32 path.
    out_f32 = jax.block_until_ready(
        jax.jit(functools.partial(double_conv_forward,
                                  compute_dtype=jnp.float32))(x, params))
    assert out_f32.shape == (N, out_ch, H, W), out_f32.shape
    assert jnp.allclose(out_f32, ref, atol=1e-4, rtol=1e-4), (
        float(jnp.max(jnp.abs(out_f32 - ref))))

    # Default bf16 MXU path.
    out_bf = jax.block_until_ready(jax.jit(double_conv_forward)(x, params))
    assert out_bf.shape == (N, out_ch, H, W), out_bf.shape
    assert jnp.allclose(out_bf, ref, atol=5e-2, rtol=5e-2), (
        float(jnp.max(jnp.abs(out_bf - ref))))

    # Multi-strip path (exercises halo BlockSpec + bottom-pad handling).
    out_ms = jax.block_until_ready(
        jax.jit(functools.partial(double_conv_forward, row_tile=8))(x, params))
    assert jnp.allclose(out_ms, ref, atol=5e-2, rtol=5e-2), (
        float(jnp.max(jnp.abs(out_ms - ref))))

    print("KERNEL_OK")
</pallas_src>

<mosaic_0001>
module attributes {stable_mosaic.version = 11 : i64} {
  func.func @_fused_double_conv_kernel(%arg0: i32, %arg1: i32, %arg2: memref<1x16x32x13xf32, #tpu.memory_space<vmem>>, %arg3: memref<1x2x32x13xf32, #tpu.memory_space<vmem>>, %arg4: memref<13x8xf32, #tpu.memory_space<vmem>>, %arg5: memref<9x8x6xf32, #tpu.memory_space<vmem>>, %arg6: memref<1x6xf32, #tpu.memory_space<vmem>>, %arg7: memref<1x16x16x6xf32, #tpu.memory_space<vmem>>, %arg8: memref<592x8xf32, #tpu.memory_space<vmem>>) attributes {dimension_semantics = [#tpu.dimension_semantics<parallel>, #tpu.dimension_semantics<parallel>], iteration_bounds = array<i64: 2, 1>, scalar_prefetch = 0 : i64, scratch_operands = 1 : i64, tpu.core_type = #tpu.core_type<tc>, window_params = [{transform_indices = @transform_0, window_bounds = array<i64: 1, 16, 32, 13>}, {transform_indices = @transform_1, window_bounds = array<i64: 1, 2, 32, 13>}, {pipeline_mode = #tpu.pipeline_mode<synchronous>, transform_indices = @transform_2, window_bounds = array<i64: 13, 8>}, {pipeline_mode = #tpu.pipeline_mode<synchronous>, transform_indices = @transform_3, window_bounds = array<i64: 9, 8, 6>}, {pipeline_mode = #tpu.pipeline_mode<synchronous>, transform_indices = @transform_4, window_bounds = array<i64: 1, 6>}, {transform_indices = @transform_5, window_bounds = array<i64: 1, 16, 16, 6>}]} {
    %c0 = arith.constant 0 : index
    %c0_0 = arith.constant 0 : index
    %0 = vector.load %arg4[%c0, %c0_0] : memref<13x8xf32, #tpu.memory_space<vmem>>, vector<13x8xf32>
    %c0_1 = arith.constant 0 : index
    %c0_2 = arith.constant 0 : index
    %c0_3 = arith.constant 0 : index
    %c0_4 = arith.constant 0 : index
    %1 = vector.load %arg2[%c0_1, %c0_2, %c0_3, %c0_4] : memref<1x16x32x13xf32, #tpu.memory_space<vmem>>, vector<1x16x32x13xf32>
    %2 = vector.shape_cast %1 : vector<1x16x32x13xf32> to vector<16x32x13xf32>
    %3 = vector.shape_cast %2 : vector<16x32x13xf32> to vector<512x13xf32>
    %cst = arith.constant dense<0.000000e+00> : vector<512x8xf32>
    %4 = tpu.matmul %3, %0, %cst {dimension_numbers = #tpu.dot_dimension_numbers<[1], [0], [0], [1], [0, 0, 1, 1], [], []>} : vector<512x13xf32>, vector<13x8xf32>, vector<512x8xf32> -> vector<512x8xf32>
    %cst_5 = arith.constant 0.000000e+00 : f32
    %5 = vector.broadcast %cst_5 : f32 to vector<512x8xf32>
    %6 = arith.maximumf %4, %5 : vector<512x8xf32>
    %c0_6 = arith.constant 0 : index
    %c0_7 = arith.constant 0 : index
    %7 = vector.load %arg8[%c0_6, %c0_7] : memref<592x8xf32, #tpu.memory_space<vmem>>, vector<512x8xf32>
    tpu.vector_store %arg8[%c0_6, %c0_7], %6 {strides = array<i32>} : memref<592x8xf32, #tpu.memory_space<vmem>>, vector<512x8xf32>,
    %c0_8 = arith.constant 0 : index
    %c0_9 = arith.constant 0 : index
    %c0_10 = arith.constant 0 : index
    %c0_11 = arith.constant 0 : index
    %8 = vector.load %arg3[%c0_8, %c0_9, %c0_10, %c0_11] : memref<1x2x32x13xf32, #tpu.memory_space<vmem>>, vector<1x2x32x13xf32>
    %9 = vector.shape_cast %8 : vector<1x2x32x13xf32> to vector<2x32x13xf32>
    %10 = vector.shape_cast %9 : vector<2x32x13xf32> to vector<64x13xf32>
    %cst_12 = arith.constant dense<0.000000e+00> : vector<64x8xf32>
    %11 = tpu.matmul %10, %0, %cst_12 {dimension_numbers = #tpu.dot_dimension_numbers<[1], [0], [0], [1], [0, 0, 1, 1], [], []>} : vector<64x13xf32>, vector<13x8xf32>, vector<64x8xf32> -> vector<64x8xf32>
    %cst_13 = arith.constant 0.000000e+00 : f32
    %12 = vector.broadcast %cst_13 : f32 to vector<64x8xf32>
    %13 = arith.maximumf %11, %12 : vector<64x8xf32>
    %c512 = arith.constant 512 : index
    %c0_14 = arith.constant 0 : index
    %14 = vector.load %arg8[%c512, %c0_14] : memref<592x8xf32, #tpu.memory_space<vmem>>, vector<64x8xf32>
    tpu.vector_store %arg8[%c512, %c0_14], %13 {strides = array<i32>} : memref<592x8xf32, #tpu.memory_space<vmem>>, vector<64x8xf32>,
    %cst_15 = arith.constant 0.000000e+00 : f32
    %15 = vector.broadcast %cst_15 : f32 to vector<16x8xf32>
    %c576 = arith.constant 576 : index
    %c0_16 = arith.constant 0 : index
    %16 = vector.load %arg8[%c576, %c0_16] : memref<592x8xf32, #tpu.memory_space<vmem>>, vector<16x8xf32>
    tpu.vector_store %arg8[%c576, %c0_16], %15 {strides = array<i32>} : memref<592x8xf32, #tpu.memory_space<vmem>>, vector<16x8xf32>,
    %c0_17 = arith.constant 0 : index
    %c0_18 = arith.constant 0 : index
    %17 = vector.load %arg8[%c0_17, %c0_18] : memref<592x8xf32, #tpu.memory_space<vmem>>, vector<512x8xf32>
    %c0_19 = arith.constant 0 : index
    %c0_20 = arith.constant 0 : index
    %c0_21 = arith.constant 0 : index
    %18 = vector.load %arg5[%c0_19, %c0_20, %c0_21] : memref<9x8x6xf32, #tpu.memory_space<vmem>>, vector<1x8x6xf32>
    %19 = vector.shape_cast %18 : vector<1x8x6xf32> to vector<8x6xf32>
    %cst_22 = arith.constant dense<0.000000e+00> : vector<512x6xf32>
    %20 = tpu.matmul %17, %19, %cst_22 {dimension_numbers = #tpu.dot_dimension_numbers<[1], [0], [0], [1], [0, 0, 1, 1], [], []>} : vector<512x8xf32>, vector<8x6xf32>, vector<512x6xf32> -> vector<512x6xf32>
    %c1 = arith.constant 1 : index
    %c0_23 = arith.constant 0 : index
    %21 = vector.load %arg8[%c1, %c0_23] : memref<592x8xf32, #tpu.memory_space<vmem>>, vector<512x8xf32>
    %c1_24 = arith.constant 1 : index
    %c0_25 = arith.constant 0 : index
    %c0_26 = arith.constant 0 : index
    %22 = vector.load %arg5[%c1_24, %c0_25, %c0_26] : memref<9x8x6xf32, #tpu.memory_space<vmem>>, vector<1x8x6xf32>
    %23 = vector.shape_cast %22 : vector<1x8x6xf32> to vector<8x6xf32>
    %cst_27 = arith.constant dense<0.000000e+00> : vector<512x6xf32>
    %24 = tpu.matmul %21, %23, %cst_27 {dimension_numbers = #tpu.dot_dimension_numbers<[1], [0], [0], [1], [0, 0, 1, 1], [], []>} : vector<512x8xf32>, vector<8x6xf32>, vector<512x6xf32> -> vector<512x6xf32>
    %25 = arith.addf %20, %24 : vector<512x6xf32>
    %c2 = arith.constant 2 : index
    %c0_28 = arith.constant 0 : index
    %26 = vector.load %arg8[%c2, %c0_28] : memref<592x8xf32, #tpu.memory_space<vmem>>, vector<512x8xf32>
    %c2_29 = arith.constant 2 : index
    %c0_30 = arith.constant 0 : index
    %c0_31 = arith.constant 0 : index
    %27 = vector.load %arg5[%c2_29, %c0_30, %c0_31] : memref<9x8x6xf32, #tpu.memory_space<vmem>>, vector<1x8x6xf32>
    %28 = vector.shape_cast %27 : vector<1x8x6xf32> to vector<8x6xf32>
    %cst_32 = arith.constant dense<0.000000e+00> : vector<512x6xf32>
    %29 = tpu.matmul %26, %28, %cst_32 {dimension_numbers = #tpu.dot_dimension_numbers<[1], [0], [0], [1], [0, 0, 1, 1], [], []>} : vector<512x8xf32>, vector<8x6xf32>, vector<512x6xf32> -> vector<512x6xf32>
    %30 = arith.addf %25, %29 : vector<512x6xf32>
    %c32 = arith.constant 32 : index
    %c0_33 = arith.constant 0 : index
    %31 = vector.load %arg8[%c32, %c0_33] : memref<592x8xf32, #tpu.memory_space<vmem>>, vector<512x8xf32>
    %c3 = arith.constant 3 : index
    %c0_34 = arith.constant 0 : index
    %c0_35 = arith.constant 0 : index
    %32 = vector.load %arg5[%c3, %c0_34, %c0_35] : memref<9x8x6xf32, #tpu.memory_space<vmem>>, vector<1x8x6xf32>
    %33 = vector.shape_cast %32 : vector<1x8x6xf32> to vector<8x6xf32>
    %cst_36 = arith.constant dense<0.000000e+00> : vector<512x6xf32>
    %34 = tpu.matmul %31, %33, %cst_36 {dimension_numbers = #tpu.dot_dimension_numbers<[1], [0], [0], [1], [0, 0, 1, 1], [], []>} : vector<512x8xf32>, vector<8x6xf32>, vector<512x6xf32> -> vector<512x6xf32>
    %35 = arith.addf %30, %34 : vector<512x6xf32>
    %c33 = arith.constant 33 : index
    %c0_37 = arith.constant 0 : index
    %36 = vector.load %arg8[%c33, %c0_37] : memref<592x8xf32, #tpu.memory_space<vmem>>, vector<512x8xf32>
    %c4 = arith.constant 4 : index
    %c0_38 = arith.constant 0 : index
    %c0_39 = arith.constant 0 : index
    %37 = vector.load %arg5[%c4, %c0_38, %c0_39] : memref<9x8x6xf32, #tpu.memory_space<vmem>>, vector<1x8x6xf32>
    %38 = vector.shape_cast %37 : vector<1x8x6xf32> to vector<8x6xf32>
    %cst_40 = arith.constant dense<0.000000e+00> : vector<512x6xf32>
    %39 = tpu.matmul %36, %38, %cst_40 {dimension_numbers = #tpu.dot_dimension_numbers<[1], [0], [0], [1], [0, 0, 1, 1], [], []>} : vector<512x8xf32>, vector<8x6xf32>, vector<512x6xf32> -> vector<512x6xf32>
    %40 = arith.addf %35, %39 : vector<512x6xf32>
    %c34 = arith.constant 34 : index
    %c0_41 = arith.constant 0 : index
    %41 = vector.load %arg8[%c34, %c0_41] : memref<592x8xf32, #tpu.memory_space<vmem>>, vector<512x8xf32>
    %c5 = arith.constant 5 : index
    %c0_42 = arith.constant 0 : index
    %c0_43 = arith.constant 0 : index
    %42 = vector.load %arg5[%c5, %c0_42, %c0_43] : memref<9x8x6xf32, #tpu.memory_space<vmem>>, vector<1x8x6xf32>
    %43 = vector.shape_cast %42 : vector<1x8x6xf32> to vector<8x6xf32>
    %cst_44 = arith.constant dense<0.000000e+00> : vector<512x6xf32>
    %44 = tpu.matmul %41, %43, %cst_44 {dimension_numbers = #tpu.dot_dimension_numbers<[1], [0], [0], [1], [0, 0, 1, 1], [], []>} : vector<512x8xf32>, vector<8x6xf32>, vector<512x6xf32> -> vector<512x6xf32>
    %45 = arith.addf %40, %44 : vector<512x6xf32>
    %c64 = arith.constant 64 : index
    %c0_45 = arith.constant 0 : index
    %46 = vector.load %arg8[%c64, %c0_45] : memref<592x8xf32, #tpu.memory_space<vmem>>, vector<512x8xf32>
    %c6 = arith.constant 6 : index
    %c0_46 = arith.constant 0 : index
    %c0_47 = arith.constant 0 : index
    %47 = vector.load %arg5[%c6, %c0_46, %c0_47] : memref<9x8x6xf32, #tpu.memory_space<vmem>>, vector<1x8x6xf32>
    %48 = vector.shape_cast %47 : vector<1x8x6xf32> to vector<8x6xf32>
    %cst_48 = arith.constant dense<0.000000e+00> : vector<512x6xf32>
    %49 = tpu.matmul %46, %48, %cst_48 {dimension_numbers = #tpu.dot_dimension_numbers<[1], [0], [0], [1], [0, 0, 1, 1], [], []>} : vector<512x8xf32>, vector<8x6xf32>, vector<512x6xf32> -> vector<512x6xf32>
    %50 = arith.addf %45, %49 : vector<512x6xf32>
    %c65 = arith.constant 65 : index
    %c0_49 = arith.constant 0 : index
    %51 = vector.load %arg8[%c65, %c0_49] : memref<592x8xf32, #tpu.memory_space<vmem>>, vector<512x8xf32>
    %c7 = arith.constant 7 : index
    %c0_50 = arith.constant 0 : index
    %c0_51 = arith.constant 0 : index
    %52 = vector.load %arg5[%c7, %c0_50, %c0_51] : memref<9x8x6xf32, #tpu.memory_space<vmem>>, vector<1x8x6xf32>
    %53 = vector.shape_cast %52 : vector<1x8x6xf32> to vector<8x6xf32>
    %cst_52 = arith.constant dense<0.000000e+00> : vector<512x6xf32>
    %54 = tpu.matmul %51, %53, %cst_52 {dimension_numbers = #tpu.dot_dimension_numbers<[1], [0], [0], [1], [0, 0, 1, 1], [], []>} : vector<512x8xf32>, vector<8x6xf32>, vector<512x6xf32> -> vector<512x6xf32>
    %55 = arith.addf %50, %54 : vector<512x6xf32>
    %c66 = arith.constant 66 : index
    %c0_53 = arith.constant 0 : index
    %56 = vector.load %arg8[%c66, %c0_53] : memref<592x8xf32, #tpu.memory_space<vmem>>, vector<512x8xf32>
    %c8 = arith.constant 8 : index
    %c0_54 = arith.constant 0 : index
    %c0_55 = arith.constant 0 : index
    %57 = vector.load %arg5[%c8, %c0_54, %c0_55] : memref<9x8x6xf32, #tpu.memory_space<vmem>>, vector<1x8x6xf32>
    %58 = vector.shape_cast %57 : vector<1x8x6xf32> to vector<8x6xf32>
    %cst_56 = arith.constant dense<0.000000e+00> : vector<512x6xf32>
    %59 = tpu.matmul %56, %58, %cst_56 {dimension_numbers = #tpu.dot_dimension_numbers<[1], [0], [0], [1], [0, 0, 1, 1], [], []>} : vector<512x8xf32>, vector<8x6xf32>, vector<512x6xf32> -> vector<512x6xf32>
    %60 = arith.addf %55, %59 : vector<512x6xf32>
    %c0_57 = arith.constant 0 : index
    %c0_58 = arith.constant 0 : index
    %61 = vector.load %arg6[%c0_57, %c0_58] : memref<1x6xf32, #tpu.memory_space<vmem>>, vector<1x6xf32>
    %62 = vector.broadcast %61 : vector<1x6xf32> to vector<512x6xf32>
    %63 = arith.addf %60, %62 : vector<512x6xf32>
    %cst_59 = arith.constant 0.000000e+00 : f32
    %64 = vector.broadcast %cst_59 : f32 to vector<512x6xf32>
    %65 = arith.maximumf %63, %64 : vector<512x6xf32>
    %66 = vector.shape_cast %65 : vector<512x6xf32> to vector<16x32x6xf32>
    %67 = vector.extract_strided_slice %66 {offsets = [0, 0, 0], sizes = [16, 16, 6], strides = [1, 1, 1]} : vector<16x32x6xf32> to vector<16x16x6xf32>
    %c0_60 = arith.constant 0 : index
    %c0_61 = arith.constant 0 : index
    %c0_62 = arith.constant 0 : index
    %c0_63 = arith.constant 0 : index
    %68 = vector.load %arg7[%c0_60, %c0_61, %c0_62, %c0_63] : memref<1x16x16x6xf32, #tpu.memory_space<vmem>>, vector<1x16x16x6xf32>
    %69 = vector.shape_cast %68 : vector<1x16x16x6xf32> to vector<16x16x6xf32>
    %70 = vector.shape_cast %67 : vector<16x16x6xf32> to vector<1x16x16x6xf32>
    tpu.vector_store %arg7[%c0_60, %c0_61, %c0_62, %c0_63], %70 {strides = array<i32>} : memref<1x16x16x6xf32, #tpu.memory_space<vmem>>, vector<1x16x16x6xf32>,
    return
  }
  func.func @transform_0(%arg0: i32, %arg1: i32) -> (i32, i32, i32, i32) {
    %c0_i32 = arith.constant 0 : i32
    %c0_i32_0 = arith.constant 0 : i32
    %c0_i32_1 = arith.constant 0 : i32
    return %arg0, %arg1, %c0_i32, %c0_i32_0 : i32, i32, i32, i32
  }
  func.func @transform_1(%arg0: i32, %arg1: i32) -> (i32, i32, i32, i32) {
    %c1_i32 = arith.constant 1 : i32
    %0 = arith.addi %arg1, %c1_i32 : i32
    %c8_i32 = arith.constant 8 : i32
    %1 = arith.muli %0, %c8_i32 : i32
    %c0_i32 = arith.constant 0 : i32
    %c0_i32_0 = arith.constant 0 : i32
    %c0_i32_1 = arith.constant 0 : i32
    return %arg0, %1, %c0_i32, %c0_i32_0 : i32, i32, i32, i32
  }
  func.func @transform_2(%arg0: i32, %arg1: i32) -> (i32, i32) {
    %c0_i32 = arith.constant 0 : i32
    %c0_i32_0 = arith.constant 0 : i32
    %c0_i32_1 = arith.constant 0 : i32
    return %c0_i32, %c0_i32_0 : i32, i32
  }
  func.func @transform_3(%arg0: i32, %arg1: i32) -> (i32, i32, i32) {
    %c0_i32 = arith.constant 0 : i32
    %c0_i32_0 = arith.constant 0 : i32
    %c0_i32_1 = arith.constant 0 : i32
    %c0_i32_2 = arith.constant 0 : i32
    return %c0_i32, %c0_i32_0, %c0_i32_1 : i32, i32, i32
  }
  func.func @transform_4(%arg0: i32, %arg1: i32) -> (i32, i32) {
    %c0_i32 = arith.constant 0 : i32
    %c0_i32_0 = arith.constant 0 : i32
    %c0_i32_1 = arith.constant 0 : i32
    return %c0_i32, %c0_i32_0 : i32, i32
  }
  func.func @transform_5(%arg0: i32, %arg1: i32) -> (i32, i32, i32, i32) {
    %c0_i32 = arith.constant 0 : i32
    %c0_i32_0 = arith.constant 0 : i32
    %c0_i32_1 = arith.constant 0 : i32
    return %arg0, %arg1, %c0_i32, %c0_i32_0 : i32, i32, i32, i32
  }
}

</mosaic_0001>

<llo_original>
// kernel: double_conv_forward.1
$region0: #{double_conv_forward.1}
  #allocation0 [shape = 'u32[]', space=smem, size = 0x4, offset = 0x4, fixed_abs, tag = 'smem constant byte address 0x4 - core index']
  #allocation1 [shape = 'u32[144,128]{1,0:T(1,128)}', space=vmem, size = 0x12000, scoped, tag = 'internal scratch']
  #allocation2 [shape = 'f32[592,8]{1,0:T(8,128)}', space=vmem, size = 0x4a000, scoped, tag = 'scratch operand']
  %s0 = inlined_call_operand.vmem [shape: f32[2,18,32,13], index: 0, kind: input, shape index: {}, may-alias: {0,1}]
  %s1 = inlined_call_operand.vmem [shape: f32[2,18,32,13], index: 1, kind: input, shape index: {}, may-alias: {0,1}]
  %s2 = inlined_call_operand.vmem [shape: f32[13,8], index: 2, kind: input, shape index: {}]
  %s3 = inlined_call_operand.vmem [shape: f32[9,8,6], index: 3, kind: input, shape index: {}]
  %s4 = inlined_call_operand.vmem [shape: f32[1,6], index: 4, kind: input, shape index: {}]
  %s5 = inlined_call_operand.vmem [shape: f32[2,16,16,6], index: 5, kind: output, shape index: {}]
  %s6 = sld [smem:[#allocation0]]
  $region53: #{double_conv_forward.1} parent=0
    _
  %s8 = ssub.s32 1, %s6
  %s9 = scalar_select 0, %s8, %s6
  loop: start=0, step=1, limit=4
  $region2: #{double_conv_forward.1} parent=0 // loop_pre_header
    _
  $region3: #{double_conv_forward.1} parent=0 // loop_header
    %s11 = sphi 0, %s15
    %p12 = scmp.ge.s32.totalorder %s11, 4
    %s18 = sphi 0, %s30
    %s19 = sphi 0, %s26
    %s20 = sphi 0, %s18
    %s21 = sphi 0, %s19
    %s22 = sphi 0, %s20
    %s23 = sphi 0, %s21
    %s35 = sphi 0, %s37
    %s38 = sphi 0, %s35
    %s39 = sphi 0, %s38
    %s55 = sphi 0, %s39
    %s67 = sphi 0, %s69
    %s70 = sphi 0, %s67
    %s71 = sphi 0, %s70
    %s87 = sphi 0, %s71
    %s91 = sphi 0, %s91
    %s93 = sphi 0, %s91
    %s94 = sphi 0, %s93
    %s108 = sphi 0, %s94
    %s112 = sphi 0, %s112
    %s114 = sphi 0, %s112
    %s115 = sphi 0, %s114
    %s129 = sphi 0, %s115
    %s133 = sphi 0, %s133
    %s135 = sphi 0, %s133
    %s136 = sphi 0, %s135
    %s150 = sphi 0, %s136
    %s158 = sphi 0, %s160
    %s161 = sphi 0, %s158
    %s162 = sphi 0, %s161
    %s178 = sphi 0, %s162
  $region4: #{double_conv_forward.1} parent=0 // loop_header_branch
    %14 = sbr.rel (%p12) target = $region8
  $region5: #{double_conv_forward.1} parent=0 // loop_body
    %s16 = ssub.s32 %s11, 1
    %s17 = ssub.s32 %s11, 2
    %s24 = sadd.s32 1, %s19
    %p25 = scmp.ge.s32.totalorder %s24, 1
    %s26 = scalar_select %p25, 0, %s24
    %s27 = sadd.s32 1, %s18
    %s28 = scalar_select %p25, %s27, %s18
    %p29 = scmp.ge.s32.totalorder %s28, 2
    %s30 = scalar_select %p29, 0, %s28
    %s31 = ssub.s32 %s18, %s30
    %s32 = ssub.s32 %s19, %s26
    %s33 = sor.u32 %s31, %s32
    %p34 = scmp.eq.s32.totalorder %s33, 0
    %s36 = sadd.s32 %s35, 1
    %s37 = scalar_select %p34, %s35, %s36
    %p40 = pneg %p34
    %p41 = scmp.eq.s32.totalorder %s11, 1
    %p42 = por %p40, %p41
    %p43 = scmp.ne.s32.totalorder %s35, %s38
    %p44 = scmp.eq.s32.totalorder %s11, 0
    %p45 = por %p43, %p44
    %p46 = scmp.ne.s32.totalorder %s35, %s38
    %p47 = scmp.eq.s32.totalorder %s16, 1
    %p48 = por %p46, %p47
    %p49 = scmp.ne.s32.totalorder %s38, %s39
    %p50 = scmp.eq.s32.totalorder %s16, 0
    %p51 = por %p49, %p50
    %p52 = scmp.ne.s32.totalorder %s38, %s39
    %p53 = scmp.eq.s32.totalorder %s17, 1
    %p54 = por %p52, %p53
    %p56 = scmp.ne.s32.totalorder %s39, %s55
    %p57 = scmp.eq.s32.totalorder %s17, 0
    %p58 = por %p56, %p57
    %s59 = sadd.s32 %s19, 1
    %s60 = smul.u32 %s59, 8
    %s61 = sadd.s32 %s26, 1
    %s62 = smul.u32 %s61, 8
    %s63 = ssub.s32 %s18, %s30
    %s64 = ssub.s32 %s60, %s62
    %s65 = sor.u32 %s63, %s64
    %p66 = scmp.eq.s32.totalorder %s65, 0
    %s68 = sadd.s32 %s67, 1
    %s69 = scalar_select %p66, %s67, %s68
    %p72 = pneg %p66
    %p73 = scmp.eq.s32.totalorder %s11, 1
    %p74 = por %p72, %p73
    %p75 = scmp.ne.s32.totalorder %s67, %s70
    %p76 = scmp.eq.s32.totalorder %s11, 0
    %p77 = por %p75, %p76
    %p78 = scmp.ne.s32.totalorder %s67, %s70
    %p79 = scmp.eq.s32.totalorder %s16, 1
    %p80 = por %p78, %p79
    %p81 = scmp.ne.s32.totalorder %s70, %s71
    %p82 = scmp.eq.s32.totalorder %s16, 0
    %p83 = por %p81, %p82
    %p84 = scmp.ne.s32.totalorder %s70, %s71
    %p85 = scmp.eq.s32.totalorder %s17, 1
    %p86 = por %p84, %p85
    %p88 = scmp.ne.s32.totalorder %s71, %s87
    %p89 = scmp.eq.s32.totalorder %s17, 0
    %p90 = por %p88, %p89
    %s92 = sadd.s32 %s91, 1
    %p95 = scmp.eq.s32.totalorder %s11, 1
    %p96 = scmp.ne.s32.totalorder %s91, %s93
    %p97 = scmp.eq.s32.totalorder %s11, 0
    %p98 = por %p96, %p97
    %p99 = scmp.ne.s32.totalorder %s91, %s93
    %p100 = scmp.eq.s32.totalorder %s16, 1
    %p101 = por %p99, %p100
    %p102 = scmp.ne.s32.totalorder %s93, %s94
    %p103 = scmp.eq.s32.totalorder %s16, 0
    %p104 = por %p102, %p103
    %p105 = scmp.ne.s32.totalorder %s93, %s94
    %p106 = scmp.eq.s32.totalorder %s17, 1
    %p107 = por %p105, %p106
    %p109 = scmp.ne.s32.totalorder %s94, %s108
    %p110 = scmp.eq.s32.totalorder %s17, 0
    %p111 = por %p109, %p110
    %s113 = sadd.s32 %s112, 1
    %p116 = scmp.eq.s32.totalorder %s11, 1
    %p117 = scmp.ne.s32.totalorder %s112, %s114
    %p118 = scmp.eq.s32.totalorder %s11, 0
    %p119 = por %p117, %p118
    %p120 = scmp.ne.s32.totalorder %s112, %s114
    %p121 = scmp.eq.s32.totalorder %s16, 1
    %p122 = por %p120, %p121
    %p123 = scmp.ne.s32.totalorder %s114, %s115
    %p124 = scmp.eq.s32.totalorder %s16, 0
    %p125 = por %p123, %p124
    %p126 = scmp.ne.s32.totalorder %s114, %s115
    %p127 = scmp.eq.s32.totalorder %s17, 1
    %p128 = por %p126, %p127
    %p130 = scmp.ne.s32.totalorder %s115, %s129
    %p131 = scmp.eq.s32.totalorder %s17, 0
    %p132 = por %p130, %p131
    %s134 = sadd.s32 %s133, 1
    %p137 = scmp.eq.s32.totalorder %s11, 1
    %p138 = scmp.ne.s32.totalorder %s133, %s135
    %p139 = scmp.eq.s32.totalorder %s11, 0
    %p140 = por %p138, %p139
    %p141 = scmp.ne.s32.totalorder %s133, %s135
    %p142 = scmp.eq.s32.totalorder %s16, 1
    %p143 = por %p141, %p142
    %p144 = scmp.ne.s32.totalorder %s135, %s136
    %p145 = scmp.eq.s32.totalorder %s16, 0
    %p146 = por %p144, %p145
    %p147 = scmp.ne.s32.totalorder %s135, %s136
    %p148 = scmp.eq.s32.totalorder %s17, 1
    %p149 = por %p147, %p148
    %p151 = scmp.ne.s32.totalorder %s136, %s150
    %p152 = scmp.eq.s32.totalorder %s17, 0
    %p153 = por %p151, %p152
    %s154 = ssub.s32 %s18, %s30
    %s155 = ssub.s32 %s19, %s26
    %s156 = sor.u32 %s154, %s155
    %p157 = scmp.eq.s32.totalorder %s156, 0
    %s159 = sadd.s32 %s158, 1
    %s160 = scalar_select %p157, %s158, %s159
    %p163 = pneg %p157
    %p164 = scmp.eq.s32.totalorder %s11, 1
    %p165 = por %p163, %p164
    %p166 = scmp.ne.s32.totalorder %s158, %s161
    %p167 = scmp.eq.s32.totalorder %s11, 0
    %p168 = por %p166, %p167
    %p169 = scmp.ne.s32.totalorder %s158, %s161
    %p170 = scmp.eq.s32.totalorder %s16, 1
    %p171 = por %p169, %p170
    %p172 = scmp.ne.s32.totalorder %s161, %s162
    %p173 = scmp.eq.s32.totalorder %s16, 0
    %p174 = por %p172, %p173
    %p175 = scmp.ne.s32.totalorder %s161, %s162
    %p176 = scmp.eq.s32.totalorder %s17, 1
    %p177 = por %p175, %p176
    %p179 = scmp.ne.s32.totalorder %s162, %s178
    %p180 = scmp.eq.s32.totalorder %s17, 0
    %p181 = por %p179, %p180
    %p182 = scmp.le.s32.totalorder 1, %s11
    %p183 = scmp.lt.s32.totalorder %s11, 3
    %p184 = pnand %p182, %p183
    %p185 = pneg %p184
    // Predicated region
    $region9: #{double_conv_forward.1} parent=5 // pred_check
      _
    $region10: #{double_conv_forward.1} parent=5 // pred_check_branch
      %187 = sbr.rel (%p184) target = $region12
    $region11: #{double_conv_forward.1} parent=5 // pred_region
      %s188 = ssub.s32 %s11, 1
      // Predicated region
      $region13: #{double_conv_forward.1} parent=11 // pred_check
        %p189 = pneg %p104
      $region14: #{double_conv_forward.1} parent=11 // pred_check_branch
        %191 = sbr.rel (%p189) target = $region16
      $region15: #{double_conv_forward.1} parent=11 // pred_region
        _
      $region16: #{double_conv_forward.1} parent=11 // pred_fallthru
        _
      // Predicated region
      $region17: #{double_conv_forward.1} parent=11 // pred_check
        %p192 = pneg %p125
      $region18: #{double_conv_forward.1} parent=11 // pred_check_branch
        %194 = sbr.rel (%p192) target = $region20
      $region19: #{double_conv_forward.1} parent=11 // pred_region
        _
      $region20: #{double_conv_forward.1} parent=11 // pred_fallthru
        _
      // Predicated region
      $region21: #{double_conv_forward.1} parent=11 // pred_check
        %p195 = pneg %p146
      $region22: #{double_conv_forward.1} parent=11 // pred_check_branch
        %197 = sbr.rel (%p195) target = $region24
      $region23: #{double_conv_forward.1} parent=11 // pred_region
        _
      $region24: #{double_conv_forward.1} parent=11 // pred_fallthru
        _
    $region12: #{double_conv_forward.1} parent=5 // pred_fallthru
      _
    %p198 = scmp.lt.s32.totalorder %s11, 2
    // Predicated region
    $region25: #{double_conv_forward.1} parent=5 // pred_check
      %p199 = pneg %p198
    $region26: #{double_conv_forward.1} parent=5 // pred_check_branch
      %201 = sbr.rel (%p199) target = $region28
    $region27: #{double_conv_forward.1} parent=5 // pred_region
      // Predicated region
      $region29: #{double_conv_forward.1} parent=27 // pred_check
        %p202 = pneg %p45
      $region30: #{double_conv_forward.1} parent=27 // pred_check_branch
        %204 = sbr.rel (%p202) target = $region32
      $region31: #{double_conv_forward.1} parent=27 // pred_region
        %s205 = smul.u32 16, %s19
        %s206 = ssub.s32 18, %s205
        %p207 = scmp.lt.s32.totalorder %s206, 16
        %s208 = scalar_select %p207, %s206, 16
        %s209 = smul.u32 128, %s208
        %s210 = smul.u32 %s209, 4
        %p211 = scmp.lt.s32.totalorder %s18, 1
        %s212 = scalar_select %p211, %s18, 1
        %p213 = scmp.lt.s32.totalorder %s205, 17
        %s214 = scalar_select %p213, %s205, 17
        %s215 = smul.addr %s214, 4
        %s216 = smul.addr %s212, 72
        %s217 = sadd.s32 %s215, %s216
        %s218 = smul.addr %s217, 8
        %s219 = scalar_lea.vmem %s0, %s218
        %s220 = smul.u32 16, %s19
        %s221 = ssub.s32 18, %s220
        %p222 = scmp.lt.s32.totalorder %s221, 16
        %s223 = scalar_select %p222, %s221, 16
        %s224 = smul.u32 128, %s223
        %s225 = smul.u32 %s224, 4
      $region32: #{double_conv_forward.1} parent=27 // pred_fallthru
        _
      // Predicated region
      $region33: #{double_conv_forward.1} parent=27 // pred_check
        %p226 = pneg %p77
      $region34: #{double_conv_forward.1} parent=27 // pred_check_branch
        %228 = sbr.rel (%p226) target = $region36
      $region35: #{double_conv_forward.1} parent=27 // pred_region
        %s229 = sadd.s32 %s19, 1
        %s230 = smul.u32 %s229, 8
        %s231 = smul.u32 2, %s230
        %p232 = scmp.lt.s32.totalorder %s18, 1
        %s233 = scalar_select %p232, %s18, 1
        %p234 = scmp.lt.s32.totalorder %s231, 17
        %s235 = scalar_select %p234, %s231, 17
        %s236 = smul.addr %s235, 4
        %s237 = smul.addr %s233, 72
        %s238 = sadd.s32 %s236, %s237
        %s239 = smul.addr %s238, 8
        %s240 = scalar_lea.vmem %s1, %s239
        %s241 = sadd.s32 %s19, 1
        %s242 = smul.u32 %s241, 8
        %s243 = smul.u32 2, %s242
      $region36: #{double_conv_forward.1} parent=27 // pred_fallthru
        _
    $region28: #{double_conv_forward.1} parent=5 // pred_fallthru
      _
    %p244 = scmp.le.s32.totalorder 1, %s11
    %p245 = scmp.lt.s32.totalorder %s11, 3
    %p246 = pnand %p244, %p245
    %p247 = pneg %p246
    // Predicated region
    $region37: #{double_conv_forward.1} parent=5 // pred_check
      _
    $region38: #{double_conv_forward.1} parent=5 // pred_check_branch
      %249 = sbr.rel (%p246) target = $region40
    $region39: #{double_conv_forward.1} parent=5 // pred_region
      %s250 = ssub.s32 %s11, 1
      %s251 = smul.u32 16, %s21
      %s252 = ssub.s32 18, %s251
      %p253 = scmp.lt.s32.totalorder %s252, 16
      %s254 = scalar_select %p253, %s252, 16
      %s255 = smul.u32 128, %s254
      %s256 = smul.u32 %s255, 4
      %p257 = scmp.lt.s32.totalorder %s20, 1
      %s258 = scalar_select %p257, %s20, 1
      %p259 = scmp.lt.s32.totalorder %s251, 17
      %s260 = scalar_select %p259, %s251, 17
      %s261 = smul.addr %s260, 4
      %s262 = smul.addr %s258, 72
      %s263 = sadd.s32 %s261, %s262
      %s264 = smul.addr %s263, 8
      %s265 = scalar_lea.vmem %s0, %s264
      %p266 = pneg %p51
      %p267 = pneg %p48
      %s268 = sadd.s32 %s21, 1
      %s269 = smul.u32 %s268, 8
      %s270 = smul.u32 2, %s269
      %p271 = scmp.lt.s32.totalorder %s20, 1
      %s272 = scalar_select %p271, %s20, 1
      %p273 = scmp.lt.s32.totalorder %s270, 17
      %s274 = scalar_select %p273, %s270, 17
      %s275 = smul.addr %s274, 4
      %s276 = smul.addr %s272, 72
      %s277 = sadd.s32 %s275, %s276
      %s278 = smul.addr %s277, 8
      %s279 = scalar_lea.vmem %s1, %s278
      %p280 = pneg %p83
      %p281 = pneg %p80
      %p282 = pneg %p104
      %p283 = pneg %p101
      %p284 = pneg %p125
      %p285 = pneg %p122
      %p286 = pneg %p146
      %p287 = pneg %p143
      %p288 = pneg %p174
      %p289 = pneg %p171
      %s290 = smul.u32 16, %s21
      %p291 = scmp.lt.s32.totalorder %s20, 1
      %s292 = scalar_select %p291, %s20, 1
      %p293 = scmp.lt.s32.totalorder %s290, 15
      %s294 = scalar_select %p293, %s290, 15
      %s295 = smul.addr %s294, 2
      %s296 = smul.addr %s292, 32
      %s297 = sadd.s32 %s295, %s296
      %s298 = smul.addr %s297, 8
      %s299 = scalar_lea.vmem %s5, %s298
      %s300 = smul.u32 16, %s21
      %s301 = ssub.s32 18, %s300
      %p302 = scmp.lt.s32.totalorder %s301, 16
      %s303 = scalar_select %p302, %s301, 16
      %s304 = smul.u32 128, %s303
      %s305 = smul.u32 %s304, 4
      %p306 = scmp.lt.s32.totalorder %s20, 1
      %s307 = scalar_select %p306, %s20, 1
      %p308 = scmp.lt.s32.totalorder %s300, 17
      %s309 = scalar_select %p308, %s300, 17
      %s310 = smul.addr %s309, 4
      %s311 = smul.addr %s307, 72
      %s312 = sadd.s32 %s310, %s311
      %s313 = smul.addr %s312, 8
      %s314 = scalar_lea.vmem %s0, %s313
      %s315 = smul.u32 16, %s21
      %s316 = ssub.s32 18, %s315
      %p317 = scmp.lt.s32.totalorder %s316, 16
      %s318 = scalar_select %p317, %s316, 16
      %s319 = smul.u32 128, %s318
      %s320 = smul.u32 %s319, 4
      %s321 = sadd.s32 %s21, 1
      %s322 = smul.u32 %s321, 8
      %s323 = smul.u32 2, %s322
      %p324 = scmp.lt.s32.totalorder %s20, 1
      %s325 = scalar_select %p324, %s20, 1
      %p326 = scmp.lt.s32.totalorder %s323, 17
      %s327 = scalar_select %p326, %s323, 17
      %s328 = smul.addr %s327, 4
      %s329 = smul.addr %s325, 72
      %s330 = sadd.s32 %s328, %s329
      %s331 = smul.addr %s330, 8
      %s332 = scalar_lea.vmem %s1, %s331
      %s333 = sadd.s32 %s21, 1
      %s334 = smul.u32 %s333, 8
      %s335 = smul.u32 2, %s334
      %s336 = smul.u32 16, %s21
      %p337 = scmp.lt.s32.totalorder %s20, 1
      %s338 = scalar_select %p337, %s20, 1
      %p339 = scmp.lt.s32.totalorder %s336, 15
      %s340 = scalar_select %p339, %s336, 15
      %s341 = smul.addr %s340, 2
      %s342 = smul.addr %s338, 32
      %s343 = sadd.s32 %s341, %s342
      %s344 = smul.addr %s343, 8
      %s345 = scalar_lea.vmem %s5, %s344
      %s346 = smul.u32 16, %s21
      %v347 = vld [vmem:[%s2] sm:$0xff]
      %v348 = vld [vmem:[%s2 + $0x8] sm:$0x1f]
      %v349 = vld [vmem:[%s314] sm:$0xff]
      %v350 = vld [vmem:[%s314 + $0x8] sm:$0xff]
      %v351 = vld [vmem:[%s314 + $0x10] sm:$0xff]
      %v352 = vld [vmem:[%s314 + $0x18] sm:$0xff]
      %v353 = vld [vmem:[%s314 + $0x20] sm:$0xff]
      %v354 = vld [vmem:[%s314 + $0x28] sm:$0xff]
      %v355 = vld [vmem:[%s314 + $0x30] sm:$0xff]
      %v356 = vld [vmem:[%s314 + $0x38] sm:$0xff]
      %v357 = vld [vmem:[%s314 + $0x40] sm:$0xff]
      %v358 = vld [vmem:[%s314 + $0x48] sm:$0xff]
      %v359 = vld [vmem:[%s314 + $0x50] sm:$0xff]
      %v360 = vld [vmem:[%s314 + $0x58] sm:$0xff]
      %v361 = vld [vmem:[%s314 + $0x60] sm:$0xff]
      %v362 = vld [vmem:[%s314 + $0x68] sm:$0xff]
      %v363 = vld [vmem:[%s314 + $0x70] sm:$0xff]
      %v364 = vld [vmem:[%s314 + $0x78] sm:$0xff]
      %v365 = vld [vmem:[%s314 + $0x80] sm:$0xff]
      %v366 = vld [vmem:[%s314 + $0x88] sm:$0xff]
      %v367 = vld [vmem:[%s314 + $0x90] sm:$0xff]
      %v368 = vld [vmem:[%s314 + $0x98] sm:$0xff]
      %v369 = vld [vmem:[%s314 + $0xa0] sm:$0xff]
      %v370 = vld [vmem:[%s314 + $0xa8] sm:$0xff]
      %v371 = vld [vmem:[%s314 + $0xb0] sm:$0xff]
      %v372 = vld [vmem:[%s314 + $0xb8] sm:$0xff]
      %v373 = vld [vmem:[%s314 + $0xc0] sm:$0xff]
      %v374 = vld [vmem:[%s314 + $0xc8] sm:$0xff]
      %v375 = vld [vmem:[%s314 + $0xd0] sm:$0xff]
      %v376 = vld [vmem:[%s314 + $0xd8] sm:$0xff]
      %v377 = vld [vmem:[%s314 + $0xe0] sm:$0xff]
      %v378 = vld [vmem:[%s314 + $0xe8] sm:$0xff]
      %v379 = vld [vmem:[%s314 + $0xf0] sm:$0xff]
      %v380 = vld [vmem:[%s314 + $0xf8] sm:$0xff]
      %v381 = vld [vmem:[%s314 + $0x100] sm:$0xff]
      %v382 = vld [vmem:[%s314 + $0x108] sm:$0xff]
      %v383 = vld [vmem:[%s314 + $0x110] sm:$0xff]
      %v384 = vld [vmem:[%s314 + $0x118] sm:$0xff]
      %v385 = vld [vmem:[%s314 + $0x120] sm:$0xff]
      %v386 = vld [vmem:[%s314 + $0x128] sm:$0xff]
      %v387 = vld [vmem:[%s314 + $0x130] sm:$0xff]
      %v388 = vld [vmem:[%s314 + $0x138] sm:$0xff]
      %v389 = vld [vmem:[%s314 + $0x140] sm:$0xff]
      %v390 = vld [vmem:[%s314 + $0x148] sm:$0xff]
      %v391 = vld [vmem:[%s314 + $0x150] sm:$0xff]
      %v392 = vld [vmem:[%s314 + $0x158] sm:$0xff]
      %v393 = vld [vmem:[%s314 + $0x160] sm:$0xff]
      %v394 = vld [vmem:[%s314 + $0x168] sm:$0xff]
      %v395 = vld [vmem:[%s314 + $0x170] sm:$0xff]
      %v396 = vld [vmem:[%s314 + $0x178] sm:$0xff]
      %v397 = vld [vmem:[%s314 + $0x180] sm:$0xff]
      %v398 = vld [vmem:[%s314 + $0x188] sm:$0xff]
      %v399 = vld [vmem:[%s314 + $0x190] sm:$0xff]
      %v400 = vld [vmem:[%s314 + $0x198] sm:$0xff]
      %v401 = vld [vmem:[%s314 + $0x1a0] sm:$0xff]
      %v402 = vld [vmem:[%s314 + $0x1a8] sm:$0xff]
      %v403 = vld [vmem:[%s314 + $0x1b0] sm:$0xff]
      %v404 = vld [vmem:[%s314 + $0x1b8] sm:$0xff]
      %v405 = vld [vmem:[%s314 + $0x1c0] sm:$0xff]
      %v406 = vld [vmem:[%s314 + $0x1c8] sm:$0xff]
      %v407 = vld [vmem:[%s314 + $0x1d0] sm:$0xff]
      %v408 = vld [vmem:[%s314 + $0x1d8] sm:$0xff]
      %v409 = vld [vmem:[%s314 + $0x1e0] sm:$0xff]
      %v410 = vld [vmem:[%s314 + $0x1e8] sm:$0xff]
      %v411 = vld [vmem:[%s314 + $0x1f0] sm:$0xff]
      %v412 = vld [vmem:[%s314 + $0x1f8] sm:$0xff]
      %vm413 = vcmask 105472
      %v415 = vsel %vm413, %v349, 0
      %v418 = vsel %vm413, %v350, 0
      %v421 = vsel %vm413, %v351, 0
      %v424 = vsel %vm413, %v352, 0
      %v427 = vsel %vm413, %v353, 0
      %v430 = vsel %vm413, %v354, 0
      %v433 = vsel %vm413, %v355, 0
      %v436 = vsel %vm413, %v356, 0
      %v439 = vsel %vm413, %v357, 0
      %v442 = vsel %vm413, %v358, 0
      %v445 = vsel %vm413, %v359, 0
      %v448 = vsel %vm413, %v360, 0
      %v451 = vsel %vm413, %v361, 0
      %v454 = vsel %vm413, %v362, 0
      %v457 = vsel %vm413, %v363, 0
      %v460 = vsel %vm413, %v364, 0
      %v463 = vsel %vm413, %v365, 0
      %v466 = vsel %vm413, %v366, 0
      %v469 = vsel %vm413, %v367, 0
      %v472 = vsel %vm413, %v368, 0
      %v475 = vsel %vm413, %v369, 0
      %v478 = vsel %vm413, %v370, 0
      %v481 = vsel %vm413, %v371, 0
      %v484 = vsel %vm413, %v372, 0
      %v487 = vsel %vm413, %v373, 0
      %v490 = vsel %vm413, %v374, 0
      %v493 = vsel %vm413, %v375, 0
      %v496 = vsel %vm413, %v376, 0
      %v499 = vsel %vm413, %v377, 0
      %v502 = vsel %vm413, %v378, 0
      %v505 = vsel %vm413, %v379, 0
      %v508 = vsel %vm413, %v380, 0
      %v511 = vsel %vm413, %v381, 0
      %v514 = vsel %vm413, %v382, 0
      %v517 = vsel %vm413, %v383, 0
      %v520 = vsel %vm413, %v384, 0
      %v523 = vsel %vm413, %v385, 0
      %v526 = vsel %vm413, %v386, 0
      %v529 = vsel %vm413, %v387, 0
      %v532 = vsel %vm413, %v388, 0
      %v535 = vsel %vm413, %v389, 0
      %v538 = vsel %vm413, %v390, 0
      %v541 = vsel %vm413, %v391, 0
      %v544 = vsel %vm413, %v392, 0
      %v547 = vsel %vm413, %v393, 0
      %v550 = vsel %vm413, %v394, 0
      %v553 = vsel %vm413, %v395, 0
      %v556 = vsel %vm413, %v396, 0
      %v559 = vsel %vm413, %v397, 0
      %v562 = vsel %vm413, %v398, 0
      %v565 = vsel %vm413, %v399, 0
      %v568 = vsel %vm413, %v400, 0
      %v571 = vsel %vm413, %v401, 0
      %v574 = vsel %vm413, %v402, 0
      %v577 = vsel %vm413, %v403, 0
      %v580 = vsel %vm413, %v404, 0
      %v583 = vsel %vm413, %v405, 0
      %v586 = vsel %vm413, %v406, 0
      %v589 = vsel %vm413, %v407, 0
      %v592 = vsel %vm413, %v408, 0
      %v595 = vsel %vm413, %v409, 0
      %v598 = vsel %vm413, %v410, 0
      %v601 = vsel %vm413, %v411, 0
      %v604 = vsel %vm413, %v412, 0
      %vm606 = vcmask 1044480
      %v608 = vsel %vm606, %v348, 0
      %610 = vmatprep.subr.mxu0 0.0
      %611 = vmatpush1.msra.mxu0 %v347
      %612 = vmatprep.subr.mxu0 0.0
      %613 = vmatpush1.msra.mxu0 %v608
      %614 = vmatprep.subr.mxu0 0.0
      %615 = vmatpush1.msra.mxu0 0.0
      %616 = vmatprep.subr.mxu0 0.0
      %617 = vmatpush1.msra.mxu0 0.0
      %618 = vmatprep.subr.mxu0 0.0
      %619 = vmatpush1.msra.mxu0 0.0
      %620 = vmatprep.subr.mxu0 0.0
      %621 = vmatpush1.msra.mxu0 0.0
      %622 = vmatprep.subr.mxu0 0.0
      %623 = vmatpush1.msra.mxu0 0.0
      %624 = vmatprep.subr.mxu0 0.0
      %625 = vmatpush1.msra.mxu0 0.0
      %626 = vmatprep.subr.mxu0 0.0
      %627 = vmatpush1.msra.mxu0 0.0
      %628 = vmatprep.subr.mxu0 0.0
      %629 = vmatpush1.msra.mxu0 0.0
      %630 = vmatprep.subr.mxu0 0.0
      %631 = vmatpush1.msra.mxu0 0.0
      %632 = vmatprep.subr.mxu0 0.0
      %633 = vmatpush1.msra.mxu0 0.0
      %634 = vmatprep.subr.mxu0 0.0
      %635 = vmatpush1.msra.mxu0 0.0
      %636 = vmatprep.subr.mxu0 0.0
      %637 = vmatpush1.msra.mxu0 0.0
      %638 = vmatprep.subr.mxu0 0.0
      %639 = vmatpush1.msra.mxu0 0.0
      %640 = vmatprep.subr.mxu0 0.0
      %641 = vmatpush1.msra.mxu0 0.0
      %642 = vmatprep.subr.mxu0 0.0
      %643 = vmatpush1.msra.mxu0 0.0
      %644 = vmatprep.subr.mxu0 0.0
      %645 = vmatpush1.msra.mxu0 0.0
      %646 = vmatprep.subr.mxu0 0.0
      %647 = vmatpush1.msra.mxu0 0.0
      %648 = vmatprep.subr.mxu0 0.0
      %649 = vmatpush1.msra.mxu0 0.0
      %650 = vmatprep.subr.mxu0 0.0
      %651 = vmatpush1.msra.mxu0 0.0
      %652 = vmatprep.subr.mxu0 0.0
      %653 = vmatpush1.msra.mxu0 0.0
      %654 = vmatprep.subr.mxu0 0.0
      %655 = vmatpush1.msra.mxu0 0.0
      %656 = vmatprep.subr.mxu0 0.0
      %657 = vmatpush1.msra.mxu0 0.0
      %658 = vmatprep.subr.mxu0 0.0
      %659 = vmatpush1.msra.mxu0 0.0
      %660 = vmatprep.subr.mxu0 0.0
      %661 = vmatpush1.msra.mxu0 0.0
      %662 = vmatprep.subr.mxu0 0.0
      %663 = vmatpush1.msra.mxu0 0.0
      %664 = vmatprep.subr.mxu0 0.0
      %665 = vmatpush1.msra.mxu0 0.0
      %666 = vmatprep.subr.mxu0 0.0
      %667 = vmatpush1.msra.mxu0 0.0
      %668 = vmatprep.subr.mxu0 0.0
      %669 = vmatpush1.msra.mxu0 0.0
      %670 = vmatprep.subr.mxu0 0.0
      %671 = vmatpush1.msra.mxu0 0.0
      %672 = vmatprep.subr.mxu0 0.0
      %673 = vmatpush1.msra.mxu0 0.0
      %674 = vmatprep.mubr.f32.mxu0 0.0
      %675 = vmatmul.mubr.f32.gmra.mrb[0].mxu0 %v415
      %v676 = vpop.f32.mrb[0].mxu0
      %v677 = vadd.f32 0.0, %v676
      %v678 = vpop.f32.mrb[0].mxu0
      %679 = vmatprep.mubr.f32.mxu0 0.0
      %680 = vmatmul.mubr.f32.gmra.mrb[0].mxu0 %v418
      %v681 = vpop.f32.mrb[0].mxu0
      %v682 = vadd.f32 0.0, %v681
      %v683 = vpop.f32.mrb[0].mxu0
      %684 = vmatprep.mubr.f32.mxu0 0.0
      %685 = vmatmul.mubr.f32.gmra.mrb[0].mxu0 %v421
      %v686 = vpop.f32.mrb[0].mxu0
      %v687 = vadd.f32 0.0, %v686
      %v688 = vpop.f32.mrb[0].mxu0
      %689 = vmatprep.mubr.f32.mxu0 0.0
      %690 = vmatmul.mubr.f32.gmra.mrb[0].mxu0 %v424
      %v691 = vpop.f32.mrb[0].mxu0
      %v692 = vadd.f32 0.0, %v691
      %v693 = vpop.f32.mrb[0].mxu0
      %694 = vmatprep.mubr.f32.mxu0 0.0
      %695 = vmatmul.mubr.f32.gmra.mrb[0].mxu0 %v427
      %v696 = vpop.f32.mrb[0].mxu0
      %v697 = vadd.f32 0.0, %v696
      %v698 = vpop.f32.mrb[0].mxu0
      %699 = vmatprep.mubr.f32.mxu0 0.0
      %700 = vmatmul.mubr.f32.gmra.mrb[0].mxu0 %v430
      %v701 = vpop.f32.mrb[0].mxu0
      %v702 = vadd.f32 0.0, %v701
      %v703 = vpop.f32.mrb[0].mxu0
      %704 = vmatprep.mubr.f32.mxu0 0.0
      %705 = vmatmul.mubr.f32.gmra.mrb[0].mxu0 %v433
      %v706 = vpop.f32.mrb[0].mxu0
      %v707 = vadd.f32 0.0, %v706
      %v708 = vpop.f32.mrb[0].mxu0
      %709 = vmatprep.mubr.f32.mxu0 0.0
      %710 = vmatmul.mubr.f32.gmra.mrb[0].mxu0 %v436
      %v711 = vpop.f32.mrb[0].mxu0
      %v712 = vadd.f32 0.0, %v711
      %v713 = vpop.f32.mrb[0].mxu0
      %714 = vmatprep.mubr.f32.mxu0 0.0
      %715 = vmatmul.mubr.f32.gmra.mrb[0].mxu0 %v439
      %v716 = vpop.f32.mrb[0].mxu0
      %v717 = vadd.f32 0.0, %v716
      %v718 = vpop.f32.mrb[0].mxu0
      %719 = vmatprep.mubr.f32.mxu0 0.0
      %720 = vmatmul.mubr.f32.gmra.mrb[0].mxu0 %v442
      %v721 = vpop.f32.mrb[0].mxu0
      %v722 = vadd.f32 0.0, %v721
      %v723 = vpop.f32.mrb[0].mxu0
      %724 = vmatprep.mubr.f32.mxu0 0.0
      %725 = vmatmul.mubr.f32.gmra.mrb[0].mxu0 %v445
      %v726 = vpop.f32.mrb[0].mxu0
      %v727 = vadd.f32 0.0, %v726
      %v728 = vpop.f32.mrb[0].mxu0
      %729 = vmatprep.mubr.f32.mxu0 0.0
      %730 = vmatmul.mubr.f32.gmra.mrb[0].mxu0 %v448
      %v731 = vpop.f32.mrb[0].mxu0
      %v732 = vadd.f32 0.0, %v731
      %v733 = vpop.f32.mrb[0].mxu0
      %734 = vmatprep.mubr.f32.mxu0 0.0
      %735 = vmatmul.mubr.f32.gmra.mrb[0].mxu0 %v451
      %v736 = vpop.f32.mrb[0].mxu0
      %v737 = vadd.f32 0.0, %v736
      %v738 = vpop.f32.mrb[0].mxu0
      %739 = vmatprep.mubr.f32.mxu0 0.0
      %740 = vmatmul.mubr.f32.gmra.mrb[0].mxu0 %v454
      %v741 = vpop.f32.mrb[0].mxu0
      %v742 = vadd.f32 0.0, %v741
      %v743 = vpop.f32.mrb[0].mxu0
      %744 = vmatprep.mubr.f32.mxu0 0.0
      %745 = vmatmul.mubr.f32.gmra.mrb[0].mxu0 %v457
      %v746 = vpop.f32.mrb[0].mxu0
      %v747 = vadd.f32 0.0, %v746
      %v748 = vpop.f32.mrb[0].mxu0
      %749 = vmatprep.mubr.f32.mxu0 0.0
      %750 = vmatmul.mubr.f32.gmra.mrb[0].mxu0 %v460
      %v751 = vpop.f32.mrb[0].mxu0
      %v752 = vadd.f32 0.0, %v751
      %v753 = vpop.f32.mrb[0].mxu0
      %754 = vmatprep.mubr.f32.mxu0 0.0
      %755 = vmatmul.mubr.f32.gmra.mrb[0].mxu0 %v463
      %v756 = vpop.f32.mrb[0].mxu0
      %v757 = vadd.f32 0.0, %v756
      %v758 = vpop.f32.mrb[0].mxu0
      %759 = vmatprep.mubr.f32.mxu0 0.0
      %760 = vmatmul.mubr.f32.gmra.mrb[0].mxu0 %v466
      %v761 = vpop.f32.mrb[0].mxu0
      %v762 = vadd.f32 0.0, %v761
      %v763 = vpop.f32.mrb[0].mxu0
      %764 = vmatprep.mubr.f32.mxu0 0.0
      %765 = vmatmul.mubr.f32.gmra.mrb[0].mxu0 %v469
      %v766 = vpop.f32.mrb[0].mxu0
      %v767 = vadd.f32 0.0, %v766
      %v768 = vpop.f32.mrb[0].mxu0
      %769 = vmatprep.mubr.f32.mxu0 0.0
      %770 = vmatmul.mubr.f32.gmra.mrb[0].mxu0 %v472
      %v771 = vpop.f32.mrb[0].mxu0
      %v772 = vadd.f32 0.0, %v771
      %v773 = vpop.f32.mrb[0].mxu0
      %774 = vmatprep.mubr.f32.mxu0 0.0
      %775 = vmatmul.mubr.f32.gmra.mrb[0].mxu0 %v475
      %v776 = vpop.f32.mrb[0].mxu0
      %v777 = vadd.f32 0.0, %v776
      %v778 = vpop.f32.mrb[0].mxu0
      %779 = vmatprep.mubr.f32.mxu0 0.0
      %780 = vmatmul.mubr.f32.gmra.mrb[0].mxu0 %v478
      %v781 = vpop.f32.mrb[0].mxu0
      %v782 = vadd.f32 0.0, %v781
      %v783 = vpop.f32.mrb[0].mxu0
      %784 = vmatprep.mubr.f32.mxu0 0.0
      %785 = vmatmul.mubr.f32.gmra.mrb[0].mxu0 %v481
      %v786 = vpop.f32.mrb[0].mxu0
      %v787 = vadd.f32 0.0, %v786
      %v788 = vpop.f32.mrb[0].mxu0
      %789 = vmatprep.mubr.f32.mxu0 0.0
      %790 = vmatmul.mubr.f32.gmra.mrb[0].mxu0 %v484
      %v791 = vpop.f32.mrb[0].mxu0
      %v792 = vadd.f32 0.0, %v791
      %v793 = vpop.f32.mrb[0].mxu0
      %794 = vmatprep.mubr.f32.mxu0 0.0
      %795 = vmatmul.mubr.f32.gmra.mrb[0].mxu0 %v487
      %v796 = vpop.f32.mrb[0].mxu0
      %v797 = vadd.f32 0.0, %v796
      %v798 = vpop.f32.mrb[0].mxu0
      %799 = vmatprep.mubr.f32.mxu0 0.0
      %800 = vmatmul.mubr.f32.gmra.mrb[0].mxu0 %v490
      %v801 = vpop.f32.mrb[0].mxu0
      %v802 = vadd.f32 0.0, %v801
      %v803 = vpop.f32.mrb[0].mxu0
      %804 = vmatprep.mubr.f32.mxu0 0.0
      %805 = vmatmul.mubr.f32.gmra.mrb[0].mxu0 %v493
      %v806 = vpop.f32.mrb[0].mxu0
      %v807 = vadd.f32 0.0, %v806
      %v808 = vpop.f32.mrb[0].mxu0
      %809 = vmatprep.mubr.f32.mxu0 0.0
      %810 = vmatmul.mubr.f32.gmra.mrb[0].mxu0 %v496
      %v811 = vpop.f32.mrb[0].mxu0
      %v812 = vadd.f32 0.0, %v811
      %v813 = vpop.f32.mrb[0].mxu0
      %814 = vmatprep.mubr.f32.mxu0 0.0
      %815 = vmatmul.mubr.f32.gmra.mrb[0].mxu0 %v499
      %v816 = vpop.f32.mrb[0].mxu0
      %v817 = vadd.f32 0.0, %v816
      %v818 = vpop.f32.mrb[0].mxu0
      %819 = vmatprep.mubr.f32.mxu0 0.0
      %820 = vmatmul.mubr.f32.gmra.mrb[0].mxu0 %v502
      %v821 = vpop.f32.mrb[0].mxu0
      %v822 = vadd.f32 0.0, %v821
      %v823 = vpop.f32.mrb[0].mxu0
      %824 = vmatprep.mubr.f32.mxu0 0.0
      %825 = vmatmul.mubr.f32.gmra.mrb[0].mxu0 %v505
      %v826 = vpop.f32.mrb[0].mxu0
      %v827 = vadd.f32 0.0, %v826
      %v828 = vpop.f32.mrb[0].mxu0
      %829 = vmatprep.mubr.f32.mxu0 0.0
      %830 = vmatmul.mubr.f32.gmra.mrb[0].mxu0 %v508
      %v831 = vpop.f32.mrb[0].mxu0
      %v832 = vadd.f32 0.0, %v831
      %v833 = vpop.f32.mrb[0].mxu0
      %834 = vmatprep.mubr.f32.mxu0 0.0
      %835 = vmatmul.mubr.f32.gmra.mrb[0].mxu0 %v511
      %v836 = vpop.f32.mrb[0].mxu0
      %v837 = vadd.f32 0.0, %v836
      %v838 = vpop.f32.mrb[0].mxu0
      %839 = vmatprep.mubr.f32.mxu0 0.0
      %840 = vmatmul.mubr.f32.gmra.mrb[0].mxu0 %v514
      %v841 = vpop.f32.mrb[0].mxu0
      %v842 = vadd.f32 0.0, %v841
      %v843 = vpop.f32.mrb[0].mxu0
      %844 = vmatprep.mubr.f32.mxu0 0.0
      %845 = vmatmul.mubr.f32.gmra.mrb[0].mxu0 %v517
      %v846 = vpop.f32.mrb[0].mxu0
      %v847 = vadd.f32 0.0, %v846
      %v848 = vpop.f32.mrb[0].mxu0
      %849 = vmatprep.mubr.f32.mxu0 0.0
      %850 = vmatmul.mubr.f32.gmra.mrb[0].mxu0 %v520
      %v851 = vpop.f32.mrb[0].mxu0
      %v852 = vadd.f32 0.0, %v851
      %v853 = vpop.f32.mrb[0].mxu0
      %854 = vmatprep.mubr.f32.mxu0 0.0
      %855 = vmatmul.mubr.f32.gmra.mrb[0].mxu0 %v523
      %v856 = vpop.f32.mrb[0].mxu0
      %v857 = vadd.f32 0.0, %v856
      %v858 = vpop.f32.mrb[0].mxu0
      %859 = vmatprep.mubr.f32.mxu0 0.0
      %860 = vmatmul.mubr.f32.gmra.mrb[0].mxu0 %v526
      %v861 = vpop.f32.mrb[0].mxu0
      %v862 = vadd.f32 0.0, %v861
      %v863 = vpop.f32.mrb[0].mxu0
      %864 = vmatprep.mubr.f32.mxu0 0.0
      %865 = vmatmul.mubr.f32.gmra.mrb[0].mxu0 %v529
      %v866 = vpop.f32.mrb[0].mxu0
      %v867 = vadd.f32 0.0, %v866
      %v868 = vpop.f32.mrb[0].mxu0
      %869 = vmatprep.mubr.f32.mxu0 0.0
      %870 = vmatmul.mubr.f32.gmra.mrb[0].mxu0 %v532
      %v871 = vpop.f32.mrb[0].mxu0
      %v872 = vadd.f32 0.0, %v871
      %v873 = vpop.f32.mrb[0].mxu0
      %874 = vmatprep.mubr.f32.mxu0 0.0
      %875 = vmatmul.mubr.f32.gmra.mrb[0].mxu0 %v535
      %v876 = vpop.f32.mrb[0].mxu0
      %v877 = vadd.f32 0.0, %v876
      %v878 = vpop.f32.mrb[0].mxu0
      %879 = vmatprep.mubr.f32.mxu0 0.0
      %880 = vmatmul.mubr.f32.gmra.mrb[0].mxu0 %v538
      %v881 = vpop.f32.mrb[0].mxu0
      %v882 = vadd.f32 0.0, %v881
      %v883 = vpop.f32.mrb[0].mxu0
      %884 = vmatprep.mubr.f32.mxu0 0.0
      %885 = vmatmul.mubr.f32.gmra.mrb[0].mxu0 %v541
      %v886 = vpop.f32.mrb[0].mxu0
      %v887 = vadd.f32 0.0, %v886
      %v888 = vpop.f32.mrb[0].mxu0
      %889 = vmatprep.mubr.f32.mxu0 0.0
      %890 = vmatmul.mubr.f32.gmra.mrb[0].mxu0 %v544
      %v891 = vpop.f32.mrb[0].mxu0
      %v892 = vadd.f32 0.0, %v891
      %v893 = vpop.f32.mrb[0].mxu0
      %894 = vmatprep.mubr.f32.mxu0 0.0
      %895 = vmatmul.mubr.f32.gmra.mrb[0].mxu0 %v547
      %v896 = vpop.f32.mrb[0].mxu0
      %v897 = vadd.f32 0.0, %v896
      %v898 = vpop.f32.mrb[0].mxu0
      %899 = vmatprep.mubr.f32.mxu0 0.0
      %900 = vmatmul.mubr.f32.gmra.mrb[0].mxu0 %v550
      %v901 = vpop.f32.mrb[0].mxu0
      %v902 = vadd.f32 0.0, %v901
      %v903 = vpop.f32.mrb[0].mxu0
      %904 = vmatprep.mubr.f32.mxu0 0.0
      %905 = vmatmul.mubr.f32.gmra.mrb[0].mxu0 %v553
      %v906 = vpop.f32.mrb[0].mxu0
      %v907 = vadd.f32 0.0, %v906
      %v908 = vpop.f32.mrb[0].mxu0
      %909 = vmatprep.mubr.f32.mxu0 0.0
      %910 = vmatmul.mubr.f32.gmra.mrb[0].mxu0 %v556
      %v911 = vpop.f32.mrb[0].mxu0
      %v912 = vadd.f32 0.0, %v911
      %v913 = vpop.f32.mrb[0].mxu0
      %914 = vmatprep.mubr.f32.mxu0 0.0
      %915 = vmatmul.mubr.f32.gmra.mrb[0].mxu0 %v559
      %v916 = vpop.f32.mrb[0].mxu0
      %v917 = vadd.f32 0.0, %v916
      %v918 = vpop.f32.mrb[0].mxu0
      %919 = vmatprep.mubr.f32.mxu0 0.0
      %920 = vmatmul.mubr.f32.gmra.mrb[0].mxu0 %v562
      %v921 = vpop.f32.mrb[0].mxu0
      %v922 = vadd.f32 0.0, %v921
      %v923 = vpop.f32.mrb[0].mxu0
      %924 = vmatprep.mubr.f32.mxu0 0.0
      %925 = vmatmul.mubr.f32.gmra.mrb[0].mxu0 %v565
      %v926 = vpop.f32.mrb[0].mxu0
      %v927 = vadd.f32 0.0, %v926
      %v928 = vpop.f32.mrb[0].mxu0
      %929 = vmatprep.mubr.f32.mxu0 0.0
      %930 = vmatmul.mubr.f32.gmra.mrb[0].mxu0 %v568
      %v931 = vpop.f32.mrb[0].mxu0
      %v932 = vadd.f32 0.0, %v931
      %v933 = vpop.f32.mrb[0].mxu0
      %934 = vmatprep.mubr.f32.mxu0 0.0
      %935 = vmatmul.mubr.f32.gmra.mrb[0].mxu0 %v571
      %v936 = vpop.f32.mrb[0].mxu0
      %v937 = vadd.f32 0.0, %v936
      %v938 = vpop.f32.mrb[0].mxu0
      %939 = vmatprep.mubr.f32.mxu0 0.0
      %940 = vmatmul.mubr.f32.gmra.mrb[0].mxu0 %v574
      %v941 = vpop.f32.mrb[0].mxu0
      %v942 = vadd.f32 0.0, %v941
      %v943 = vpop.f32.mrb[0].mxu0
      %944 = vmatprep.mubr.f32.mxu0 0.0
      %945 = vmatmul.mubr.f32.gmra.mrb[0].mxu0 %v577
      %v946 = vpop.f32.mrb[0].mxu0
      %v947 = vadd.f32 0.0, %v946
      %v948 = vpop.f32.mrb[0].mxu0
      %949 = vmatprep.mubr.f32.mxu0 0.0
      %950 = vmatmul.mubr.f32.gmra.mrb[0].mxu0 %v580
      %v951 = vpop.f32.mrb[0].mxu0
      %v952 = vadd.f32 0.0, %v951
      %v953 = vpop.f32.mrb[0].mxu0
      %954 = vmatprep.mubr.f32.mxu0 0.0
      %955 = vmatmul.mubr.f32.gmra.mrb[0].mxu0 %v583
      %v956 = vpop.f32.mrb[0].mxu0
      %v957 = vadd.f32 0.0, %v956
      %v958 = vpop.f32.mrb[0].mxu0
      %959 = vmatprep.mubr.f32.mxu0 0.0
      %960 = vmatmul.mubr.f32.gmra.mrb[0].mxu0 %v586
      %v961 = vpop.f32.mrb[0].mxu0
      %v962 = vadd.f32 0.0, %v961
      %v963 = vpop.f32.mrb[0].mxu0
      %964 = vmatprep.mubr.f32.mxu0 0.0
      %965 = vmatmul.mubr.f32.gmra.mrb[0].mxu0 %v589
      %v966 = vpop.f32.mrb[0].mxu0
      %v967 = vadd.f32 0.0, %v966
      %v968 = vpop.f32.mrb[0].mxu0
      %969 = vmatprep.mubr.f32.mxu0 0.0
      %970 = vmatmul.mubr.f32.gmra.mrb[0].mxu0 %v592
      %v971 = vpop.f32.mrb[0].mxu0
      %v972 = vadd.f32 0.0, %v971
      %v973 = vpop.f32.mrb[0].mxu0
      %974 = vmatprep.mubr.f32.mxu0 0.0
      %975 = vmatmul.mubr.f32.gmra.mrb[0].mxu0 %v595
      %v976 = vpop.f32.mrb[0].mxu0
      %v977 = vadd.f32 0.0, %v976
      %v978 = vpop.f32.mrb[0].mxu0
      %979 = vmatprep.mubr.f32.mxu0 0.0
      %980 = vmatmul.mubr.f32.gmra.mrb[0].mxu0 %v598
      %v981 = vpop.f32.mrb[0].mxu0
      %v982 = vadd.f32 0.0, %v981
      %v983 = vpop.f32.mrb[0].mxu0
      %984 = vmatprep.mubr.f32.mxu0 0.0
      %985 = vmatmul.mubr.f32.gmra.mrb[0].mxu0 %v601
      %v986 = vpop.f32.mrb[0].mxu0
      %v987 = vadd.f32 0.0, %v986
      %v988 = vpop.f32.mrb[0].mxu0
      %989 = vmatprep.mubr.f32.mxu0 0.0
      %990 = vmatmul.mubr.f32.gmra.mrb[0].mxu0 %v604
      %v991 = vpop.f32.mrb[0].mxu0
      %v992 = vadd.f32 0.0, %v991
      %v993 = vpop.f32.mrb[0].mxu0
      %994 = vdwg.mxu0
      %v995 = vmax.f32 %v677, 0.0
      %v996 = vmax.f32 %v682, 0.0
      %v997 = vmax.f32 %v687, 0.0
      %v998 = vmax.f32 %v692, 0.0
      %v999 = vmax.f32 %v697, 0.0
      %v1000 = vmax.f32 %v702, 0.0
      %v1001 = vmax.f32 %v707, 0.0
      %v1002 = vmax.f32 %v712, 0.0
      %v1003 = vmax.f32 %v717, 0.0
      %v1004 = vmax.f32 %v722, 0.0
      %v1005 = vmax.f32 %v727, 0.0
      %v1006 = vmax.f32 %v732, 0.0
      %v1007 = vmax.f32 %v737, 0.0
      %v1008 = vmax.f32 %v742, 0.0
      %v1009 = vmax.f32 %v747, 0.0
      %v1010 = vmax.f32 %v752, 0.0
      %v1011 = vmax.f32 %v757, 0.0
      %v1012 = vmax.f32 %v762, 0.0
      %v1013 = vmax.f32 %v767, 0.0
      %v1014 = vmax.f32 %v772, 0.0
      %v1015 = vmax.f32 %v777, 0.0
      %v1016 = vmax.f32 %v782, 0.0
      %v1017 = vmax.f32 %v787, 0.0
      %v1018 = vmax.f32 %v792, 0.0
      %v1019 = vmax.f32 %v797, 0.0
      %v1020 = vmax.f32 %v802, 0.0
      %v1021 = vmax.f32 %v807, 0.0
      %v1022 = vmax.f32 %v812, 0.0
      %v1023 = vmax.f32 %v817, 0.0
      %v1024 = vmax.f32 %v822, 0.0
      %v1025 = vmax.f32 %v827, 0.0
      %v1026 = vmax.f32 %v832, 0.0
      %v1027 = vmax.f32 %v837, 0.0
      %v1028 = vmax.f32 %v842, 0.0
      %v1029 = vmax.f32 %v847, 0.0
      %v1030 = vmax.f32 %v852, 0.0
      %v1031 = vmax.f32 %v857, 0.0
      %v1032 = vmax.f32 %v862, 0.0
      %v1033 = vmax.f32 %v867, 0.0
      %v1034 = vmax.f32 %v872, 0.0
      %v1035 = vmax.f32 %v877, 0.0
      %v1036 = vmax.f32 %v882, 0.0
      %v1037 = vmax.f32 %v887, 0.0
      %v1038 = vmax.f32 %v892, 0.0
      %v1039 = vmax.f32 %v897, 0.0
      %v1040 = vmax.f32 %v902, 0.0
      %v1041 = vmax.f32 %v907, 0.0
      %v1042 = vmax.f32 %v912, 0.0
      %v1043 = vmax.f32 %v917, 0.0
      %v1044 = vmax.f32 %v922, 0.0
      %v1045 = vmax.f32 %v927, 0.0
      %v1046 = vmax.f32 %v932, 0.0
      %v1047 = vmax.f32 %v937, 0.0
      %v1048 = vmax.f32 %v942, 0.0
      %v1049 = vmax.f32 %v947, 0.0
      %v1050 = vmax.f32 %v952, 0.0
      %v1051 = vmax.f32 %v957, 0.0
      %v1052 = vmax.f32 %v962, 0.0
      %v1053 = vmax.f32 %v967, 0.0
      %v1054 = vmax.f32 %v972, 0.0
      %v1055 = vmax.f32 %v977, 0.0
      %v1056 = vmax.f32 %v982, 0.0
      %v1057 = vmax.f32 %v987, 0.0
      %v1058 = vmax.f32 %v992, 0.0
      %vm1059 = vcmask 64512
      %1060 = vst.msk [vmem:[#allocation2] sm:$0xff] %vm1059, %v995
      %1061 = vst.msk [vmem:[#allocation2 + $0x8] sm:$0xff] %vm1059, %v996
      %1062 = vst.msk [vmem:[#allocation2 + $0x10] sm:$0xff] %vm1059, %v997
      %1063 = vst.msk [vmem:[#allocation2 + $0x18] sm:$0xff] %vm1059, %v998
      %1064 = vst.msk [vmem:[#allocation2 + $0x20] sm:$0xff] %vm1059, %v999
      %1065 = vst.msk [vmem:[#allocation2 + $0x28] sm:$0xff] %vm1059, %v1000
      %1066 = vst.msk [vmem:[#allocation2 + $0x30] sm:$0xff] %vm1059, %v1001
      %1067 = vst.msk [vmem:[#allocation2 + $0x38] sm:$0xff] %vm1059, %v1002
      %1068 = vst.msk [vmem:[#allocation2 + $0x40] sm:$0xff] %vm1059, %v1003
      %1069 = vst.msk [vmem:[#allocation2 + $0x48] sm:$0xff] %vm1059, %v1004
      %1070 = vst.msk [vmem:[#allocation2 + $0x50] sm:$0xff] %vm1059, %v1005
      %1071 = vst.msk [vmem:[#allocation2 + $0x58] sm:$0xff] %vm1059, %v1006
      %1072 = vst.msk [vmem:[#allocation2 + $0x60] sm:$0xff] %vm1059, %v1007
      %1073 = vst.msk [vmem:[#allocation2 + $0x68] sm:$0xff] %vm1059, %v1008
      %1074 = vst.msk [vmem:[#allocation2 + $0x70] sm:$0xff] %vm1059, %v1009
      %1075 = vst.msk [vmem:[#allocation2 + $0x78] sm:$0xff] %vm1059, %v1010
      %1076 = vst.msk [vmem:[#allocation2 + $0x80] sm:$0xff] %vm1059, %v1011
      %1077 = vst.msk [vmem:[#allocation2 + $0x88] sm:$0xff] %vm1059, %v1012
      %1078 = vst.msk [vmem:[#allocation2 + $0x90] sm:$0xff] %vm1059, %v1013
      %1079 = vst.msk [vmem:[#allocation2 + $0x98] sm:$0xff] %vm1059, %v1014
      %1080 = vst.msk [vmem:[#allocation2 + $0xa0] sm:$0xff] %vm1059, %v1015
      %1081 = vst.msk [vmem:[#allocation2 + $0xa8] sm:$0xff] %vm1059, %v1016
      %1082 = vst.msk [vmem:[#allocation2 + $0xb0] sm:$0xff] %vm1059, %v1017
      %1083 = vst.msk [vmem:[#allocation2 + $0xb8] sm:$0xff] %vm1059, %v1018
      %1084 = vst.msk [vmem:[#allocation2 + $0xc0] sm:$0xff] %vm1059, %v1019
      %1085 = vst.msk [vmem:[#allocation2 + $0xc8] sm:$0xff] %vm1059, %v1020
      %1086 = vst.msk [vmem:[#allocation2 + $0xd0] sm:$0xff] %vm1059, %v1021
      %1087 = vst.msk [vmem:[#allocation2 + $0xd8] sm:$0xff] %vm1059, %v1022
      %1088 = vst.msk [vmem:[#allocation2 + $0xe0] sm:$0xff] %vm1059, %v1023
      %1089 = vst.msk [vmem:[#allocation2 + $0xe8] sm:$0xff] %vm1059, %v1024
      %1090 = vst.msk [vmem:[#allocation2 + $0xf0] sm:$0xff] %vm1059, %v1025
      %1091 = vst.msk [vmem:[#allocation2 + $0xf8] sm:$0xff] %vm1059, %v1026
      %1092 = vst.msk [vmem:[#allocation2 + $0x100] sm:$0xff] %vm1059, %v1027
      %1093 = vst.msk [vmem:[#allocation2 + $0x108] sm:$0xff] %vm1059, %v1028
      %1094 = vst.msk [vmem:[#allocation2 + $0x110] sm:$0xff] %vm1059, %v1029
      %1095 = vst.msk [vmem:[#allocation2 + $0x118] sm:$0xff] %vm1059, %v1030
      %1096 = vst.msk [vmem:[#allocation2 + $0x120] sm:$0xff] %vm1059, %v1031
      %1097 = vst.msk [vmem:[#allocation2 + $0x128] sm:$0xff] %vm1059, %v1032
      %1098 = vst.msk [vmem:[#allocation2 + $0x130] sm:$0xff] %vm1059, %v1033
      %1099 = vst.msk [vmem:[#allocation2 + $0x138] sm:$0xff] %vm1059, %v1034
      %1100 = vst.msk [vmem:[#allocation2 + $0x140] sm:$0xff] %vm1059, %v1035
      %1101 = vst.msk [vmem:[#allocation2 + $0x148] sm:$0xff] %vm1059, %v1036
      %1102 = vst.msk [vmem:[#allocation2 + $0x150] sm:$0xff] %vm1059, %v1037
      %1103 = vst.msk [vmem:[#allocation2 + $0x158] sm:$0xff] %vm1059, %v1038
      %1104 = vst.msk [vmem:[#allocation2 + $0x160] sm:$0xff] %vm1059, %v1039
      %1105 = vst.msk [vmem:[#allocation2 + $0x168] sm:$0xff] %vm1059, %v1040
      %1106 = vst.msk [vmem:[#allocation2 + $0x170] sm:$0xff] %vm1059, %v1041
      %1107 = vst.msk [vmem:[#allocation2 + $0x178] sm:$0xff] %vm1059, %v1042
      %1108 = vst.msk [vmem:[#allocation2 + $0x180] sm:$0xff] %vm1059, %v1043
      %1109 = vst.msk [vmem:[#allocation2 + $0x188] sm:$0xff] %vm1059, %v1044
      %1110 = vst.msk [vmem:[#allocation2 + $0x190] sm:$0xff] %vm1059, %v1045
      %1111 = vst.msk [vmem:[#allocation2 + $0x198] sm:$0xff] %vm1059, %v1046
      %1112 = vst.msk [vmem:[#allocation2 + $0x1a0] sm:$0xff] %vm1059, %v1047
      %1113 = vst.msk [vmem:[#allocation2 + $0x1a8] sm:$0xff] %vm1059, %v1048
      %1114 = vst.msk [vmem:[#allocation2 + $0x1b0] sm:$0xff] %vm1059, %v1049
      %1115 = vst.msk [vmem:[#allocation2 + $0x1b8] sm:$0xff] %vm1059, %v1050
      %1116 = vst.msk [vmem:[#allocation2 + $0x1c0] sm:$0xff] %vm1059, %v1051
      %1117 = vst.msk [vmem:[#allocation2 + $0x1c8] sm:$0xff] %vm1059, %v1052
      %1118 = vst.msk [vmem:[#allocation2 + $0x1d0] sm:$0xff] %vm1059, %v1053
      %1119 = vst.msk [vmem:[#allocation2 + $0x1d8] sm:$0xff] %vm1059, %v1054
      %1120 = vst.msk [vmem:[#allocation2 + $0x1e0] sm:$0xff] %vm1059, %v1055
      %1121 = vst.msk [vmem:[#allocation2 + $0x1e8] sm:$0xff] %vm1059, %v1056
      %1122 = vst.msk [vmem:[#allocation2 + $0x1f0] sm:$0xff] %vm1059, %v1057
      %1123 = vst.msk [vmem:[#allocation2 + $0x1f8] sm:$0xff] %vm1059, %v1058
      %v1124 = vld [vmem:[%s332] sm:$0xff]
      %v1125 = vld [vmem:[%s332 + $0x8] sm:$0xff]
      %v1126 = vld [vmem:[%s332 + $0x10] sm:$0xff]
      %v1127 = vld [vmem:[%s332 + $0x18] sm:$0xff]
      %v1128 = vld [vmem:[%s332 + $0x20] sm:$0xff]
      %v1129 = vld [vmem:[%s332 + $0x28] sm:$0xff]
      %v1130 = vld [vmem:[%s332 + $0x30] sm:$0xff]
      %v1131 = vld [vmem:[%s332 + $0x38] sm:$0xff]
      %v1133 = vsel %vm413, %v1124, 0
      %v1136 = vsel %vm413, %v1125, 0
      %v1139 = vsel %vm413, %v1126, 0
      %v1142 = vsel %vm413, %v1127, 0
      %v1145 = vsel %vm413, %v1128, 0
      %v1148 = vsel %vm413, %v1129, 0
      %v1151 = vsel %vm413, %v1130, 0
      %v1154 = vsel %vm413, %v1131, 0
      %1156 = vmatprep.subr.mxu0 0.0
      %1157 = vmatpush1.msra.mxu0 %v347
      %1158 = vmatprep.subr.mxu0 0.0
      %1159 = vmatpush1.msra.mxu0 %v608
      %1160 = vmatprep.subr.mxu0 0.0
      %1161 = vmatpush1.msra.mxu0 0.0
      %1162 = vmatprep.subr.mxu0 0.0
      %1163 = vmatpush1.msra.mxu0 0.0
      %1164 = vmatprep.subr.mxu0 0.0
      %1165 = vmatpush1.msra.mxu0 0.0
      %1166 = vmatprep.subr.mxu0 0.0
      %1167 = vmatpush1.msra.mxu0 0.0
      %1168 = vmatprep.subr.mxu0 0.0
      %1169 = vmatpush1.msra.mxu0 0.0
      %1170 = vmatprep.subr.mxu0 0.0
      %1171 = vmatpush1.msra.mxu0 0.0
      %1172 = vmatprep.subr.mxu0 0.0
      %1173 = vmatpush1.msra.mxu0 0.0
      %1174 = vmatprep.subr.mxu0 0.0
      %1175 = vmatpush1.msra.mxu0 0.0
      %1176 = vmatprep.subr.mxu0 0.0
      %1177 = vmatpush1.msra.mxu0 0.0
      %1178 = vmatprep.subr.mxu0 0.0
      %1179 = vmatpush1.msra.mxu0 0.0
      %1180 = vmatprep.subr.mxu0 0.0
      %1181 = vmatpush1.msra.mxu0 0.0
      %1182 = vmatprep.subr.mxu0 0.0
      %1183 = vmatpush1.msra.mxu0 0.0
      %1184 = vmatprep.subr.mxu0 0.0
      %1185 = vmatpush1.msra.mxu0 0.0
      %1186 = vmatprep.subr.mxu0 0.0
      %1187 = vmatpush1.msra.mxu0 0.0
      %1188 = vmatprep.subr.mxu0 0.0
      %1189 = vmatpush1.msra.mxu0 0.0
      %1190 = vmatprep.subr.mxu0 0.0
      %1191 = vmatpush1.msra.mxu0 0.0
      %1192 = vmatprep.subr.mxu0 0.0
      %1193 = vmatpush1.msra.mxu0 0.0
      %1194 = vmatprep.subr.mxu0 0.0
      %1195 = vmatpush1.msra.mxu0 0.0
      %1196 = vmatprep.subr.mxu0 0.0
      %1197 = vmatpush1.msra.mxu0 0.0
      %1198 = vmatprep.subr.mxu0 0.0
      %1199 = vmatpush1.msra.mxu0 0.0
      %1200 = vmatprep.subr.mxu0 0.0
      %1201 = vmatpush1.msra.mxu0 0.0
      %1202 = vmatprep.subr.mxu0 0.0
      %1203 = vmatpush1.msra.mxu0 0.0
      %1204 = vmatprep.subr.mxu0 0.0
      %1205 = vmatpush1.msra.mxu0 0.0
      %1206 = vmatprep.subr.mxu0 0.0
      %1207 = vmatpush1.msra.mxu0 0.0
      %1208 = vmatprep.subr.mxu0 0.0
      %1209 = vmatpush1.msra.mxu0 0.0
      %1210 = vmatprep.subr.mxu0 0.0
      %1211 = vmatpush1.msra.mxu0 0.0
      %1212 = vmatprep.subr.mxu0 0.0
      %1213 = vmatpush1.msra.mxu0 0.0
      %1214 = vmatprep.subr.mxu0 0.0
      %1215 = vmatpush1.msra.mxu0 0.0
      %1216 = vmatprep.subr.mxu0 0.0
      %1217 = vmatpush1.msra.mxu0 0.0
      %1218 = vmatprep.subr.mxu0 0.0
      %1219 = vmatpush1.msra.mxu0 0.0
      %1220 = vmatprep.mubr.f32.mxu0 0.0
      %1221 = vmatmul.mubr.f32.gmra.mrb[0].mxu0 %v1133
      %v1222 = vpop.f32.mrb[0].mxu0
      %v1223 = vadd.f32 0.0, %v1222
      %v1224 = vpop.f32.mrb[0].mxu0
      %1225 = vmatprep.mubr.f32.mxu0 0.0
      %1226 = vmatmul.mubr.f32.gmra.mrb[0].mxu0 %v1136
      %v1227 = vpop.f32.mrb[0].mxu0
      %v1228 = vadd.f32 0.0, %v1227
      %v1229 = vpop.f32.mrb[0].mxu0
      %1230 = vmatprep.mubr.f32.mxu0 0.0
      %1231 = vmatmul.mubr.f32.gmra.mrb[0].mxu0 %v1139
      %v1232 = vpop.f32.mrb[0].mxu0
      %v1233 = vadd.f32 0.0, %v1232
      %v1234 = vpop.f32.mrb[0].mxu0
      %1235 = vmatprep.mubr.f32.mxu0 0.0
      %1236 = vmatmul.mubr.f32.gmra.mrb[0].mxu0 %v1142
      %v1237 = vpop.f32.mrb[0].mxu0
      %v1238 = vadd.f32 0.0, %v1237
      %v1239 = vpop.f32.mrb[0].mxu0
      %1240 = vmatprep.mubr.f32.mxu0 0.0
      %1241 = vmatmul.mubr.f32.gmra.mrb[0].mxu0 %v1145
      %v1242 = vpop.f32.mrb[0].mxu0
      %v1243 = vadd.f32 0.0, %v1242
      %v1244 = vpop.f32.mrb[0].mxu0
      %1245 = vmatprep.mubr.f32.mxu0 0.0
      %1246 = vmatmul.mubr.f32.gmra.mrb[0].mxu0 %v1148
      %v1247 = vpop.f32.mrb[0].mxu0
      %v1248 = vadd.f32 0.0, %v1247
      %v1249 = vpop.f32.mrb[0].mxu0
      %1250 = vmatprep.mubr.f32.mxu0 0.0
      %1251 = vmatmul.mubr.f32.gmra.mrb[0].mxu0 %v1151
      %v1252 = vpop.f32.mrb[0].mxu0
      %v1253 = vadd.f32 0.0, %v1252
      %v1254 = vpop.f32.mrb[0].mxu0
      %1255 = vmatprep.mubr.f32.mxu0 0.0
      %1256 = vmatmul.mubr.f32.gmra.mrb[0].mxu0 %v1154
      %v1257 = vpop.f32.mrb[0].mxu0
      %v1258 = vadd.f32 0.0, %v1257
      %v1259 = vpop.f32.mrb[0].mxu0
      %1260 = vdwg.mxu0
      %v1261 = vmax.f32 %v1223, 0.0
      %v1262 = vmax.f32 %v1228, 0.0
      %v1263 = vmax.f32 %v1233, 0.0
      %v1264 = vmax.f32 %v1238, 0.0
      %v1265 = vmax.f32 %v1243, 0.0
      %v1266 = vmax.f32 %v1248, 0.0
      %v1267 = vmax.f32 %v1253, 0.0
      %v1268 = vmax.f32 %v1258, 0.0
      %1269 = vst.msk [vmem:[#allocation2 + $0x200] sm:$0xff] %vm1059, %v1261
      %1270 = vst.msk [vmem:[#allocation2 + $0x208] sm:$0xff] %vm1059, %v1262
      %1271 = vst.msk [vmem:[#allocation2 + $0x210] sm:$0xff] %vm1059, %v1263
      %1272 = vst.msk [vmem:[#allocation2 + $0x218] sm:$0xff] %vm1059, %v1264
      %1273 = vst.msk [vmem:[#allocation2 + $0x220] sm:$0xff] %vm1059, %v1265
      %1274 = vst.msk [vmem:[#allocation2 + $0x228] sm:$0xff] %vm1059, %v1266
      %1275 = vst.msk [vmem:[#allocation2 + $0x230] sm:$0xff] %vm1059, %v1267
      %1276 = vst.msk [vmem:[#allocation2 + $0x238] sm:$0xff] %vm1059, %v1268
      %1277 = vst.msk [vmem:[#allocation2 + $0x240] sm:$0xff] %vm1059, 0.0
      %1278 = vst.msk [vmem:[#allocation2 + $0x248] sm:$0xff] %vm1059, 0.0
      %v1279 = vld [vmem:[#allocation2] sm:$0xff]
      %v1280 = vld [vmem:[#allocation2 + $0x8] sm:$0xff]
      %v1281 = vld [vmem:[#allocation2 + $0x10] sm:$0xff]
      %v1282 = vld [vmem:[#allocation2 + $0x18] sm:$0xff]
      %v1283 = vld [vmem:[#allocation2 + $0x20] sm:$0xff]
      %v1284 = vld [vmem:[#allocation2 + $0x28] sm:$0xff]
      %v1285 = vld [vmem:[#allocation2 + $0x30] sm:$0xff]
      %v1286 = vld [vmem:[#allocation2 + $0x38] sm:$0xff]
      %v1287 = vld [vmem:[#allocation2 + $0x40] sm:$0xff]
      %v1288 = vld [vmem:[#allocation2 + $0x48] sm:$0xff]
      %v1289 = vld [vmem:[#allocation2 + $0x50] sm:$0xff]
      %v1290 = vld [vmem:[#allocation2 + $0x58] sm:$0xff]
      %v1291 = vld [vmem:[#allocation2 + $0x60] sm:$0xff]
      %v1292 = vld [vmem:[#allocation2 + $0x68] sm:$0xff]
      %v1293 = vld [vmem:[#allocation2 + $0x70] sm:$0xff]
      %v1294 = vld [vmem:[#allocation2 + $0x78] sm:$0xff]
      %v1295 = vld [vmem:[#allocation2 + $0x80] sm:$0xff]
      %v1296 = vld [vmem:[#allocation2 + $0x88] sm:$0xff]
      %v1297 = vld [vmem:[#allocation2 + $0x90] sm:$0xff]
      %v1298 = vld [vmem:[#allocation2 + $0x98] sm:$0xff]
      %v1299 = vld [vmem:[#allocation2 + $0xa0] sm:$0xff]
      %v1300 = vld [vmem:[#allocation2 + $0xa8] sm:$0xff]
      %v1301 = vld [vmem:[#allocation2 + $0xb0] sm:$0xff]
      %v1302 = vld [vmem:[#allocation2 + $0xb8] sm:$0xff]
      %v1303 = vld [vmem:[#allocation2 + $0xc0] sm:$0xff]
      %v1304 = vld [vmem:[#allocation2 + $0xc8] sm:$0xff]
      %v1305 = vld [vmem:[#allocation2 + $0xd0] sm:$0xff]
      %v1306 = vld [vmem:[#allocation2 + $0xd8] sm:$0xff]
      %v1307 = vld [vmem:[#allocation2 + $0xe0] sm:$0xff]
      %v1308 = vld [vmem:[#allocation2 + $0xe8] sm:$0xff]
      %v1309 = vld [vmem:[#allocation2 + $0xf0] sm:$0xff]
      %v1310 = vld [vmem:[#allocation2 + $0xf8] sm:$0xff]
      %v1311 = vld [vmem:[#allocation2 + $0x100] sm:$0xff]
      %v1312 = vld [vmem:[#allocation2 + $0x108] sm:$0xff]
      %v1313 = vld [vmem:[#allocation2 + $0x110] sm:$0xff]
      %v1314 = vld [vmem:[#allocation2 + $0x118] sm:$0xff]
      %v1315 = vld [vmem:[#allocation2 + $0x120] sm:$0xff]
      %v1316 = vld [vmem:[#allocation2 + $0x128] sm:$0xff]
      %v1317 = vld [vmem:[#allocation2 + $0x130] sm:$0xff]
      %v1318 = vld [vmem:[#allocation2 + $0x138] sm:$0xff]
      %v1319 = vld [vmem:[#allocation2 + $0x140] sm:$0xff]
      %v1320 = vld [vmem:[#allocation2 + $0x148] sm:$0xff]
      %v1321 = vld [vmem:[#allocation2 + $0x150] sm:$0xff]
      %v1322 = vld [vmem:[#allocation2 + $0x158] sm:$0xff]
      %v1323 = vld [vmem:[#allocation2 + $0x160] sm:$0xff]
      %v1324 = vld [vmem:[#allocation2 + $0x168] sm:$0xff]
      %v1325 = vld [vmem:[#allocation2 + $0x170] sm:$0xff]
      %v1326 = vld [vmem:[#allocation2 + $0x178] sm:$0xff]
      %v1327 = vld [vmem:[#allocation2 + $0x180] sm:$0xff]
      %v1328 = vld [vmem:[#allocation2 + $0x188] sm:$0xff]
      %v1329 = vld [vmem:[#allocation2 + $0x190] sm:$0xff]
      %v1330 = vld [vmem:[#allocation2 + $0x198] sm:$0xff]
      %v1331 = vld [vmem:[#allocation2 + $0x1a0] sm:$0xff]
      %v1332 = vld [vmem:[#allocation2 + $0x1a8] sm:$0xff]
      %v1333 = vld [vmem:[#allocation2 + $0x1b0] sm:$0xff]
      %v1334 = vld [vmem:[#allocation2 + $0x1b8] sm:$0xff]
      %v1335 = vld [vmem:[#allocation2 + $0x1c0] sm:$0xff]
      %v1336 = vld [vmem:[#allocation2 + $0x1c8] sm:$0xff]
      %v1337 = vld [vmem:[#allocation2 + $0x1d0] sm:$0xff]
      %v1338 = vld [vmem:[#allocation2 + $0x1d8] sm:$0xff]
      %v1339 = vld [vmem:[#allocation2 + $0x1e0] sm:$0xff]
      %v1340 = vld [vmem:[#allocation2 + $0x1e8] sm:$0xff]
      %v1341 = vld [vmem:[#allocation2 + $0x1f0] sm:$0xff]
      %v1342 = vld [vmem:[#allocation2 + $0x1f8] sm:$0xff]
      %v1343 = vld [vmem:[%s3] sm:$0xff]
      %v1344 = vld [vmem:[#allocation2 + $0x1] sm:$0xff]
      %v1345 = vld [vmem:[#allocation2 + $0x9] sm:$0xff]
      %v1346 = vld [vmem:[#allocation2 + $0x11] sm:$0xff]
      %v1347 = vld [vmem:[#allocation2 + $0x19] sm:$0xff]
      %v1348 = vld [vmem:[#allocation2 + $0x21] sm:$0xff]
      %v1349 = vld [vmem:[#allocation2 + $0x29] sm:$0xff]
      %v1350 = vld [vmem:[#allocation2 + $0x31] sm:$0xff]
      %v1351 = vld [vmem:[#allocation2 + $0x39] sm:$0xff]
      %v1352 = vld [vmem:[#allocation2 + $0x41] sm:$0xff]
      %v1353 = vld [vmem:[#allocation2 + $0x49] sm:$0xff]
      %v1354 = vld [vmem:[#allocation2 + $0x51] sm:$0xff]
      %v1355 = vld [vmem:[#allocation2 + $0x59] sm:$0xff]
      %v1356 = vld [vmem:[#allocation2 + $0x61] sm:$0xff]
      %v1357 = vld [vmem:[#allocation2 + $0x69] sm:$0xff]
      %v1358 = vld [vmem:[#allocation2 + $0x71] sm:$0xff]
      %v1359 = vld [vmem:[#allocation2 + $0x79] sm:$0xff]
      %v1360 = vld [vmem:[#allocation2 + $0x81] sm:$0xff]
      %v1361 = vld [vmem:[#allocation2 + $0x89] sm:$0xff]
      %v1362 = vld [vmem:[#allocation2 + $0x91] sm:$0xff]
      %v1363 = vld [vmem:[#allocation2 + $0x99] sm:$0xff]
      %v1364 = vld [vmem:[#allocation2 + $0xa1] sm:$0xff]
      %v1365 = vld [vmem:[#allocation2 + $0xa9] sm:$0xff]
      %v1366 = vld [vmem:[#allocation2 + $0xb1] sm:$0xff]
      %v1367 = vld [vmem:[#allocation2 + $0xb9] sm:$0xff]
      %v1368 = vld [vmem:[#allocation2 + $0xc1] sm:$0xff]
      %v1369 = vld [vmem:[#allocation2 + $0xc9] sm:$0xff]
      %v1370 = vld [vmem:[#allocation2 + $0xd1] sm:$0xff]
      %v1371 = vld [vmem:[#allocation2 + $0xd9] sm:$0xff]
      %v1372 = vld [vmem:[#allocation2 + $0xe1] sm:$0xff]
      %v1373 = vld [vmem:[#allocation2 + $0xe9] sm:$0xff]
      %v1374 = vld [vmem:[#allocation2 + $0xf1] sm:$0xff]
      %v1375 = vld [vmem:[#allocation2 + $0xf9] sm:$0xff]
      %v1376 = vld [vmem:[#allocation2 + $0x101] sm:$0xff]
      %v1377 = vld [vmem:[#allocation2 + $0x109] sm:$0xff]
      %v1378 = vld [vmem:[#allocation2 + $0x111] sm:$0xff]
      %v1379 = vld [vmem:[#allocation2 + $0x119] sm:$0xff]
      %v1380 = vld [vmem:[#allocation2 + $0x121] sm:$0xff]
      %v1381 = vld [vmem:[#allocation2 + $0x129] sm:$0xff]
      %v1382 = vld [vmem:[#allocation2 + $0x131] sm:$0xff]
      %v1383 = vld [vmem:[#allocation2 + $0x139] sm:$0xff]
      %v1384 = vld [vmem:[#allocation2 + $0x141] sm:$0xff]
      %v1385 = vld [vmem:[#allocation2 + $0x149] sm:$0xff]
      %v1386 = vld [vmem:[#allocation2 + $0x151] sm:$0xff]
      %v1387 = vld [vmem:[#allocation2 + $0x159] sm:$0xff]
      %v1388 = vld [vmem:[#allocation2 + $0x161] sm:$0xff]
      %v1389 = vld [vmem:[#allocation2 + $0x169] sm:$0xff]
      %v1390 = vld [vmem:[#allocation2 + $0x171] sm:$0xff]
      %v1391 = vld [vmem:[#allocation2 + $0x179] sm:$0xff]
      %v1392 = vld [vmem:[#allocation2 + $0x181] sm:$0xff]
      %v1393 = vld [vmem:[#allocation2 + $0x189] sm:$0xff]
      %v1394 = vld [vmem:[#allocation2 + $0x191] sm:$0xff]
      %v1395 = vld [vmem:[#allocation2 + $0x199] sm:$0xff]
      %v1396 = vld [vmem:[#allocation2 + $0x1a1] sm:$0xff]
      %v1397 = vld [vmem:[#allocation2 + $0x1a9] sm:$0xff]
      %v1398 = vld [vmem:[#allocation2 + $0x1b1] sm:$0xff]
      %v1399 = vld [vmem:[#allocation2 + $0x1b9] sm:$0xff]
      %v1400 = vld [vmem:[#allocation2 + $0x1c1] sm:$0xff]
      %v1401 = vld [vmem:[#allocation2 + $0x1c9] sm:$0xff]
      %v1402 = vld [vmem:[#allocation2 + $0x1d1] sm:$0xff]
      %v1403 = vld [vmem:[#allocation2 + $0x1d9] sm:$0xff]
      %v1404 = vld [vmem:[#allocation2 + $0x1e1] sm:$0xff]
      %v1405 = vld [vmem:[#allocation2 + $0x1e9] sm:$0xff]
      %v1406 = vld [vmem:[#allocation2 + $0x1f1] sm:$0xff]
      %v1407 = vld [vmem:[#allocation2 + $0x1f9] sm:$0xff]
      %s1408 = scalar_lea.vmem %s3, 8
      %v1409 = vld [vmem:[%s1408] sm:$0xff]
      %v1411 = vsel %vm1059, %v1344, 0
      %v1414 = vsel %vm1059, %v1345, 0
      %v1417 = vsel %vm1059, %v1346, 0
      %v1420 = vsel %vm1059, %v1347, 0
      %v1423 = vsel %vm1059, %v1348, 0
      %v1426 = vsel %vm1059, %v1349, 0
      %v1429 = vsel %vm1059, %v1350, 0
      %v1432 = vsel %vm1059, %v1351, 0
      %v1435 = vsel %vm1059, %v1352, 0
      %v1438 = vsel %vm1059, %v1353, 0
      %v1441 = vsel %vm1059, %v1354, 0
      %v1444 = vsel %vm1059, %v1355, 0
      %v1447 = vsel %vm1059, %v1356, 0
      %v1450 = vsel %vm1059, %v1357, 0
      %v1453 = vsel %vm1059, %v1358, 0
      %v1456 = vsel %vm1059, %v1359, 0
      %v1459 = vsel %vm1059, %v1360, 0
      %v1462 = vsel %vm1059, %v1361, 0
      %v1465 = vsel %vm1059, %v1362, 0
      %v1468 = vsel %vm1059, %v1363, 0
      %v1471 = vsel %vm1059, %v1364, 0
      %v1474 = vsel %vm1059, %v1365, 0
      %v1477 = vsel %vm1059, %v1366, 0
      %v1480 = vsel %vm1059, %v1367, 0
      %v1483 = vsel %vm1059, %v1368, 0
      %v1486 = vsel %vm1059, %v1369, 0
      %v1489 = vsel %vm1059, %v1370, 0
      %v1492 = vsel %vm1059, %v1371, 0
      %v1495 = vsel %vm1059, %v1372, 0
      %v1498 = vsel %vm1059, %v1373, 0
      %v1501 = vsel %vm1059, %v1374, 0
      %v1504 = vsel %vm1059, %v1375, 0
      %v1507 = vsel %vm1059, %v1376, 0
      %v1510 = vsel %vm1059, %v1377, 0
      %v1513 = vsel %vm1059, %v1378, 0
      %v1516 = vsel %vm1059, %v1379, 0
      %v1519 = vsel %vm1059, %v1380, 0
      %v1522 = vsel %vm1059, %v1381, 0
      %v1525 = vsel %vm1059, %v1382, 0
      %v1528 = vsel %vm1059, %v1383, 0
      %v1531 = vsel %vm1059, %v1384, 0
      %v1534 = vsel %vm1059, %v1385, 0
      %v1537 = vsel %vm1059, %v1386, 0
      %v1540 = vsel %vm1059, %v1387, 0
      %v1543 = vsel %vm1059, %v1388, 0
      %v1546 = vsel %vm1059, %v1389, 0
      %v1549 = vsel %vm1059, %v1390, 0
      %v1552 = vsel %vm1059, %v1391, 0
      %v1555 = vsel %vm1059, %v1392, 0
      %v1558 = vsel %vm1059, %v1393, 0
      %v1561 = vsel %vm1059, %v1394, 0
      %v1564 = vsel %vm1059, %v1395, 0
      %v1567 = vsel %vm1059, %v1396, 0
      %v1570 = vsel %vm1059, %v1397, 0
      %v1573 = vsel %vm1059, %v1398, 0
      %v1576 = vsel %vm1059, %v1399, 0
      %v1579 = vsel %vm1059, %v1400, 0
      %v1582 = vsel %vm1059, %v1401, 0
      %v1585 = vsel %vm1059, %v1402, 0
      %v1588 = vsel %vm1059, %v1403, 0
      %v1591 = vsel %vm1059, %v1404, 0
      %v1594 = vsel %vm1059, %v1405, 0
      %v1597 = vsel %vm1059, %v1406, 0
      %v1600 = vsel %vm1059, %v1407, 0
      %1602 = vmatprep.subr.mxu0 0.0
      %1603 = vmatpush1.msra.mxu0 %v1409
      %1604 = vmatprep.subr.mxu0 0.0
      %1605 = vmatpush1.msra.mxu0 0.0
      %1606 = vmatprep.subr.mxu0 0.0
      %1607 = vmatpush1.msra.mxu0 0.0
      %1608 = vmatprep.subr.mxu0 0.0
      %1609 = vmatpush1.msra.mxu0 0.0
      %1610 = vmatprep.subr.mxu0 0.0
      %1611 = vmatpush1.msra.mxu0 0.0
      %1612 = vmatprep.subr.mxu0 0.0
      %1613 = vmatpush1.msra.mxu0 0.0
      %1614 = vmatprep.subr.mxu0 0.0
      %1615 = vmatpush1.msra.mxu0 0.0
      %1616 = vmatprep.subr.mxu0 0.0
      %1617 = vmatpush1.msra.mxu0 0.0
      %1618 = vmatprep.subr.mxu0 0.0
      %1619 = vmatpush1.msra.mxu0 0.0
      %1620 = vmatprep.subr.mxu0 0.0
      %1621 = vmatpush1.msra.mxu0 0.0
      %1622 = vmatprep.subr.mxu0 0.0
      %1623 = vmatpush1.msra.mxu0 0.0
      %1624 = vmatprep.subr.mxu0 0.0
      %1625 = vmatpush1.msra.mxu0 0.0
      %1626 = vmatprep.subr.mxu0 0.0
      %1627 = vmatpush1.msra.mxu0 0.0
      %1628 = vmatprep.subr.mxu0 0.0
      %1629 = vmatpush1.msra.mxu0 0.0
      %1630 = vmatprep.subr.mxu0 0.0
      %1631 = vmatpush1.msra.mxu0 0.0
      %1632 = vmatprep.subr.mxu0 0.0
      %1633 = vmatpush1.msra.mxu0 0.0
      %1634 = vmatprep.subr.mxu0 0.0
      %1635 = vmatpush1.msra.mxu0 0.0
      %1636 = vmatprep.subr.mxu0 0.0
      %1637 = vmatpush1.msra.mxu0 0.0
      %1638 = vmatprep.subr.mxu0 0.0
      %1639 = vmatpush1.msra.mxu0 0.0
      %1640 = vmatprep.subr.mxu0 0.0
      %1641 = vmatpush1.msra.mxu0 0.0
      %1642 = vmatprep.subr.mxu0 0.0
      %1643 = vmatpush1.msra.mxu0 0.0
      %1644 = vmatprep.subr.mxu0 0.0
      %1645 = vmatpush1.msra.mxu0 0.0
      %1646 = vmatprep.subr.mxu0 0.0
      %1647 = vmatpush1.msra.mxu0 0.0
      %1648 = vmatprep.subr.mxu0 0.0
      %1649 = vmatpush1.msra.mxu0 0.0
      %1650 = vmatprep.subr.mxu0 0.0
      %1651 = vmatpush1.msra.mxu0 0.0
      %1652 = vmatprep.subr.mxu0 0.0
      %1653 = vmatpush1.msra.mxu0 0.0
      %1654 = vmatprep.subr.mxu0 0.0
      %1655 = vmatpush1.msra.mxu0 0.0
      %1656 = vmatprep.subr.mxu0 0.0
      %1657 = vmatpush1.msra.mxu0 0.0
      %1658 = vmatprep.subr.mxu0 0.0
      %1659 = vmatpush1.msra.mxu0 0.0
      %1660 = vmatprep.subr.mxu0 0.0
      %1661 = vmatpush1.msra.mxu0 0.0
      %1662 = vmatprep.subr.mxu0 0.0
      %1663 = vmatpush1.msra.mxu0 0.0
      %1664 = vmatprep.subr.mxu0 0.0
      %1665 = vmatpush1.msra.mxu0 0.0
      %1666 = vmatprep.mubr.f32.mxu0 0.0
      %1667 = vmatmul.mubr.f32.gmra.mrb[0].mxu0 %v1411
      %v1668 = vpop.f32.mrb[0].mxu0
      %v1669 = vadd.f32 0.0, %v1668
      %v1670 = vpop.f32.mrb[0].mxu0
      %1671 = vmatprep.mubr.f32.mxu0 0.0
      %1672 = vmatmul.mubr.f32.gmra.mrb[0].mxu0 %v1414
      %v1673 = vpop.f32.mrb[0].mxu0
      %v1674 = vadd.f32 0.0, %v1673
      %v1675 = vpop.f32.mrb[0].mxu0
      %1676 = vmatprep.mubr.f32.mxu0 0.0
      %1677 = vmatmul.mubr.f32.gmra.mrb[0].mxu0 %v1417
      %v1678 = vpop.f32.mrb[0].mxu0
      %v1679 = vpop.f32.mrb[0].mxu0
      %1680 = vmatprep.mubr.f32.mxu0 0.0
      %1681 = vmatmul.mubr.f32.gmra.mrb[0].mxu0 %v1420
      %v1682 = vpop.f32.mrb[0].mxu0
      %v1683 = vpop.f32.mrb[0].mxu0
      %1684 = vmatprep.mubr.f32.mxu0 0.0
      %1685 = vmatmul.mubr.f32.gmra.mrb[0].mxu0 %v1423
      %v1686 = vpop.f32.mrb[0].mxu0
      %v1687 = vadd.f32 0.0, %v1686
      %v1688 = vpop.f32.mrb[0].mxu0
      %1689 = vmatprep.mubr.f32.mxu0 0.0
      %1690 = vmatmul.mubr.f32.gmra.mrb[0].mxu0 %v1426
      %v1691 = vpop.f32.mrb[0].mxu0
      %v1692 = vadd.f32 0.0, %v1691
      %v1693 = vpop.f32.mrb[0].mxu0
      %1694 = vmatprep.mubr.f32.mxu0 0.0
      %1695 = vmatmul.mubr.f32.gmra.mrb[0].mxu0 %v1429
      %v1696 = vpop.f32.mrb[0].mxu0
      %v1697 = vpop.f32.mrb[0].mxu0
      %1698 = vmatprep.mubr.f32.mxu0 0.0
      %1699 = vmatmul.mubr.f32.gmra.mrb[0].mxu0 %v1432
      %v1700 = vpop.f32.mrb[0].mxu0
      %v1701 = vpop.f32.mrb[0].mxu0
      %1702 = vmatprep.mubr.f32.mxu0 0.0
      %1703 = vmatmul.mubr.f32.gmra.mrb[0].mxu0 %v1435
      %v1704 = vpop.f32.mrb[0].mxu0
      %v1705 = vadd.f32 0.0, %v1704
      %v1706 = vpop.f32.mrb[0].mxu0
      %1707 = vmatprep.mubr.f32.mxu0 0.0
      %1708 = vmatmul.mubr.f32.gmra.mrb[0].mxu0 %v1438
      %v1709 = vpop.f32.mrb[0].mxu0
      %v1710 = vadd.f32 0.0, %v1709
      %v1711 = vpop.f32.mrb[0].mxu0
      %1712 = vmatprep.mubr.f32.mxu0 0.0
      %1713 = vmatmul.mubr.f32.gmra.mrb[0].mxu0 %v1441
      %v1714 = vpop.f32.mrb[0].mxu0
      %v1715 = vpop.f32.mrb[0].mxu0
      %1716 = vmatprep.mubr.f32.mxu0 0.0
      %1717 = vmatmul.mubr.f32.gmra.mrb[0].mxu0 %v1444
      %v1718 = vpop.f32.mrb[0].mxu0
      %v1719 = vpop.f32.mrb[0].mxu0
      %1720 = vmatprep.mubr.f32.mxu0 0.0
      %1721 = vmatmul.mubr.f32.gmra.mrb[0].mxu0 %v1447
      %v1722 = vpop.f32.mrb[0].mxu0
      %v1723 = vadd.f32 0.0, %v1722
      %v1724 = vpop.f32.mrb[0].mxu0
      %1725 = vmatprep.mubr.f32.mxu0 0.0
      %1726 = vmatmul.mubr.f32.gmra.mrb[0].mxu0 %v1450
      %v1727 = vpop.f32.mrb[0].mxu0
      %v1728 = vadd.f32 0.0, %v1727
      %v1729 = vpop.f32.mrb[0].mxu0
      %1730 = vmatprep.mubr.f32.mxu0 0.0
      %1731 = vmatmul.mubr.f32.gmra.mrb[0].mxu0 %v1453
      %v1732 = vpop.f32.mrb[0].mxu0
      %v1733 = vpop.f32.mrb[0].mxu0
      %1734 = vmatprep.mubr.f32.mxu0 0.0
      %1735 = vmatmul.mubr.f32.gmra.mrb[0].mxu0 %v1456
      %v1736 = vpop.f32.mrb[0].mxu0
      %v1737 = vpop.f32.mrb[0].mxu0
      %1738 = vmatprep.mubr.f32.mxu0 0.0
      %1739 = vmatmul.mubr.f32.gmra.mrb[0].mxu0 %v1459
      %v1740 = vpop.f32.mrb[0].mxu0
      %v1741 = vadd.f32 0.0, %v1740
      %v1742 = vpop.f32.mrb[0].mxu0
      %1743 = vmatprep.mubr.f32.mxu0 0.0
      %1744 = vmatmul.mubr.f32.gmra.mrb[0].mxu0 %v1462
      %v1745 = vpop.f32.mrb[0].mxu0
      %v1746 = vadd.f32 0.0, %v1745
      %v1747 = vpop.f32.mrb[0].mxu0
      %1748 = vmatprep.mubr.f32.mxu0 0.0
      %1749 = vmatmul.mubr.f32.gmra.mrb[0].mxu0 %v1465
      %v1750 = vpop.f32.mrb[0].mxu0
      %v1751 = vpop.f32.mrb[0].mxu0
      %1752 = vmatprep.mubr.f32.mxu0 0.0
      %1753 = vmatmul.mubr.f32.gmra.mrb[0].mxu0 %v1468
      %v1754 = vpop.f32.mrb[0].mxu0
      %v1755 = vpop.f32.mrb[0].mxu0
      %1756 = vmatprep.mubr.f32.mxu0 0.0
      %1757 = vmatmul.mubr.f32.gmra.mrb[0].mxu0 %v1471
      %v1758 = vpop.f32.mrb[0].mxu0
      %v1759 = vadd.f32 0.0, %v1758
      %v1760 = vpop.f32.mrb[0].mxu0
      %1761 = vmatprep.mubr.f32.mxu0 0.0
      %1762 = vmatmul.mubr.f32.gmra.mrb[0].mxu0 %v1474
      %v1763 = vpop.f32.mrb[0].mxu0
      %v1764 = vadd.f32 0.0, %v1763
      %v1765 = vpop.f32.mrb[0].mxu0
      %1766 = vmatprep.mubr.f32.mxu0 0.0
      %1767 = vmatmul.mubr.f32.gmra.mrb[0].mxu0 %v1477
      %v1768 = vpop.f32.mrb[0].mxu0
      %v1769 = vpop.f32.mrb[0].mxu0
      %1770 = vmatprep.mubr.f32.mxu0 0.0
      %1771 = vmatmul.mubr.f32.gmra.mrb[0].mxu0 %v1480
      %v1772 = vpop.f32.mrb[0].mxu0
      %v1773 = vpop.f32.mrb[0].mxu0
      %1774 = vmatprep.mubr.f32.mxu0 0.0
      %1775 = vmatmul.mubr.f32.gmra.mrb[0].mxu0 %v1483
      %v1776 = vpop.f32.mrb[0].mxu0
      %v1777 = vadd.f32 0.0, %v1776
      %v1778 = vpop.f32.mrb[0].mxu0
      %1779 = vmatprep.mubr.f32.mxu0 0.0
      %1780 = vmatmul.mubr.f32.gmra.mrb[0].mxu0 %v1486
      %v1781 = vpop.f32.mrb[0].mxu0
      %v1782 = vadd.f32 0.0, %v1781
      %v1783 = vpop.f32.mrb[0].mxu0
      %1784 = vmatprep.mubr.f32.mxu0 0.0
      %1785 = vmatmul.mubr.f32.gmra.mrb[0].mxu0 %v1489
      %v1786 = vpop.f32.mrb[0].mxu0
      %v1787 = vpop.f32.mrb[0].mxu0
      %1788 = vmatprep.mubr.f32.mxu0 0.0
      %1789 = vmatmul.mubr.f32.gmra.mrb[0].mxu0 %v1492
      %v1790 = vpop.f32.mrb[0].mxu0
      %v1791 = vpop.f32.mrb[0].mxu0
      %1792 = vmatprep.mubr.f32.mxu0 0.0
      %1793 = vmatmul.mubr.f32.gmra.mrb[0].mxu0 %v1495
      %v1794 = vpop.f32.mrb[0].mxu0
      %v1795 = vadd.f32 0.0, %v1794
      %v1796 = vpop.f32.mrb[0].mxu0
      %1797 = vmatprep.mubr.f32.mxu0 0.0
      %1798 = vmatmul.mubr.f32.gmra.mrb[0].mxu0 %v1498
      %v1799 = vpop.f32.mrb[0].mxu0
      %v1800 = vadd.f32 0.0, %v1799
      %v1801 = vpop.f32.mrb[0].mxu0
      %1802 = vmatprep.mubr.f32.mxu0 0.0
      %1803 = vmatmul.mubr.f32.gmra.mrb[0].mxu0 %v1501
      %v1804 = vpop.f32.mrb[0].mxu0
      %v1805 = vpop.f32.mrb[0].mxu0
      %1806 = vmatprep.mubr.f32.mxu0 0.0
      %1807 = vmatmul.mubr.f32.gmra.mrb[0].mxu0 %v1504
      %v1808 = vpop.f32.mrb[0].mxu0
      %v1809 = vpop.f32.mrb[0].mxu0
      %1810 = vmatprep.mubr.f32.mxu0 0.0
      %1811 = vmatmul.mubr.f32.gmra.mrb[0].mxu0 %v1507
      %v1812 = vpop.f32.mrb[0].mxu0
      %v1813 = vadd.f32 0.0, %v1812
      %v1814 = vpop.f32.mrb[0].mxu0
      %1815 = vmatprep.mubr.f32.mxu0 0.0
      %1816 = vmatmul.mubr.f32.gmra.mrb[0].mxu0 %v1510
      %v1817 = vpop.f32.mrb[0].mxu0
      %v1818 = vadd.f32 0.0, %v1817
      %v1819 = vpop.f32.mrb[0].mxu0
      %1820 = vmatprep.mubr.f32.mxu0 0.0
      %1821 = vmatmul.mubr.f32.gmra.mrb[0].mxu0 %v1513
      %v1822 = vpop.f32.mrb[0].mxu0
      %v1823 = vpop.f32.mrb[0].mxu0
      %1824 = vmatprep.mubr.f32.mxu0 0.0
      %1825 = vmatmul.mubr.f32.gmra.mrb[0].mxu0 %v1516
      %v1826 = vpop.f32.mrb[0].mxu0
      %v1827 = vpop.f32.mrb[0].mxu0
      %1828 = vmatprep.mubr.f32.mxu0 0.0
      %1829 = vmatmul.mubr.f32.gmra.mrb[0].mxu0 %v1519
      %v1830 = vpop.f32.mrb[0].mxu0
      %v1831 = vadd.f32 0.0, %v1830
      %v1832 = vpop.f32.mrb[0].mxu0
      %1833 = vmatprep.mubr.f32.mxu0 0.0
      %1834 = vmatmul.mubr.f32.gmra.mrb[0].mxu0 %v1522
      %v1835 = vpop.f32.mrb[0].mxu0
      %v1836 = vadd.f32 0.0, %v1835
      %v1837 = vpop.f32.mrb[0].mxu0
      %1838 = vmatprep.mubr.f32.mxu0 0.0
      %1839 = vmatmul.mubr.f32.gmra.mrb[0].mxu0 %v1525
      %v1840 = vpop.f32.mrb[0].mxu0
      %v1841 = vpop.f32.mrb[0].mxu0
      %1842 = vmatprep.mubr.f32.mxu0 0.0
      %1843 = vmatmul.mubr.f32.gmra.mrb[0].mxu0 %v1528
      %v1844 = vpop.f32.mrb[0].mxu0
      %v1845 = vpop.f32.mrb[0].mxu0
      %1846 = vmatprep.mubr.f32.mxu0 0.0
      %1847 = vmatmul.mubr.f32.gmra.mrb[0].mxu0 %v1531
      %v1848 = vpop.f32.mrb[0].mxu0
      %v1849 = vadd.f32 0.0, %v1848
      %v1850 = vpop.f32.mrb[0].mxu0
      %1851 = vmatprep.mubr.f32.mxu0 0.0
      %1852 = vmatmul.mubr.f32.gmra.mrb[0].mxu0 %v1534
      %v1853 = vpop.f32.mrb[0].mxu0
      %v1854 = vadd.f32 0.0, %v1853
      %v1855 = vpop.f32.mrb[0].mxu0
      %1856 = vmatprep.mubr.f32.mxu0 0.0
      %1857 = vmatmul.mubr.f32.gmra.mrb[0].mxu0 %v1537
      %v1858 = vpop.f32.mrb[0].mxu0
      %v1859 = vpop.f32.mrb[0].mxu0
      %1860 = vmatprep.mubr.f32.mxu0 0.0
      %1861 = vmatmul.mubr.f32.gmra.mrb[0].mxu0 %v1540
      %v1862 = vpop.f32.mrb[0].mxu0
      %v1863 = vpop.f32.mrb[0].mxu0
      %1864 = vmatprep.mubr.f32.mxu0 0.0
      %1865 = vmatmul.mubr.f32.gmra.mrb[0].mxu0 %v1543
      %v1866 = vpop.f32.mrb[0].mxu0
      %v1867 = vadd.f32 0.0, %v1866
      %v1868 = vpop.f32.mrb[0].mxu0
      %1869 = vmatprep.mubr.f32.mxu0 0.0
      %1870 = vmatmul.mubr.f32.gmra.mrb[0].mxu0 %v1546
      %v1871 = vpop.f32.mrb[0].mxu0
      %v1872 = vadd.f32 0.0, %v1871
      %v1873 = vpop.f32.mrb[0].mxu0
      %1874 = vmatprep.mubr.f32.mxu0 0.0
      %1875 = vmatmul.mubr.f32.gmra.mrb[0].mxu0 %v1549
      %v1876 = vpop.f32.mrb[0].mxu0
      %v1877 = vpop.f32.mrb[0].mxu0
      %1878 = vmatprep.mubr.f32.mxu0 0.0
      %1879 = vmatmul.mubr.f32.gmra.mrb[0].mxu0 %v1552
      %v1880 = vpop.f32.mrb[0].mxu0
      %v1881 = vpop.f32.mrb[0].mxu0
      %1882 = vmatprep.mubr.f32.mxu0 0.0
      %1883 = vmatmul.mubr.f32.gmra.mrb[0].mxu0 %v1555
      %v1884 = vpop.f32.mrb[0].mxu0
      %v1885 = vadd.f32 0.0, %v1884
      %v1886 = vpop.f32.mrb[0].mxu0
      %1887 = vmatprep.mubr.f32.mxu0 0.0
      %1888 = vmatmul.mubr.f32.gmra.mrb[0].mxu0 %v1558
      %v1889 = vpop.f32.mrb[0].mxu0
      %v1890 = vadd.f32 0.0, %v1889
      %v1891 = vpop.f32.mrb[0].mxu0
      %1892 = vmatprep.mubr.f32.mxu0 0.0
      %1893 = vmatmul.mubr.f32.gmra.mrb[0].mxu0 %v1561
      %v1894 = vpop.f32.mrb[0].mxu0
      %v1895 = vpop.f32.mrb[0].mxu0
      %1896 = vmatprep.mubr.f32.mxu0 0.0
      %1897 = vmatmul.mubr.f32.gmra.mrb[0].mxu0 %v1564
      %v1898 = vpop.f32.mrb[0].mxu0
      %v1899 = vpop.f32.mrb[0].mxu0
      %1900 = vmatprep.mubr.f32.mxu0 0.0
      %1901 = vmatmul.mubr.f32.gmra.mrb[0].mxu0 %v1567
      %v1902 = vpop.f32.mrb[0].mxu0
      %v1903 = vadd.f32 0.0, %v1902
      %v1904 = vpop.f32.mrb[0].mxu0
      %1905 = vmatprep.mubr.f32.mxu0 0.0
      %1906 = vmatmul.mubr.f32.gmra.mrb[0].mxu0 %v1570
      %v1907 = vpop.f32.mrb[0].mxu0
      %v1908 = vadd.f32 0.0, %v1907
      %v1909 = vpop.f32.mrb[0].mxu0
      %1910 = vmatprep.mubr.f32.mxu0 0.0
      %1911 = vmatmul.mubr.f32.gmra.mrb[0].mxu0 %v1573
      %v1912 = vpop.f32.mrb[0].mxu0
      %v1913 = vpop.f32.mrb[0].mxu0
      %1914 = vmatprep.mubr.f32.mxu0 0.0
      %1915 = vmatmul.mubr.f32.gmra.mrb[0].mxu0 %v1576
      %v1916 = vpop.f32.mrb[0].mxu0
      %v1917 = vpop.f32.mrb[0].mxu0
      %1918 = vmatprep.mubr.f32.mxu0 0.0
      %1919 = vmatmul.mubr.f32.gmra.mrb[0].mxu0 %v1579
      %v1920 = vpop.f32.mrb[0].mxu0
      %v1921 = vadd.f32 0.0, %v1920
      %v1922 = vpop.f32.mrb[0].mxu0
      %1923 = vmatprep.mubr.f32.mxu0 0.0
      %1924 = vmatmul.mubr.f32.gmra.mrb[0].mxu0 %v1582
      %v1925 = vpop.f32.mrb[0].mxu0
      %v1926 = vadd.f32 0.0, %v1925
      %v1927 = vpop.f32.mrb[0].mxu0
      %1928 = vmatprep.mubr.f32.mxu0 0.0
      %1929 = vmatmul.mubr.f32.gmra.mrb[0].mxu0 %v1585
      %v1930 = vpop.f32.mrb[0].mxu0
      %v1931 = vpop.f32.mrb[0].mxu0
      %1932 = vmatprep.mubr.f32.mxu0 0.0
      %1933 = vmatmul.mubr.f32.gmra.mrb[0].mxu0 %v1588
      %v1934 = vpop.f32.mrb[0].mxu0
      %v1935 = vpop.f32.mrb[0].mxu0
      %1936 = vmatprep.mubr.f32.mxu0 0.0
      %1937 = vmatmul.mubr.f32.gmra.mrb[0].mxu0 %v1591
      %v1938 = vpop.f32.mrb[0].mxu0
      %v1939 = vadd.f32 0.0, %v1938
      %v1940 = vpop.f32.mrb[0].mxu0
      %1941 = vmatprep.mubr.f32.mxu0 0.0
      %1942 = vmatmul.mubr.f32.gmra.mrb[0].mxu0 %v1594
      %v1943 = vpop.f32.mrb[0].mxu0
      %v1944 = vadd.f32 0.0, %v1943
      %v1945 = vpop.f32.mrb[0].mxu0
      %1946 = vmatprep.mubr.f32.mxu0 0.0
      %1947 = vmatmul.mubr.f32.gmra.mrb[0].mxu0 %v1597
      %v1948 = vpop.f32.mrb[0].mxu0
      %v1949 = vpop.f32.mrb[0].mxu0
      %1950 = vmatprep.mubr.f32.mxu0 0.0
      %1951 = vmatmul.mubr.f32.gmra.mrb[0].mxu0 %v1600
      %v1952 = vpop.f32.mrb[0].mxu0
      %v1953 = vpop.f32.mrb[0].mxu0
      %1954 = vdwg.mxu0
      %v1956 = vsel %vm1059, %v1279, 0
      %v1959 = vsel %vm1059, %v1280, 0
      %v1962 = vsel %vm1059, %v1281, 0
      %v1965 = vsel %vm1059, %v1282, 0
      %v1968 = vsel %vm1059, %v1283, 0
      %v1971 = vsel %vm1059, %v1284, 0
      %v1974 = vsel %vm1059, %v1285, 0
      %v1977 = vsel %vm1059, %v1286, 0
      %v1980 = vsel %vm1059, %v1287, 0
      %v1983 = vsel %vm1059, %v1288, 0
      %v1986 = vsel %vm1059, %v1289, 0
      %v1989 = vsel %vm1059, %v1290, 0
      %v1992 = vsel %vm1059, %v1291, 0
      %v1995 = vsel %vm1059, %v1292, 0
      %v1998 = vsel %vm1059, %v1293, 0
      %v2001 = vsel %vm1059, %v1294, 0
      %v2004 = vsel %vm1059, %v1295, 0
      %v2007 = vsel %vm1059, %v1296, 0
      %v2010 = vsel %vm1059, %v1297, 0
      %v2013 = vsel %vm1059, %v1298, 0
      %v2016 = vsel %vm1059, %v1299, 0
      %v2019 = vsel %vm1059, %v1300, 0
      %v2022 = vsel %vm1059, %v1301, 0
      %v2025 = vsel %vm1059, %v1302, 0
      %v2028 = vsel %vm1059, %v1303, 0
      %v2031 = vsel %vm1059, %v1304, 0
      %v2034 = vsel %vm1059, %v1305, 0
      %v2037 = vsel %vm1059, %v1306, 0
      %v2040 = vsel %vm1059, %v1307, 0
      %v2043 = vsel %vm1059, %v1308, 0
      %v2046 = vsel %vm1059, %v1309, 0
      %v2049 = vsel %vm1059, %v1310, 0
      %v2052 = vsel %vm1059, %v1311, 0
      %v2055 = vsel %vm1059, %v1312, 0
      %v2058 = vsel %vm1059, %v1313, 0
      %v2061 = vsel %vm1059, %v1314, 0
      %v2064 = vsel %vm1059, %v1315, 0
      %v2067 = vsel %vm1059, %v1316, 0
      %v2070 = vsel %vm1059, %v1317, 0
      %v2073 = vsel %vm1059, %v1318, 0
      %v2076 = vsel %vm1059, %v1319, 0
      %v2079 = vsel %vm1059, %v1320, 0
      %v2082 = vsel %vm1059, %v1321, 0
      %v2085 = vsel %vm1059, %v1322, 0
      %v2088 = vsel %vm1059, %v1323, 0
      %v2091 = vsel %vm1059, %v1324, 0
      %v2094 = vsel %vm1059, %v1325, 0
      %v2097 = vsel %vm1059, %v1326, 0
      %v2100 = vsel %vm1059, %v1327, 0
      %v2103 = vsel %vm1059, %v1328, 0
      %v2106 = vsel %vm1059, %v1329, 0
      %v2109 = vsel %vm1059, %v1330, 0
      %v2112 = vsel %vm1059, %v1331, 0
      %v2115 = vsel %vm1059, %v1332, 0
      %v2118 = vsel %vm1059, %v1333, 0
      %v2121 = vsel %vm1059, %v1334, 0
      %v2124 = vsel %vm1059, %v1335, 0
      %v2127 = vsel %vm1059, %v1336, 0
      %v2130 = vsel %vm1059, %v1337, 0
      %v2133 = vsel %vm1059, %v1338, 0
      %v2136 = vsel %vm1059, %v1339, 0
      %v2139 = vsel %vm1059, %v1340, 0
      %v2142 = vsel %vm1059, %v1341, 0
      %v2145 = vsel %vm1059, %v1342, 0
      %2147 = vmatprep.subr.mxu0 0.0
      %2148 = vmatpush1.msra.mxu0 %v1343
      %2149 = vmatprep.subr.mxu0 0.0
      %2150 = vmatpush1.msra.mxu0 0.0
      %2151 = vmatprep.subr.mxu0 0.0
      %2152 = vmatpush1.msra.mxu0 0.0
      %2153 = vmatprep.subr.mxu0 0.0
      %2154 = vmatpush1.msra.mxu0 0.0
      %2155 = vmatprep.subr.mxu0 0.0
      %2156 = vmatpush1.msra.mxu0 0.0
      %2157 = vmatprep.subr.mxu0 0.0
      %2158 = vmatpush1.msra.mxu0 0.0
      %2159 = vmatprep.subr.mxu0 0.0
      %2160 = vmatpush1.msra.mxu0 0.0
      %2161 = vmatprep.subr.mxu0 0.0
      %2162 = vmatpush1.msra.mxu0 0.0
      %2163 = vmatprep.subr.mxu0 0.0
      %2164 = vmatpush1.msra.mxu0 0.0
      %2165 = vmatprep.subr.mxu0 0.0
      %2166 = vmatpush1.msra.mxu0 0.0
      %2167 = vmatprep.subr.mxu0 0.0
      %2168 = vmatpush1.msra.mxu0 0.0
      %2169 = vmatprep.subr.mxu0 0.0
      %2170 = vmatpush1.msra.mxu0 0.0
      %2171 = vmatprep.subr.mxu0 0.0
      %2172 = vmatpush1.msra.mxu0 0.0
      %2173 = vmatprep.subr.mxu0 0.0
      %2174 = vmatpush1.msra.mxu0 0.0
      %2175 = vmatprep.subr.mxu0 0.0
      %2176 = vmatpush1.msra.mxu0 0.0
      %2177 = vmatprep.subr.mxu0 0.0
      %2178 = vmatpush1.msra.mxu0 0.0
      %2179 = vmatprep.subr.mxu0 0.0
      %2180 = vmatpush1.msra.mxu0 0.0
      %2181 = vmatprep.subr.mxu0 0.0
      %2182 = vmatpush1.msra.mxu0 0.0
      %2183 = vmatprep.subr.mxu0 0.0
      %2184 = vmatpush1.msra.mxu0 0.0
      %2185 = vmatprep.subr.mxu0 0.0
      %2186 = vmatpush1.msra.mxu0 0.0
      %2187 = vmatprep.subr.mxu0 0.0
      %2188 = vmatpush1.msra.mxu0 0.0
      %2189 = vmatprep.subr.mxu0 0.0
      %2190 = vmatpush1.msra.mxu0 0.0
      %2191 = vmatprep.subr.mxu0 0.0
      %2192 = vmatpush1.msra.mxu0 0.0
      %2193 = vmatprep.subr.mxu0 0.0
      %2194 = vmatpush1.msra.mxu0 0.0
      %2195 = vmatprep.subr.mxu0 0.0
      %2196 = vmatpush1.msra.mxu0 0.0
      %2197 = vmatprep.subr.mxu0 0.0
      %2198 = vmatpush1.msra.mxu0 0.0
      %2199 = vmatprep.subr.mxu0 0.0
      %2200 = vmatpush1.msra.mxu0 0.0
      %2201 = vmatprep.subr.mxu0 0.0
      %2202 = vmatpush1.msra.mxu0 0.0
      %2203 = vmatprep.subr.mxu0 0.0
      %2204 = vmatpush1.msra.mxu0 0.0
      %2205 = vmatprep.subr.mxu0 0.0
      %2206 = vmatpush1.msra.mxu0 0.0
      %2207 = vmatprep.subr.mxu0 0.0
      %2208 = vmatpush1.msra.mxu0 0.0
      %2209 = vmatprep.subr.mxu0 0.0
      %2210 = vmatpush1.msra.mxu0 0.0
      %2211 = vmatprep.mubr.f32.mxu0 0.0
      %2212 = vmatmul.mubr.f32.gmra.mrb[0].mxu0 %v1956
      %v2213 = vpop.f32.mrb[0].mxu0
      %v2214 = vadd.f32 %v1669, %v2213
      %v2215 = vpop.f32.mrb[0].mxu0
      %2216 = vmatprep.mubr.f32.mxu0 0.0
      %2217 = vmatmul.mubr.f32.gmra.mrb[0].mxu0 %v1959
      %v2218 = vpop.f32.mrb[0].mxu0
      %v2219 = vadd.f32 %v1674, %v2218
      %v2220 = vpop.f32.mrb[0].mxu0
      %2221 = vmatprep.mubr.f32.mxu0 0.0
      %2222 = vmatmul.mubr.f32.gmra.mrb[0].mxu0 %v1962
      %v2223 = vpop.f32.mrb[0].mxu0
      %v2224 = vpop.f32.mrb[0].mxu0
      %2225 = vmatprep.mubr.f32.mxu0 0.0
      %2226 = vmatmul.mubr.f32.gmra.mrb[0].mxu0 %v1965
      %v2227 = vpop.f32.mrb[0].mxu0
      %v2228 = vpop.f32.mrb[0].mxu0
      %2229 = vmatprep.mubr.f32.mxu0 0.0
      %2230 = vmatmul.mubr.f32.gmra.mrb[0].mxu0 %v1968
      %v2231 = vpop.f32.mrb[0].mxu0
      %v2232 = vadd.f32 %v1687, %v2231
      %v2233 = vpop.f32.mrb[0].mxu0
      %2234 = vmatprep.mubr.f32.mxu0 0.0
      %2235 = vmatmul.mubr.f32.gmra.mrb[0].mxu0 %v1971
      %v2236 = vpop.f32.mrb[0].mxu0
      %v2237 = vadd.f32 %v1692, %v2236
      %v2238 = vpop.f32.mrb[0].mxu0
      %2239 = vmatprep.mubr.f32.mxu0 0.0
      %2240 = vmatmul.mubr.f32.gmra.mrb[0].mxu0 %v1974
      %v2241 = vpop.f32.mrb[0].mxu0
      %v2242 = vpop.f32.mrb[0].mxu0
      %2243 = vmatprep.mubr.f32.mxu0 0.0
      %2244 = vmatmul.mubr.f32.gmra.mrb[0].mxu0 %v1977
      %v2245 = vpop.f32.mrb[0].mxu0
      %v2246 = vpop.f32.mrb[0].mxu0
      %2247 = vmatprep.mubr.f32.mxu0 0.0
      %2248 = vmatmul.mubr.f32.gmra.mrb[0].mxu0 %v1980
      %v2249 = vpop.f32.mrb[0].mxu0
      %v2250 = vadd.f32 %v1705, %v2249
      %v2251 = vpop.f32.mrb[0].mxu0
      %2252 = vmatprep.mubr.f32.mxu0 0.0
      %2253 = vmatmul.mubr.f32.gmra.mrb[0].mxu0 %v1983
      %v2254 = vpop.f32.mrb[0].mxu0
      %v2255 = vadd.f32 %v1710, %v2254
      %v2256 = vpop.f32.mrb[0].mxu0
      %2257 = vmatprep.mubr.f32.mxu0 0.0
      %2258 = vmatmul.mubr.f32.gmra.mrb[0].mxu0 %v1986
      %v2259 = vpop.f32.mrb[0].mxu0
      %v2260 = vpop.f32.mrb[0].mxu0
      %2261 = vmatprep.mubr.f32.mxu0 0.0
      %2262 = vmatmul.mubr.f32.gmra.mrb[0].mxu0 %v1989
      %v2263 = vpop.f32.mrb[0].mxu0
      %v2264 = vpop.f32.mrb[0].mxu0
      %2265 = vmatprep.mubr.f32.mxu0 0.0
      %2266 = vmatmul.mubr.f32.gmra.mrb[0].mxu0 %v1992
      %v2267 = vpop.f32.mrb[0].mxu0
      %v2268 = vadd.f32 %v1723, %v2267
      %v2269 = vpop.f32.mrb[0].mxu0
      %2270 = vmatprep.mubr.f32.mxu0 0.0
      %2271 = vmatmul.mubr.f32.gmra.mrb[0].mxu0 %v1995
      %v2272 = vpop.f32.mrb[0].mxu0
      %v2273 = vadd.f32 %v1728, %v2272
      %v2274 = vpop.f32.mrb[0].mxu0
      %2275 = vmatprep.mubr.f32.mxu0 0.0
      %2276 = vmatmul.mubr.f32.gmra.mrb[0].mxu0 %v1998
      %v2277 = vpop.f32.mrb[0].mxu0
      %v2278 = vpop.f32.mrb[0].mxu0
      %2279 = vmatprep.mubr.f32.mxu0 0.0
      %2280 = vmatmul.mubr.f32.gmra.mrb[0].mxu0 %v2001
      %v2281 = vpop.f32.mrb[0].mxu0
      %v2282 = vpop.f32.mrb[0].mxu0
      %2283 = vmatprep.mubr.f32.mxu0 0.0
      %2284 = vmatmul.mubr.f32.gmra.mrb[0].mxu0 %v2004
      %v2285 = vpop.f32.mrb[0].mxu0
      %v2286 = vadd.f32 %v1741, %v2285
      %v2287 = vpop.f32.mrb[0].mxu0
      %2288 = vmatprep.mubr.f32.mxu0 0.0
      %2289 = vmatmul.mubr.f32.gmra.mrb[0].mxu0 %v2007
      %v2290 = vpop.f32.mrb[0].mxu0
      %v2291 = vadd.f32 %v1746, %v2290
      %v2292 = vpop.f32.mrb[0].mxu0
      %2293 = vmatprep.mubr.f32.mxu0 0.0
      %2294 = vmatmul.mubr.f32.gmra.mrb[0].mxu0 %v2010
      %v2295 = vpop.f32.mrb[0].mxu0
      %v2296 = vpop.f32.mrb[0].mxu0
      %2297 = vmatprep.mubr.f32.mxu0 0.0
      %2298 = vmatmul.mubr.f32.gmra.mrb[0].mxu0 %v2013
      %v2299 = vpop.f32.mrb[0].mxu0
      %v2300 = vpop.f32.mrb[0].mxu0
      %2301 = vmatprep.mubr.f32.mxu0 0.0
      %2302 = vmatmul.mubr.f32.gmra.mrb[0].mxu0 %v2016
      %v2303 = vpop.f32.mrb[0].mxu0
      %v2304 = vadd.f32 %v1759, %v2303
      %v2305 = vpop.f32.mrb[0].mxu0
      %2306 = vmatprep.mubr.f32.mxu0 0.0
      %2307 = vmatmul.mubr.f32.gmra.mrb[0].mxu0 %v2019
      %v2308 = vpop.f32.mrb[0].mxu0
      %v2309 = vadd.f32 %v1764, %v2308
      %v2310 = vpop.f32.mrb[0].mxu0
      %2311 = vmatprep.mubr.f32.mxu0 0.0
      %2312 = vmatmul.mubr.f32.gmra.mrb[0].mxu0 %v2022
      %v2313 = vpop.f32.mrb[0].mxu0
      %v2314 = vpop.f32.mrb[0].mxu0
      %2315 = vmatprep.mubr.f32.mxu0 0.0
      %2316 = vmatmul.mubr.f32.gmra.mrb[0].mxu0 %v2025
      %v2317 = vpop.f32.mrb[0].mxu0
      %v2318 = vpop.f32.mrb[0].mxu0
      %2319 = vmatprep.mubr.f32.mxu0 0.0
      %2320 = vmatmul.mubr.f32.gmra.mrb[0].mxu0 %v2028
      %v2321 = vpop.f32.mrb[0].mxu0
      %v2322 = vadd.f32 %v1777, %v2321
      %v2323 = vpop.f32.mrb[0].mxu0
      %2324 = vmatprep.mubr.f32.mxu0 0.0
      %2325 = vmatmul.mubr.f32.gmra.mrb[0].mxu0 %v2031
      %v2326 = vpop.f32.mrb[0].mxu0
      %v2327 = vadd.f32 %v1782, %v2326
      %v2328 = vpop.f32.mrb[0].mxu0
      %2329 = vmatprep.mubr.f32.mxu0 0.0
      %2330 = vmatmul.mubr.f32.gmra.mrb[0].mxu0 %v2034
      %v2331 = vpop.f32.mrb[0].mxu0
      %v2332 = vpop.f32.mrb[0].mxu0
      %2333 = vmatprep.mubr.f32.mxu0 0.0
      %2334 = vmatmul.mubr.f32.gmra.mrb[0].mxu0 %v2037
      %v2335 = vpop.f32.mrb[0].mxu0
      %v2336 = vpop.f32.mrb[0].mxu0
      %2337 = vmatprep.mubr.f32.mxu0 0.0
      %2338 = vmatmul.mubr.f32.gmra.mrb[0].mxu0 %v2040
      %v2339 = vpop.f32.mrb[0].mxu0
      %v2340 = vadd.f32 %v1795, %v2339
      %v2341 = vpop.f32.mrb[0].mxu0
      %2342 = vmatprep.mubr.f32.mxu0 0.0
      %2343 = vmatmul.mubr.f32.gmra.mrb[0].mxu0 %v2043
      %v2344 = vpop.f32.mrb[0].mxu0
      %v2345 = vadd.f32 %v1800, %v2344
      %v2346 = vpop.f32.mrb[0].mxu0
      %2347 = vmatprep.mubr.f32.mxu0 0.0
      %2348 = vmatmul.mubr.f32.gmra.mrb[0].mxu0 %v2046
      %v2349 = vpop.f32.mrb[0].mxu0
      %v2350 = vpop.f32.mrb[0].mxu0
      %2351 = vmatprep.mubr.f32.mxu0 0.0
      %2352 = vmatmul.mubr.f32.gmra.mrb[0].mxu0 %v2049
      %v2353 = vpop.f32.mrb[0].mxu0
      %v2354 = vpop.f32.mrb[0].mxu0
      %2355 = vmatprep.mubr.f32.mxu0 0.0
      %2356 = vmatmul.mubr.f32.gmra.mrb[0].mxu0 %v2052
      %v2357 = vpop.f32.mrb[0].mxu0
      %v2358 = vadd.f32 %v1813, %v2357
      %v2359 = vpop.f32.mrb[0].mxu0
      %2360 = vmatprep.mubr.f32.mxu0 0.0
      %2361 = vmatmul.mubr.f32.gmra.mrb[0].mxu0 %v2055
      %v2362 = vpop.f32.mrb[0].mxu0
      %v2363 = vadd.f32 %v1818, %v2362
      %v2364 = vpop.f32.mrb[0].mxu0
      %2365 = vmatprep.mubr.f32.mxu0 0.0
      %2366 = vmatmul.mubr.f32.gmra.mrb[0].mxu0 %v2058
      %v2367 = vpop.f32.mrb[0].mxu0
      %v2368 = vpop.f32.mrb[0].mxu0
      %2369 = vmatprep.mubr.f32.mxu0 0.0
      %2370 = vmatmul.mubr.f32.gmra.mrb[0].mxu0 %v2061
      %v2371 = vpop.f32.mrb[0].mxu0
      %v2372 = vpop.f32.mrb[0].mxu0
      %2373 = vmatprep.mubr.f32.mxu0 0.0
      %2374 = vmatmul.mubr.f32.gmra.mrb[0].mxu0 %v2064
      %v2375 = vpop.f32.mrb[0].mxu0
      %v2376 = vadd.f32 %v1831, %v2375
      %v2377 = vpop.f32.mrb[0].mxu0
      %2378 = vmatprep.mubr.f32.mxu0 0.0
      %2379 = vmatmul.mubr.f32.gmra.mrb[0].mxu0 %v2067
      %v2380 = vpop.f32.mrb[0].mxu0
      %v2381 = vadd.f32 %v1836, %v2380
      %v2382 = vpop.f32.mrb[0].mxu0
      %2383 = vmatprep.mubr.f32.mxu0 0.0
      %2384 = vmatmul.mubr.f32.gmra.mrb[0].mxu0 %v2070
      %v2385 = vpop.f32.mrb[0].mxu0
      %v2386 = vpop.f32.mrb[0].mxu0
      %2387 = vmatprep.mubr.f32.mxu0 0.0
      %2388 = vmatmul.mubr.f32.gmra.mrb[0].mxu0 %v2073
      %v2389 = vpop.f32.mrb[0].mxu0
      %v2390 = vpop.f32.mrb[0].mxu0
      %2391 = vmatprep.mubr.f32.mxu0 0.0
      %2392 = vmatmul.mubr.f32.gmra.mrb[0].mxu0 %v2076
      %v2393 = vpop.f32.mrb[0].mxu0
      %v2394 = vadd.f32 %v1849, %v2393
      %v2395 = vpop.f32.mrb[0].mxu0
      %2396 = vmatprep.mubr.f32.mxu0 0.0
      %2397 = vmatmul.mubr.f32.gmra.mrb[0].mxu0 %v2079
      %v2398 = vpop.f32.mrb[0].mxu0
      %v2399 = vadd.f32 %v1854, %v2398
      %v2400 = vpop.f32.mrb[0].mxu0
      %2401 = vmatprep.mubr.f32.mxu0 0.0
      %2402 = vmatmul.mubr.f32.gmra.mrb[0].mxu0 %v2082
      %v2403 = vpop.f32.mrb[0].mxu0
      %v2404 = vpop.f32.mrb[0].mxu0
      %2405 = vmatprep.mubr.f32.mxu0 0.0
      %2406 = vmatmul.mubr.f32.gmra.mrb[0].mxu0 %v2085
      %v2407 = vpop.f32.mrb[0].mxu0
      %v2408 = vpop.f32.mrb[0].mxu0
      %2409 = vmatprep.mubr.f32.mxu0 0.0
      %2410 = vmatmul.mubr.f32.gmra.mrb[0].mxu0 %v2088
      %v2411 = vpop.f32.mrb[0].mxu0
      %v2412 = vadd.f32 %v1867, %v2411
      %v2413 = vpop.f32.mrb[0].mxu0
      %2414 = vmatprep.mubr.f32.mxu0 0.0
      %2415 = vmatmul.mubr.f32.gmra.mrb[0].mxu0 %v2091
      %v2416 = vpop.f32.mrb[0].mxu0
      %v2417 = vadd.f32 %v1872, %v2416
      %v2418 = vpop.f32.mrb[0].mxu0
      %2419 = vmatprep.mubr.f32.mxu0 0.0
      %2420 = vmatmul.mubr.f32.gmra.mrb[0].mxu0 %v2094
      %v2421 = vpop.f32.mrb[0].mxu0
      %v2422 = vpop.f32.mrb[0].mxu0
      %2423 = vmatprep.mubr.f32.mxu0 0.0
      %2424 = vmatmul.mubr.f32.gmra.mrb[0].mxu0 %v2097
      %v2425 = vpop.f32.mrb[0].mxu0
      %v2426 = vpop.f32.mrb[0].mxu0
      %2427 = vmatprep.mubr.f32.mxu0 0.0
      %2428 = vmatmul.mubr.f32.gmra.mrb[0].mxu0 %v2100
      %v2429 = vpop.f32.mrb[0].mxu0
      %v2430 = vadd.f32 %v1885, %v2429
      %v2431 = vpop.f32.mrb[0].mxu0
      %2432 = vmatprep.mubr.f32.mxu0 0.0
      %2433 = vmatmul.mubr.f32.gmra.mrb[0].mxu0 %v2103
      %v2434 = vpop.f32.mrb[0].mxu0
      %v2435 = vadd.f32 %v1890, %v2434
      %v2436 = vpop.f32.mrb[0].mxu0
      %2437 = vmatprep.mubr.f32.mxu0 0.0
      %2438 = vmatmul.mubr.f32.gmra.mrb[0].mxu0 %v2106
      %v2439 = vpop.f32.mrb[0].mxu0
      %v2440 = vpop.f32.mrb[0].mxu0
      %2441 = vmatprep.mubr.f32.mxu0 0.0
      %2442 = vmatmul.mubr.f32.gmra.mrb[0].mxu0 %v2109
      %v2443 = vpop.f32.mrb[0].mxu0
      %v2444 = vpop.f32.mrb[0].mxu0
      %2445 = vmatprep.mubr.f32.mxu0 0.0
      %2446 = vmatmul.mubr.f32.gmra.mrb[0].mxu0 %v2112
      %v2447 = vpop.f32.mrb[0].mxu0
      %v2448 = vadd.f32 %v1903, %v2447
      %v2449 = vpop.f32.mrb[0].mxu0
      %2450 = vmatprep.mubr.f32.mxu0 0.0
      %2451 = vmatmul.mubr.f32.gmra.mrb[0].mxu0 %v2115
      %v2452 = vpop.f32.mrb[0].mxu0
      %v2453 = vadd.f32 %v1908, %v2452
      %v2454 = vpop.f32.mrb[0].mxu0
      %2455 = vmatprep.mubr.f32.mxu0 0.0
      %2456 = vmatmul.mubr.f32.gmra.mrb[0].mxu0 %v2118
      %v2457 = vpop.f32.mrb[0].mxu0
      %v2458 = vpop.f32.mrb[0].mxu0
      %2459 = vmatprep.mubr.f32.mxu0 0.0
      %2460 = vmatmul.mubr.f32.gmra.mrb[0].mxu0 %v2121
      %v2461 = vpop.f32.mrb[0].mxu0
      %v2462 = vpop.f32.mrb[0].mxu0
      %2463 = vmatprep.mubr.f32.mxu0 0.0
      %2464 = vmatmul.mubr.f32.gmra.mrb[0].mxu0 %v2124
      %v2465 = vpop.f32.mrb[0].mxu0
      %v2466 = vadd.f32 %v1921, %v2465
      %v2467 = vpop.f32.mrb[0].mxu0
      %2468 = vmatprep.mubr.f32.mxu0 0.0
      %2469 = vmatmul.mubr.f32.gmra.mrb[0].mxu0 %v2127
      %v2470 = vpop.f32.mrb[0].mxu0
      %v2471 = vadd.f32 %v1926, %v2470
      %v2472 = vpop.f32.mrb[0].mxu0
      %2473 = vmatprep.mubr.f32.mxu0 0.0
      %2474 = vmatmul.mubr.f32.gmra.mrb[0].mxu0 %v2130
      %v2475 = vpop.f32.mrb[0].mxu0
      %v2476 = vpop.f32.mrb[0].mxu0
      %2477 = vmatprep.mubr.f32.mxu0 0.0
      %2478 = vmatmul.mubr.f32.gmra.mrb[0].mxu0 %v2133
      %v2479 = vpop.f32.mrb[0].mxu0
      %v2480 = vpop.f32.mrb[0].mxu0
      %2481 = vmatprep.mubr.f32.mxu0 0.0
      %2482 = vmatmul.mubr.f32.gmra.mrb[0].mxu0 %v2136
      %v2483 = vpop.f32.mrb[0].mxu0
      %v2484 = vadd.f32 %v1939, %v2483
      %v2485 = vpop.f32.mrb[0].mxu0
      %2486 = vmatprep.mubr.f32.mxu0 0.0
      %2487 = vmatmul.mubr.f32.gmra.mrb[0].mxu0 %v2139
      %v2488 = vpop.f32.mrb[0].mxu0
      %v2489 = vadd.f32 %v1944, %v2488
      %v2490 = vpop.f32.mrb[0].mxu0
      %2491 = vmatprep.mubr.f32.mxu0 0.0
      %2492 = vmatmul.mubr.f32.gmra.mrb[0].mxu0 %v2142
      %v2493 = vpop.f32.mrb[0].mxu0
      %v2494 = vpop.f32.mrb[0].mxu0
      %2495 = vmatprep.mubr.f32.mxu0 0.0
      %2496 = vmatmul.mubr.f32.gmra.mrb[0].mxu0 %v2145
      %v2497 = vpop.f32.mrb[0].mxu0
      %v2498 = vpop.f32.mrb[0].mxu0
      %2499 = vdwg.mxu0
      %v2500 = vld [vmem:[#allocation2 + $0x2] sm:$0xff]
      %v2501 = vld [vmem:[#allocation2 + $0xa] sm:$0xff]
      %v2502 = vld [vmem:[#allocation2 + $0x12] sm:$0xff]
      %v2503 = vld [vmem:[#allocation2 + $0x1a] sm:$0xff]
      %v2504 = vld [vmem:[#allocation2 + $0x22] sm:$0xff]
      %v2505 = vld [vmem:[#allocation2 + $0x2a] sm:$0xff]
      %v2506 = vld [vmem:[#allocation2 + $0x32] sm:$0xff]
      %v2507 = vld [vmem:[#allocation2 + $0x3a] sm:$0xff]
      %v2508 = vld [vmem:[#allocation2 + $0x42] sm:$0xff]
      %v2509 = vld [vmem:[#allocation2 + $0x4a] sm:$0xff]
      %v2510 = vld [vmem:[#allocation2 + $0x52] sm:$0xff]
      %v2511 = vld [vmem:[#allocation2 + $0x5a] sm:$0xff]
      %v2512 = vld [vmem:[#allocation2 + $0x62] sm:$0xff]
      %v2513 = vld [vmem:[#allocation2 + $0x6a] sm:$0xff]
      %v2514 = vld [vmem:[#allocation2 + $0x72] sm:$0xff]
      %v2515 = vld [vmem:[#allocation2 + $0x7a] sm:$0xff]
      %v2516 = vld [vmem:[#allocation2 + $0x82] sm:$0xff]
      %v2517 = vld [vmem:[#allocation2 + $0x8a] sm:$0xff]
      %v2518 = vld [vmem:[#allocation2 + $0x92] sm:$0xff]
      %v2519 = vld [vmem:[#allocation2 + $0x9a] sm:$0xff]
      %v2520 = vld [vmem:[#allocation2 + $0xa2] sm:$0xff]
      %v2521 = vld [vmem:[#allocation2 + $0xaa] sm:$0xff]
      %v2522 = vld [vmem:[#allocation2 + $0xb2] sm:$0xff]
      %v2523 = vld [vmem:[#allocation2 + $0xba] sm:$0xff]
      %v2524 = vld [vmem:[#allocation2 + $0xc2] sm:$0xff]
      %v2525 = vld [vmem:[#allocation2 + $0xca] sm:$0xff]
      %v2526 = vld [vmem:[#allocation2 + $0xd2] sm:$0xff]
      %v2527 = vld [vmem:[#allocation2 + $0xda] sm:$0xff]
      %v2528 = vld [vmem:[#allocation2 + $0xe2] sm:$0xff]
      %v2529 = vld [vmem:[#allocation2 + $0xea] sm:$0xff]
      %v2530 = vld [vmem:[#allocation2 + $0xf2] sm:$0xff]
      %v2531 = vld [vmem:[#allocation2 + $0xfa] sm:$0xff]
      %v2532 = vld [vmem:[#allocation2 + $0x102] sm:$0xff]
      %v2533 = vld [vmem:[#allocation2 + $0x10a] sm:$0xff]
      %v2534 = vld [vmem:[#allocation2 + $0x112] sm:$0xff]
      %v2535 = vld [vmem:[#allocation2 + $0x11a] sm:$0xff]
      %v2536 = vld [vmem:[#allocation2 + $0x122] sm:$0xff]
      %v2537 = vld [vmem:[#allocation2 + $0x12a] sm:$0xff]
      %v2538 = vld [vmem:[#allocation2 + $0x132] sm:$0xff]
      %v2539 = vld [vmem:[#allocation2 + $0x13a] sm:$0xff]
      %v2540 = vld [vmem:[#allocation2 + $0x142] sm:$0xff]
      %v2541 = vld [vmem:[#allocation2 + $0x14a] sm:$0xff]
      %v2542 = vld [vmem:[#allocation2 + $0x152] sm:$0xff]
      %v2543 = vld [vmem:[#allocation2 + $0x15a] sm:$0xff]
      %v2544 = vld [vmem:[#allocation2 + $0x162] sm:$0xff]
      %v2545 = vld [vmem:[#allocation2 + $0x16a] sm:$0xff]
      %v2546 = vld [vmem:[#allocation2 + $0x172] sm:$0xff]
      %v2547 = vld [vmem:[#allocation2 + $0x17a] sm:$0xff]
      %v2548 = vld [vmem:[#allocation2 + $0x182] sm:$0xff]
      %v2549 = vld [vmem:[#allocation2 + $0x18a] sm:$0xff]
      %v2550 = vld [vmem:[#allocation2 + $0x192] sm:$0xff]
      %v2551 = vld [vmem:[#allocation2 + $0x19a] sm:$0xff]
      %v2552 = vld [vmem:[#allocation2 + $0x1a2] sm:$0xff]
      %v2553 = vld [vmem:[#allocation2 + $0x1aa] sm:$0xff]
      %v2554 = vld [vmem:[#allocation2 + $0x1b2] sm:$0xff]
      %v2555 = vld [vmem:[#allocation2 + $0x1ba] sm:$0xff]
      %v2556 = vld [vmem:[#allocation2 + $0x1c2] sm:$0xff]
      %v2557 = vld [vmem:[#allocation2 + $0x1ca] sm:$0xff]
      %v2558 = vld [vmem:[#allocation2 + $0x1d2] sm:$0xff]
      %v2559 = vld [vmem:[#allocation2 + $0x1da] sm:$0xff]
      %v2560 = vld [vmem:[#allocation2 + $0x1e2] sm:$0xff]
      %v2561 = vld [vmem:[#allocation2 + $0x1ea] sm:$0xff]
      %v2562 = vld [vmem:[#allocation2 + $0x1f2] sm:$0xff]
      %v2563 = vld [vmem:[#allocation2 + $0x1fa] sm:$0xff]
      %s2564 = scalar_lea.vmem %s3, 16
      %v2565 = vld [vmem:[%s2564] sm:$0xff]
      %v2567 = vsel %vm1059, %v2500, 0
      %v2570 = vsel %vm1059, %v2501, 0
      %v2573 = vsel %vm1059, %v2502, 0
      %v2576 = vsel %vm1059, %v2503, 0
      %v2579 = vsel %vm1059, %v2504, 0
      %v2582 = vsel %vm1059, %v2505, 0
      %v2585 = vsel %vm1059, %v2506, 0
      %v2588 = vsel %vm1059, %v2507, 0
      %v2591 = vsel %vm1059, %v2508, 0
      %v2594 = vsel %vm1059, %v2509, 0
      %v2597 = vsel %vm1059, %v2510, 0
      %v2600 = vsel %vm1059, %v2511, 0
      %v2603 = vsel %vm1059, %v2512, 0
      %v2606 = vsel %vm1059, %v2513, 0
      %v2609 = vsel %vm1059, %v2514, 0
      %v2612 = vsel %vm1059, %v2515, 0
      %v2615 = vsel %vm1059, %v2516, 0
      %v2618 = vsel %vm1059, %v2517, 0
      %v2621 = vsel %vm1059, %v2518, 0
      %v2624 = vsel %vm1059, %v2519, 0
      %v2627 = vsel %vm1059, %v2520, 0
      %v2630 = vsel %vm1059, %v2521, 0
      %v2633 = vsel %vm1059, %v2522, 0
      %v2636 = vsel %vm1059, %v2523, 0
      %v2639 = vsel %vm1059, %v2524, 0
      %v2642 = vsel %vm1059, %v2525, 0
      %v2645 = vsel %vm1059, %v2526, 0
      %v2648 = vsel %vm1059, %v2527, 0
      %v2651 = vsel %vm1059, %v2528, 0
      %v2654 = vsel %vm1059, %v2529, 0
      %v2657 = vsel %vm1059, %v2530, 0
      %v2660 = vsel %vm1059, %v2531, 0
      %v2663 = vsel %vm1059, %v2532, 0
      %v2666 = vsel %vm1059, %v2533, 0
      %v2669 = vsel %vm1059, %v2534, 0
      %v2672 = vsel %vm1059, %v2535, 0
      %v2675 = vsel %vm1059, %v2536, 0
      %v2678 = vsel %vm1059, %v2537, 0
      %v2681 = vsel %vm1059, %v2538, 0
      %v2684 = vsel %vm1059, %v2539, 0
      %v2687 = vsel %vm1059, %v2540, 0
      %v2690 = vsel %vm1059, %v2541, 0
      %v2693 = vsel %vm1059, %v2542, 0
      %v2696 = vsel %vm1059, %v2543, 0
      %v2699 = vsel %vm1059, %v2544, 0
      %v2702 = vsel %vm1059, %v2545, 0
      %v2705 = vsel %vm1059, %v2546, 0
      %v2708 = vsel %vm1059, %v2547, 0
      %v2711 = vsel %vm1059, %v2548, 0
      %v2714 = vsel %vm1059, %v2549, 0
      %v2717 = vsel %vm1059, %v2550, 0
      %v2720 = vsel %vm1059, %v2551, 0
      %v2723 = vsel %vm1059, %v2552, 0
      %v2726 = vsel %vm1059, %v2553, 0
      %v2729 = vsel %vm1059, %v2554, 0
      %v2732 = vsel %vm1059, %v2555, 0
      %v2735 = vsel %vm1059, %v2556, 0
      %v2738 = vsel %vm1059, %v2557, 0
      %v2741 = vsel %vm1059, %v2558, 0
      %v2744 = vsel %vm1059, %v2559, 0
      %v2747 = vsel %vm1059, %v2560, 0
      %v2750 = vsel %vm1059, %v2561, 0
      %v2753 = vsel %vm1059, %v2562, 0
      %v2756 = vsel %vm1059, %v2563, 0
      %2758 = vmatprep.subr.mxu0 0.0
      %2759 = vmatpush1.msra.mxu0 %v2565
      %2760 = vmatprep.subr.mxu0 0.0
      %2761 = vmatpush1.msra.mxu0 0.0
      %2762 = vmatprep.subr.mxu0 0.0
      %2763 = vmatpush1.msra.mxu0 0.0
      %2764 = vmatprep.subr.mxu0 0.0
      %2765 = vmatpush1.msra.mxu0 0.0
      %2766 = vmatprep.subr.mxu0 0.0
      %2767 = vmatpush1.msra.mxu0 0.0
      %2768 = vmatprep.subr.mxu0 0.0
      %2769 = vmatpush1.msra.mxu0 0.0
      %2770 = vmatprep.subr.mxu0 0.0
      %2771 = vmatpush1.msra.mxu0 0.0
      %2772 = vmatprep.subr.mxu0 0.0
      %2773 = vmatpush1.msra.mxu0 0.0
      %2774 = vmatprep.subr.mxu0 0.0
      %2775 = vmatpush1.msra.mxu0 0.0
      %2776 = vmatprep.subr.mxu0 0.0
      %2777 = vmatpush1.msra.mxu0 0.0
      %2778 = vmatprep.subr.mxu0 0.0
      %2779 = vmatpush1.msra.mxu0 0.0
      %2780 = vmatprep.subr.mxu0 0.0
      %2781 = vmatpush1.msra.mxu0 0.0
      %2782 = vmatprep.subr.mxu0 0.0
      %2783 = vmatpush1.msra.mxu0 0.0
      %2784 = vmatprep.subr.mxu0 0.0
      %2785 = vmatpush1.msra.mxu0 0.0
      %2786 = vmatprep.subr.mxu0 0.0
      %2787 = vmatpush1.msra.mxu0 0.0
      %2788 = vmatprep.subr.mxu0 0.0
      %2789 = vmatpush1.msra.mxu0 0.0
      %2790 = vmatprep.subr.mxu0 0.0
      %2791 = vmatpush1.msra.mxu0 0.0
      %2792 = vmatprep.subr.mxu0 0.0
      %2793 = vmatpush1.msra.mxu0 0.0
      %2794 = vmatprep.subr.mxu0 0.0
      %2795 = vmatpush1.msra.mxu0 0.0
      %2796 = vmatprep.subr.mxu0 0.0
      %2797 = vmatpush1.msra.mxu0 0.0
      %2798 = vmatprep.subr.mxu0 0.0
      %2799 = vmatpush1.msra.mxu0 0.0
      %2800 = vmatprep.subr.mxu0 0.0
      %2801 = vmatpush1.msra.mxu0 0.0
      %2802 = vmatprep.subr.mxu0 0.0
      %2803 = vmatpush1.msra.mxu0 0.0
      %2804 = vmatprep.subr.mxu0 0.0
      %2805 = vmatpush1.msra.mxu0 0.0
      %2806 = vmatprep.subr.mxu0 0.0
      %2807 = vmatpush1.msra.mxu0 0.0
      %2808 = vmatprep.subr.mxu0 0.0
      %2809 = vmatpush1.msra.mxu0 0.0
      %2810 = vmatprep.subr.mxu0 0.0
      %2811 = vmatpush1.msra.mxu0 0.0
      %2812 = vmatprep.subr.mxu0 0.0
      %2813 = vmatpush1.msra.mxu0 0.0
      %2814 = vmatprep.subr.mxu0 0.0
      %2815 = vmatpush1.msra.mxu0 0.0
      %2816 = vmatprep.subr.mxu0 0.0
      %2817 = vmatpush1.msra.mxu0 0.0
      %2818 = vmatprep.subr.mxu0 0.0
      %2819 = vmatpush1.msra.mxu0 0.0
      %2820 = vmatprep.subr.mxu0 0.0
      %2821 = vmatpush1.msra.mxu0 0.0
      %2822 = vmatprep.mubr.f32.mxu0 0.0
      %2823 = vmatmul.mubr.f32.gmra.mrb[0].mxu0 %v2567
      %v2824 = vpop.f32.mrb[0].mxu0
      %v2825 = vadd.f32 0.0, %v2824
      %v2826 = vpop.f32.mrb[0].mxu0
      %2827 = vmatprep.mubr.f32.mxu0 0.0
      %2828 = vmatmul.mubr.f32.gmra.mrb[0].mxu0 %v2570
      %v2829 = vpop.f32.mrb[0].mxu0
      %v2830 = vadd.f32 0.0, %v2829
      %v2831 = vpop.f32.mrb[0].mxu0
      %2832 = vmatprep.mubr.f32.mxu0 0.0
      %2833 = vmatmul.mubr.f32.gmra.mrb[0].mxu0 %v2573
      %v2834 = vpop.f32.mrb[0].mxu0
      %v2835 = vpop.f32.mrb[0].mxu0
      %2836 = vmatprep.mubr.f32.mxu0 0.0
      %2837 = vmatmul.mubr.f32.gmra.mrb[0].mxu0 %v2576
      %v2838 = vpop.f32.mrb[0].mxu0
      %v2839 = vpop.f32.mrb[0].mxu0
      %2840 = vmatprep.mubr.f32.mxu0 0.0
      %2841 = vmatmul.mubr.f32.gmra.mrb[0].mxu0 %v2579
      %v2842 = vpop.f32.mrb[0].mxu0
      %v2843 = vadd.f32 0.0, %v2842
      %v2844 = vpop.f32.mrb[0].mxu0
      %2845 = vmatprep.mubr.f32.mxu0 0.0
      %2846 = vmatmul.mubr.f32.gmra.mrb[0].mxu0 %v2582
      %v2847 = vpop.f32.mrb[0].mxu0
      %v2848 = vadd.f32 0.0, %v2847
      %v2849 = vpop.f32.mrb[0].mxu0
      %2850 = vmatprep.mubr.f32.mxu0 0.0
      %2851 = vmatmul.mubr.f32.gmra.mrb[0].mxu0 %v2585
      %v2852 = vpop.f32.mrb[0].mxu0
      %v2853 = vpop.f32.mrb[0].mxu0
      %2854 = vmatprep.mubr.f32.mxu0 0.0
      %2855 = vmatmul.mubr.f32.gmra.mrb[0].mxu0 %v2588
      %v2856 = vpop.f32.mrb[0].mxu0
      %v2857 = vpop.f32.mrb[0].mxu0
      %2858 = vmatprep.mubr.f32.mxu0 0.0
      %2859 = vmatmul.mubr.f32.gmra.mrb[0].mxu0 %v2591
      %v2860 = vpop.f32.mrb[0].mxu0
      %v2861 = vadd.f32 0.0, %v2860
      %v2862 = vpop.f32.mrb[0].mxu0
      %2863 = vmatprep.mubr.f32.mxu0 0.0
      %2864 = vmatmul.mubr.f32.gmra.mrb[0].mxu0 %v2594
      %v2865 = vpop.f32.mrb[0].mxu0
      %v2866 = vadd.f32 0.0, %v2865
      %v2867 = vpop.f32.mrb[0].mxu0
      %2868 = vmatprep.mubr.f32.mxu0 0.0
      %2869 = vmatmul.mubr.f32.gmra.mrb[0].mxu0 %v2597
      %v2870 = vpop.f32.mrb[0].mxu0
      %v2871 = vpop.f32.mrb[0].mxu0
      %2872 = vmatprep.mubr.f32.mxu0 0.0
      %2873 = vmatmul.mubr.f32.gmra.mrb[0].mxu0 %v2600
      %v2874 = vpop.f32.mrb[0].mxu0
      %v2875 = vpop.f32.mrb[0].mxu0
      %2876 = vmatprep.mubr.f32.mxu0 0.0
      %2877 = vmatmul.mubr.f32.gmra.mrb[0].mxu0 %v2603
      %v2878 = vpop.f32.mrb[0].mxu0
      %v2879 = vadd.f32 0.0, %v2878
      %v2880 = vpop.f32.mrb[0].mxu0
      %2881 = vmatprep.mubr.f32.mxu0 0.0
      %2882 = vmatmul.mubr.f32.gmra.mrb[0].mxu0 %v2606
      %v2883 = vpop.f32.mrb[0].mxu0
      %v2884 = vadd.f32 0.0, %v2883
      %v2885 = vpop.f32.mrb[0].mxu0
      %2886 = vmatprep.mubr.f32.mxu0 0.0
      %2887 = vmatmul.mubr.f32.gmra.mrb[0].mxu0 %v2609
      %v2888 = vpop.f32.mrb[0].mxu0
      %v2889 = vpop.f32.mrb[0].mxu0
      %2890 = vmatprep.mubr.f32.mxu0 0.0
      %2891 = vmatmul.mubr.f32.gmra.mrb[0].mxu0 %v2612
      %v2892 = vpop.f32.mrb[0].mxu0
      %v2893 = vpop.f32.mrb[0].mxu0
      %2894 = vmatprep.mubr.f32.mxu0 0.0
      %2895 = vmatmul.mubr.f32.gmra.mrb[0].mxu0 %v2615
      %v2896 = vpop.f32.mrb[0].mxu0
      %v2897 = vadd.f32 0.0, %v2896
      %v2898 = vpop.f32.mrb[0].mxu0
      %2899 = vmatprep.mubr.f32.mxu0 0.0
      %2900 = vmatmul.mubr.f32.gmra.mrb[0].mxu0 %v2618
      %v2901 = vpop.f32.mrb[0].mxu0
      %v2902 = vadd.f32 0.0, %v2901
      %v2903 = vpop.f32.mrb[0].mxu0
      %2904 = vmatprep.mubr.f32.mxu0 0.0
      %2905 = vmatmul.mubr.f32.gmra.mrb[0].mxu0 %v2621
      %v2906 = vpop.f32.mrb[0].mxu0
      %v2907 = vpop.f32.mrb[0].mxu0
      %2908 = vmatprep.mubr.f32.mxu0 0.0
      %2909 = vmatmul.mubr.f32.gmra.mrb[0].mxu0 %v2624
      %v2910 = vpop.f32.mrb[0].mxu0
      %v2911 = vpop.f32.mrb[0].mxu0
      %2912 = vmatprep.mubr.f32.mxu0 0.0
      %2913 = vmatmul.mubr.f32.gmra.mrb[0].mxu0 %v2627
      %v2914 = vpop.f32.mrb[0].mxu0
      %v2915 = vadd.f32 0.0, %v2914
      %v2916 = vpop.f32.mrb[0].mxu0
      %2917 = vmatprep.mubr.f32.mxu0 0.0
      %2918 = vmatmul.mubr.f32.gmra.mrb[0].mxu0 %v2630
      %v2919 = vpop.f32.mrb[0].mxu0
      %v2920 = vadd.f32 0.0, %v2919
      %v2921 = vpop.f32.mrb[0].mxu0
      %2922 = vmatprep.mubr.f32.mxu0 0.0
      %2923 = vmatmul.mubr.f32.gmra.mrb[0].mxu0 %v2633
      %v2924 = vpop.f32.mrb[0].mxu0
      %v2925 = vpop.f32.mrb[0].mxu0
      %2926 = vmatprep.mubr.f32.mxu0 0.0
      %2927 = vmatmul.mubr.f32.gmra.mrb[0].mxu0 %v2636
      %v2928 = vpop.f32.mrb[0].mxu0
      %v2929 = vpop.f32.mrb[0].mxu0
      %2930 = vmatprep.mubr.f32.mxu0 0.0
      %2931 = vmatmul.mubr.f32.gmra.mrb[0].mxu0 %v2639
      %v2932 = vpop.f32.mrb[0].mxu0
      %v2933 = vadd.f32 0.0, %v2932
      %v2934 = vpop.f32.mrb[0].mxu0
      %2935 = vmatprep.mubr.f32.mxu0 0.0
      %2936 = vmatmul.mubr.f32.gmra.mrb[0].mxu0 %v2642
      %v2937 = vpop.f32.mrb[0].mxu0
      %v2938 = vadd.f32 0.0, %v2937
      %v2939 = vpop.f32.mrb[0].mxu0
      %2940 = vmatprep.mubr.f32.mxu0 0.0
      %2941 = vmatmul.mubr.f32.gmra.mrb[0].mxu0 %v2645
      %v2942 = vpop.f32.mrb[0].mxu0
      %v2943 = vpop.f32.mrb[0].mxu0
      %2944 = vmatprep.mubr.f32.mxu0 0.0
      %2945 = vmatmul.mubr.f32.gmra.mrb[0].mxu0 %v2648
      %v2946 = vpop.f32.mrb[0].mxu0
      %v2947 = vpop.f32.mrb[0].mxu0
      %2948 = vmatprep.mubr.f32.mxu0 0.0
      %2949 = vmatmul.mubr.f32.gmra.mrb[0].mxu0 %v2651
      %v2950 = vpop.f32.mrb[0].mxu0
      %v2951 = vadd.f32 0.0, %v2950
      %v2952 = vpop.f32.mrb[0].mxu0
      %2953 = vmatprep.mubr.f32.mxu0 0.0
      %2954 = vmatmul.mubr.f32.gmra.mrb[0].mxu0 %v2654
      %v2955 = vpop.f32.mrb[0].mxu0
      %v2956 = vadd.f32 0.0, %v2955
      %v2957 = vpop.f32.mrb[0].mxu0
      %2958 = vmatprep.mubr.f32.mxu0 0.0
      %2959 = vmatmul.mubr.f32.gmra.mrb[0].mxu0 %v2657
      %v2960 = vpop.f32.mrb[0].mxu0
      %v2961 = vpop.f32.mrb[0].mxu0
      %2962 = vmatprep.mubr.f32.mxu0 0.0
      %2963 = vmatmul.mubr.f32.gmra.mrb[0].mxu0 %v2660
      %v2964 = vpop.f32.mrb[0].mxu0
      %v2965 = vpop.f32.mrb[0].mxu0
      %2966 = vmatprep.mubr.f32.mxu0 0.0
      %2967 = vmatmul.mubr.f32.gmra.mrb[0].mxu0 %v2663
      %v2968 = vpop.f32.mrb[0].mxu0
      %v2969 = vadd.f32 0.0, %v2968
      %v2970 = vpop.f32.mrb[0].mxu0
      %2971 = vmatprep.mubr.f32.mxu0 0.0
      %2972 = vmatmul.mubr.f32.gmra.mrb[0].mxu0 %v2666
      %v2973 = vpop.f32.mrb[0].mxu0
      %v2974 = vadd.f32 0.0, %v2973
      %v2975 = vpop.f32.mrb[0].mxu0
      %2976 = vmatprep.mubr.f32.mxu0 0.0
      %2977 = vmatmul.mubr.f32.gmra.mrb[0].mxu0 %v2669
      %v2978 = vpop.f32.mrb[0].mxu0
      %v2979 = vpop.f32.mrb[0].mxu0
      %2980 = vmatprep.mubr.f32.mxu0 0.0
      %2981 = vmatmul.mubr.f32.gmra.mrb[0].mxu0 %v2672
      %v2982 = vpop.f32.mrb[0].mxu0
      %v2983 = vpop.f32.mrb[0].mxu0
      %2984 = vmatprep.mubr.f32.mxu0 0.0
      %2985 = vmatmul.mubr.f32.gmra.mrb[0].mxu0 %v2675
      %v2986 = vpop.f32.mrb[0].mxu0
      %v2987 = vadd.f32 0.0, %v2986
      %v2988 = vpop.f32.mrb[0].mxu0
      %2989 = vmatprep.mubr.f32.mxu0 0.0
      %2990 = vmatmul.mubr.f32.gmra.mrb[0].mxu0 %v2678
      %v2991 = vpop.f32.mrb[0].mxu0
      %v2992 = vadd.f32 0.0, %v2991
      %v2993 = vpop.f32.mrb[0].mxu0
      %2994 = vmatprep.mubr.f32.mxu0 0.0
      %2995 = vmatmul.mubr.f32.gmra.mrb[0].mxu0 %v2681
      %v2996 = vpop.f32.mrb[0].mxu0
      %v2997 = vpop.f32.mrb[0].mxu0
      %2998 = vmatprep.mubr.f32.mxu0 0.0
      %2999 = vmatmul.mubr.f32.gmra.mrb[0].mxu0 %v2684
      %v3000 = vpop.f32.mrb[0].mxu0
      %v3001 = vpop.f32.mrb[0].mxu0
      %3002 = vmatprep.mubr.f32.mxu0 0.0
      %3003 = vmatmul.mubr.f32.gmra.mrb[0].mxu0 %v2687
      %v3004 = vpop.f32.mrb[0].mxu0
      %v3005 = vadd.f32 0.0, %v3004
      %v3006 = vpop.f32.mrb[0].mxu0
      %3007 = vmatprep.mubr.f32.mxu0 0.0
      %3008 = vmatmul.mubr.f32.gmra.mrb[0].mxu0 %v2690
      %v3009 = vpop.f32.mrb[0].mxu0
      %v3010 = vadd.f32 0.0, %v3009
      %v3011 = vpop.f32.mrb[0].mxu0
      %3012 = vmatprep.mubr.f32.mxu0 0.0
      %3013 = vmatmul.mubr.f32.gmra.mrb[0].mxu0 %v2693
      %v3014 = vpop.f32.mrb[0].mxu0
      %v3015 = vpop.f32.mrb[0].mxu0
      %3016 = vmatprep.mubr.f32.mxu0 0.0
      %3017 = vmatmul.mubr.f32.gmra.mrb[0].mxu0 %v2696
      %v3018 = vpop.f32.mrb[0].mxu0
      %v3019 = vpop.f32.mrb[0].mxu0
      %3020 = vmatprep.mubr.f32.mxu0 0.0
      %3021 = vmatmul.mubr.f32.gmra.mrb[0].mxu0 %v2699
      %v3022 = vpop.f32.mrb[0].mxu0
      %v3023 = vadd.f32 0.0, %v3022
      %v3024 = vpop.f32.mrb[0].mxu0
      %3025 = vmatprep.mubr.f32.mxu0 0.0
      %3026 = vmatmul.mubr.f32.gmra.mrb[0].mxu0 %v2702
      %v3027 = vpop.f32.mrb[0].mxu0
      %v3028 = vadd.f32 0.0, %v3027
      %v3029 = vpop.f32.mrb[0].mxu0
      %3030 = vmatprep.mubr.f32.mxu0 0.0
      %3031 = vmatmul.mubr.f32.gmra.mrb[0].mxu0 %v2705
      %v3032 = vpop.f32.mrb[0].mxu0
      %v3033 = vpop.f32.mrb[0].mxu0
      %3034 = vmatprep.mubr.f32.mxu0 0.0
      %3035 = vmatmul.mubr.f32.gmra.mrb[0].mxu0 %v2708
      %v3036 = vpop.f32.mrb[0].mxu0
      %v3037 = vpop.f32.mrb[0].mxu0
      %3038 = vmatprep.mubr.f32.mxu0 0.0
      %3039 = vmatmul.mubr.f32.gmra.mrb[0].mxu0 %v2711
      %v3040 = vpop.f32.mrb[0].mxu0
      %v3041 = vadd.f32 0.0, %v3040
      %v3042 = vpop.f32.mrb[0].mxu0
      %3043 = vmatprep.mubr.f32.mxu0 0.0
      %3044 = vmatmul.mubr.f32.gmra.mrb[0].mxu0 %v2714
      %v3045 = vpop.f32.mrb[0].mxu0
      %v3046 = vadd.f32 0.0, %v3045
      %v3047 = vpop.f32.mrb[0].mxu0
      %3048 = vmatprep.mubr.f32.mxu0 0.0
      %3049 = vmatmul.mubr.f32.gmra.mrb[0].mxu0 %v2717
      %v3050 = vpop.f32.mrb[0].mxu0
      %v3051 = vpop.f32.mrb[0].mxu0
      %3052 = vmatprep.mubr.f32.mxu0 0.0
      %3053 = vmatmul.mubr.f32.gmra.mrb[0].mxu0 %v2720
      %v3054 = vpop.f32.mrb[0].mxu0
      %v3055 = vpop.f32.mrb[0].mxu0
      %3056 = vmatprep.mubr.f32.mxu0 0.0
      %3057 = vmatmul.mubr.f32.gmra.mrb[0].mxu0 %v2723
      %v3058 = vpop.f32.mrb[0].mxu0
      %v3059 = vadd.f32 0.0, %v3058
      %v3060 = vpop.f32.mrb[0].mxu0
      %3061 = vmatprep.mubr.f32.mxu0 0.0
      %3062 = vmatmul.mubr.f32.gmra.mrb[0].mxu0 %v2726
      %v3063 = vpop.f32.mrb[0].mxu0
      %v3064 = vadd.f32 0.0, %v3063
      %v3065 = vpop.f32.mrb[0].mxu0
      %3066 = vmatprep.mubr.f32.mxu0 0.0
      %3067 = vmatmul.mubr.f32.gmra.mrb[0].mxu0 %v2729
      %v3068 = vpop.f32.mrb[0].mxu0
      %v3069 = vpop.f32.mrb[0].mxu0
      %3070 = vmatprep.mubr.f32.mxu0 0.0
      %3071 = vmatmul.mubr.f32.gmra.mrb[0].mxu0 %v2732
      %v3072 = vpop.f32.mrb[0].mxu0
      %v3073 = vpop.f32.mrb[0].mxu0
      %3074 = vmatprep.mubr.f32.mxu0 0.0
      %3075 = vmatmul.mubr.f32.gmra.mrb[0].mxu0 %v2735
      %v3076 = vpop.f32.mrb[0].mxu0
      %v3077 = vadd.f32 0.0, %v3076
      %v3078 = vpop.f32.mrb[0].mxu0
      %3079 = vmatprep.mubr.f32.mxu0 0.0
      %3080 = vmatmul.mubr.f32.gmra.mrb[0].mxu0 %v2738
      %v3081 = vpop.f32.mrb[0].mxu0
      %v3082 = vadd.f32 0.0, %v3081
      %v3083 = vpop.f32.mrb[0].mxu0
      %3084 = vmatprep.mubr.f32.mxu0 0.0
      %3085 = vmatmul.mubr.f32.gmra.mrb[0].mxu0 %v2741
      %v3086 = vpop.f32.mrb[0].mxu0
      %v3087 = vpop.f32.mrb[0].mxu0
      %3088 = vmatprep.mubr.f32.mxu0 0.0
      %3089 = vmatmul.mubr.f32.gmra.mrb[0].mxu0 %v2744
      %v3090 = vpop.f32.mrb[0].mxu0
      %v3091 = vpop.f32.mrb[0].mxu0
      %3092 = vmatprep.mubr.f32.mxu0 0.0
      %3093 = vmatmul.mubr.f32.gmra.mrb[0].mxu0 %v2747
      %v3094 = vpop.f32.mrb[0].mxu0
      %v3095 = vadd.f32 0.0, %v3094
      %v3096 = vpop.f32.mrb[0].mxu0
      %3097 = vmatprep.mubr.f32.mxu0 0.0
      %3098 = vmatmul.mubr.f32.gmra.mrb[0].mxu0 %v2750
      %v3099 = vpop.f32.mrb[0].mxu0
      %v3100 = vadd.f32 0.0, %v3099
      %v3101 = vpop.f32.mrb[0].mxu0
      %3102 = vmatprep.mubr.f32.mxu0 0.0
      %3103 = vmatmul.mubr.f32.gmra.mrb[0].mxu0 %v2753
      %v3104 = vpop.f32.mrb[0].mxu0
      %v3105 = vpop.f32.mrb[0].mxu0
      %3106 = vmatprep.mubr.f32.mxu0 0.0
      %3107 = vmatmul.mubr.f32.gmra.mrb[0].mxu0 %v2756
      %v3108 = vpop.f32.mrb[0].mxu0
      %v3109 = vpop.f32.mrb[0].mxu0
      %3110 = vdwg.mxu0
      %v3111 = vadd.f32 %v2214, %v2825
      %v3112 = vadd.f32 %v2219, %v2830
      %v3113 = vadd.f32 %v2232, %v2843
      %v3114 = vadd.f32 %v2237, %v2848
      %v3115 = vadd.f32 %v2250, %v2861
      %v3116 = vadd.f32 %v2255, %v2866
      %v3117 = vadd.f32 %v2268, %v2879
      %v3118 = vadd.f32 %v2273, %v2884
      %v3119 = vadd.f32 %v2286, %v2897
      %v3120 = vadd.f32 %v2291, %v2902
      %v3121 = vadd.f32 %v2304, %v2915
      %v3122 = vadd.f32 %v2309, %v2920
      %v3123 = vadd.f32 %v2322, %v2933
      %v3124 = vadd.f32 %v2327, %v2938
      %v3125 = vadd.f32 %v2340, %v2951
      %v3126 = vadd.f32 %v2345, %v2956
      %v3127 = vadd.f32 %v2358, %v2969
      %v3128 = vadd.f32 %v2363, %v2974
      %v3129 = vadd.f32 %v2376, %v2987
      %v3130 = vadd.f32 %v2381, %v2992
      %v3131 = vadd.f32 %v2394, %v3005
      %v3132 = vadd.f32 %v2399, %v3010
      %v3133 = vadd.f32 %v2412, %v3023
      %v3134 = vadd.f32 %v2417, %v3028
      %v3135 = vadd.f32 %v2430, %v3041
      %v3136 = vadd.f32 %v2435, %v3046
      %v3137 = vadd.f32 %v2448, %v3059
      %v3138 = vadd.f32 %v2453, %v3064
      %v3139 = vadd.f32 %v2466, %v3077
      %v3140 = vadd.f32 %v2471, %v3082
      %v3141 = vadd.f32 %v2484, %v3095
      %v3142 = vadd.f32 %v2489, %v3100
      %v3143 = vld [vmem:[#allocation2 + $0x20] sm:$0xff]
      %v3144 = vld [vmem:[#allocation2 + $0x28] sm:$0xff]
      %v3145 = vld [vmem:[#allocation2 + $0x30] sm:$0xff]
      %v3146 = vld [vmem:[#allocation2 + $0x38] sm:$0xff]
      %v3147 = vld [vmem:[#allocation2 + $0x40] sm:$0xff]
      %v3148 = vld [vmem:[#allocation2 + $0x48] sm:$0xff]
      %v3149 = vld [vmem:[#allocation2 + $0x50] sm:$0xff]
      %v3150 = vld [vmem:[#allocation2 + $0x58] sm:$0xff]
      %v3151 = vld [vmem:[#allocation2 + $0x60] sm:$0xff]
      %v3152 = vld [vmem:[#allocation2 + $0x68] sm:$0xff]
      %v3153 = vld [vmem:[#allocation2 + $0x70] sm:$0xff]
      %v3154 = vld [vmem:[#allocation2 + $0x78] sm:$0xff]
      %v3155 = vld [vmem:[#allocation2 + $0x80] sm:$0xff]
      %v3156 = vld [vmem:[#allocation2 + $0x88] sm:$0xff]
      %v3157 = vld [vmem:[#allocation2 + $0x90] sm:$0xff]
      %v3158 = vld [vmem:[#allocation2 + $0x98] sm:$0xff]
      %v3159 = vld [vmem:[#allocation2 + $0xa0] sm:$0xff]
      %v3160 = vld [vmem:[#allocation2 + $0xa8] sm:$0xff]
      %v3161 = vld [vmem:[#allocation2 + $0xb0] sm:$0xff]
      %v3162 = vld [vmem:[#allocation2 + $0xb8] sm:$0xff]
      %v3163 = vld [vmem:[#allocation2 + $0xc0] sm:$0xff]
      %v3164 = vld [vmem:[#allocation2 + $0xc8] sm:$0xff]
      %v3165 = vld [vmem:[#allocation2 + $0xd0] sm:$0xff]
      %v3166 = vld [vmem:[#allocation2 + $0xd8] sm:$0xff]
      %v3167 = vld [vmem:[#allocation2 + $0xe0] sm:$0xff]
      %v3168 = vld [vmem:[#allocation2 + $0xe8] sm:$0xff]
      %v3169 = vld [vmem:[#allocation2 + $0xf0] sm:$0xff]
      %v3170 = vld [vmem:[#allocation2 + $0xf8] sm:$0xff]
      %v3171 = vld [vmem:[#allocation2 + $0x100] sm:$0xff]
      %v3172 = vld [vmem:[#allocation2 + $0x108] sm:$0xff]
      %v3173 = vld [vmem:[#allocation2 + $0x110] sm:$0xff]
      %v3174 = vld [vmem:[#allocation2 + $0x118] sm:$0xff]
      %v3175 = vld [vmem:[#allocation2 + $0x120] sm:$0xff]
      %v3176 = vld [vmem:[#allocation2 + $0x128] sm:$0xff]
      %v3177 = vld [vmem:[#allocation2 + $0x130] sm:$0xff]
      %v3178 = vld [vmem:[#allocation2 + $0x138] sm:$0xff]
      %v3179 = vld [vmem:[#allocation2 + $0x140] sm:$0xff]
      %v3180 = vld [vmem:[#allocation2 + $0x148] sm:$0xff]
      %v3181 = vld [vmem:[#allocation2 + $0x150] sm:$0xff]
      %v3182 = vld [vmem:[#allocation2 + $0x158] sm:$0xff]
      %v3183 = vld [vmem:[#allocation2 + $0x160] sm:$0xff]
      %v3184 = vld [vmem:[#allocation2 + $0x168] sm:$0xff]
      %v3185 = vld [vmem:[#allocation2 + $0x170] sm:$0xff]
      %v3186 = vld [vmem:[#allocation2 + $0x178] sm:$0xff]
      %v3187 = vld [vmem:[#allocation2 + $0x180] sm:$0xff]
      %v3188 = vld [vmem:[#allocation2 + $0x188] sm:$0xff]
      %v3189 = vld [vmem:[#allocation2 + $0x190] sm:$0xff]
      %v3190 = vld [vmem:[#allocation2 + $0x198] sm:$0xff]
      %v3191 = vld [vmem:[#allocation2 + $0x1a0] sm:$0xff]
      %v3192 = vld [vmem:[#allocation2 + $0x1a8] sm:$0xff]
      %v3193 = vld [vmem:[#allocation2 + $0x1b0] sm:$0xff]
      %v3194 = vld [vmem:[#allocation2 + $0x1b8] sm:$0xff]
      %v3195 = vld [vmem:[#allocation2 + $0x1c0] sm:$0xff]
      %v3196 = vld [vmem:[#allocation2 + $0x1c8] sm:$0xff]
      %v3197 = vld [vmem:[#allocation2 + $0x1d0] sm:$0xff]
      %v3198 = vld [vmem:[#allocation2 + $0x1d8] sm:$0xff]
      %v3199 = vld [vmem:[#allocation2 + $0x1e0] sm:$0xff]
      %v3200 = vld [vmem:[#allocation2 + $0x1e8] sm:$0xff]
      %v3201 = vld [vmem:[#allocation2 + $0x1f0] sm:$0xff]
      %v3202 = vld [vmem:[#allocation2 + $0x1f8] sm:$0xff]
      %v3203 = vld [vmem:[#allocation2 + $0x200] sm:$0xff]
      %v3204 = vld [vmem:[#allocation2 + $0x208] sm:$0xff]
      %v3205 = vld [vmem:[#allocation2 + $0x210] sm:$0xff]
      %v3206 = vld [vmem:[#allocation2 + $0x218] sm:$0xff]
      %s3207 = scalar_lea.vmem %s3, 24
      %v3208 = vld [vmem:[%s3207] sm:$0xff]
      %v3210 = vsel %vm1059, %v3143, 0
      %v3213 = vsel %vm1059, %v3144, 0
      %v3216 = vsel %vm1059, %v3145, 0
      %v3219 = vsel %vm1059, %v3146, 0
      %v3222 = vsel %vm1059, %v3147, 0
      %v3225 = vsel %vm1059, %v3148, 0
      %v3228 = vsel %vm1059, %v3149, 0
      %v3231 = vsel %vm1059, %v3150, 0
      %v3234 = vsel %vm1059, %v3151, 0
      %v3237 = vsel %vm1059, %v3152, 0
      %v3240 = vsel %vm1059, %v3153, 0
      %v3243 = vsel %vm1059, %v3154, 0
      %v3246 = vsel %vm1059, %v3155, 0
      %v3249 = vsel %vm1059, %v3156, 0
      %v3252 = vsel %vm1059, %v3157, 0
      %v3255 = vsel %vm1059, %v3158, 0
      %v3258 = vsel %vm1059, %v3159, 0
      %v3261 = vsel %vm1059, %v3160, 0
      %v3264 = vsel %vm1059, %v3161, 0
      %v3267 = vsel %vm1059, %v3162, 0
      %v3270 = vsel %vm1059, %v3163, 0
      %v3273 = vsel %vm1059, %v3164, 0
      %v3276 = vsel %vm1059, %v3165, 0
      %v3279 = vsel %vm1059, %v3166, 0
      %v3282 = vsel %vm1059, %v3167, 0
      %v3285 = vsel %vm1059, %v3168, 0
      %v3288 = vsel %vm1059, %v3169, 0
      %v3291 = vsel %vm1059, %v3170, 0
      %v3294 = vsel %vm1059, %v3171, 0
      %v3297 = vsel %vm1059, %v3172, 0
      %v3300 = vsel %vm1059, %v3173, 0
      %v3303 = vsel %vm1059, %v3174, 0
      %v3306 = vsel %vm1059, %v3175, 0
      %v3309 = vsel %vm1059, %v3176, 0
      %v3312 = vsel %vm1059, %v3177, 0
      %v3315 = vsel %vm1059, %v3178, 0
      %v3318 = vsel %vm1059, %v3179, 0
      %v3321 = vsel %vm1059, %v3180, 0
      %v3324 = vsel %vm1059, %v3181, 0
      %v3327 = vsel %vm1059, %v3182, 0
      %v3330 = vsel %vm1059, %v3183, 0
      %v3333 = vsel %vm1059, %v3184, 0
      %v3336 = vsel %vm1059, %v3185, 0
      %v3339 = vsel %vm1059, %v3186, 0
      %v3342 = vsel %vm1059, %v3187, 0
      %v3345 = vsel %vm1059, %v3188, 0
      %v3348 = vsel %vm1059, %v3189, 0
      %v3351 = vsel %vm1059, %v3190, 0
      %v3354 = vsel %vm1059, %v3191, 0
      %v3357 = vsel %vm1059, %v3192, 0
      %v3360 = vsel %vm1059, %v3193, 0
      %v3363 = vsel %vm1059, %v3194, 0
      %v3366 = vsel %vm1059, %v3195, 0
      %v3369 = vsel %vm1059, %v3196, 0
      %v3372 = vsel %vm1059, %v3197, 0
      %v3375 = vsel %vm1059, %v3198, 0
      %v3378 = vsel %vm1059, %v3199, 0
      %v3381 = vsel %vm1059, %v3200, 0
      %v3384 = vsel %vm1059, %v3201, 0
      %v3387 = vsel %vm1059, %v3202, 0
      %v3390 = vsel %vm1059, %v3203, 0
      %v3393 = vsel %vm1059, %v3204, 0
      %v3396 = vsel %vm1059, %v3205, 0
      %v3399 = vsel %vm1059, %v3206, 0
      %3401 = vmatprep.subr.mxu0 0.0
      %3402 = vmatpush1.msra.mxu0 %v3208
      %3403 = vmatprep.subr.mxu0 0.0
      %3404 = vmatpush1.msra.mxu0 0.0
      %3405 = vmatprep.subr.mxu0 0.0
      %3406 = vmatpush1.msra.mxu0 0.0
      %3407 = vmatprep.subr.mxu0 0.0
      %3408 = vmatpush1.msra.mxu0 0.0
      %3409 = vmatprep.subr.mxu0 0.0
      %3410 = vmatpush1.msra.mxu0 0.0
      %3411 = vmatprep.subr.mxu0 0.0
      %3412 = vmatpush1.msra.mxu0 0.0
      %3413 = vmatprep.subr.mxu0 0.0
      %3414 = vmatpush1.msra.mxu0 0.0
      %3415 = vmatprep.subr.mxu0 0.0
      %3416 = vmatpush1.msra.mxu0 0.0
      %3417 = vmatprep.subr.mxu0 0.0
      %3418 = vmatpush1.msra.mxu0 0.0
      %3419 = vmatprep.subr.mxu0 0.0
      %3420 = vmatpush1.msra.mxu0 0.0
      %3421 = vmatprep.subr.mxu0 0.0
      %3422 = vmatpush1.msra.mxu0 0.0
      %3423 = vmatprep.subr.mxu0 0.0
      %3424 = vmatpush1.msra.mxu0 0.0
      %3425 = vmatprep.subr.mxu0 0.0
      %3426 = vmatpush1.msra.mxu0 0.0
      %3427 = vmatprep.subr.mxu0 0.0
      %3428 = vmatpush1.msra.mxu0 0.0
      %3429 = vmatprep.subr.mxu0 0.0
      %3430 = vmatpush1.msra.mxu0 0.0
      %3431 = vmatprep.subr.mxu0 0.0
      %3432 = vmatpush1.msra.mxu0 0.0
      %3433 = vmatprep.subr.mxu0 0.0
      %3434 = vmatpush1.msra.mxu0 0.0
      %3435 = vmatprep.subr.mxu0 0.0
      %3436 = vmatpush1.msra.mxu0 0.0
      %3437 = vmatprep.subr.mxu0 0.0
      %3438 = vmatpush1.msra.mxu0 0.0
      %3439 = vmatprep.subr.mxu0 0.0
      %3440 = vmatpush1.msra.mxu0 0.0
      %3441 = vmatprep.subr.mxu0 0.0
      %3442 = vmatpush1.msra.mxu0 0.0
      %3443 = vmatprep.subr.mxu0 0.0
      %3444 = vmatpush1.msra.mxu0 0.0
      %3445 = vmatprep.subr.mxu0 0.0
      %3446 = vmatpush1.msra.mxu0 0.0
      %3447 = vmatprep.subr.mxu0 0.0
      %3448 = vmatpush1.msra.mxu0 0.0
      %3449 = vmatprep.subr.mxu0 0.0
      %3450 = vmatpush1.msra.mxu0 0.0
      %3451 = vmatprep.subr.mxu0 0.0
      %3452 = vmatpush1.msra.mxu0 0.0
      %3453 = vmatprep.subr.mxu0 0.0
      %3454 = vmatpush1.msra.mxu0 0.0
      %3455 = vmatprep.subr.mxu0 0.0
      %3456 = vmatpush1.msra.mxu0 0.0
      %3457 = vmatprep.subr.mxu0 0.0
      %3458 = vmatpush1.msra.mxu0 0.0
      %3459 = vmatprep.subr.mxu0 0.0
      %3460 = vmatpush1.msra.mxu0 0.0
      %3461 = vmatprep.subr.mxu0 0.0
      %3462 = vmatpush1.msra.mxu0 0.0
      %3463 = vmatprep.subr.mxu0 0.0
      %3464 = vmatpush1.msra.mxu0 0.0
      %3465 = vmatprep.mubr.f32.mxu0 0.0
      %3466 = vmatmul.mubr.f32.gmra.mrb[0].mxu0 %v3210
      %v3467 = vpop.f32.mrb[0].mxu0
      %v3468 = vadd.f32 0.0, %v3467
      %v3469 = vpop.f32.mrb[0].mxu0
      %3470 = vmatprep.mubr.f32.mxu0 0.0
      %3471 = vmatmul.mubr.f32.gmra.mrb[0].mxu0 %v3213
      %v3472 = vpop.f32.mrb[0].mxu0
      %v3473 = vadd.f32 0.0, %v3472
      %v3474 = vpop.f32.mrb[0].mxu0
      %3475 = vmatprep.mubr.f32.mxu0 0.0
      %3476 = vmatmul.mubr.f32.gmra.mrb[0].mxu0 %v3216
      %v3477 = vpop.f32.mrb[0].mxu0
      %v3478 = vpop.f32.mrb[0].mxu0
      %3479 = vmatprep.mubr.f32.mxu0 0.0
      %3480 = vmatmul.mubr.f32.gmra.mrb[0].mxu0 %v3219
      %v3481 = vpop.f32.mrb[0].mxu0
      %v3482 = vpop.f32.mrb[0].mxu0
      %3483 = vmatprep.mubr.f32.mxu0 0.0
      %3484 = vmatmul.mubr.f32.gmra.mrb[0].mxu0 %v3222
      %v3485 = vpop.f32.mrb[0].mxu0
      %v3486 = vadd.f32 0.0, %v3485
      %v3487 = vpop.f32.mrb[0].mxu0
      %3488 = vmatprep.mubr.f32.mxu0 0.0
      %3489 = vmatmul.mubr.f32.gmra.mrb[0].mxu0 %v3225
      %v3490 = vpop.f32.mrb[0].mxu0
      %v3491 = vadd.f32 0.0, %v3490
      %v3492 = vpop.f32.mrb[0].mxu0
      %3493 = vmatprep.mubr.f32.mxu0 0.0
      %3494 = vmatmul.mubr.f32.gmra.mrb[0].mxu0 %v3228
      %v3495 = vpop.f32.mrb[0].mxu0
      %v3496 = vpop.f32.mrb[0].mxu0
      %3497 = vmatprep.mubr.f32.mxu0 0.0
      %3498 = vmatmul.mubr.f32.gmra.mrb[0].mxu0 %v3231
      %v3499 = vpop.f32.mrb[0].mxu0
      %v3500 = vpop.f32.mrb[0].mxu0
      %3501 = vmatprep.mubr.f32.mxu0 0.0
      %3502 = vmatmul.mubr.f32.gmra.mrb[0].mxu0 %v3234
      %v3503 = vpop.f32.mrb[0].mxu0
      %v3504 = vadd.f32 0.0, %v3503
      %v3505 = vpop.f32.mrb[0].mxu0
      %3506 = vmatprep.mubr.f32.mxu0 0.0
      %3507 = vmatmul.mubr.f32.gmra.mrb[0].mxu0 %v3237
      %v3508 = vpop.f32.mrb[0].mxu0
      %v3509 = vadd.f32 0.0, %v3508
      %v3510 = vpop.f32.mrb[0].mxu0
      %3511 = vmatprep.mubr.f32.mxu0 0.0
      %3512 = vmatmul.mubr.f32.gmra.mrb[0].mxu0 %v3240
      %v3513 = vpop.f32.mrb[0].mxu0
      %v3514 = vpop.f32.mrb[0].mxu0
      %3515 = vmatprep.mubr.f32.mxu0 0.0
      %3516 = vmatmul.mubr.f32.gmra.mrb[0].mxu0 %v3243
      %v3517 = vpop.f32.mrb[0].mxu0
      %v3518 = vpop.f32.mrb[0].mxu0
      %3519 = vmatprep.mubr.f32.mxu0 0.0
      %3520 = vmatmul.mubr.f32.gmra.mrb[0].mxu0 %v3246
      %v3521 = vpop.f32.mrb[0].mxu0
      %v3522 = vadd.f32 0.0, %v3521
      %v3523 = vpop.f32.mrb[0].mxu0
      %3524 = vmatprep.mubr.f32.mxu0 0.0
      %3525 = vmatmul.mubr.f32.gmra.mrb[0].mxu0 %v3249
      %v3526 = vpop.f32.mrb[0].mxu0
      %v3527 = vadd.f32 0.0, %v3526
      %v3528 = vpop.f32.mrb[0].mxu0
      %3529 = vmatprep.mubr.f32.mxu0 0.0
      %3530 = vmatmul.mubr.f32.gmra.mrb[0].mxu0 %v3252
      %v3531 = vpop.f32.mrb[0].mxu0
      %v3532 = vpop.f32.mrb[0].mxu0
      %3533 = vmatprep.mubr.f32.mxu0 0.0
      %3534 = vmatmul.mubr.f32.gmra.mrb[0].mxu0 %v3255
      %v3535 = vpop.f32.mrb[0].mxu0
      %v3536 = vpop.f32.mrb[0].mxu0
      %3537 = vmatprep.mubr.f32.mxu0 0.0
      %3538 = vmatmul.mubr.f32.gmra.mrb[0].mxu0 %v3258
      %v3539 = vpop.f32.mrb[0].mxu0
      %v3540 = vadd.f32 0.0, %v3539
      %v3541 = vpop.f32.mrb[0].mxu0
      %3542 = vmatprep.mubr.f32.mxu0 0.0
      %3543 = vmatmul.mubr.f32.gmra.mrb[0].mxu0 %v3261
      %v3544 = vpop.f32.mrb[0].mxu0
      %v3545 = vadd.f32 0.0, %v3544
      %v3546 = vpop.f32.mrb[0].mxu0
      %3547 = vmatprep.mubr.f32.mxu0 0.0
      %3548 = vmatmul.mubr.f32.gmra.mrb[0].mxu0 %v3264
      %v3549 = vpop.f32.mrb[0].mxu0
      %v3550 = vpop.f32.mrb[0].mxu0
      %3551 = vmatprep.mubr.f32.mxu0 0.0
      %3552 = vmatmul.mubr.f32.gmra.mrb[0].mxu0 %v3267
      %v3553 = vpop.f32.mrb[0].mxu0
      %v3554 = vpop.f32.mrb[0].mxu0
      %3555 = vmatprep.mubr.f32.mxu0 0.0
      %3556 = vmatmul.mubr.f32.gmra.mrb[0].mxu0 %v3270
      %v3557 = vpop.f32.mrb[0].mxu0
      %v3558 = vadd.f32 0.0, %v3557
      %v3559 = vpop.f32.mrb[0].mxu0
      %3560 = vmatprep.mubr.f32.mxu0 0.0
      %3561 = vmatmul.mubr.f32.gmra.mrb[0].mxu0 %v3273
      %v3562 = vpop.f32.mrb[0].mxu0
      %v3563 = vadd.f32 0.0, %v3562
      %v3564 = vpop.f32.mrb[0].mxu0
      %3565 = vmatprep.mubr.f32.mxu0 0.0
      %3566 = vmatmul.mubr.f32.gmra.mrb[0].mxu0 %v3276
      %v3567 = vpop.f32.mrb[0].mxu0
      %v3568 = vpop.f32.mrb[0].mxu0
      %3569 = vmatprep.mubr.f32.mxu0 0.0
      %3570 = vmatmul.mubr.f32.gmra.mrb[0].mxu0 %v3279
      %v3571 = vpop.f32.mrb[0].mxu0
      %v3572 = vpop.f32.mrb[0].mxu0
      %3573 = vmatprep.mubr.f32.mxu0 0.0
      %3574 = vmatmul.mubr.f32.gmra.mrb[0].mxu0 %v3282
      %v3575 = vpop.f32.mrb[0].mxu0
      %v3576 = vadd.f32 0.0, %v3575
      %v3577 = vpop.f32.mrb[0].mxu0
      %3578 = vmatprep.mubr.f32.mxu0 0.0
      %3579 = vmatmul.mubr.f32.gmra.mrb[0].mxu0 %v3285
      %v3580 = vpop.f32.mrb[0].mxu0
      %v3581 = vadd.f32 0.0, %v3580
      %v3582 = vpop.f32.mrb[0].mxu0
      %3583 = vmatprep.mubr.f32.mxu0 0.0
      %3584 = vmatmul.mubr.f32.gmra.mrb[0].mxu0 %v3288
      %v3585 = vpop.f32.mrb[0].mxu0
      %v3586 = vpop.f32.mrb[0].mxu0
      %3587 = vmatprep.mubr.f32.mxu0 0.0
      %3588 = vmatmul.mubr.f32.gmra.mrb[0].mxu0 %v3291
      %v3589 = vpop.f32.mrb[0].mxu0
      %v3590 = vpop.f32.mrb[0].mxu0
      %3591 = vmatprep.mubr.f32.mxu0 0.0
      %3592 = vmatmul.mubr.f32.gmra.mrb[0].mxu0 %v3294
      %v3593 = vpop.f32.mrb[0].mxu0
      %v3594 = vadd.f32 0.0, %v3593
      %v3595 = vpop.f32.mrb[0].mxu0
      %3596 = vmatprep.mubr.f32.mxu0 0.0
      %3597 = vmatmul.mubr.f32.gmra.mrb[0].mxu0 %v3297
      %v3598 = vpop.f32.mrb[0].mxu0
      %v3599 = vadd.f32 0.0, %v3598
      %v3600 = vpop.f32.mrb[0].mxu0
      %3601 = vmatprep.mubr.f32.mxu0 0.0
      %3602 = vmatmul.mubr.f32.gmra.mrb[0].mxu0 %v3300
      %v3603 = vpop.f32.mrb[0].mxu0
      %v3604 = vpop.f32.mrb[0].mxu0
      %3605 = vmatprep.mubr.f32.mxu0 0.0
      %3606 = vmatmul.mubr.f32.gmra.mrb[0].mxu0 %v3303
      %v3607 = vpop.f32.mrb[0].mxu0
      %v3608 = vpop.f32.mrb[0].mxu0
      %3609 = vmatprep.mubr.f32.mxu0 0.0
      %3610 = vmatmul.mubr.f32.gmra.mrb[0].mxu0 %v3306
      %v3611 = vpop.f32.mrb[0].mxu0
      %v3612 = vadd.f32 0.0, %v3611
      %v3613 = vpop.f32.mrb[0].mxu0
      %3614 = vmatprep.mubr.f32.mxu0 0.0
      %3615 = vmatmul.mubr.f32.gmra.mrb[0].mxu0 %v3309
      %v3616 = vpop.f32.mrb[0].mxu0
      %v3617 = vadd.f32 0.0, %v3616
      %v3618 = vpop.f32.mrb[0].mxu0
      %3619 = vmatprep.mubr.f32.mxu0 0.0
      %3620 = vmatmul.mubr.f32.gmra.mrb[0].mxu0 %v3312
      %v3621 = vpop.f32.mrb[0].mxu0
      %v3622 = vpop.f32.mrb[0].mxu0
      %3623 = vmatprep.mubr.f32.mxu0 0.0
      %3624 = vmatmul.mubr.f32.gmra.mrb[0].mxu0 %v3315
      %v3625 = vpop.f32.mrb[0].mxu0
      %v3626 = vpop.f32.mrb[0].mxu0
      %3627 = vmatprep.mubr.f32.mxu0 0.0
      %3628 = vmatmul.mubr.f32.gmra.mrb[0].mxu0 %v3318
      %v3629 = vpop.f32.mrb[0].mxu0
      %v3630 = vadd.f32 0.0, %v3629
      %v3631 = vpop.f32.mrb[0].mxu0
      %3632 = vmatprep.mubr.f32.mxu0 0.0
      %3633 = vmatmul.mubr.f32.gmra.mrb[0].mxu0 %v3321
      %v3634 = vpop.f32.mrb[0].mxu0
      %v3635 = vadd.f32 0.0, %v3634
      %v3636 = vpop.f32.mrb[0].mxu0
      %3637 = vmatprep.mubr.f32.mxu0 0.0
      %3638 = vmatmul.mubr.f32.gmra.mrb[0].mxu0 %v3324
      %v3639 = vpop.f32.mrb[0].mxu0
      %v3640 = vpop.f32.mrb[0].mxu0
      %3641 = vmatprep.mubr.f32.mxu0 0.0
      %3642 = vmatmul.mubr.f32.gmra.mrb[0].mxu0 %v3327
      %v3643 = vpop.f32.mrb[0].mxu0
      %v3644 = vpop.f32.mrb[0].mxu0
      %3645 = vmatprep.mubr.f32.mxu0 0.0
      %3646 = vmatmul.mubr.f32.gmra.mrb[0].mxu0 %v3330
      %v3647 = vpop.f32.mrb[0].mxu0
      %v3648 = vadd.f32 0.0, %v3647
      %v3649 = vpop.f32.mrb[0].mxu0
      %3650 = vmatprep.mubr.f32.mxu0 0.0
      %3651 = vmatmul.mubr.f32.gmra.mrb[0].mxu0 %v3333
      %v3652 = vpop.f32.mrb[0].mxu0
      %v3653 = vadd.f32 0.0, %v3652
      %v3654 = vpop.f32.mrb[0].mxu0
      %3655 = vmatprep.mubr.f32.mxu0 0.0
      %3656 = vmatmul.mubr.f32.gmra.mrb[0].mxu0 %v3336
      %v3657 = vpop.f32.mrb[0].mxu0
      %v3658 = vpop.f32.mrb[0].mxu0
      %3659 = vmatprep.mubr.f32.mxu0 0.0
      %3660 = vmatmul.mubr.f32.gmra.mrb[0].mxu0 %v3339
      %v3661 = vpop.f32.mrb[0].mxu0
      %v3662 = vpop.f32.mrb[0].mxu0
      %3663 = vmatprep.mubr.f32.mxu0 0.0
      %3664 = vmatmul.mubr.f32.gmra.mrb[0].mxu0 %v3342
      %v3665 = vpop.f32.mrb[0].mxu0
      %v3666 = vadd.f32 0.0, %v3665
      %v3667 = vpop.f32.mrb[0].mxu0
      %3668 = vmatprep.mubr.f32.mxu0 0.0
      %3669 = vmatmul.mubr.f32.gmra.mrb[0].mxu0 %v3345
      %v3670 = vpop.f32.mrb[0].mxu0
      %v3671 = vadd.f32 0.0, %v3670
      %v3672 = vpop.f32.mrb[0].mxu0
      %3673 = vmatprep.mubr.f32.mxu0 0.0
      %3674 = vmatmul.mubr.f32.gmra.mrb[0].mxu0 %v3348
      %v3675 = vpop.f32.mrb[0].mxu0
      %v3676 = vpop.f32.mrb[0].mxu0
      %3677 = vmatprep.mubr.f32.mxu0 0.0
      %3678 = vmatmul.mubr.f32.gmra.mrb[0].mxu0 %v3351
      %v3679 = vpop.f32.mrb[0].mxu0
      %v3680 = vpop.f32.mrb[0].mxu0
      %3681 = vmatprep.mubr.f32.mxu0 0.0
      %3682 = vmatmul.mubr.f32.gmra.mrb[0].mxu0 %v3354
      %v3683 = vpop.f32.mrb[0].mxu0
      %v3684 = vadd.f32 0.0, %v3683
      %v3685 = vpop.f32.mrb[0].mxu0
      %3686 = vmatprep.mubr.f32.mxu0 0.0
      %3687 = vmatmul.mubr.f32.gmra.mrb[0].mxu0 %v3357
      %v3688 = vpop.f32.mrb[0].mxu0
      %v3689 = vadd.f32 0.0, %v3688
      %v3690 = vpop.f32.mrb[0].mxu0
      %3691 = vmatprep.mubr.f32.mxu0 0.0
      %3692 = vmatmul.mubr.f32.gmra.mrb[0].mxu0 %v3360
      %v3693 = vpop.f32.mrb[0].mxu0
      %v3694 = vpop.f32.mrb[0].mxu0
      %3695 = vmatprep.mubr.f32.mxu0 0.0
      %3696 = vmatmul.mubr.f32.gmra.mrb[0].mxu0 %v3363
      %v3697 = vpop.f32.mrb[0].mxu0
      %v3698 = vpop.f32.mrb[0].mxu0
      %3699 = vmatprep.mubr.f32.mxu0 0.0
      %3700 = vmatmul.mubr.f32.gmra.mrb[0].mxu0 %v3366
      %v3701 = vpop.f32.mrb[0].mxu0
      %v3702 = vadd.f32 0.0, %v3701
      %v3703 = vpop.f32.mrb[0].mxu0
      %3704 = vmatprep.mubr.f32.mxu0 0.0
      %3705 = vmatmul.mubr.f32.gmra.mrb[0].mxu0 %v3369
      %v3706 = vpop.f32.mrb[0].mxu0
      %v3707 = vadd.f32 0.0, %v3706
      %v3708 = vpop.f32.mrb[0].mxu0
      %3709 = vmatprep.mubr.f32.mxu0 0.0
      %3710 = vmatmul.mubr.f32.gmra.mrb[0].mxu0 %v3372
      %v3711 = vpop.f32.mrb[0].mxu0
      %v3712 = vpop.f32.mrb[0].mxu0
      %3713 = vmatprep.mubr.f32.mxu0 0.0
      %3714 = vmatmul.mubr.f32.gmra.mrb[0].mxu0 %v3375
      %v3715 = vpop.f32.mrb[0].mxu0
      %v3716 = vpop.f32.mrb[0].mxu0
      %3717 = vmatprep.mubr.f32.mxu0 0.0
      %3718 = vmatmul.mubr.f32.gmra.mrb[0].mxu0 %v3378
      %v3719 = vpop.f32.mrb[0].mxu0
      %v3720 = vadd.f32 0.0, %v3719
      %v3721 = vpop.f32.mrb[0].mxu0
      %3722 = vmatprep.mubr.f32.mxu0 0.0
      %3723 = vmatmul.mubr.f32.gmra.mrb[0].mxu0 %v3381
      %v3724 = vpop.f32.mrb[0].mxu0
      %v3725 = vadd.f32 0.0, %v3724
      %v3726 = vpop.f32.mrb[0].mxu0
      %3727 = vmatprep.mubr.f32.mxu0 0.0
      %3728 = vmatmul.mubr.f32.gmra.mrb[0].mxu0 %v3384
      %v3729 = vpop.f32.mrb[0].mxu0
      %v3730 = vpop.f32.mrb[0].mxu0
      %3731 = vmatprep.mubr.f32.mxu0 0.0
      %3732 = vmatmul.mubr.f32.gmra.mrb[0].mxu0 %v3387
      %v3733 = vpop.f32.mrb[0].mxu0
      %v3734 = vpop.f32.mrb[0].mxu0
      %3735 = vmatprep.mubr.f32.mxu0 0.0
      %3736 = vmatmul.mubr.f32.gmra.mrb[0].mxu0 %v3390
      %v3737 = vpop.f32.mrb[0].mxu0
      %v3738 = vadd.f32 0.0, %v3737
      %v3739 = vpop.f32.mrb[0].mxu0
      %3740 = vmatprep.mubr.f32.mxu0 0.0
      %3741 = vmatmul.mubr.f32.gmra.mrb[0].mxu0 %v3393
      %v3742 = vpop.f32.mrb[0].mxu0
      %v3743 = vadd.f32 0.0, %v3742
      %v3744 = vpop.f32.mrb[0].mxu0
      %3745 = vmatprep.mubr.f32.mxu0 0.0
      %3746 = vmatmul.mubr.f32.gmra.mrb[0].mxu0 %v3396
      %v3747 = vpop.f32.mrb[0].mxu0
      %v3748 = vpop.f32.mrb[0].mxu0
      %3749 = vmatprep.mubr.f32.mxu0 0.0
      %3750 = vmatmul.mubr.f32.gmra.mrb[0].mxu0 %v3399
      %v3751 = vpop.f32.mrb[0].mxu0
      %v3752 = vpop.f32.mrb[0].mxu0
      %3753 = vdwg.mxu0
      %v3754 = vadd.f32 %v3111, %v3468
      %v3755 = vadd.f32 %v3112, %v3473
      %v3756 = vadd.f32 %v3113, %v3486
      %v3757 = vadd.f32 %v3114, %v3491
      %v3758 = vadd.f32 %v3115, %v3504
      %v3759 = vadd.f32 %v3116, %v3509
      %v3760 = vadd.f32 %v3117, %v3522
      %v3761 = vadd.f32 %v3118, %v3527
      %v3762 = vadd.f32 %v3119, %v3540
      %v3763 = vadd.f32 %v3120, %v3545
      %v3764 = vadd.f32 %v3121, %v3558
      %v3765 = vadd.f32 %v3122, %v3563
      %v3766 = vadd.f32 %v3123, %v3576
      %v3767 = vadd.f32 %v3124, %v3581
      %v3768 = vadd.f32 %v3125, %v3594
      %v3769 = vadd.f32 %v3126, %v3599
      %v3770 = vadd.f32 %v3127, %v3612
      %v3771 = vadd.f32 %v3128, %v3617
      %v3772 = vadd.f32 %v3129, %v3630
      %v3773 = vadd.f32 %v3130, %v3635
      %v3774 = vadd.f32 %v3131, %v3648
      %v3775 = vadd.f32 %v3132, %v3653
      %v3776 = vadd.f32 %v3133, %v3666
      %v3777 = vadd.f32 %v3134, %v3671
      %v3778 = vadd.f32 %v3135, %v3684
      %v3779 = vadd.f32 %v3136, %v3689
      %v3780 = vadd.f32 %v3137, %v3702
      %v3781 = vadd.f32 %v3138, %v3707
      %v3782 = vadd.f32 %v3139, %v3720
      %v3783 = vadd.f32 %v3140, %v3725
      %v3784 = vadd.f32 %v3141, %v3738
      %v3785 = vadd.f32 %v3142, %v3743
      %v3786 = vld [vmem:[#allocation2 + $0x21] sm:$0xff]
      %v3787 = vld [vmem:[#allocation2 + $0x29] sm:$0xff]
      %v3788 = vld [vmem:[#allocation2 + $0x31] sm:$0xff]
      %v3789 = vld [vmem:[#allocation2 + $0x39] sm:$0xff]
      %v3790 = vld [vmem:[#allocation2 + $0x41] sm:$0xff]
      %v3791 = vld [vmem:[#allocation2 + $0x49] sm:$0xff]
      %v3792 = vld [vmem:[#allocation2 + $0x51] sm:$0xff]
      %v3793 = vld [vmem:[#allocation2 + $0x59] sm:$0xff]
      %v3794 = vld [vmem:[#allocation2 + $0x61] sm:$0xff]
      %v3795 = vld [vmem:[#allocation2 + $0x69] sm:$0xff]
      %v3796 = vld [vmem:[#allocation2 + $0x71] sm:$0xff]
      %v3797 = vld [vmem:[#allocation2 + $0x79] sm:$0xff]
      %v3798 = vld [vmem:[#allocation2 + $0x81] sm:$0xff]
      %v3799 = vld [vmem:[#allocation2 + $0x89] sm:$0xff]
      %v3800 = vld [vmem:[#allocation2 + $0x91] sm:$0xff]
      %v3801 = vld [vmem:[#allocation2 + $0x99] sm:$0xff]
      %v3802 = vld [vmem:[#allocation2 + $0xa1] sm:$0xff]
      %v3803 = vld [vmem:[#allocation2 + $0xa9] sm:$0xff]
      %v3804 = vld [vmem:[#allocation2 + $0xb1] sm:$0xff]
      %v3805 = vld [vmem:[#allocation2 + $0xb9] sm:$0xff]
      %v3806 = vld [vmem:[#allocation2 + $0xc1] sm:$0xff]
      %v3807 = vld [vmem:[#allocation2 + $0xc9] sm:$0xff]
      %v3808 = vld [vmem:[#allocation2 + $0xd1] sm:$0xff]
      %v3809 = vld [vmem:[#allocation2 + $0xd9] sm:$0xff]
      %v3810 = vld [vmem:[#allocation2 + $0xe1] sm:$0xff]
      %v3811 = vld [vmem:[#allocation2 + $0xe9] sm:$0xff]
      %v3812 = vld [vmem:[#allocation2 + $0xf1] sm:$0xff]
      %v3813 = vld [vmem:[#allocation2 + $0xf9] sm:$0xff]
      %v3814 = vld [vmem:[#allocation2 + $0x101] sm:$0xff]
      %v3815 = vld [vmem:[#allocation2 + $0x109] sm:$0xff]
      %v3816 = vld [vmem:[#allocation2 + $0x111] sm:$0xff]
      %v3817 = vld [vmem:[#allocation2 + $0x119] sm:$0xff]
      %v3818 = vld [vmem:[#allocation2 + $0x121] sm:$0xff]
      %v3819 = vld [vmem:[#allocation2 + $0x129] sm:$0xff]
      %v3820 = vld [vmem:[#allocation2 + $0x131] sm:$0xff]
      %v3821 = vld [vmem:[#allocation2 + $0x139] sm:$0xff]
      %v3822 = vld [vmem:[#allocation2 + $0x141] sm:$0xff]
      %v3823 = vld [vmem:[#allocation2 + $0x149] sm:$0xff]
      %v3824 = vld [vmem:[#allocation2 + $0x151] sm:$0xff]
      %v3825 = vld [vmem:[#allocation2 + $0x159] sm:$0xff]
      %v3826 = vld [vmem:[#allocation2 + $0x161] sm:$0xff]
      %v3827 = vld [vmem:[#allocation2 + $0x169] sm:$0xff]
      %v3828 = vld [vmem:[#allocation2 + $0x171] sm:$0xff]
      %v3829 = vld [vmem:[#allocation2 + $0x179] sm:$0xff]
      %v3830 = vld [vmem:[#allocation2 + $0x181] sm:$0xff]
      %v3831 = vld [vmem:[#allocation2 + $0x189] sm:$0xff]
      %v3832 = vld [vmem:[#allocation2 + $0x191] sm:$0xff]
      %v3833 = vld [vmem:[#allocation2 + $0x199] sm:$0xff]
      %v3834 = vld [vmem:[#allocation2 + $0x1a1] sm:$0xff]
      %v3835 = vld [vmem:[#allocation2 + $0x1a9] sm:$0xff]
      %v3836 = vld [vmem:[#allocation2 + $0x1b1] sm:$0xff]
      %v3837 = vld [vmem:[#allocation2 + $0x1b9] sm:$0xff]
      %v3838 = vld [vmem:[#allocation2 + $0x1c1] sm:$0xff]
      %v3839 = vld [vmem:[#allocation2 + $0x1c9] sm:$0xff]
      %v3840 = vld [vmem:[#allocation2 + $0x1d1] sm:$0xff]
      %v3841 = vld [vmem:[#allocation2 + $0x1d9] sm:$0xff]
      %v3842 = vld [vmem:[#allocation2 + $0x1e1] sm:$0xff]
      %v3843 = vld [vmem:[#allocation2 + $0x1e9] sm:$0xff]
      %v3844 = vld [vmem:[#allocation2 + $0x1f1] sm:$0xff]
      %v3845 = vld [vmem:[#allocation2 + $0x1f9] sm:$0xff]
      %v3846 = vld [vmem:[#allocation2 + $0x201] sm:$0xff]
      %v3847 = vld [vmem:[#allocation2 + $0x209] sm:$0xff]
      %v3848 = vld [vmem:[#allocation2 + $0x211] sm:$0xff]
      %v3849 = vld [vmem:[#allocation2 + $0x219] sm:$0xff]
      %s3850 = scalar_lea.vmem %s3, 32
      %v3851 = vld [vmem:[%s3850] sm:$0xff]
      %v3853 = vsel %vm1059, %v3786, 0
      %v3856 = vsel %vm1059, %v3787, 0
      %v3859 = vsel %vm1059, %v3788, 0
      %v3862 = vsel %vm1059, %v3789, 0
      %v3865 = vsel %vm1059, %v3790, 0
      %v3868 = vsel %vm1059, %v3791, 0
      %v3871 = vsel %vm1059, %v3792, 0
      %v3874 = vsel %vm1059, %v3793, 0
      %v3877 = vsel %vm1059, %v3794, 0
      %v3880 = vsel %vm1059, %v3795, 0
      %v3883 = vsel %vm1059, %v3796, 0
      %v3886 = vsel %vm1059, %v3797, 0
      %v3889 = vsel %vm1059, %v3798, 0
      %v3892 = vsel %vm1059, %v3799, 0
      %v3895 = vsel %vm1059, %v3800, 0
      %v3898 = vsel %vm1059, %v3801, 0
      %v3901 = vsel %vm1059, %v3802, 0
      %v3904 = vsel %vm1059, %v3803, 0
      %v3907 = vsel %vm1059, %v3804, 0
      %v3910 = vsel %vm1059, %v3805, 0
      %v3913 = vsel %vm1059, %v3806, 0
      %v3916 = vsel %vm1059, %v3807, 0
      %v3919 = vsel %vm1059, %v3808, 0
      %v3922 = vsel %vm1059, %v3809, 0
      %v3925 = vsel %vm1059, %v3810, 0
      %v3928 = vsel %vm1059, %v3811, 0
      %v3931 = vsel %vm1059, %v3812, 0
      %v3934 = vsel %vm1059, %v3813, 0
      %v3937 = vsel %vm1059, %v3814, 0
      %v3940 = vsel %vm1059, %v3815, 0
      %v3943 = vsel %vm1059, %v3816, 0
      %v3946 = vsel %vm1059, %v3817, 0
      %v3949 = vsel %vm1059, %v3818, 0
      %v3952 = vsel %vm1059, %v3819, 0
      %v3955 = vsel %vm1059, %v3820, 0
      %v3958 = vsel %vm1059, %v3821, 0
      %v3961 = vsel %vm1059, %v3822, 0
      %v3964 = vsel %vm1059, %v3823, 0
      %v3967 = vsel %vm1059, %v3824, 0
      %v3970 = vsel %vm1059, %v3825, 0
      %v3973 = vsel %vm1059, %v3826, 0
      %v3976 = vsel %vm1059, %v3827, 0
      %v3979 = vsel %vm1059, %v3828, 0
      %v3982 = vsel %vm1059, %v3829, 0
      %v3985 = vsel %vm1059, %v3830, 0
      %v3988 = vsel %vm1059, %v3831, 0
      %v3991 = vsel %vm1059, %v3832, 0
      %v3994 = vsel %vm1059, %v3833, 0
      %v3997 = vsel %vm1059, %v3834, 0
      %v4000 = vsel %vm1059, %v3835, 0
      %v4003 = vsel %vm1059, %v3836, 0
      %v4006 = vsel %vm1059, %v3837, 0
      %v4009 = vsel %vm1059, %v3838, 0
      %v4012 = vsel %vm1059, %v3839, 0
      %v4015 = vsel %vm1059, %v3840, 0
      %v4018 = vsel %vm1059, %v3841, 0
      %v4021 = vsel %vm1059, %v3842, 0
      %v4024 = vsel %vm1059, %v3843, 0
      %v4027 = vsel %vm1059, %v3844, 0
      %v4030 = vsel %vm1059, %v3845, 0
      %v4033 = vsel %vm1059, %v3846, 0
      %v4036 = vsel %vm1059, %v3847, 0
      %v4039 = vsel %vm1059, %v3848, 0
      %v4042 = vsel %vm1059, %v3849, 0
      %4044 = vmatprep.subr.mxu0 0.0
      %4045 = vmatpush1.msra.mxu0 %v3851
      %4046 = vmatprep.subr.mxu0 0.0
      %4047 = vmatpush1.msra.mxu0 0.0
      %4048 = vmatprep.subr.mxu0 0.0
      %4049 = vmatpush1.msra.mxu0 0.0
      %4050 = vmatprep.subr.mxu0 0.0
      %4051 = vmatpush1.msra.mxu0 0.0
      %4052 = vmatprep.subr.mxu0 0.0
      %4053 = vmatpush1.msra.mxu0 0.0
      %4054 = vmatprep.subr.mxu0 0.0
      %4055 = vmatpush1.msra.mxu0 0.0
      %4056 = vmatprep.subr.mxu0 0.0
      %4057 = vmatpush1.msra.mxu0 0.0
      %4058 = vmatprep.subr.mxu0 0.0
      %4059 = vmatpush1.msra.mxu0 0.0
      %4060 = vmatprep.subr.mxu0 0.0
      %4061 = vmatpush1.msra.mxu0 0.0
      %4062 = vmatprep.subr.mxu0 0.0
      %4063 = vmatpush1.msra.mxu0 0.0
      %4064 = vmatprep.subr.mxu0 0.0
      %4065 = vmatpush1.msra.mxu0 0.0
      %4066 = vmatprep.subr.mxu0 0.0
      %4067 = vmatpush1.msra.mxu0 0.0
      %4068 = vmatprep.subr.mxu0 0.0
      %4069 = vmatpush1.msra.mxu0 0.0
      %4070 = vmatprep.subr.mxu0 0.0
      %4071 = vmatpush1.msra.mxu0 0.0
      %4072 = vmatprep.subr.mxu0 0.0
      %4073 = vmatpush1.msra.mxu0 0.0
      %4074 = vmatprep.subr.mxu0 0.0
      %4075 = vmatpush1.msra.mxu0 0.0
      %4076 = vmatprep.subr.mxu0 0.0
      %4077 = vmatpush1.msra.mxu0 0.0
      %4078 = vmatprep.subr.mxu0 0.0
      %4079 = vmatpush1.msra.mxu0 0.0
      %4080 = vmatprep.subr.mxu0 0.0
      %4081 = vmatpush1.msra.mxu0 0.0
      %4082 = vmatprep.subr.mxu0 0.0
      %4083 = vmatpush1.msra.mxu0 0.0
      %4084 = vmatprep.subr.mxu0 0.0
      %4085 = vmatpush1.msra.mxu0 0.0
      %4086 = vmatprep.subr.mxu0 0.0
      %4087 = vmatpush1.msra.mxu0 0.0
      %4088 = vmatprep.subr.mxu0 0.0
      %4089 = vmatpush1.msra.mxu0 0.0
      %4090 = vmatprep.subr.mxu0 0.0
      %4091 = vmatpush1.msra.mxu0 0.0
      %4092 = vmatprep.subr.mxu0 0.0
      %4093 = vmatpush1.msra.mxu0 0.0
      %4094 = vmatprep.subr.mxu0 0.0
      %4095 = vmatpush1.msra.mxu0 0.0
      %4096 = vmatprep.subr.mxu0 0.0
      %4097 = vmatpush1.msra.mxu0 0.0
      %4098 = vmatprep.subr.mxu0 0.0
      %4099 = vmatpush1.msra.mxu0 0.0
      %4100 = vmatprep.subr.mxu0 0.0
      %4101 = vmatpush1.msra.mxu0 0.0
      %4102 = vmatprep.subr.mxu0 0.0
      %4103 = vmatpush1.msra.mxu0 0.0
      %4104 = vmatprep.subr.mxu0 0.0
      %4105 = vmatpush1.msra.mxu0 0.0
      %4106 = vmatprep.subr.mxu0 0.0
      %4107 = vmatpush1.msra.mxu0 0.0
      %4108 = vmatprep.mubr.f32.mxu0 0.0
      %4109 = vmatmul.mubr.f32.gmra.mrb[0].mxu0 %v3853
      %v4110 = vpop.f32.mrb[0].mxu0
      %v4111 = vadd.f32 0.0, %v4110
      %v4112 = vpop.f32.mrb[0].mxu0
      %4113 = vmatprep.mubr.f32.mxu0 0.0
      %4114 = vmatmul.mubr.f32.gmra.mrb[0].mxu0 %v3856
      %v4115 = vpop.f32.mrb[0].mxu0
      %v4116 = vadd.f32 0.0, %v4115
      %v4117 = vpop.f32.mrb[0].mxu0
      %4118 = vmatprep.mubr.f32.mxu0 0.0
      %4119 = vmatmul.mubr.f32.gmra.mrb[0].mxu0 %v3859
      %v4120 = vpop.f32.mrb[0].mxu0
      %v4121 = vpop.f32.mrb[0].mxu0
      %4122 = vmatprep.mubr.f32.mxu0 0.0
      %4123 = vmatmul.mubr.f32.gmra.mrb[0].mxu0 %v3862
      %v4124 = vpop.f32.mrb[0].mxu0
      %v4125 = vpop.f32.mrb[0].mxu0
      %4126 = vmatprep.mubr.f32.mxu0 0.0
      %4127 = vmatmul.mubr.f32.gmra.mrb[0].mxu0 %v3865
      %v4128 = vpop.f32.mrb[0].mxu0
      %v4129 = vadd.f32 0.0, %v4128
      %v4130 = vpop.f32.mrb[0].mxu0
      %4131 = vmatprep.mubr.f32.mxu0 0.0
      %4132 = vmatmul.mubr.f32.gmra.mrb[0].mxu0 %v3868
      %v4133 = vpop.f32.mrb[0].mxu0
      %v4134 = vadd.f32 0.0, %v4133
      %v4135 = vpop.f32.mrb[0].mxu0
      %4136 = vmatprep.mubr.f32.mxu0 0.0
      %4137 = vmatmul.mubr.f32.gmra.mrb[0].mxu0 %v3871
      %v4138 = vpop.f32.mrb[0].mxu0
      %v4139 = vpop.f32.mrb[0].mxu0
      %4140 = vmatprep.mubr.f32.mxu0 0.0
      %4141 = vmatmul.mubr.f32.gmra.mrb[0].mxu0 %v3874
      %v4142 = vpop.f32.mrb[0].mxu0
      %v4143 = vpop.f32.mrb[0].mxu0
      %4144 = vmatprep.mubr.f32.mxu0 0.0
      %4145 = vmatmul.mubr.f32.gmra.mrb[0].mxu0 %v3877
      %v4146 = vpop.f32.mrb[0].mxu0
      %v4147 = vadd.f32 0.0, %v4146
      %v4148 = vpop.f32.mrb[0].mxu0
      %4149 = vmatprep.mubr.f32.mxu0 0.0
      %4150 = vmatmul.mubr.f32.gmra.mrb[0].mxu0 %v3880
      %v4151 = vpop.f32.mrb[0].mxu0
      %v4152 = vadd.f32 0.0, %v4151
      %v4153 = vpop.f32.mrb[0].mxu0
      %4154 = vmatprep.mubr.f32.mxu0 0.0
      %4155 = vmatmul.mubr.f32.gmra.mrb[0].mxu0 %v3883
      %v4156 = vpop.f32.mrb[0].mxu0
      %v4157 = vpop.f32.mrb[0].mxu0
      %4158 = vmatprep.mubr.f32.mxu0 0.0
      %4159 = vmatmul.mubr.f32.gmra.mrb[0].mxu0 %v3886
      %v4160 = vpop.f32.mrb[0].mxu0
      %v4161 = vpop.f32.mrb[0].mxu0
      %4162 = vmatprep.mubr.f32.mxu0 0.0
      %4163 = vmatmul.mubr.f32.gmra.mrb[0].mxu0 %v3889
      %v4164 = vpop.f32.mrb[0].mxu0
      %v4165 = vadd.f32 0.0, %v4164
      %v4166 = vpop.f32.mrb[0].mxu0
      %4167 = vmatprep.mubr.f32.mxu0 0.0
      %4168 = vmatmul.mubr.f32.gmra.mrb[0].mxu0 %v3892
      %v4169 = vpop.f32.mrb[0].mxu0
      %v4170 = vadd.f32 0.0, %v4169
      %v4171 = vpop.f32.mrb[0].mxu0
      %4172 = vmatprep.mubr.f32.mxu0 0.0
      %4173 = vmatmul.mubr.f32.gmra.mrb[0].mxu0 %v3895
      %v4174 = vpop.f32.mrb[0].mxu0
      %v4175 = vpop.f32.mrb[0].mxu0
      %4176 = vmatprep.mubr.f32.mxu0 0.0
      %4177 = vmatmul.mubr.f32.gmra.mrb[0].mxu0 %v3898
      %v4178 = vpop.f32.mrb[0].mxu0
      %v4179 = vpop.f32.mrb[0].mxu0
      %4180 = vmatprep.mubr.f32.mxu0 0.0
      %4181 = vmatmul.mubr.f32.gmra.mrb[0].mxu0 %v3901
      %v4182 = vpop.f32.mrb[0].mxu0
      %v4183 = vadd.f32 0.0, %v4182
      %v4184 = vpop.f32.mrb[0].mxu0
      %4185 = vmatprep.mubr.f32.mxu0 0.0
      %4186 = vmatmul.mubr.f32.gmra.mrb[0].mxu0 %v3904
      %v4187 = vpop.f32.mrb[0].mxu0
      %v4188 = vadd.f32 0.0, %v4187
      %v4189 = vpop.f32.mrb[0].mxu0
      %4190 = vmatprep.mubr.f32.mxu0 0.0
      %4191 = vmatmul.mubr.f32.gmra.mrb[0].mxu0 %v3907
      %v4192 = vpop.f32.mrb[0].mxu0
      %v4193 = vpop.f32.mrb[0].mxu0
      %4194 = vmatprep.mubr.f32.mxu0 0.0
      %4195 = vmatmul.mubr.f32.gmra.mrb[0].mxu0 %v3910
      %v4196 = vpop.f32.mrb[0].mxu0
      %v4197 = vpop.f32.mrb[0].mxu0
      %4198 = vmatprep.mubr.f32.mxu0 0.0
      %4199 = vmatmul.mubr.f32.gmra.mrb[0].mxu0 %v3913
      %v4200 = vpop.f32.mrb[0].mxu0
      %v4201 = vadd.f32 0.0, %v4200
      %v4202 = vpop.f32.mrb[0].mxu0
      %4203 = vmatprep.mubr.f32.mxu0 0.0
      %4204 = vmatmul.mubr.f32.gmra.mrb[0].mxu0 %v3916
      %v4205 = vpop.f32.mrb[0].mxu0
      %v4206 = vadd.f32 0.0, %v4205
      %v4207 = vpop.f32.mrb[0].mxu0
      %4208 = vmatprep.mubr.f32.mxu0 0.0
      %4209 = vmatmul.mubr.f32.gmra.mrb[0].mxu0 %v3919
      %v4210 = vpop.f32.mrb[0].mxu0
      %v4211 = vpop.f32.mrb[0].mxu0
      %4212 = vmatprep.mubr.f32.mxu0 0.0
      %4213 = vmatmul.mubr.f32.gmra.mrb[0].mxu0 %v3922
      %v4214 = vpop.f32.mrb[0].mxu0
      %v4215 = vpop.f32.mrb[0].mxu0
      %4216 = vmatprep.mubr.f32.mxu0 0.0
      %4217 = vmatmul.mubr.f32.gmra.mrb[0].mxu0 %v3925
      %v4218 = vpop.f32.mrb[0].mxu0
      %v4219 = vadd.f32 0.0, %v4218
      %v4220 = vpop.f32.mrb[0].mxu0
      %4221 = vmatprep.mubr.f32.mxu0 0.0
      %4222 = vmatmul.mubr.f32.gmra.mrb[0].mxu0 %v3928
      %v4223 = vpop.f32.mrb[0].mxu0
      %v4224 = vadd.f32 0.0, %v4223
      %v4225 = vpop.f32.mrb[0].mxu0
      %4226 = vmatprep.mubr.f32.mxu0 0.0
      %4227 = vmatmul.mubr.f32.gmra.mrb[0].mxu0 %v3931
      %v4228 = vpop.f32.mrb[0].mxu0
      %v4229 = vpop.f32.mrb[0].mxu0
      %4230 = vmatprep.mubr.f32.mxu0 0.0
      %4231 = vmatmul.mubr.f32.gmra.mrb[0].mxu0 %v3934
      %v4232 = vpop.f32.mrb[0].mxu0
      %v4233 = vpop.f32.mrb[0].mxu0
      %4234 = vmatprep.mubr.f32.mxu0 0.0
      %4235 = vmatmul.mubr.f32.gmra.mrb[0].mxu0 %v3937
      %v4236 = vpop.f32.mrb[0].mxu0
      %v4237 = vadd.f32 0.0, %v4236
      %v4238 = vpop.f32.mrb[0].mxu0
      %4239 = vmatprep.mubr.f32.mxu0 0.0
      %4240 = vmatmul.mubr.f32.gmra.mrb[0].mxu0 %v3940
      %v4241 = vpop.f32.mrb[0].mxu0
      %v4242 = vadd.f32 0.0, %v4241
      %v4243 = vpop.f32.mrb[0].mxu0
      %4244 = vmatprep.mubr.f32.mxu0 0.0
      %4245 = vmatmul.mubr.f32.gmra.mrb[0].mxu0 %v3943
      %v4246 = vpop.f32.mrb[0].mxu0
      %v4247 = vpop.f32.mrb[0].mxu0
      %4248 = vmatprep.mubr.f32.mxu0 0.0
      %4249 = vmatmul.mubr.f32.gmra.mrb[0].mxu0 %v3946
      %v4250 = vpop.f32.mrb[0].mxu0
      %v4251 = vpop.f32.mrb[0].mxu0
      %4252 = vmatprep.mubr.f32.mxu0 0.0
      %4253 = vmatmul.mubr.f32.gmra.mrb[0].mxu0 %v3949
      %v4254 = vpop.f32.mrb[0].mxu0
      %v4255 = vadd.f32 0.0, %v4254
      %v4256 = vpop.f32.mrb[0].mxu0
      %4257 = vmatprep.mubr.f32.mxu0 0.0
      %4258 = vmatmul.mubr.f32.gmra.mrb[0].mxu0 %v3952
      %v4259 = vpop.f32.mrb[0].mxu0
      %v4260 = vadd.f32 0.0, %v4259
      %v4261 = vpop.f32.mrb[0].mxu0
      %4262 = vmatprep.mubr.f32.mxu0 0.0
      %4263 = vmatmul.mubr.f32.gmra.mrb[0].mxu0 %v3955
      %v4264 = vpop.f32.mrb[0].mxu0
      %v4265 = vpop.f32.mrb[0].mxu0
      %4266 = vmatprep.mubr.f32.mxu0 0.0
      %4267 = vmatmul.mubr.f32.gmra.mrb[0].mxu0 %v3958
      %v4268 = vpop.f32.mrb[0].mxu0
      %v4269 = vpop.f32.mrb[0].mxu0
      %4270 = vmatprep.mubr.f32.mxu0 0.0
      %4271 = vmatmul.mubr.f32.gmra.mrb[0].mxu0 %v3961
      %v4272 = vpop.f32.mrb[0].mxu0
      %v4273 = vadd.f32 0.0, %v4272
      %v4274 = vpop.f32.mrb[0].mxu0
      %4275 = vmatprep.mubr.f32.mxu0 0.0
      %4276 = vmatmul.mubr.f32.gmra.mrb[0].mxu0 %v3964
      %v4277 = vpop.f32.mrb[0].mxu0
      %v4278 = vadd.f32 0.0, %v4277
      %v4279 = vpop.f32.mrb[0].mxu0
      %4280 = vmatprep.mubr.f32.mxu0 0.0
      %4281 = vmatmul.mubr.f32.gmra.mrb[0].mxu0 %v3967
      %v4282 = vpop.f32.mrb[0].mxu0
      %v4283 = vpop.f32.mrb[0].mxu0
      %4284 = vmatprep.mubr.f32.mxu0 0.0
      %4285 = vmatmul.mubr.f32.gmra.mrb[0].mxu0 %v3970
      %v4286 = vpop.f32.mrb[0].mxu0
      %v4287 = vpop.f32.mrb[0].mxu0
      %4288 = vmatprep.mubr.f32.mxu0 0.0
      %4289 = vmatmul.mubr.f32.gmra.mrb[0].mxu0 %v3973
      %v4290 = vpop.f32.mrb[0].mxu0
      %v4291 = vadd.f32 0.0, %v4290
      %v4292 = vpop.f32.mrb[0].mxu0
      %4293 = vmatprep.mubr.f32.mxu0 0.0
      %4294 = vmatmul.mubr.f32.gmra.mrb[0].mxu0 %v3976
      %v4295 = vpop.f32.mrb[0].mxu0
      %v4296 = vadd.f32 0.0, %v4295
      %v4297 = vpop.f32.mrb[0].mxu0
      %4298 = vmatprep.mubr.f32.mxu0 0.0
      %4299 = vmatmul.mubr.f32.gmra.mrb[0].mxu0 %v3979
      %v4300 = vpop.f32.mrb[0].mxu0
      %v4301 = vpop.f32.mrb[0].mxu0
      %4302 = vmatprep.mubr.f32.mxu0 0.0
      %4303 = vmatmul.mubr.f32.gmra.mrb[0].mxu0 %v3982
      %v4304 = vpop.f32.mrb[0].mxu0
      %v4305 = vpop.f32.mrb[0].mxu0
      %4306 = vmatprep.mubr.f32.mxu0 0.0
      %4307 = vmatmul.mubr.f32.gmra.mrb[0].mxu0 %v3985
      %v4308 = vpop.f32.mrb[0].mxu0
      %v4309 = vadd.f32 0.0, %v4308
      %v4310 = vpop.f32.mrb[0].mxu0
      %4311 = vmatprep.mubr.f32.mxu0 0.0
      %4312 = vmatmul.mubr.f32.gmra.mrb[0].mxu0 %v3988
      %v4313 = vpop.f32.mrb[0].mxu0
      %v4314 = vadd.f32 0.0, %v4313
      %v4315 = vpop.f32.mrb[0].mxu0
      %4316 = vmatprep.mubr.f32.mxu0 0.0
      %4317 = vmatmul.mubr.f32.gmra.mrb[0].mxu0 %v3991
      %v4318 = vpop.f32.mrb[0].mxu0
      %v4319 = vpop.f32.mrb[0].mxu0
      %4320 = vmatprep.mubr.f32.mxu0 0.0
      %4321 = vmatmul.mubr.f32.gmra.mrb[0].mxu0 %v3994
      %v4322 = vpop.f32.mrb[0].mxu0
      %v4323 = vpop.f32.mrb[0].mxu0
      %4324 = vmatprep.mubr.f32.mxu0 0.0
      %4325 = vmatmul.mubr.f32.gmra.mrb[0].mxu0 %v3997
      %v4326 = vpop.f32.mrb[0].mxu0
      %v4327 = vadd.f32 0.0, %v4326
      %v4328 = vpop.f32.mrb[0].mxu0
      %4329 = vmatprep.mubr.f32.mxu0 0.0
      %4330 = vmatmul.mubr.f32.gmra.mrb[0].mxu0 %v4000
      %v4331 = vpop.f32.mrb[0].mxu0
      %v4332 = vadd.f32 0.0, %v4331
      %v4333 = vpop.f32.mrb[0].mxu0
      %4334 = vmatprep.mubr.f32.mxu0 0.0
      %4335 = vmatmul.mubr.f32.gmra.mrb[0].mxu0 %v4003
      %v4336 = vpop.f32.mrb[0].mxu0
      %v4337 = vpop.f32.mrb[0].mxu0
      %4338 = vmatprep.mubr.f32.mxu0 0.0
      %4339 = vmatmul.mubr.f32.gmra.mrb[0].mxu0 %v4006
      %v4340 = vpop.f32.mrb[0].mxu0
      %v4341 = vpop.f32.mrb[0].mxu0
      %4342 = vmatprep.mubr.f32.mxu0 0.0
      %4343 = vmatmul.mubr.f32.gmra.mrb[0].mxu0 %v4009
      %v4344 = vpop.f32.mrb[0].mxu0
      %v4345 = vadd.f32 0.0, %v4344
      %v4346 = vpop.f32.mrb[0].mxu0
      %4347 = vmatprep.mubr.f32.mxu0 0.0
      %4348 = vmatmul.mubr.f32.gmra.mrb[0].mxu0 %v4012
      %v4349 = vpop.f32.mrb[0].mxu0
      %v4350 = vadd.f32 0.0, %v4349
      %v4351 = vpop.f32.mrb[0].mxu0
      %4352 = vmatprep.mubr.f32.mxu0 0.0
      %4353 = vmatmul.mubr.f32.gmra.mrb[0].mxu0 %v4015
      %v4354 = vpop.f32.mrb[0].mxu0
      %v4355 = vpop.f32.mrb[0].mxu0
      %4356 = vmatprep.mubr.f32.mxu0 0.0
      %4357 = vmatmul.mubr.f32.gmra.mrb[0].mxu0 %v4018
      %v4358 = vpop.f32.mrb[0].mxu0
      %v4359 = vpop.f32.mrb[0].mxu0
      %4360 = vmatprep.mubr.f32.mxu0 0.0
      %4361 = vmatmul.mubr.f32.gmra.mrb[0].mxu0 %v4021
      %v4362 = vpop.f32.mrb[0].mxu0
      %v4363 = vadd.f32 0.0, %v4362
      %v4364 = vpop.f32.mrb[0].mxu0
      %4365 = vmatprep.mubr.f32.mxu0 0.0
      %4366 = vmatmul.mubr.f32.gmra.mrb[0].mxu0 %v4024
      %v4367 = vpop.f32.mrb[0].mxu0
      %v4368 = vadd.f32 0.0, %v4367
      %v4369 = vpop.f32.mrb[0].mxu0
      %4370 = vmatprep.mubr.f32.mxu0 0.0
      %4371 = vmatmul.mubr.f32.gmra.mrb[0].mxu0 %v4027
      %v4372 = vpop.f32.mrb[0].mxu0
      %v4373 = vpop.f32.mrb[0].mxu0
      %4374 = vmatprep.mubr.f32.mxu0 0.0
      %4375 = vmatmul.mubr.f32.gmra.mrb[0].mxu0 %v4030
      %v4376 = vpop.f32.mrb[0].mxu0
      %v4377 = vpop.f32.mrb[0].mxu0
      %4378 = vmatprep.mubr.f32.mxu0 0.0
      %4379 = vmatmul.mubr.f32.gmra.mrb[0].mxu0 %v4033
      %v4380 = vpop.f32.mrb[0].mxu0
      %v4381 = vadd.f32 0.0, %v4380
      %v4382 = vpop.f32.mrb[0].mxu0
      %4383 = vmatprep.mubr.f32.mxu0 0.0
      %4384 = vmatmul.mubr.f32.gmra.mrb[0].mxu0 %v4036
      %v4385 = vpop.f32.mrb[0].mxu0
      %v4386 = vadd.f32 0.0, %v4385
      %v4387 = vpop.f32.mrb[0].mxu0
      %4388 = vmatprep.mubr.f32.mxu0 0.0
      %4389 = vmatmul.mubr.f32.gmra.mrb[0].mxu0 %v4039
      %v4390 = vpop.f32.mrb[0].mxu0
      %v4391 = vpop.f32.mrb[0].mxu0
      %4392 = vmatprep.mubr.f32.mxu0 0.0
      %4393 = vmatmul.mubr.f32.gmra.mrb[0].mxu0 %v4042
      %v4394 = vpop.f32.mrb[0].mxu0
      %v4395 = vpop.f32.mrb[0].mxu0
      %4396 = vdwg.mxu0
      %v4397 = vadd.f32 %v3754, %v4111
      %v4398 = vadd.f32 %v3755, %v4116
      %v4399 = vadd.f32 %v3756, %v4129
      %v4400 = vadd.f32 %v3757, %v4134
      %v4401 = vadd.f32 %v3758, %v4147
      %v4402 = vadd.f32 %v3759, %v4152
      %v4403 = vadd.f32 %v3760, %v4165
      %v4404 = vadd.f32 %v3761, %v4170
      %v4405 = vadd.f32 %v3762, %v4183
      %v4406 = vadd.f32 %v3763, %v4188
      %v4407 = vadd.f32 %v3764, %v4201
      %v4408 = vadd.f32 %v3765, %v4206
      %v4409 = vadd.f32 %v3766, %v4219
      %v4410 = vadd.f32 %v3767, %v4224
      %v4411 = vadd.f32 %v3768, %v4237
      %v4412 = vadd.f32 %v3769, %v4242
      %v4413 = vadd.f32 %v3770, %v4255
      %v4414 = vadd.f32 %v3771, %v4260
      %v4415 = vadd.f32 %v3772, %v4273
      %v4416 = vadd.f32 %v3773, %v4278
      %v4417 = vadd.f32 %v3774, %v4291
      %v4418 = vadd.f32 %v3775, %v4296
      %v4419 = vadd.f32 %v3776, %v4309
      %v4420 = vadd.f32 %v3777, %v4314
      %v4421 = vadd.f32 %v3778, %v4327
      %v4422 = vadd.f32 %v3779, %v4332
      %v4423 = vadd.f32 %v3780, %v4345
      %v4424 = vadd.f32 %v3781, %v4350
      %v4425 = vadd.f32 %v3782, %v4363
      %v4426 = vadd.f32 %v3783, %v4368
      %v4427 = vadd.f32 %v3784, %v4381
      %v4428 = vadd.f32 %v3785, %v4386
      %v4429 = vld [vmem:[#allocation2 + $0x22] sm:$0xff]
      %v4430 = vld [vmem:[#allocation2 + $0x2a] sm:$0xff]
      %v4431 = vld [vmem:[#allocation2 + $0x32] sm:$0xff]
      %v4432 = vld [vmem:[#allocation2 + $0x3a] sm:$0xff]
      %v4433 = vld [vmem:[#allocation2 + $0x42] sm:$0xff]
      %v4434 = vld [vmem:[#allocation2 + $0x4a] sm:$0xff]
      %v4435 = vld [vmem:[#allocation2 + $0x52] sm:$0xff]
      %v4436 = vld [vmem:[#allocation2 + $0x5a] sm:$0xff]
      %v4437 = vld [vmem:[#allocation2 + $0x62] sm:$0xff]
      %v4438 = vld [vmem:[#allocation2 + $0x6a] sm:$0xff]
      %v4439 = vld [vmem:[#allocation2 + $0x72] sm:$0xff]
      %v4440 = vld [vmem:[#allocation2 + $0x7a] sm:$0xff]
      %v4441 = vld [vmem:[#allocation2 + $0x82] sm:$0xff]
      %v4442 = vld [vmem:[#allocation2 + $0x8a] sm:$0xff]
      %v4443 = vld [vmem:[#allocation2 + $0x92] sm:$0xff]
      %v4444 = vld [vmem:[#allocation2 + $0x9a] sm:$0xff]
      %v4445 = vld [vmem:[#allocation2 + $0xa2] sm:$0xff]
      %v4446 = vld [vmem:[#allocation2 + $0xaa] sm:$0xff]
      %v4447 = vld [vmem:[#allocation2 + $0xb2] sm:$0xff]
      %v4448 = vld [vmem:[#allocation2 + $0xba] sm:$0xff]
      %v4449 = vld [vmem:[#allocation2 + $0xc2] sm:$0xff]
      %v4450 = vld [vmem:[#allocation2 + $0xca] sm:$0xff]
      %v4451 = vld [vmem:[#allocation2 + $0xd2] sm:$0xff]
      %v4452 = vld [vmem:[#allocation2 + $0xda] sm:$0xff]
      %v4453 = vld [vmem:[#allocation2 + $0xe2] sm:$0xff]
      %v4454 = vld [vmem:[#allocation2 + $0xea] sm:$0xff]
      %v4455 = vld [vmem:[#allocation2 + $0xf2] sm:$0xff]
      %v4456 = vld [vmem:[#allocation2 + $0xfa] sm:$0xff]
      %v4457 = vld [vmem:[#allocation2 + $0x102] sm:$0xff]
      %v4458 = vld [vmem:[#allocation2 + $0x10a] sm:$0xff]
      %v4459 = vld [vmem:[#allocation2 + $0x112] sm:$0xff]
      %v4460 = vld [vmem:[#allocation2 + $0x11a] sm:$0xff]
      %v4461 = vld [vmem:[#allocation2 + $0x122] sm:$0xff]
      %v4462 = vld [vmem:[#allocation2 + $0x12a] sm:$0xff]
      %v4463 = vld [vmem:[#allocation2 + $0x132] sm:$0xff]
      %v4464 = vld [vmem:[#allocation2 + $0x13a] sm:$0xff]
      %v4465 = vld [vmem:[#allocation2 + $0x142] sm:$0xff]
      %v4466 = vld [vmem:[#allocation2 + $0x14a] sm:$0xff]
      %v4467 = vld [vmem:[#allocation2 + $0x152] sm:$0xff]
      %v4468 = vld [vmem:[#allocation2 + $0x15a] sm:$0xff]
      %v4469 = vld [vmem:[#allocation2 + $0x162] sm:$0xff]
      %v4470 = vld [vmem:[#allocation2 + $0x16a] sm:$0xff]
      %v4471 = vld [vmem:[#allocation2 + $0x172] sm:$0xff]
      %v4472 = vld [vmem:[#allocation2 + $0x17a] sm:$0xff]
      %v4473 = vld [vmem:[#allocation2 + $0x182] sm:$0xff]
      %v4474 = vld [vmem:[#allocation2 + $0x18a] sm:$0xff]
      %v4475 = vld [vmem:[#allocation2 + $0x192] sm:$0xff]
      %v4476 = vld [vmem:[#allocation2 + $0x19a] sm:$0xff]
      %v4477 = vld [vmem:[#allocation2 + $0x1a2] sm:$0xff]
      %v4478 = vld [vmem:[#allocation2 + $0x1aa] sm:$0xff]
      %v4479 = vld [vmem:[#allocation2 + $0x1b2] sm:$0xff]
      %v4480 = vld [vmem:[#allocation2 + $0x1ba] sm:$0xff]
      %v4481 = vld [vmem:[#allocation2 + $0x1c2] sm:$0xff]
      %v4482 = vld [vmem:[#allocation2 + $0x1ca] sm:$0xff]
      %v4483 = vld [vmem:[#allocation2 + $0x1d2] sm:$0xff]
      %v4484 = vld [vmem:[#allocation2 + $0x1da] sm:$0xff]
      %v4485 = vld [vmem:[#allocation2 + $0x1e2] sm:$0xff]
      %v4486 = vld [vmem:[#allocation2 + $0x1ea] sm:$0xff]
      %v4487 = vld [vmem:[#allocation2 + $0x1f2] sm:$0xff]
      %v4488 = vld [vmem:[#allocation2 + $0x1fa] sm:$0xff]
      %v4489 = vld [vmem:[#allocation2 + $0x202] sm:$0xff]
      %v4490 = vld [vmem:[#allocation2 + $0x20a] sm:$0xff]
      %v4491 = vld [vmem:[#allocation2 + $0x212] sm:$0xff]
      %v4492 = vld [vmem:[#allocation2 + $0x21a] sm:$0xff]
      %s4493 = scalar_lea.vmem %s3, 40
      %v4494 = vld [vmem:[%s4493] sm:$0xff]
      %v4496 = vsel %vm1059, %v4429, 0
      %v4499 = vsel %vm1059, %v4430, 0
      %v4502 = vsel %vm1059, %v4431, 0
      %v4505 = vsel %vm1059, %v4432, 0
      %v4508 = vsel %vm1059, %v4433, 0
      %v4511 = vsel %vm1059, %v4434, 0
      %v4514 = vsel %vm1059, %v4435, 0
      %v4517 = vsel %vm1059, %v4436, 0
      %v4520 = vsel %vm1059, %v4437, 0
      %v4523 = vsel %vm1059, %v4438, 0
      %v4526 = vsel %vm1059, %v4439, 0
      %v4529 = vsel %vm1059, %v4440, 0
      %v4532 = vsel %vm1059, %v4441, 0
      %v4535 = vsel %vm1059, %v4442, 0
      %v4538 = vsel %vm1059, %v4443, 0
      %v4541 = vsel %vm1059, %v4444, 0
      %v4544 = vsel %vm1059, %v4445, 0
      %v4547 = vsel %vm1059, %v4446, 0
      %v4550 = vsel %vm1059, %v4447, 0
      %v4553 = vsel %vm1059, %v4448, 0
      %v4556 = vsel %vm1059, %v4449, 0
      %v4559 = vsel %vm1059, %v4450, 0
      %v4562 = vsel %vm1059, %v4451, 0
      %v4565 = vsel %vm1059, %v4452, 0
      %v4568 = vsel %vm1059, %v4453, 0
      %v4571 = vsel %vm1059, %v4454, 0
      %v4574 = vsel %vm1059, %v4455, 0
      %v4577 = vsel %vm1059, %v4456, 0
      %v4580 = vsel %vm1059, %v4457, 0
      %v4583 = vsel %vm1059, %v4458, 0
      %v4586 = vsel %vm1059, %v4459, 0
      %v4589 = vsel %vm1059, %v4460, 0
      %v4592 = vsel %vm1059, %v4461, 0
      %v4595 = vsel %vm1059, %v4462, 0
      %v4598 = vsel %vm1059, %v4463, 0
      %v4601 = vsel %vm1059, %v4464, 0
      %v4604 = vsel %vm1059, %v4465, 0
      %v4607 = vsel %vm1059, %v4466, 0
      %v4610 = vsel %vm1059, %v4467, 0
      %v4613 = vsel %vm1059, %v4468, 0
      %v4616 = vsel %vm1059, %v4469, 0
      %v4619 = vsel %vm1059, %v4470, 0
      %v4622 = vsel %vm1059, %v4471, 0
      %v4625 = vsel %vm1059, %v4472, 0
      %v4628 = vsel %vm1059, %v4473, 0
      %v4631 = vsel %vm1059, %v4474, 0
      %v4634 = vsel %vm1059, %v4475, 0
      %v4637 = vsel %vm1059, %v4476, 0
      %v4640 = vsel %vm1059, %v4477, 0
      %v4643 = vsel %vm1059, %v4478, 0
      %v4646 = vsel %vm1059, %v4479, 0
      %v4649 = vsel %vm1059, %v4480, 0
      %v4652 = vsel %vm1059, %v4481, 0
      %v4655 = vsel %vm1059, %v4482, 0
      %v4658 = vsel %vm1059, %v4483, 0
      %v4661 = vsel %vm1059, %v4484, 0
      %v4664 = vsel %vm1059, %v4485, 0
      %v4667 = vsel %vm1059, %v4486, 0
      %v4670 = vsel %vm1059, %v4487, 0
      %v4673 = vsel %vm1059, %v4488, 0
      %v4676 = vsel %vm1059, %v4489, 0
      %v4679 = vsel %vm1059, %v4490, 0
      %v4682 = vsel %vm1059, %v4491, 0
      %v4685 = vsel %vm1059, %v4492, 0
      %4687 = vmatprep.subr.mxu0 0.0
      %4688 = vmatpush1.msra.mxu0 %v4494
      %4689 = vmatprep.subr.mxu0 0.0
      %4690 = vmatpush1.msra.mxu0 0.0
      %4691 = vmatprep.subr.mxu0 0.0
      %4692 = vmatpush1.msra.mxu0 0.0
      %4693 = vmatprep.subr.mxu0 0.0
      %4694 = vmatpush1.msra.mxu0 0.0
      %4695 = vmatprep.subr.mxu0 0.0
      %4696 = vmatpush1.msra.mxu0 0.0
      %4697 = vmatprep.subr.mxu0 0.0
      %4698 = vmatpush1.msra.mxu0 0.0
      %4699 = vmatprep.subr.mxu0 0.0
      %4700 = vmatpush1.msra.mxu0 0.0
      %4701 = vmatprep.subr.mxu0 0.0
      %4702 = vmatpush1.msra.mxu0 0.0
      %4703 = vmatprep.subr.mxu0 0.0
      %4704 = vmatpush1.msra.mxu0 0.0
      %4705 = vmatprep.subr.mxu0 0.0
      %4706 = vmatpush1.msra.mxu0 0.0
      %4707 = vmatprep.subr.mxu0 0.0
      %4708 = vmatpush1.msra.mxu0 0.0
      %4709 = vmatprep.subr.mxu0 0.0
      %4710 = vmatpush1.msra.mxu0 0.0
      %4711 = vmatprep.subr.mxu0 0.0
      %4712 = vmatpush1.msra.mxu0 0.0
      %4713 = vmatprep.subr.mxu0 0.0
      %4714 = vmatpush1.msra.mxu0 0.0
      %4715 = vmatprep.subr.mxu0 0.0
      %4716 = vmatpush1.msra.mxu0 0.0
      %4717 = vmatprep.subr.mxu0 0.0
      %4718 = vmatpush1.msra.mxu0 0.0
      %4719 = vmatprep.subr.mxu0 0.0
      %4720 = vmatpush1.msra.mxu0 0.0
      %4721 = vmatprep.subr.mxu0 0.0
      %4722 = vmatpush1.msra.mxu0 0.0
      %4723 = vmatprep.subr.mxu0 0.0
      %4724 = vmatpush1.msra.mxu0 0.0
      %4725 = vmatprep.subr.mxu0 0.0
      %4726 = vmatpush1.msra.mxu0 0.0
      %4727 = vmatprep.subr.mxu0 0.0
      %4728 = vmatpush1.msra.mxu0 0.0
      %4729 = vmatprep.subr.mxu0 0.0
      %4730 = vmatpush1.msra.mxu0 0.0
      %4731 = vmatprep.subr.mxu0 0.0
      %4732 = vmatpush1.msra.mxu0 0.0
      %4733 = vmatprep.subr.mxu0 0.0
      %4734 = vmatpush1.msra.mxu0 0.0
      %4735 = vmatprep.subr.mxu0 0.0
      %4736 = vmatpush1.msra.mxu0 0.0
      %4737 = vmatprep.subr.mxu0 0.0
      %4738 = vmatpush1.msra.mxu0 0.0
      %4739 = vmatprep.subr.mxu0 0.0
      %4740 = vmatpush1.msra.mxu0 0.0
      %4741 = vmatprep.subr.mxu0 0.0
      %4742 = vmatpush1.msra.mxu0 0.0
      %4743 = vmatprep.subr.mxu0 0.0
      %4744 = vmatpush1.msra.mxu0 0.0
      %4745 = vmatprep.subr.mxu0 0.0
      %4746 = vmatpush1.msra.mxu0 0.0
      %4747 = vmatprep.subr.mxu0 0.0
      %4748 = vmatpush1.msra.mxu0 0.0
      %4749 = vmatprep.subr.mxu0 0.0
      %4750 = vmatpush1.msra.mxu0 0.0
      %4751 = vmatprep.mubr.f32.mxu0 0.0
      %4752 = vmatmul.mubr.f32.gmra.mrb[0].mxu0 %v4496
      %v4753 = vpop.f32.mrb[0].mxu0
      %v4754 = vadd.f32 0.0, %v4753
      %v4755 = vpop.f32.mrb[0].mxu0
      %4756 = vmatprep.mubr.f32.mxu0 0.0
      %4757 = vmatmul.mubr.f32.gmra.mrb[0].mxu0 %v4499
      %v4758 = vpop.f32.mrb[0].mxu0
      %v4759 = vadd.f32 0.0, %v4758
      %v4760 = vpop.f32.mrb[0].mxu0
      %4761 = vmatprep.mubr.f32.mxu0 0.0
      %4762 = vmatmul.mubr.f32.gmra.mrb[0].mxu0 %v4502
      %v4763 = vpop.f32.mrb[0].mxu0
      %v4764 = vpop.f32.mrb[0].mxu0
      %4765 = vmatprep.mubr.f32.mxu0 0.0
      %4766 = vmatmul.mubr.f32.gmra.mrb[0].mxu0 %v4505
      %v4767 = vpop.f32.mrb[0].mxu0
      %v4768 = vpop.f32.mrb[0].mxu0
      %4769 = vmatprep.mubr.f32.mxu0 0.0
      %4770 = vmatmul.mubr.f32.gmra.mrb[0].mxu0 %v4508
      %v4771 = vpop.f32.mrb[0].mxu0
      %v4772 = vadd.f32 0.0, %v4771
      %v4773 = vpop.f32.mrb[0].mxu0
      %4774 = vmatprep.mubr.f32.mxu0 0.0
      %4775 = vmatmul.mubr.f32.gmra.mrb[0].mxu0 %v4511
      %v4776 = vpop.f32.mrb[0].mxu0
      %v4777 = vadd.f32 0.0, %v4776
      %v4778 = vpop.f32.mrb[0].mxu0
      %4779 = vmatprep.mubr.f32.mxu0 0.0
      %4780 = vmatmul.mubr.f32.gmra.mrb[0].mxu0 %v4514
      %v4781 = vpop.f32.mrb[0].mxu0
      %v4782 = vpop.f32.mrb[0].mxu0
      %4783 = vmatprep.mubr.f32.mxu0 0.0
      %4784 = vmatmul.mubr.f32.gmra.mrb[0].mxu0 %v4517
      %v4785 = vpop.f32.mrb[0].mxu0
      %v4786 = vpop.f32.mrb[0].mxu0
      %4787 = vmatprep.mubr.f32.mxu0 0.0
      %4788 = vmatmul.mubr.f32.gmra.mrb[0].mxu0 %v4520
      %v4789 = vpop.f32.mrb[0].mxu0
      %v4790 = vadd.f32 0.0, %v4789
      %v4791 = vpop.f32.mrb[0].mxu0
      %4792 = vmatprep.mubr.f32.mxu0 0.0
      %4793 = vmatmul.mubr.f32.gmra.mrb[0].mxu0 %v4523
      %v4794 = vpop.f32.mrb[0].mxu0
      %v4795 = vadd.f32 0.0, %v4794
      %v4796 = vpop.f32.mrb[0].mxu0
      %4797 = vmatprep.mubr.f32.mxu0 0.0
      %4798 = vmatmul.mubr.f32.gmra.mrb[0].mxu0 %v4526
      %v4799 = vpop.f32.mrb[0].mxu0
      %v4800 = vpop.f32.mrb[0].mxu0
      %4801 = vmatprep.mubr.f32.mxu0 0.0
      %4802 = vmatmul.mubr.f32.gmra.mrb[0].mxu0 %v4529
      %v4803 = vpop.f32.mrb[0].mxu0
      %v4804 = vpop.f32.mrb[0].mxu0
      %4805 = vmatprep.mubr.f32.mxu0 0.0
      %4806 = vmatmul.mubr.f32.gmra.mrb[0].mxu0 %v4532
      %v4807 = vpop.f32.mrb[0].mxu0
      %v4808 = vadd.f32 0.0, %v4807
      %v4809 = vpop.f32.mrb[0].mxu0
      %4810 = vmatprep.mubr.f32.mxu0 0.0
      %4811 = vmatmul.mubr.f32.gmra.mrb[0].mxu0 %v4535
      %v4812 = vpop.f32.mrb[0].mxu0
      %v4813 = vadd.f32 0.0, %v4812
      %v4814 = vpop.f32.mrb[0].mxu0
      %4815 = vmatprep.mubr.f32.mxu0 0.0
      %4816 = vmatmul.mubr.f32.gmra.mrb[0].mxu0 %v4538
      %v4817 = vpop.f32.mrb[0].mxu0
      %v4818 = vpop.f32.mrb[0].mxu0
      %4819 = vmatprep.mubr.f32.mxu0 0.0
      %4820 = vmatmul.mubr.f32.gmra.mrb[0].mxu0 %v4541
      %v4821 = vpop.f32.mrb[0].mxu0
      %v4822 = vpop.f32.mrb[0].mxu0
      %4823 = vmatprep.mubr.f32.mxu0 0.0
      %4824 = vmatmul.mubr.f32.gmra.mrb[0].mxu0 %v4544
      %v4825 = vpop.f32.mrb[0].mxu0
      %v4826 = vadd.f32 0.0, %v4825
      %v4827 = vpop.f32.mrb[0].mxu0
      %4828 = vmatprep.mubr.f32.mxu0 0.0
      %4829 = vmatmul.mubr.f32.gmra.mrb[0].mxu0 %v4547
      %v4830 = vpop.f32.mrb[0].mxu0
      %v4831 = vadd.f32 0.0, %v4830
      %v4832 = vpop.f32.mrb[0].mxu0
      %4833 = vmatprep.mubr.f32.mxu0 0.0
      %4834 = vmatmul.mubr.f32.gmra.mrb[0].mxu0 %v4550
      %v4835 = vpop.f32.mrb[0].mxu0
      %v4836 = vpop.f32.mrb[0].mxu0
      %4837 = vmatprep.mubr.f32.mxu0 0.0
      %4838 = vmatmul.mubr.f32.gmra.mrb[0].mxu0 %v4553
      %v4839 = vpop.f32.mrb[0].mxu0
      %v4840 = vpop.f32.mrb[0].mxu0
      %4841 = vmatprep.mubr.f32.mxu0 0.0
      %4842 = vmatmul.mubr.f32.gmra.mrb[0].mxu0 %v4556
      %v4843 = vpop.f32.mrb[0].mxu0
      %v4844 = vadd.f32 0.0, %v4843
      %v4845 = vpop.f32.mrb[0].mxu0
      %4846 = vmatprep.mubr.f32.mxu0 0.0
      %4847 = vmatmul.mubr.f32.gmra.mrb[0].mxu0 %v4559
      %v4848 = vpop.f32.mrb[0].mxu0
      %v4849 = vadd.f32 0.0, %v4848
      %v4850 = vpop.f32.mrb[0].mxu0
      %4851 = vmatprep.mubr.f32.mxu0 0.0
      %4852 = vmatmul.mubr.f32.gmra.mrb[0].mxu0 %v4562
      %v4853 = vpop.f32.mrb[0].mxu0
      %v4854 = vpop.f32.mrb[0].mxu0
      %4855 = vmatprep.mubr.f32.mxu0 0.0
      %4856 = vmatmul.mubr.f32.gmra.mrb[0].mxu0 %v4565
      %v4857 = vpop.f32.mrb[0].mxu0
      %v4858 = vpop.f32.mrb[0].mxu0
      %4859 = vmatprep.mubr.f32.mxu0 0.0
      %4860 = vmatmul.mubr.f32.gmra.mrb[0].mxu0 %v4568
      %v4861 = vpop.f32.mrb[0].mxu0
      %v4862 = vadd.f32 0.0, %v4861
      %v4863 = vpop.f32.mrb[0].mxu0
      %4864 = vmatprep.mubr.f32.mxu0 0.0
      %4865 = vmatmul.mubr.f32.gmra.mrb[0].mxu0 %v4571
      %v4866 = vpop.f32.mrb[0].mxu0
      %v4867 = vadd.f32 0.0, %v4866
      %v4868 = vpop.f32.mrb[0].mxu0
      %4869 = vmatprep.mubr.f32.mxu0 0.0
      %4870 = vmatmul.mubr.f32.gmra.mrb[0].mxu0 %v4574
      %v4871 = vpop.f32.mrb[0].mxu0
      %v4872 = vpop.f32.mrb[0].mxu0
      %4873 = vmatprep.mubr.f32.mxu0 0.0
      %4874 = vmatmul.mubr.f32.gmra.mrb[0].mxu0 %v4577
      %v4875 = vpop.f32.mrb[0].mxu0
      %v4876 = vpop.f32.mrb[0].mxu0
      %4877 = vmatprep.mubr.f32.mxu0 0.0
      %4878 = vmatmul.mubr.f32.gmra.mrb[0].mxu0 %v4580
      %v4879 = vpop.f32.mrb[0].mxu0
      %v4880 = vadd.f32 0.0, %v4879
      %v4881 = vpop.f32.mrb[0].mxu0
      %4882 = vmatprep.mubr.f32.mxu0 0.0
      %4883 = vmatmul.mubr.f32.gmra.mrb[0].mxu0 %v4583
      %v4884 = vpop.f32.mrb[0].mxu0
      %v4885 = vadd.f32 0.0, %v4884
      %v4886 = vpop.f32.mrb[0].mxu0
      %4887 = vmatprep.mubr.f32.mxu0 0.0
      %4888 = vmatmul.mubr.f32.gmra.mrb[0].mxu0 %v4586
      %v4889 = vpop.f32.mrb[0].mxu0
      %v4890 = vpop.f32.mrb[0].mxu0
      %4891 = vmatprep.mubr.f32.mxu0 0.0
      %4892 = vmatmul.mubr.f32.gmra.mrb[0].mxu0 %v4589
      %v4893 = vpop.f32.mrb[0].mxu0
      %v4894 = vpop.f32.mrb[0].mxu0
      %4895 = vmatprep.mubr.f32.mxu0 0.0
      %4896 = vmatmul.mubr.f32.gmra.mrb[0].mxu0 %v4592
      %v4897 = vpop.f32.mrb[0].mxu0
      %v4898 = vadd.f32 0.0, %v4897
      %v4899 = vpop.f32.mrb[0].mxu0
      %4900 = vmatprep.mubr.f32.mxu0 0.0
      %4901 = vmatmul.mubr.f32.gmra.mrb[0].mxu0 %v4595
      %v4902 = vpop.f32.mrb[0].mxu0
      %v4903 = vadd.f32 0.0, %v4902
      %v4904 = vpop.f32.mrb[0].mxu0
      %4905 = vmatprep.mubr.f32.mxu0 0.0
      %4906 = vmatmul.mubr.f32.gmra.mrb[0].mxu0 %v4598
      %v4907 = vpop.f32.mrb[0].mxu0
      %v4908 = vpop.f32.mrb[0].mxu0
      %4909 = vmatprep.mubr.f32.mxu0 0.0
      %4910 = vmatmul.mubr.f32.gmra.mrb[0].mxu0 %v4601
      %v4911 = vpop.f32.mrb[0].mxu0
      %v4912 = vpop.f32.mrb[0].mxu0
      %4913 = vmatprep.mubr.f32.mxu0 0.0
      %4914 = vmatmul.mubr.f32.gmra.mrb[0].mxu0 %v4604
      %v4915 = vpop.f32.mrb[0].mxu0
      %v4916 = vadd.f32 0.0, %v4915
      %v4917 = vpop.f32.mrb[0].mxu0
      %4918 = vmatprep.mubr.f32.mxu0 0.0
      %4919 = vmatmul.mubr.f32.gmra.mrb[0].mxu0 %v4607
      %v4920 = vpop.f32.mrb[0].mxu0
      %v4921 = vadd.f32 0.0, %v4920
      %v4922 = vpop.f32.mrb[0].mxu0
      %4923 = vmatprep.mubr.f32.mxu0 0.0
      %4924 = vmatmul.mubr.f32.gmra.mrb[0].mxu0 %v4610
      %v4925 = vpop.f32.mrb[0].mxu0
      %v4926 = vpop.f32.mrb[0].mxu0
      %4927 = vmatprep.mubr.f32.mxu0 0.0
      %4928 = vmatmul.mubr.f32.gmra.mrb[0].mxu0 %v4613
      %v4929 = vpop.f32.mrb[0].mxu0
      %v4930 = vpop.f32.mrb[0].mxu0
      %4931 = vmatprep.mubr.f32.mxu0 0.0
      %4932 = vmatmul.mubr.f32.gmra.mrb[0].mxu0 %v4616
      %v4933 = vpop.f32.mrb[0].mxu0
      %v4934 = vadd.f32 0.0, %v4933
      %v4935 = vpop.f32.mrb[0].mxu0
      %4936 = vmatprep.mubr.f32.mxu0 0.0
      %4937 = vmatmul.mubr.f32.gmra.mrb[0].mxu0 %v4619
      %v4938 = vpop.f32.mrb[0].mxu0
      %v4939 = vadd.f32 0.0, %v4938
      %v4940 = vpop.f32.mrb[0].mxu0
      %4941 = vmatprep.mubr.f32.mxu0 0.0
      %4942 = vmatmul.mubr.f32.gmra.mrb[0].mxu0 %v4622
      %v4943 = vpop.f32.mrb[0].mxu0
      %v4944 = vpop.f32.mrb[0].mxu0
      %4945 = vmatprep.mubr.f32.mxu0 0.0
      %4946 = vmatmul.mubr.f32.gmra.mrb[0].mxu0 %v4625
      %v4947 = vpop.f32.mrb[0].mxu0
      %v4948 = vpop.f32.mrb[0].mxu0
      %4949 = vmatprep.mubr.f32.mxu0 0.0
      %4950 = vmatmul.mubr.f32.gmra.mrb[0].mxu0 %v4628
      %v4951 = vpop.f32.mrb[0].mxu0
      %v4952 = vadd.f32 0.0, %v4951
      %v4953 = vpop.f32.mrb[0].mxu0
      %4954 = vmatprep.mubr.f32.mxu0 0.0
      %4955 = vmatmul.mubr.f32.gmra.mrb[0].mxu0 %v4631
      %v4956 = vpop.f32.mrb[0].mxu0
      %v4957 = vadd.f32 0.0, %v4956
      %v4958 = vpop.f32.mrb[0].mxu0
      %4959 = vmatprep.mubr.f32.mxu0 0.0
      %4960 = vmatmul.mubr.f32.gmra.mrb[0].mxu0 %v4634
      %v4961 = vpop.f32.mrb[0].mxu0
      %v4962 = vpop.f32.mrb[0].mxu0
      %4963 = vmatprep.mubr.f32.mxu0 0.0
      %4964 = vmatmul.mubr.f32.gmra.mrb[0].mxu0 %v4637
      %v4965 = vpop.f32.mrb[0].mxu0
      %v4966 = vpop.f32.mrb[0].mxu0
      %4967 = vmatprep.mubr.f32.mxu0 0.0
      %4968 = vmatmul.mubr.f32.gmra.mrb[0].mxu0 %v4640
      %v4969 = vpop.f32.mrb[0].mxu0
      %v4970 = vadd.f32 0.0, %v4969
      %v4971 = vpop.f32.mrb[0].mxu0
      %4972 = vmatprep.mubr.f32.mxu0 0.0
      %4973 = vmatmul.mubr.f32.gmra.mrb[0].mxu0 %v4643
      %v4974 = vpop.f32.mrb[0].mxu0
      %v4975 = vadd.f32 0.0, %v4974
      %v4976 = vpop.f32.mrb[0].mxu0
      %4977 = vmatprep.mubr.f32.mxu0 0.0
      %4978 = vmatmul.mubr.f32.gmra.mrb[0].mxu0 %v4646
      %v4979 = vpop.f32.mrb[0].mxu0
      %v4980 = vpop.f32.mrb[0].mxu0
      %4981 = vmatprep.mubr.f32.mxu0 0.0
      %4982 = vmatmul.mubr.f32.gmra.mrb[0].mxu0 %v4649
      %v4983 = vpop.f32.mrb[0].mxu0
      %v4984 = vpop.f32.mrb[0].mxu0
      %4985 = vmatprep.mubr.f32.mxu0 0.0
      %4986 = vmatmul.mubr.f32.gmra.mrb[0].mxu0 %v4652
      %v4987 = vpop.f32.mrb[0].mxu0
      %v4988 = vadd.f32 0.0, %v4987
      %v4989 = vpop.f32.mrb[0].mxu0
      %4990 = vmatprep.mubr.f32.mxu0 0.0
      %4991 = vmatmul.mubr.f32.gmra.mrb[0].mxu0 %v4655
      %v4992 = vpop.f32.mrb[0].mxu0
      %v4993 = vadd.f32 0.0, %v4992
      %v4994 = vpop.f32.mrb[0].mxu0
      %4995 = vmatprep.mubr.f32.mxu0 0.0
      %4996 = vmatmul.mubr.f32.gmra.mrb[0].mxu0 %v4658
      %v4997 = vpop.f32.mrb[0].mxu0
      %v4998 = vpop.f32.mrb[0].mxu0
      %4999 = vmatprep.mubr.f32.mxu0 0.0
      %5000 = vmatmul.mubr.f32.gmra.mrb[0].mxu0 %v4661
      %v5001 = vpop.f32.mrb[0].mxu0
      %v5002 = vpop.f32.mrb[0].mxu0
      %5003 = vmatprep.mubr.f32.mxu0 0.0
      %5004 = vmatmul.mubr.f32.gmra.mrb[0].mxu0 %v4664
      %v5005 = vpop.f32.mrb[0].mxu0
      %v5006 = vadd.f32 0.0, %v5005
      %v5007 = vpop.f32.mrb[0].mxu0
      %5008 = vmatprep.mubr.f32.mxu0 0.0
      %5009 = vmatmul.mubr.f32.gmra.mrb[0].mxu0 %v4667
      %v5010 = vpop.f32.mrb[0].mxu0
      %v5011 = vadd.f32 0.0, %v5010
      %v5012 = vpop.f32.mrb[0].mxu0
      %5013 = vmatprep.mubr.f32.mxu0 0.0
      %5014 = vmatmul.mubr.f32.gmra.mrb[0].mxu0 %v4670
      %v5015 = vpop.f32.mrb[0].mxu0
      %v5016 = vpop.f32.mrb[0].mxu0
      %5017 = vmatprep.mubr.f32.mxu0 0.0
      %5018 = vmatmul.mubr.f32.gmra.mrb[0].mxu0 %v4673
      %v5019 = vpop.f32.mrb[0].mxu0
      %v5020 = vpop.f32.mrb[0].mxu0
      %5021 = vmatprep.mubr.f32.mxu0 0.0
      %5022 = vmatmul.mubr.f32.gmra.mrb[0].mxu0 %v4676
      %v5023 = vpop.f32.mrb[0].mxu0
      %v5024 = vadd.f32 0.0, %v5023
      %v5025 = vpop.f32.mrb[0].mxu0
      %5026 = vmatprep.mubr.f32.mxu0 0.0
      %5027 = vmatmul.mubr.f32.gmra.mrb[0].mxu0 %v4679
      %v5028 = vpop.f32.mrb[0].mxu0
      %v5029 = vadd.f32 0.0, %v5028
      %v5030 = vpop.f32.mrb[0].mxu0
      %5031 = vmatprep.mubr.f32.mxu0 0.0
      %5032 = vmatmul.mubr.f32.gmra.mrb[0].mxu0 %v4682
      %v5033 = vpop.f32.mrb[0].mxu0
      %v5034 = vpop.f32.mrb[0].mxu0
      %5035 = vmatprep.mubr.f32.mxu0 0.0
      %5036 = vmatmul.mubr.f32.gmra.mrb[0].mxu0 %v4685
      %v5037 = vpop.f32.mrb[0].mxu0
      %v5038 = vpop.f32.mrb[0].mxu0
      %5039 = vdwg.mxu0
      %v5040 = vadd.f32 %v4397, %v4754
      %v5041 = vadd.f32 %v4398, %v4759
      %v5042 = vadd.f32 %v4399, %v4772
      %v5043 = vadd.f32 %v4400, %v4777
      %v5044 = vadd.f32 %v4401, %v4790
      %v5045 = vadd.f32 %v4402, %v4795
      %v5046 = vadd.f32 %v4403, %v4808
      %v5047 = vadd.f32 %v4404, %v4813
      %v5048 = vadd.f32 %v4405, %v4826
      %v5049 = vadd.f32 %v4406, %v4831
      %v5050 = vadd.f32 %v4407, %v4844
      %v5051 = vadd.f32 %v4408, %v4849
      %v5052 = vadd.f32 %v4409, %v4862
      %v5053 = vadd.f32 %v4410, %v4867
      %v5054 = vadd.f32 %v4411, %v4880
      %v5055 = vadd.f32 %v4412, %v4885
      %v5056 = vadd.f32 %v4413, %v4898
      %v5057 = vadd.f32 %v4414, %v4903
      %v5058 = vadd.f32 %v4415, %v4916
      %v5059 = vadd.f32 %v4416, %v4921
      %v5060 = vadd.f32 %v4417, %v4934
      %v5061 = vadd.f32 %v4418, %v4939
      %v5062 = vadd.f32 %v4419, %v4952
      %v5063 = vadd.f32 %v4420, %v4957
      %v5064 = vadd.f32 %v4421, %v4970
      %v5065 = vadd.f32 %v4422, %v4975
      %v5066 = vadd.f32 %v4423, %v4988
      %v5067 = vadd.f32 %v4424, %v4993
      %v5068 = vadd.f32 %v4425, %v5006
      %v5069 = vadd.f32 %v4426, %v5011
      %v5070 = vadd.f32 %v4427, %v5024
      %v5071 = vadd.f32 %v4428, %v5029
      %v5072 = vld [vmem:[#allocation2 + $0x40] sm:$0xff]
      %v5073 = vld [vmem:[#allocation2 + $0x48] sm:$0xff]
      %v5074 = vld [vmem:[#allocation2 + $0x50] sm:$0xff]
      %v5075 = vld [vmem:[#allocation2 + $0x58] sm:$0xff]
      %v5076 = vld [vmem:[#allocation2 + $0x60] sm:$0xff]
      %v5077 = vld [vmem:[#allocation2 + $0x68] sm:$0xff]
      %v5078 = vld [vmem:[#allocation2 + $0x70] sm:$0xff]
      %v5079 = vld [vmem:[#allocation2 + $0x78] sm:$0xff]
      %v5080 = vld [vmem:[#allocation2 + $0x80] sm:$0xff]
      %v5081 = vld [vmem:[#allocation2 + $0x88] sm:$0xff]
      %v5082 = vld [vmem:[#allocation2 + $0x90] sm:$0xff]
      %v5083 = vld [vmem:[#allocation2 + $0x98] sm:$0xff]
      %v5084 = vld [vmem:[#allocation2 + $0xa0] sm:$0xff]
      %v5085 = vld [vmem:[#allocation2 + $0xa8] sm:$0xff]
      %v5086 = vld [vmem:[#allocation2 + $0xb0] sm:$0xff]
      %v5087 = vld [vmem:[#allocation2 + $0xb8] sm:$0xff]
      %v5088 = vld [vmem:[#allocation2 + $0xc0] sm:$0xff]
      %v5089 = vld [vmem:[#allocation2 + $0xc8] sm:$0xff]
      %v5090 = vld [vmem:[#allocation2 + $0xd0] sm:$0xff]
      %v5091 = vld [vmem:[#allocation2 + $0xd8] sm:$0xff]
      %v5092 = vld [vmem:[#allocation2 + $0xe0] sm:$0xff]
      %v5093 = vld [vmem:[#allocation2 + $0xe8] sm:$0xff]
      %v5094 = vld [vmem:[#allocation2 + $0xf0] sm:$0xff]
      %v5095 = vld [vmem:[#allocation2 + $0xf8] sm:$0xff]
      %v5096 = vld [vmem:[#allocation2 + $0x100] sm:$0xff]
      %v5097 = vld [vmem:[#allocation2 + $0x108] sm:$0xff]
      %v5098 = vld [vmem:[#allocation2 + $0x110] sm:$0xff]
      %v5099 = vld [vmem:[#allocation2 + $0x118] sm:$0xff]
      %v5100 = vld [vmem:[#allocation2 + $0x120] sm:$0xff]
      %v5101 = vld [vmem:[#allocation2 + $0x128] sm:$0xff]
      %v5102 = vld [vmem:[#allocation2 + $0x130] sm:$0xff]
      %v5103 = vld [vmem:[#allocation2 + $0x138] sm:$0xff]
      %v5104 = vld [vmem:[#allocation2 + $0x140] sm:$0xff]
      %v5105 = vld [vmem:[#allocation2 + $0x148] sm:$0xff]
      %v5106 = vld [vmem:[#allocation2 + $0x150] sm:$0xff]
      %v5107 = vld [vmem:[#allocation2 + $0x158] sm:$0xff]
      %v5108 = vld [vmem:[#allocation2 + $0x160] sm:$0xff]
      %v5109 = vld [vmem:[#allocation2 + $0x168] sm:$0xff]
      %v5110 = vld [vmem:[#allocation2 + $0x170] sm:$0xff]
      %v5111 = vld [vmem:[#allocation2 + $0x178] sm:$0xff]
      %v5112 = vld [vmem:[#allocation2 + $0x180] sm:$0xff]
      %v5113 = vld [vmem:[#allocation2 + $0x188] sm:$0xff]
      %v5114 = vld [vmem:[#allocation2 + $0x190] sm:$0xff]
      %v5115 = vld [vmem:[#allocation2 + $0x198] sm:$0xff]
      %v5116 = vld [vmem:[#allocation2 + $0x1a0] sm:$0xff]
      %v5117 = vld [vmem:[#allocation2 + $0x1a8] sm:$0xff]
      %v5118 = vld [vmem:[#allocation2 + $0x1b0] sm:$0xff]
      %v5119 = vld [vmem:[#allocation2 + $0x1b8] sm:$0xff]
      %v5120 = vld [vmem:[#allocation2 + $0x1c0] sm:$0xff]
      %v5121 = vld [vmem:[#allocation2 + $0x1c8] sm:$0xff]
      %v5122 = vld [vmem:[#allocation2 + $0x1d0] sm:$0xff]
      %v5123 = vld [vmem:[#allocation2 + $0x1d8] sm:$0xff]
      %v5124 = vld [vmem:[#allocation2 + $0x1e0] sm:$0xff]
      %v5125 = vld [vmem:[#allocation2 + $0x1e8] sm:$0xff]
      %v5126 = vld [vmem:[#allocation2 + $0x1f0] sm:$0xff]
      %v5127 = vld [vmem:[#allocation2 + $0x1f8] sm:$0xff]
      %v5128 = vld [vmem:[#allocation2 + $0x200] sm:$0xff]
      %v5129 = vld [vmem:[#allocation2 + $0x208] sm:$0xff]
      %v5130 = vld [vmem:[#allocation2 + $0x210] sm:$0xff]
      %v5131 = vld [vmem:[#allocation2 + $0x218] sm:$0xff]
      %v5132 = vld [vmem:[#allocation2 + $0x220] sm:$0xff]
      %v5133 = vld [vmem:[#allocation2 + $0x228] sm:$0xff]
      %v5134 = vld [vmem:[#allocation2 + $0x230] sm:$0xff]
      %v5135 = vld [vmem:[#allocation2 + $0x238] sm:$0xff]
      %s5136 = scalar_lea.vmem %s3, 48
      %v5137 = vld [vmem:[%s5136] sm:$0xff]
      %v5139 = vsel %vm1059, %v5072, 0
      %v5142 = vsel %vm1059, %v5073, 0
      %v5145 = vsel %vm1059, %v5074, 0
      %v5148 = vsel %vm1059, %v5075, 0
      %v5151 = vsel %vm1059, %v5076, 0
      %v5154 = vsel %vm1059, %v5077, 0
      %v5157 = vsel %vm1059, %v5078, 0
      %v5160 = vsel %vm1059, %v5079, 0
      %v5163 = vsel %vm1059, %v5080, 0
      %v5166 = vsel %vm1059, %v5081, 0
      %v5169 = vsel %vm1059, %v5082, 0
      %v5172 = vsel %vm1059, %v5083, 0
      %v5175 = vsel %vm1059, %v5084, 0
      %v5178 = vsel %vm1059, %v5085, 0
      %v5181 = vsel %vm1059, %v5086, 0
      %v5184 = vsel %vm1059, %v5087, 0
      %v5187 = vsel %vm1059, %v5088, 0
      %v5190 = vsel %vm1059, %v5089, 0
      %v5193 = vsel %vm1059, %v5090, 0
      %v5196 = vsel %vm1059, %v5091, 0
      %v5199 = vsel %vm1059, %v5092, 0
      %v5202 = vsel %vm1059, %v5093, 0
      %v5205 = vsel %vm1059, %v5094, 0
      %v5208 = vsel %vm1059, %v5095, 0
      %v5211 = vsel %vm1059, %v5096, 0
      %v5214 = vsel %vm1059, %v5097, 0
      %v5217 = vsel %vm1059, %v5098, 0
      %v5220 = vsel %vm1059, %v5099, 0
      %v5223 = vsel %vm1059, %v5100, 0
      %v5226 = vsel %vm1059, %v5101, 0
      %v5229 = vsel %vm1059, %v5102, 0
      %v5232 = vsel %vm1059, %v5103, 0
      %v5235 = vsel %vm1059, %v5104, 0
      %v5238 = vsel %vm1059, %v5105, 0
      %v5241 = vsel %vm1059, %v5106, 0
      %v5244 = vsel %vm1059, %v5107, 0
      %v5247 = vsel %vm1059, %v5108, 0
      %v5250 = vsel %vm1059, %v5109, 0
      %v5253 = vsel %vm1059, %v5110, 0
      %v5256 = vsel %vm1059, %v5111, 0
      %v5259 = vsel %vm1059, %v5112, 0
      %v5262 = vsel %vm1059, %v5113, 0
      %v5265 = vsel %vm1059, %v5114, 0
      %v5268 = vsel %vm1059, %v5115, 0
      %v5271 = vsel %vm1059, %v5116, 0
      %v5274 = vsel %vm1059, %v5117, 0
      %v5277 = vsel %vm1059, %v5118, 0
      %v5280 = vsel %vm1059, %v5119, 0
      %v5283 = vsel %vm1059, %v5120, 0
      %v5286 = vsel %vm1059, %v5121, 0
      %v5289 = vsel %vm1059, %v5122, 0
      %v5292 = vsel %vm1059, %v5123, 0
      %v5295 = vsel %vm1059, %v5124, 0
      %v5298 = vsel %vm1059, %v5125, 0
      %v5301 = vsel %vm1059, %v5126, 0
      %v5304 = vsel %vm1059, %v5127, 0
      %v5307 = vsel %vm1059, %v5128, 0
      %v5310 = vsel %vm1059, %v5129, 0
      %v5313 = vsel %vm1059, %v5130, 0
      %v5316 = vsel %vm1059, %v5131, 0
      %v5319 = vsel %vm1059, %v5132, 0
      %v5322 = vsel %vm1059, %v5133, 0
      %v5325 = vsel %vm1059, %v5134, 0
      %v5328 = vsel %vm1059, %v5135, 0
      %5330 = vmatprep.subr.mxu0 0.0
      %5331 = vmatpush1.msra.mxu0 %v5137
      %5332 = vmatprep.subr.mxu0 0.0
      %5333 = vmatpush1.msra.mxu0 0.0
      %5334 = vmatprep.subr.mxu0 0.0
      %5335 = vmatpush1.msra.mxu0 0.0
      %5336 = vmatprep.subr.mxu0 0.0
      %5337 = vmatpush1.msra.mxu0 0.0
      %5338 = vmatprep.subr.mxu0 0.0
      %5339 = vmatpush1.msra.mxu0 0.0
      %5340 = vmatprep.subr.mxu0 0.0
      %5341 = vmatpush1.msra.mxu0 0.0
      %5342 = vmatprep.subr.mxu0 0.0
      %5343 = vmatpush1.msra.mxu0 0.0
      %5344 = vmatprep.subr.mxu0 0.0
      %5345 = vmatpush1.msra.mxu0 0.0
      %5346 = vmatprep.subr.mxu0 0.0
      %5347 = vmatpush1.msra.mxu0 0.0
      %5348 = vmatprep.subr.mxu0 0.0
      %5349 = vmatpush1.msra.mxu0 0.0
      %5350 = vmatprep.subr.mxu0 0.0
      %5351 = vmatpush1.msra.mxu0 0.0
      %5352 = vmatprep.subr.mxu0 0.0
      %5353 = vmatpush1.msra.mxu0 0.0
      %5354 = vmatprep.subr.mxu0 0.0
      %5355 = vmatpush1.msra.mxu0 0.0
      %5356 = vmatprep.subr.mxu0 0.0
      %5357 = vmatpush1.msra.mxu0 0.0
      %5358 = vmatprep.subr.mxu0 0.0
      %5359 = vmatpush1.msra.mxu0 0.0
      %5360 = vmatprep.subr.mxu0 0.0
      %5361 = vmatpush1.msra.mxu0 0.0
      %5362 = vmatprep.subr.mxu0 0.0
      %5363 = vmatpush1.msra.mxu0 0.0
      %5364 = vmatprep.subr.mxu0 0.0
      %5365 = vmatpush1.msra.mxu0 0.0
      %5366 = vmatprep.subr.mxu0 0.0
      %5367 = vmatpush1.msra.mxu0 0.0
      %5368 = vmatprep.subr.mxu0 0.0
      %5369 = vmatpush1.msra.mxu0 0.0
      %5370 = vmatprep.subr.mxu0 0.0
      %5371 = vmatpush1.msra.mxu0 0.0
      %5372 = vmatprep.subr.mxu0 0.0
      %5373 = vmatpush1.msra.mxu0 0.0
      %5374 = vmatprep.subr.mxu0 0.0
      %5375 = vmatpush1.msra.mxu0 0.0
      %5376 = vmatprep.subr.mxu0 0.0
      %5377 = vmatpush1.msra.mxu0 0.0
      %5378 = vmatprep.subr.mxu0 0.0
      %5379 = vmatpush1.msra.mxu0 0.0
      %5380 = vmatprep.subr.mxu0 0.0
      %5381 = vmatpush1.msra.mxu0 0.0
      %5382 = vmatprep.subr.mxu0 0.0
      %5383 = vmatpush1.msra.mxu0 0.0
      %5384 = vmatprep.subr.mxu0 0.0
      %5385 = vmatpush1.msra.mxu0 0.0
      %5386 = vmatprep.subr.mxu0 0.0
      %5387 = vmatpush1.msra.mxu0 0.0
      %5388 = vmatprep.subr.mxu0 0.0
      %5389 = vmatpush1.msra.mxu0 0.0
      %5390 = vmatprep.subr.mxu0 0.0
      %5391 = vmatpush1.msra.mxu0 0.0
      %5392 = vmatprep.subr.mxu0 0.0
      %5393 = vmatpush1.msra.mxu0 0.0
      %5394 = vmatprep.mubr.f32.mxu0 0.0
      %5395 = vmatmul.mubr.f32.gmra.mrb[0].mxu0 %v5139
      %v5396 = vpop.f32.mrb[0].mxu0
      %v5397 = vadd.f32 0.0, %v5396
      %v5398 = vpop.f32.mrb[0].mxu0
      %5399 = vmatprep.mubr.f32.mxu0 0.0
      %5400 = vmatmul.mubr.f32.gmra.mrb[0].mxu0 %v5142
      %v5401 = vpop.f32.mrb[0].mxu0
      %v5402 = vadd.f32 0.0, %v5401
      %v5403 = vpop.f32.mrb[0].mxu0
      %5404 = vmatprep.mubr.f32.mxu0 0.0
      %5405 = vmatmul.mubr.f32.gmra.mrb[0].mxu0 %v5145
      %v5406 = vpop.f32.mrb[0].mxu0
      %v5407 = vpop.f32.mrb[0].mxu0
      %5408 = vmatprep.mubr.f32.mxu0 0.0
      %5409 = vmatmul.mubr.f32.gmra.mrb[0].mxu0 %v5148
      %v5410 = vpop.f32.mrb[0].mxu0
      %v5411 = vpop.f32.mrb[0].mxu0
      %5412 = vmatprep.mubr.f32.mxu0 0.0
      %5413 = vmatmul.mubr.f32.gmra.mrb[0].mxu0 %v5151
      %v5414 = vpop.f32.mrb[0].mxu0
      %v5415 = vadd.f32 0.0, %v5414
      %v5416 = vpop.f32.mrb[0].mxu0
      %5417 = vmatprep.mubr.f32.mxu0 0.0
      %5418 = vmatmul.mubr.f32.gmra.mrb[0].mxu0 %v5154
      %v5419 = vpop.f32.mrb[0].mxu0
      %v5420 = vadd.f32 0.0, %v5419
      %v5421 = vpop.f32.mrb[0].mxu0
      %5422 = vmatprep.mubr.f32.mxu0 0.0
      %5423 = vmatmul.mubr.f32.gmra.mrb[0].mxu0 %v5157
      %v5424 = vpop.f32.mrb[0].mxu0
      %v5425 = vpop.f32.mrb[0].mxu0
      %5426 = vmatprep.mubr.f32.mxu0 0.0
      %5427 = vmatmul.mubr.f32.gmra.mrb[0].mxu0 %v5160
      %v5428 = vpop.f32.mrb[0].mxu0
      %v5429 = vpop.f32.mrb[0].mxu0
      %5430 = vmatprep.mubr.f32.mxu0 0.0
      %5431 = vmatmul.mubr.f32.gmra.mrb[0].mxu0 %v5163
      %v5432 = vpop.f32.mrb[0].mxu0
      %v5433 = vadd.f32 0.0, %v5432
      %v5434 = vpop.f32.mrb[0].mxu0
      %5435 = vmatprep.mubr.f32.mxu0 0.0
      %5436 = vmatmul.mubr.f32.gmra.mrb[0].mxu0 %v5166
      %v5437 = vpop.f32.mrb[0].mxu0
      %v5438 = vadd.f32 0.0, %v5437
      %v5439 = vpop.f32.mrb[0].mxu0
      %5440 = vmatprep.mubr.f32.mxu0 0.0
      %5441 = vmatmul.mubr.f32.gmra.mrb[0].mxu0 %v5169
      %v5442 = vpop.f32.mrb[0].mxu0
      %v5443 = vpop.f32.mrb[0].mxu0
      %5444 = vmatprep.mubr.f32.mxu0 0.0
      %5445 = vmatmul.mubr.f32.gmra.mrb[0].mxu0 %v5172
      %v5446 = vpop.f32.mrb[0].mxu0
      %v5447 = vpop.f32.mrb[0].mxu0
      %5448 = vmatprep.mubr.f32.mxu0 0.0
      %5449 = vmatmul.mubr.f32.gmra.mrb[0].mxu0 %v5175
      %v5450 = vpop.f32.mrb[0].mxu0
      %v5451 = vadd.f32 0.0, %v5450
      %v5452 = vpop.f32.mrb[0].mxu0
      %5453 = vmatprep.mubr.f32.mxu0 0.0
      %5454 = vmatmul.mubr.f32.gmra.mrb[0].mxu0 %v5178
      %v5455 = vpop.f32.mrb[0].mxu0
      %v5456 = vadd.f32 0.0, %v5455
      %v5457 = vpop.f32.mrb[0].mxu0
      %5458 = vmatprep.mubr.f32.mxu0 0.0
      %5459 = vmatmul.mubr.f32.gmra.mrb[0].mxu0 %v5181
      %v5460 = vpop.f32.mrb[0].mxu0
      %v5461 = vpop.f32.mrb[0].mxu0
      %5462 = vmatprep.mubr.f32.mxu0 0.0
      %5463 = vmatmul.mubr.f32.gmra.mrb[0].mxu0 %v5184
      %v5464 = vpop.f32.mrb[0].mxu0
      %v5465 = vpop.f32.mrb[0].mxu0
      %5466 = vmatprep.mubr.f32.mxu0 0.0
      %5467 = vmatmul.mubr.f32.gmra.mrb[0].mxu0 %v5187
      %v5468 = vpop.f32.mrb[0].mxu0
      %v5469 = vadd.f32 0.0, %v5468
      %v5470 = vpop.f32.mrb[0].mxu0
      %5471 = vmatprep.mubr.f32.mxu0 0.0
      %5472 = vmatmul.mubr.f32.gmra.mrb[0].mxu0 %v5190
      %v5473 = vpop.f32.mrb[0].mxu0
      %v5474 = vadd.f32 0.0, %v5473
      %v5475 = vpop.f32.mrb[0].mxu0
      %5476 = vmatprep.mubr.f32.mxu0 0.0
      %5477 = vmatmul.mubr.f32.gmra.mrb[0].mxu0 %v5193
      %v5478 = vpop.f32.mrb[0].mxu0
      %v5479 = vpop.f32.mrb[0].mxu0
      %5480 = vmatprep.mubr.f32.mxu0 0.0
      %5481 = vmatmul.mubr.f32.gmra.mrb[0].mxu0 %v5196
      %v5482 = vpop.f32.mrb[0].mxu0
      %v5483 = vpop.f32.mrb[0].mxu0
      %5484 = vmatprep.mubr.f32.mxu0 0.0
      %5485 = vmatmul.mubr.f32.gmra.mrb[0].mxu0 %v5199
      %v5486 = vpop.f32.mrb[0].mxu0
      %v5487 = vadd.f32 0.0, %v5486
      %v5488 = vpop.f32.mrb[0].mxu0
      %5489 = vmatprep.mubr.f32.mxu0 0.0
      %5490 = vmatmul.mubr.f32.gmra.mrb[0].mxu0 %v5202
      %v5491 = vpop.f32.mrb[0].mxu0
      %v5492 = vadd.f32 0.0, %v5491
      %v5493 = vpop.f32.mrb[0].mxu0
      %5494 = vmatprep.mubr.f32.mxu0 0.0
      %5495 = vmatmul.mubr.f32.gmra.mrb[0].mxu0 %v5205
      %v5496 = vpop.f32.mrb[0].mxu0
      %v5497 = vpop.f32.mrb[0].mxu0
      %5498 = vmatprep.mubr.f32.mxu0 0.0
      %5499 = vmatmul.mubr.f32.gmra.mrb[0].mxu0 %v5208
      %v5500 = vpop.f32.mrb[0].mxu0
      %v5501 = vpop.f32.mrb[0].mxu0
      %5502 = vmatprep.mubr.f32.mxu0 0.0
      %5503 = vmatmul.mubr.f32.gmra.mrb[0].mxu0 %v5211
      %v5504 = vpop.f32.mrb[0].mxu0
      %v5505 = vadd.f32 0.0, %v5504
      %v5506 = vpop.f32.mrb[0].mxu0
      %5507 = vmatprep.mubr.f32.mxu0 0.0
      %5508 = vmatmul.mubr.f32.gmra.mrb[0].mxu0 %v5214
      %v5509 = vpop.f32.mrb[0].mxu0
      %v5510 = vadd.f32 0.0, %v5509
      %v5511 = vpop.f32.mrb[0].mxu0
      %5512 = vmatprep.mubr.f32.mxu0 0.0
      %5513 = vmatmul.mubr.f32.gmra.mrb[0].mxu0 %v5217
      %v5514 = vpop.f32.mrb[0].mxu0
      %v5515 = vpop.f32.mrb[0].mxu0
      %5516 = vmatprep.mubr.f32.mxu0 0.0
      %5517 = vmatmul.mubr.f32.gmra.mrb[0].mxu0 %v5220
      %v5518 = vpop.f32.mrb[0].mxu0
      %v5519 = vpop.f32.mrb[0].mxu0
      %5520 = vmatprep.mubr.f32.mxu0 0.0
      %5521 = vmatmul.mubr.f32.gmra.mrb[0].mxu0 %v5223
      %v5522 = vpop.f32.mrb[0].mxu0
      %v5523 = vadd.f32 0.0, %v5522
      %v5524 = vpop.f32.mrb[0].mxu0
      %5525 = vmatprep.mubr.f32.mxu0 0.0
      %5526 = vmatmul.mubr.f32.gmra.mrb[0].mxu0 %v5226
      %v5527 = vpop.f32.mrb[0].mxu0
      %v5528 = vadd.f32 0.0, %v5527
      %v5529 = vpop.f32.mrb[0].mxu0
      %5530 = vmatprep.mubr.f32.mxu0 0.0
      %5531 = vmatmul.mubr.f32.gmra.mrb[0].mxu0 %v5229
      %v5532 = vpop.f32.mrb[0].mxu0
      %v5533 = vpop.f32.mrb[0].mxu0
      %5534 = vmatprep.mubr.f32.mxu0 0.0
      %5535 = vmatmul.mubr.f32.gmra.mrb[0].mxu0 %v5232
      %v5536 = vpop.f32.mrb[0].mxu0
      %v5537 = vpop.f32.mrb[0].mxu0
      %5538 = vmatprep.mubr.f32.mxu0 0.0
      %5539 = vmatmul.mubr.f32.gmra.mrb[0].mxu0 %v5235
      %v5540 = vpop.f32.mrb[0].mxu0
      %v5541 = vadd.f32 0.0, %v5540
      %v5542 = vpop.f32.mrb[0].mxu0
      %5543 = vmatprep.mubr.f32.mxu0 0.0
      %5544 = vmatmul.mubr.f32.gmra.mrb[0].mxu0 %v5238
      %v5545 = vpop.f32.mrb[0].mxu0
      %v5546 = vadd.f32 0.0, %v5545
      %v5547 = vpop.f32.mrb[0].mxu0
      %5548 = vmatprep.mubr.f32.mxu0 0.0
      %5549 = vmatmul.mubr.f32.gmra.mrb[0].mxu0 %v5241
      %v5550 = vpop.f32.mrb[0].mxu0
      %v5551 = vpop.f32.mrb[0].mxu0
      %5552 = vmatprep.mubr.f32.mxu0 0.0
      %5553 = vmatmul.mubr.f32.gmra.mrb[0].mxu0 %v5244
      %v5554 = vpop.f32.mrb[0].mxu0
      %v5555 = vpop.f32.mrb[0].mxu0
      %5556 = vmatprep.mubr.f32.mxu0 0.0
      %5557 = vmatmul.mubr.f32.gmra.mrb[0].mxu0 %v5247
      %v5558 = vpop.f32.mrb[0].mxu0
      %v5559 = vadd.f32 0.0, %v5558
      %v5560 = vpop.f32.mrb[0].mxu0
      %5561 = vmatprep.mubr.f32.mxu0 0.0
      %5562 = vmatmul.mubr.f32.gmra.mrb[0].mxu0 %v5250
      %v5563 = vpop.f32.mrb[0].mxu0
      %v5564 = vadd.f32 0.0, %v5563
      %v5565 = vpop.f32.mrb[0].mxu0
      %5566 = vmatprep.mubr.f32.mxu0 0.0
      %5567 = vmatmul.mubr.f32.gmra.mrb[0].mxu0 %v5253
      %v5568 = vpop.f32.mrb[0].mxu0
      %v5569 = vpop.f32.mrb[0].mxu0
      %5570 = vmatprep.mubr.f32.mxu0 0.0
      %5571 = vmatmul.mubr.f32.gmra.mrb[0].mxu0 %v5256
      %v5572 = vpop.f32.mrb[0].mxu0
      %v5573 = vpop.f32.mrb[0].mxu0
      %5574 = vmatprep.mubr.f32.mxu0 0.0
      %5575 = vmatmul.mubr.f32.gmra.mrb[0].mxu0 %v5259
      %v5576 = vpop.f32.mrb[0].mxu0
      %v5577 = vadd.f32 0.0, %v5576
      %v5578 = vpop.f32.mrb[0].mxu0
      %5579 = vmatprep.mubr.f32.mxu0 0.0
      %5580 = vmatmul.mubr.f32.gmra.mrb[0].mxu0 %v5262
      %v5581 = vpop.f32.mrb[0].mxu0
      %v5582 = vadd.f32 0.0, %v5581
      %v5583 = vpop.f32.mrb[0].mxu0
      %5584 = vmatprep.mubr.f32.mxu0 0.0
      %5585 = vmatmul.mubr.f32.gmra.mrb[0].mxu0 %v5265
      %v5586 = vpop.f32.mrb[0].mxu0
      %v5587 = vpop.f32.mrb[0].mxu0
      %5588 = vmatprep.mubr.f32.mxu0 0.0
      %5589 = vmatmul.mubr.f32.gmra.mrb[0].mxu0 %v5268
      %v5590 = vpop.f32.mrb[0].mxu0
      %v5591 = vpop.f32.mrb[0].mxu0
      %5592 = vmatprep.mubr.f32.mxu0 0.0
      %5593 = vmatmul.mubr.f32.gmra.mrb[0].mxu0 %v5271
      %v5594 = vpop.f32.mrb[0].mxu0
      %v5595 = vadd.f32 0.0, %v5594
      %v5596 = vpop.f32.mrb[0].mxu0
      %5597 = vmatprep.mubr.f32.mxu0 0.0
      %5598 = vmatmul.mubr.f32.gmra.mrb[0].mxu0 %v5274
      %v5599 = vpop.f32.mrb[0].mxu0
      %v5600 = vadd.f32 0.0, %v5599
      %v5601 = vpop.f32.mrb[0].mxu0
      %5602 = vmatprep.mubr.f32.mxu0 0.0
      %5603 = vmatmul.mubr.f32.gmra.mrb[0].mxu0 %v5277
      %v5604 = vpop.f32.mrb[0].mxu0
      %v5605 = vpop.f32.mrb[0].mxu0
      %5606 = vmatprep.mubr.f32.mxu0 0.0
      %5607 = vmatmul.mubr.f32.gmra.mrb[0].mxu0 %v5280
      %v5608 = vpop.f32.mrb[0].mxu0
      %v5609 = vpop.f32.mrb[0].mxu0
      %5610 = vmatprep.mubr.f32.mxu0 0.0
      %5611 = vmatmul.mubr.f32.gmra.mrb[0].mxu0 %v5283
      %v5612 = vpop.f32.mrb[0].mxu0
      %v5613 = vadd.f32 0.0, %v5612
      %v5614 = vpop.f32.mrb[0].mxu0
      %5615 = vmatprep.mubr.f32.mxu0 0.0
      %5616 = vmatmul.mubr.f32.gmra.mrb[0].mxu0 %v5286
      %v5617 = vpop.f32.mrb[0].mxu0
      %v5618 = vadd.f32 0.0, %v5617
      %v5619 = vpop.f32.mrb[0].mxu0
      %5620 = vmatprep.mubr.f32.mxu0 0.0
      %5621 = vmatmul.mubr.f32.gmra.mrb[0].mxu0 %v5289
      %v5622 = vpop.f32.mrb[0].mxu0
      %v5623 = vpop.f32.mrb[0].mxu0
      %5624 = vmatprep.mubr.f32.mxu0 0.0
      %5625 = vmatmul.mubr.f32.gmra.mrb[0].mxu0 %v5292
      %v5626 = vpop.f32.mrb[0].mxu0
      %v5627 = vpop.f32.mrb[0].mxu0
      %5628 = vmatprep.mubr.f32.mxu0 0.0
      %5629 = vmatmul.mubr.f32.gmra.mrb[0].mxu0 %v5295
      %v5630 = vpop.f32.mrb[0].mxu0
      %v5631 = vadd.f32 0.0, %v5630
      %v5632 = vpop.f32.mrb[0].mxu0
      %5633 = vmatprep.mubr.f32.mxu0 0.0
      %5634 = vmatmul.mubr.f32.gmra.mrb[0].mxu0 %v5298
      %v5635 = vpop.f32.mrb[0].mxu0
      %v5636 = vadd.f32 0.0, %v5635
      %v5637 = vpop.f32.mrb[0].mxu0
      %5638 = vmatprep.mubr.f32.mxu0 0.0
      %5639 = vmatmul.mubr.f32.gmra.mrb[0].mxu0 %v5301
      %v5640 = vpop.f32.mrb[0].mxu0
      %v5641 = vpop.f32.mrb[0].mxu0
      %5642 = vmatprep.mubr.f32.mxu0 0.0
      %5643 = vmatmul.mubr.f32.gmra.mrb[0].mxu0 %v5304
      %v5644 = vpop.f32.mrb[0].mxu0
      %v5645 = vpop.f32.mrb[0].mxu0
      %5646 = vmatprep.mubr.f32.mxu0 0.0
      %5647 = vmatmul.mubr.f32.gmra.mrb[0].mxu0 %v5307
      %v5648 = vpop.f32.mrb[0].mxu0
      %v5649 = vadd.f32 0.0, %v5648
      %v5650 = vpop.f32.mrb[0].mxu0
      %5651 = vmatprep.mubr.f32.mxu0 0.0
      %5652 = vmatmul.mubr.f32.gmra.mrb[0].mxu0 %v5310
      %v5653 = vpop.f32.mrb[0].mxu0
      %v5654 = vadd.f32 0.0, %v5653
      %v5655 = vpop.f32.mrb[0].mxu0
      %5656 = vmatprep.mubr.f32.mxu0 0.0
      %5657 = vmatmul.mubr.f32.gmra.mrb[0].mxu0 %v5313
      %v5658 = vpop.f32.mrb[0].mxu0
      %v5659 = vpop.f32.mrb[0].mxu0
      %5660 = vmatprep.mubr.f32.mxu0 0.0
      %5661 = vmatmul.mubr.f32.gmra.mrb[0].mxu0 %v5316
      %v5662 = vpop.f32.mrb[0].mxu0
      %v5663 = vpop.f32.mrb[0].mxu0
      %5664 = vmatprep.mubr.f32.mxu0 0.0
      %5665 = vmatmul.mubr.f32.gmra.mrb[0].mxu0 %v5319
      %v5666 = vpop.f32.mrb[0].mxu0
      %v5667 = vadd.f32 0.0, %v5666
      %v5668 = vpop.f32.mrb[0].mxu0
      %5669 = vmatprep.mubr.f32.mxu0 0.0
      %5670 = vmatmul.mubr.f32.gmra.mrb[0].mxu0 %v5322
      %v5671 = vpop.f32.mrb[0].mxu0
      %v5672 = vadd.f32 0.0, %v5671
      %v5673 = vpop.f32.mrb[0].mxu0
      %5674 = vmatprep.mubr.f32.mxu0 0.0
      %5675 = vmatmul.mubr.f32.gmra.mrb[0].mxu0 %v5325
      %v5676 = vpop.f32.mrb[0].mxu0
      %v5677 = vpop.f32.mrb[0].mxu0
      %5678 = vmatprep.mubr.f32.mxu0 0.0
      %5679 = vmatmul.mubr.f32.gmra.mrb[0].mxu0 %v5328
      %v5680 = vpop.f32.mrb[0].mxu0
      %v5681 = vpop.f32.mrb[0].mxu0
      %5682 = vdwg.mxu0
      %v5683 = vadd.f32 %v5040, %v5397
      %v5684 = vadd.f32 %v5041, %v5402
      %v5685 = vadd.f32 %v5042, %v5415
      %v5686 = vadd.f32 %v5043, %v5420
      %v5687 = vadd.f32 %v5044, %v5433
      %v5688 = vadd.f32 %v5045, %v5438
      %v5689 = vadd.f32 %v5046, %v5451
      %v5690 = vadd.f32 %v5047, %v5456
      %v5691 = vadd.f32 %v5048, %v5469
      %v5692 = vadd.f32 %v5049, %v5474
      %v5693 = vadd.f32 %v5050, %v5487
      %v5694 = vadd.f32 %v5051, %v5492
      %v5695 = vadd.f32 %v5052, %v5505
      %v5696 = vadd.f32 %v5053, %v5510
      %v5697 = vadd.f32 %v5054, %v5523
      %v5698 = vadd.f32 %v5055, %v5528
      %v5699 = vadd.f32 %v5056, %v5541
      %v5700 = vadd.f32 %v5057, %v5546
      %v5701 = vadd.f32 %v5058, %v5559
      %v5702 = vadd.f32 %v5059, %v5564
      %v5703 = vadd.f32 %v5060, %v5577
      %v5704 = vadd.f32 %v5061, %v5582
      %v5705 = vadd.f32 %v5062, %v5595
      %v5706 = vadd.f32 %v5063, %v5600
      %v5707 = vadd.f32 %v5064, %v5613
      %v5708 = vadd.f32 %v5065, %v5618
      %v5709 = vadd.f32 %v5066, %v5631
      %v5710 = vadd.f32 %v5067, %v5636
      %v5711 = vadd.f32 %v5068, %v5649
      %v5712 = vadd.f32 %v5069, %v5654
      %v5713 = vadd.f32 %v5070, %v5667
      %v5714 = vadd.f32 %v5071, %v5672
      %v5715 = vld [vmem:[#allocation2 + $0x41] sm:$0xff]
      %v5716 = vld [vmem:[#allocation2 + $0x49] sm:$0xff]
      %v5717 = vld [vmem:[#allocation2 + $0x51] sm:$0xff]
      %v5718 = vld [vmem:[#allocation2 + $0x59] sm:$0xff]
      %v5719 = vld [vmem:[#allocation2 + $0x61] sm:$0xff]
      %v5720 = vld [vmem:[#allocation2 + $0x69] sm:$0xff]
      %v5721 = vld [vmem:[#allocation2 + $0x71] sm:$0xff]
      %v5722 = vld [vmem:[#allocation2 + $0x79] sm:$0xff]
      %v5723 = vld [vmem:[#allocation2 + $0x81] sm:$0xff]
      %v5724 = vld [vmem:[#allocation2 + $0x89] sm:$0xff]
      %v5725 = vld [vmem:[#allocation2 + $0x91] sm:$0xff]
      %v5726 = vld [vmem:[#allocation2 + $0x99] sm:$0xff]
      %v5727 = vld [vmem:[#allocation2 + $0xa1] sm:$0xff]
      %v5728 = vld [vmem:[#allocation2 + $0xa9] sm:$0xff]
      %v5729 = vld [vmem:[#allocation2 + $0xb1] sm:$0xff]
      %v5730 = vld [vmem:[#allocation2 + $0xb9] sm:$0xff]
      %v5731 = vld [vmem:[#allocation2 + $0xc1] sm:$0xff]
      %v5732 = vld [vmem:[#allocation2 + $0xc9] sm:$0xff]
      %v5733 = vld [vmem:[#allocation2 + $0xd1] sm:$0xff]
      %v5734 = vld [vmem:[#allocation2 + $0xd9] sm:$0xff]
      %v5735 = vld [vmem:[#allocation2 + $0xe1] sm:$0xff]
      %v5736 = vld [vmem:[#allocation2 + $0xe9] sm:$0xff]
      %v5737 = vld [vmem:[#allocation2 + $0xf1] sm:$0xff]
      %v5738 = vld [vmem:[#allocation2 + $0xf9] sm:$0xff]
      %v5739 = vld [vmem:[#allocation2 + $0x101] sm:$0xff]
      %v5740 = vld [vmem:[#allocation2 + $0x109] sm:$0xff]
      %v5741 = vld [vmem:[#allocation2 + $0x111] sm:$0xff]
      %v5742 = vld [vmem:[#allocation2 + $0x119] sm:$0xff]
      %v5743 = vld [vmem:[#allocation2 + $0x121] sm:$0xff]
      %v5744 = vld [vmem:[#allocation2 + $0x129] sm:$0xff]
      %v5745 = vld [vmem:[#allocation2 + $0x131] sm:$0xff]
      %v5746 = vld [vmem:[#allocation2 + $0x139] sm:$0xff]
      %v5747 = vld [vmem:[#allocation2 + $0x141] sm:$0xff]
      %v5748 = vld [vmem:[#allocation2 + $0x149] sm:$0xff]
      %v5749 = vld [vmem:[#allocation2 + $0x151] sm:$0xff]
      %v5750 = vld [vmem:[#allocation2 + $0x159] sm:$0xff]
      %v5751 = vld [vmem:[#allocation2 + $0x161] sm:$0xff]
      %v5752 = vld [vmem:[#allocation2 + $0x169] sm:$0xff]
      %v5753 = vld [vmem:[#allocation2 + $0x171] sm:$0xff]
      %v5754 = vld [vmem:[#allocation2 + $0x179] sm:$0xff]
      %v5755 = vld [vmem:[#allocation2 + $0x181] sm:$0xff]
      %v5756 = vld [vmem:[#allocation2 + $0x189] sm:$0xff]
      %v5757 = vld [vmem:[#allocation2 + $0x191] sm:$0xff]
      %v5758 = vld [vmem:[#allocation2 + $0x199] sm:$0xff]
      %v5759 = vld [vmem:[#allocation2 + $0x1a1] sm:$0xff]
      %v5760 = vld [vmem:[#allocation2 + $0x1a9] sm:$0xff]
      %v5761 = vld [vmem:[#allocation2 + $0x1b1] sm:$0xff]
      %v5762 = vld [vmem:[#allocation2 + $0x1b9] sm:$0xff]
      %v5763 = vld [vmem:[#allocation2 + $0x1c1] sm:$0xff]
      %v5764 = vld [vmem:[#allocation2 + $0x1c9] sm:$0xff]
      %v5765 = vld [vmem:[#allocation2 + $0x1d1] sm:$0xff]
      %v5766 = vld [vmem:[#allocation2 + $0x1d9] sm:$0xff]
      %v5767 = vld [vmem:[#allocation2 + $0x1e1] sm:$0xff]
      %v5768 = vld [vmem:[#allocation2 + $0x1e9] sm:$0xff]
      %v5769 = vld [vmem:[#allocation2 + $0x1f1] sm:$0xff]
      %v5770 = vld [vmem:[#allocation2 + $0x1f9] sm:$0xff]
      %v5771 = vld [vmem:[#allocation2 + $0x201] sm:$0xff]
      %v5772 = vld [vmem:[#allocation2 + $0x209] sm:$0xff]
      %v5773 = vld [vmem:[#allocation2 + $0x211] sm:$0xff]
      %v5774 = vld [vmem:[#allocation2 + $0x219] sm:$0xff]
      %v5775 = vld [vmem:[#allocation2 + $0x221] sm:$0xff]
      %v5776 = vld [vmem:[#allocation2 + $0x229] sm:$0xff]
      %v5777 = vld [vmem:[#allocation2 + $0x231] sm:$0xff]
      %v5778 = vld [vmem:[#allocation2 + $0x239] sm:$0xff]
      %s5779 = scalar_lea.vmem %s3, 56
      %v5780 = vld [vmem:[%s5779] sm:$0xff]
      %v5782 = vsel %vm1059, %v5715, 0
      %v5785 = vsel %vm1059, %v5716, 0
      %v5788 = vsel %vm1059, %v5717, 0
      %v5791 = vsel %vm1059, %v5718, 0
      %v5794 = vsel %vm1059, %v5719, 0
      %v5797 = vsel %vm1059, %v5720, 0
      %v5800 = vsel %vm1059, %v5721, 0
      %v5803 = vsel %vm1059, %v5722, 0
      %v5806 = vsel %vm1059, %v5723, 0
      %v5809 = vsel %vm1059, %v5724, 0
      %v5812 = vsel %vm1059, %v5725, 0
      %v5815 = vsel %vm1059, %v5726, 0
      %v5818 = vsel %vm1059, %v5727, 0
      %v5821 = vsel %vm1059, %v5728, 0
      %v5824 = vsel %vm1059, %v5729, 0
      %v5827 = vsel %vm1059, %v5730, 0
      %v5830 = vsel %vm1059, %v5731, 0
      %v5833 = vsel %vm1059, %v5732, 0
      %v5836 = vsel %vm1059, %v5733, 0
      %v5839 = vsel %vm1059, %v5734, 0
      %v5842 = vsel %vm1059, %v5735, 0
      %v5845 = vsel %vm1059, %v5736, 0
      %v5848 = vsel %vm1059, %v5737, 0
      %v5851 = vsel %vm1059, %v5738, 0
      %v5854 = vsel %vm1059, %v5739, 0
      %v5857 = vsel %vm1059, %v5740, 0
      %v5860 = vsel %vm1059, %v5741, 0
      %v5863 = vsel %vm1059, %v5742, 0
      %v5866 = vsel %vm1059, %v5743, 0
      %v5869 = vsel %vm1059, %v5744, 0
      %v5872 = vsel %vm1059, %v5745, 0
      %v5875 = vsel %vm1059, %v5746, 0
      %v5878 = vsel %vm1059, %v5747, 0
      %v5881 = vsel %vm1059, %v5748, 0
      %v5884 = vsel %vm1059, %v5749, 0
      %v5887 = vsel %vm1059, %v5750, 0
      %v5890 = vsel %vm1059, %v5751, 0
      %v5893 = vsel %vm1059, %v5752, 0
      %v5896 = vsel %vm1059, %v5753, 0
      %v5899 = vsel %vm1059, %v5754, 0
      %v5902 = vsel %vm1059, %v5755, 0
      %v5905 = vsel %vm1059, %v5756, 0
      %v5908 = vsel %vm1059, %v5757, 0
      %v5911 = vsel %vm1059, %v5758, 0
      %v5914 = vsel %vm1059, %v5759, 0
      %v5917 = vsel %vm1059, %v5760, 0
      %v5920 = vsel %vm1059, %v5761, 0
      %v5923 = vsel %vm1059, %v5762, 0
      %v5926 = vsel %vm1059, %v5763, 0
      %v5929 = vsel %vm1059, %v5764, 0
      %v5932 = vsel %vm1059, %v5765, 0
      %v5935 = vsel %vm1059, %v5766, 0
      %v5938 = vsel %vm1059, %v5767, 0
      %v5941 = vsel %vm1059, %v5768, 0
      %v5944 = vsel %vm1059, %v5769, 0
      %v5947 = vsel %vm1059, %v5770, 0
      %v5950 = vsel %vm1059, %v5771, 0
      %v5953 = vsel %vm1059, %v5772, 0
      %v5956 = vsel %vm1059, %v5773, 0
      %v5959 = vsel %vm1059, %v5774, 0
      %v5962 = vsel %vm1059, %v5775, 0
      %v5965 = vsel %vm1059, %v5776, 0
      %v5968 = vsel %vm1059, %v5777, 0
      %v5971 = vsel %vm1059, %v5778, 0
      %5973 = vmatprep.subr.mxu0 0.0
      %5974 = vmatpush1.msra.mxu0 %v5780
      %5975 = vmatprep.subr.mxu0 0.0
      %5976 = vmatpush1.msra.mxu0 0.0
      %5977 = vmatprep.subr.mxu0 0.0
      %5978 = vmatpush1.msra.mxu0 0.0
      %5979 = vmatprep.subr.mxu0 0.0
      %5980 = vmatpush1.msra.mxu0 0.0
      %5981 = vmatprep.subr.mxu0 0.0
      %5982 = vmatpush1.msra.mxu0 0.0
      %5983 = vmatprep.subr.mxu0 0.0
      %5984 = vmatpush1.msra.mxu0 0.0
      %5985 = vmatprep.subr.mxu0 0.0
      %5986 = vmatpush1.msra.mxu0 0.0
      %5987 = vmatprep.subr.mxu0 0.0
      %5988 = vmatpush1.msra.mxu0 0.0
      %5989 = vmatprep.subr.mxu0 0.0
      %5990 = vmatpush1.msra.mxu0 0.0
      %5991 = vmatprep.subr.mxu0 0.0
      %5992 = vmatpush1.msra.mxu0 0.0
      %5993 = vmatprep.subr.mxu0 0.0
      %5994 = vmatpush1.msra.mxu0 0.0
      %5995 = vmatprep.subr.mxu0 0.0
      %5996 = vmatpush1.msra.mxu0 0.0
      %5997 = vmatprep.subr.mxu0 0.0
      %5998 = vmatpush1.msra.mxu0 0.0
      %5999 = vmatprep.subr.mxu0 0.0
      %6000 = vmatpush1.msra.mxu0 0.0
      %6001 = vmatprep.subr.mxu0 0.0
      %6002 = vmatpush1.msra.mxu0 0.0
      %6003 = vmatprep.subr.mxu0 0.0
      %6004 = vmatpush1.msra.mxu0 0.0
      %6005 = vmatprep.subr.mxu0 0.0
      %6006 = vmatpush1.msra.mxu0 0.0
      %6007 = vmatprep.subr.mxu0 0.0
      %6008 = vmatpush1.msra.mxu0 0.0
      %6009 = vmatprep.subr.mxu0 0.0
      %6010 = vmatpush1.msra.mxu0 0.0
      %6011 = vmatprep.subr.mxu0 0.0
      %6012 = vmatpush1.msra.mxu0 0.0
      %6013 = vmatprep.subr.mxu0 0.0
      %6014 = vmatpush1.msra.mxu0 0.0
      %6015 = vmatprep.subr.mxu0 0.0
      %6016 = vmatpush1.msra.mxu0 0.0
      %6017 = vmatprep.subr.mxu0 0.0
      %6018 = vmatpush1.msra.mxu0 0.0
      %6019 = vmatprep.subr.mxu0 0.0
      %6020 = vmatpush1.msra.mxu0 0.0
      %6021 = vmatprep.subr.mxu0 0.0
      %6022 = vmatpush1.msra.mxu0 0.0
      %6023 = vmatprep.subr.mxu0 0.0
      %6024 = vmatpush1.msra.mxu0 0.0
      %6025 = vmatprep.subr.mxu0 0.0
      %6026 = vmatpush1.msra.mxu0 0.0
      %6027 = vmatprep.subr.mxu0 0.0
      %6028 = vmatpush1.msra.mxu0 0.0
      %6029 = vmatprep.subr.mxu0 0.0
      %6030 = vmatpush1.msra.mxu0 0.0
      %6031 = vmatprep.subr.mxu0 0.0
      %6032 = vmatpush1.msra.mxu0 0.0
      %6033 = vmatprep.subr.mxu0 0.0
      %6034 = vmatpush1.msra.mxu0 0.0
      %6035 = vmatprep.subr.mxu0 0.0
      %6036 = vmatpush1.msra.mxu0 0.0
      %6037 = vmatprep.mubr.f32.mxu0 0.0
      %6038 = vmatmul.mubr.f32.gmra.mrb[0].mxu0 %v5782
      %v6039 = vpop.f32.mrb[0].mxu0
      %v6040 = vadd.f32 0.0, %v6039
      %v6041 = vpop.f32.mrb[0].mxu0
      %6042 = vmatprep.mubr.f32.mxu0 0.0
      %6043 = vmatmul.mubr.f32.gmra.mrb[0].mxu0 %v5785
      %v6044 = vpop.f32.mrb[0].mxu0
      %v6045 = vadd.f32 0.0, %v6044
      %v6046 = vpop.f32.mrb[0].mxu0
      %6047 = vmatprep.mubr.f32.mxu0 0.0
      %6048 = vmatmul.mubr.f32.gmra.mrb[0].mxu0 %v5788
      %v6049 = vpop.f32.mrb[0].mxu0
      %v6050 = vpop.f32.mrb[0].mxu0
      %6051 = vmatprep.mubr.f32.mxu0 0.0
      %6052 = vmatmul.mubr.f32.gmra.mrb[0].mxu0 %v5791
      %v6053 = vpop.f32.mrb[0].mxu0
      %v6054 = vpop.f32.mrb[0].mxu0
      %6055 = vmatprep.mubr.f32.mxu0 0.0
      %6056 = vmatmul.mubr.f32.gmra.mrb[0].mxu0 %v5794
      %v6057 = vpop.f32.mrb[0].mxu0
      %v6058 = vadd.f32 0.0, %v6057
      %v6059 = vpop.f32.mrb[0].mxu0
      %6060 = vmatprep.mubr.f32.mxu0 0.0
      %6061 = vmatmul.mubr.f32.gmra.mrb[0].mxu0 %v5797
      %v6062 = vpop.f32.mrb[0].mxu0
      %v6063 = vadd.f32 0.0, %v6062
      %v6064 = vpop.f32.mrb[0].mxu0
      %6065 = vmatprep.mubr.f32.mxu0 0.0
      %6066 = vmatmul.mubr.f32.gmra.mrb[0].mxu0 %v5800
      %v6067 = vpop.f32.mrb[0].mxu0
      %v6068 = vpop.f32.mrb[0].mxu0
      %6069 = vmatprep.mubr.f32.mxu0 0.0
      %6070 = vmatmul.mubr.f32.gmra.mrb[0].mxu0 %v5803
      %v6071 = vpop.f32.mrb[0].mxu0
      %v6072 = vpop.f32.mrb[0].mxu0
      %6073 = vmatprep.mubr.f32.mxu0 0.0
      %6074 = vmatmul.mubr.f32.gmra.mrb[0].mxu0 %v5806
      %v6075 = vpop.f32.mrb[0].mxu0
      %v6076 = vadd.f32 0.0, %v6075
      %v6077 = vpop.f32.mrb[0].mxu0
      %6078 = vmatprep.mubr.f32.mxu0 0.0
      %6079 = vmatmul.mubr.f32.gmra.mrb[0].mxu0 %v5809
      %v6080 = vpop.f32.mrb[0].mxu0
      %v6081 = vadd.f32 0.0, %v6080
      %v6082 = vpop.f32.mrb[0].mxu0
      %6083 = vmatprep.mubr.f32.mxu0 0.0
      %6084 = vmatmul.mubr.f32.gmra.mrb[0].mxu0 %v5812
      %v6085 = vpop.f32.mrb[0].mxu0
      %v6086 = vpop.f32.mrb[0].mxu0
      %6087 = vmatprep.mubr.f32.mxu0 0.0
      %6088 = vmatmul.mubr.f32.gmra.mrb[0].mxu0 %v5815
      %v6089 = vpop.f32.mrb[0].mxu0
      %v6090 = vpop.f32.mrb[0].mxu0
      %6091 = vmatprep.mubr.f32.mxu0 0.0
      %6092 = vmatmul.mubr.f32.gmra.mrb[0].mxu0 %v5818
      %v6093 = vpop.f32.mrb[0].mxu0
      %v6094 = vadd.f32 0.0, %v6093
      %v6095 = vpop.f32.mrb[0].mxu0
      %6096 = vmatprep.mubr.f32.mxu0 0.0
      %6097 = vmatmul.mubr.f32.gmra.mrb[0].mxu0 %v5821
      %v6098 = vpop.f32.mrb[0].mxu0
      %v6099 = vadd.f32 0.0, %v6098
      %v6100 = vpop.f32.mrb[0].mxu0
      %6101 = vmatprep.mubr.f32.mxu0 0.0
      %6102 = vmatmul.mubr.f32.gmra.mrb[0].mxu0 %v5824
      %v6103 = vpop.f32.mrb[0].mxu0
      %v6104 = vpop.f32.mrb[0].mxu0
      %6105 = vmatprep.mubr.f32.mxu0 0.0
      %6106 = vmatmul.mubr.f32.gmra.mrb[0].mxu0 %v5827
      %v6107 = vpop.f32.mrb[0].mxu0
      %v6108 = vpop.f32.mrb[0].mxu0
      %6109 = vmatprep.mubr.f32.mxu0 0.0
      %6110 = vmatmul.mubr.f32.gmra.mrb[0].mxu0 %v5830
      %v6111 = vpop.f32.mrb[0].mxu0
      %v6112 = vadd.f32 0.0, %v6111
      %v6113 = vpop.f32.mrb[0].mxu0
      %6114 = vmatprep.mubr.f32.mxu0 0.0
      %6115 = vmatmul.mubr.f32.gmra.mrb[0].mxu0 %v5833
      %v6116 = vpop.f32.mrb[0].mxu0
      %v6117 = vadd.f32 0.0, %v6116
      %v6118 = vpop.f32.mrb[0].mxu0
      %6119 = vmatprep.mubr.f32.mxu0 0.0
      %6120 = vmatmul.mubr.f32.gmra.mrb[0].mxu0 %v5836
      %v6121 = vpop.f32.mrb[0].mxu0
      %v6122 = vpop.f32.mrb[0].mxu0
      %6123 = vmatprep.mubr.f32.mxu0 0.0
      %6124 = vmatmul.mubr.f32.gmra.mrb[0].mxu0 %v5839
      %v6125 = vpop.f32.mrb[0].mxu0
      %v6126 = vpop.f32.mrb[0].mxu0
      %6127 = vmatprep.mubr.f32.mxu0 0.0
      %6128 = vmatmul.mubr.f32.gmra.mrb[0].mxu0 %v5842
      %v6129 = vpop.f32.mrb[0].mxu0
      %v6130 = vadd.f32 0.0, %v6129
      %v6131 = vpop.f32.mrb[0].mxu0
      %6132 = vmatprep.mubr.f32.mxu0 0.0
      %6133 = vmatmul.mubr.f32.gmra.mrb[0].mxu0 %v5845
      %v6134 = vpop.f32.mrb[0].mxu0
      %v6135 = vadd.f32 0.0, %v6134
      %v6136 = vpop.f32.mrb[0].mxu0
      %6137 = vmatprep.mubr.f32.mxu0 0.0
      %6138 = vmatmul.mubr.f32.gmra.mrb[0].mxu0 %v5848
      %v6139 = vpop.f32.mrb[0].mxu0
      %v6140 = vpop.f32.mrb[0].mxu0
      %6141 = vmatprep.mubr.f32.mxu0 0.0
      %6142 = vmatmul.mubr.f32.gmra.mrb[0].mxu0 %v5851
      %v6143 = vpop.f32.mrb[0].mxu0
      %v6144 = vpop.f32.mrb[0].mxu0
      %6145 = vmatprep.mubr.f32.mxu0 0.0
      %6146 = vmatmul.mubr.f32.gmra.mrb[0].mxu0 %v5854
      %v6147 = vpop.f32.mrb[0].mxu0
      %v6148 = vadd.f32 0.0, %v6147
      %v6149 = vpop.f32.mrb[0].mxu0
      %6150 = vmatprep.mubr.f32.mxu0 0.0
      %6151 = vmatmul.mubr.f32.gmra.mrb[0].mxu0 %v5857
      %v6152 = vpop.f32.mrb[0].mxu0
      %v6153 = vadd.f32 0.0, %v6152
      %v6154 = vpop.f32.mrb[0].mxu0
      %6155 = vmatprep.mubr.f32.mxu0 0.0
      %6156 = vmatmul.mubr.f32.gmra.mrb[0].mxu0 %v5860
      %v6157 = vpop.f32.mrb[0].mxu0
      %v6158 = vpop.f32.mrb[0].mxu0
      %6159 = vmatprep.mubr.f32.mxu0 0.0
      %6160 = vmatmul.mubr.f32.gmra.mrb[0].mxu0 %v5863
      %v6161 = vpop.f32.mrb[0].mxu0
      %v6162 = vpop.f32.mrb[0].mxu0
      %6163 = vmatprep.mubr.f32.mxu0 0.0
      %6164 = vmatmul.mubr.f32.gmra.mrb[0].mxu0 %v5866
      %v6165 = vpop.f32.mrb[0].mxu0
      %v6166 = vadd.f32 0.0, %v6165
      %v6167 = vpop.f32.mrb[0].mxu0
      %6168 = vmatprep.mubr.f32.mxu0 0.0
      %6169 = vmatmul.mubr.f32.gmra.mrb[0].mxu0 %v5869
      %v6170 = vpop.f32.mrb[0].mxu0
      %v6171 = vadd.f32 0.0, %v6170
      %v6172 = vpop.f32.mrb[0].mxu0
      %6173 = vmatprep.mubr.f32.mxu0 0.0
      %6174 = vmatmul.mubr.f32.gmra.mrb[0].mxu0 %v5872
      %v6175 = vpop.f32.mrb[0].mxu0
      %v6176 = vpop.f32.mrb[0].mxu0
      %6177 = vmatprep.mubr.f32.mxu0 0.0
      %6178 = vmatmul.mubr.f32.gmra.mrb[0].mxu0 %v5875
      %v6179 = vpop.f32.mrb[0].mxu0
      %v6180 = vpop.f32.mrb[0].mxu0
      %6181 = vmatprep.mubr.f32.mxu0 0.0
      %6182 = vmatmul.mubr.f32.gmra.mrb[0].mxu0 %v5878
      %v6183 = vpop.f32.mrb[0].mxu0
      %v6184 = vadd.f32 0.0, %v6183
      %v6185 = vpop.f32.mrb[0].mxu0
      %6186 = vmatprep.mubr.f32.mxu0 0.0
      %6187 = vmatmul.mubr.f32.gmra.mrb[0].mxu0 %v5881
      %v6188 = vpop.f32.mrb[0].mxu0
      %v6189 = vadd.f32 0.0, %v6188
      %v6190 = vpop.f32.mrb[0].mxu0
      %6191 = vmatprep.mubr.f32.mxu0 0.0
      %6192 = vmatmul.mubr.f32.gmra.mrb[0].mxu0 %v5884
      %v6193 = vpop.f32.mrb[0].mxu0
      %v6194 = vpop.f32.mrb[0].mxu0
      %6195 = vmatprep.mubr.f32.mxu0 0.0
      %6196 = vmatmul.mubr.f32.gmra.mrb[0].mxu0 %v5887
      %v6197 = vpop.f32.mrb[0].mxu0
      %v6198 = vpop.f32.mrb[0].mxu0
      %6199 = vmatprep.mubr.f32.mxu0 0.0
      %6200 = vmatmul.mubr.f32.gmra.mrb[0].mxu0 %v5890
      %v6201 = vpop.f32.mrb[0].mxu0
      %v6202 = vadd.f32 0.0, %v6201
      %v6203 = vpop.f32.mrb[0].mxu0
      %6204 = vmatprep.mubr.f32.mxu0 0.0
      %6205 = vmatmul.mubr.f32.gmra.mrb[0].mxu0 %v5893
      %v6206 = vpop.f32.mrb[0].mxu0
      %v6207 = vadd.f32 0.0, %v6206
      %v6208 = vpop.f32.mrb[0].mxu0
      %6209 = vmatprep.mubr.f32.mxu0 0.0
      %6210 = vmatmul.mubr.f32.gmra.mrb[0].mxu0 %v5896
      %v6211 = vpop.f32.mrb[0].mxu0
      %v6212 = vpop.f32.mrb[0].mxu0
      %6213 = vmatprep.mubr.f32.mxu0 0.0
      %6214 = vmatmul.mubr.f32.gmra.mrb[0].mxu0 %v5899
      %v6215 = vpop.f32.mrb[0].mxu0
      %v6216 = vpop.f32.mrb[0].mxu0
      %6217 = vmatprep.mubr.f32.mxu0 0.0
      %6218 = vmatmul.mubr.f32.gmra.mrb[0].mxu0 %v5902
      %v6219 = vpop.f32.mrb[0].mxu0
      %v6220 = vadd.f32 0.0, %v6219
      %v6221 = vpop.f32.mrb[0].mxu0
      %6222 = vmatprep.mubr.f32.mxu0 0.0
      %6223 = vmatmul.mubr.f32.gmra.mrb[0].mxu0 %v5905
      %v6224 = vpop.f32.mrb[0].mxu0
      %v6225 = vadd.f32 0.0, %v6224
      %v6226 = vpop.f32.mrb[0].mxu0
      %6227 = vmatprep.mubr.f32.mxu0 0.0
      %6228 = vmatmul.mubr.f32.gmra.mrb[0].mxu0 %v5908
      %v6229 = vpop.f32.mrb[0].mxu0
      %v6230 = vpop.f32.mrb[0].mxu0
      %6231 = vmatprep.mubr.f32.mxu0 0.0
      %6232 = vmatmul.mubr.f32.gmra.mrb[0].mxu0 %v5911
      %v6233 = vpop.f32.mrb[0].mxu0
      %v6234 = vpop.f32.mrb[0].mxu0
      %6235 = vmatprep.mubr.f32.mxu0 0.0
      %6236 = vmatmul.mubr.f32.gmra.mrb[0].mxu0 %v5914
      %v6237 = vpop.f32.mrb[0].mxu0
      %v6238 = vadd.f32 0.0, %v6237
      %v6239 = vpop.f32.mrb[0].mxu0
      %6240 = vmatprep.mubr.f32.mxu0 0.0
      %6241 = vmatmul.mubr.f32.gmra.mrb[0].mxu0 %v5917
      %v6242 = vpop.f32.mrb[0].mxu0
      %v6243 = vadd.f32 0.0, %v6242
      %v6244 = vpop.f32.mrb[0].mxu0
      %6245 = vmatprep.mubr.f32.mxu0 0.0
      %6246 = vmatmul.mubr.f32.gmra.mrb[0].mxu0 %v5920
      %v6247 = vpop.f32.mrb[0].mxu0
      %v6248 = vpop.f32.mrb[0].mxu0
      %6249 = vmatprep.mubr.f32.mxu0 0.0
      %6250 = vmatmul.mubr.f32.gmra.mrb[0].mxu0 %v5923
      %v6251 = vpop.f32.mrb[0].mxu0
      %v6252 = vpop.f32.mrb[0].mxu0
      %6253 = vmatprep.mubr.f32.mxu0 0.0
      %6254 = vmatmul.mubr.f32.gmra.mrb[0].mxu0 %v5926
      %v6255 = vpop.f32.mrb[0].mxu0
      %v6256 = vadd.f32 0.0, %v6255
      %v6257 = vpop.f32.mrb[0].mxu0
      %6258 = vmatprep.mubr.f32.mxu0 0.0
      %6259 = vmatmul.mubr.f32.gmra.mrb[0].mxu0 %v5929
      %v6260 = vpop.f32.mrb[0].mxu0
      %v6261 = vadd.f32 0.0, %v6260
      %v6262 = vpop.f32.mrb[0].mxu0
      %6263 = vmatprep.mubr.f32.mxu0 0.0
      %6264 = vmatmul.mubr.f32.gmra.mrb[0].mxu0 %v5932
      %v6265 = vpop.f32.mrb[0].mxu0
      %v6266 = vpop.f32.mrb[0].mxu0
      %6267 = vmatprep.mubr.f32.mxu0 0.0
      %6268 = vmatmul.mubr.f32.gmra.mrb[0].mxu0 %v5935
      %v6269 = vpop.f32.mrb[0].mxu0
      %v6270 = vpop.f32.mrb[0].mxu0
      %6271 = vmatprep.mubr.f32.mxu0 0.0
      %6272 = vmatmul.mubr.f32.gmra.mrb[0].mxu0 %v5938
      %v6273 = vpop.f32.mrb[0].mxu0
      %v6274 = vadd.f32 0.0, %v6273
      %v6275 = vpop.f32.mrb[0].mxu0
      %6276 = vmatprep.mubr.f32.mxu0 0.0
      %6277 = vmatmul.mubr.f32.gmra.mrb[0].mxu0 %v5941
      %v6278 = vpop.f32.mrb[0].mxu0
      %v6279 = vadd.f32 0.0, %v6278
      %v6280 = vpop.f32.mrb[0].mxu0
      %6281 = vmatprep.mubr.f32.mxu0 0.0
      %6282 = vmatmul.mubr.f32.gmra.mrb[0].mxu0 %v5944
      %v6283 = vpop.f32.mrb[0].mxu0
      %v6284 = vpop.f32.mrb[0].mxu0
      %6285 = vmatprep.mubr.f32.mxu0 0.0
      %6286 = vmatmul.mubr.f32.gmra.mrb[0].mxu0 %v5947
      %v6287 = vpop.f32.mrb[0].mxu0
      %v6288 = vpop.f32.mrb[0].mxu0
      %6289 = vmatprep.mubr.f32.mxu0 0.0
      %6290 = vmatmul.mubr.f32.gmra.mrb[0].mxu0 %v5950
      %v6291 = vpop.f32.mrb[0].mxu0
      %v6292 = vadd.f32 0.0, %v6291
      %v6293 = vpop.f32.mrb[0].mxu0
      %6294 = vmatprep.mubr.f32.mxu0 0.0
      %6295 = vmatmul.mubr.f32.gmra.mrb[0].mxu0 %v5953
      %v6296 = vpop.f32.mrb[0].mxu0
      %v6297 = vadd.f32 0.0, %v6296
      %v6298 = vpop.f32.mrb[0].mxu0
      %6299 = vmatprep.mubr.f32.mxu0 0.0
      %6300 = vmatmul.mubr.f32.gmra.mrb[0].mxu0 %v5956
      %v6301 = vpop.f32.mrb[0].mxu0
      %v6302 = vpop.f32.mrb[0].mxu0
      %6303 = vmatprep.mubr.f32.mxu0 0.0
      %6304 = vmatmul.mubr.f32.gmra.mrb[0].mxu0 %v5959
      %v6305 = vpop.f32.mrb[0].mxu0
      %v6306 = vpop.f32.mrb[0].mxu0
      %6307 = vmatprep.mubr.f32.mxu0 0.0
      %6308 = vmatmul.mubr.f32.gmra.mrb[0].mxu0 %v5962
      %v6309 = vpop.f32.mrb[0].mxu0
      %v6310 = vadd.f32 0.0, %v6309
      %v6311 = vpop.f32.mrb[0].mxu0
      %6312 = vmatprep.mubr.f32.mxu0 0.0
      %6313 = vmatmul.mubr.f32.gmra.mrb[0].mxu0 %v5965
      %v6314 = vpop.f32.mrb[0].mxu0
      %v6315 = vadd.f32 0.0, %v6314
      %v6316 = vpop.f32.mrb[0].mxu0
      %6317 = vmatprep.mubr.f32.mxu0 0.0
      %6318 = vmatmul.mubr.f32.gmra.mrb[0].mxu0 %v5968
      %v6319 = vpop.f32.mrb[0].mxu0
      %v6320 = vpop.f32.mrb[0].mxu0
      %6321 = vmatprep.mubr.f32.mxu0 0.0
      %6322 = vmatmul.mubr.f32.gmra.mrb[0].mxu0 %v5971
      %v6323 = vpop.f32.mrb[0].mxu0
      %v6324 = vpop.f32.mrb[0].mxu0
      %6325 = vdwg.mxu0
      %v6326 = vadd.f32 %v5683, %v6040
      %v6327 = vadd.f32 %v5684, %v6045
      %v6328 = vadd.f32 %v5685, %v6058
      %v6329 = vadd.f32 %v5686, %v6063
      %v6330 = vadd.f32 %v5687, %v6076
      %v6331 = vadd.f32 %v5688, %v6081
      %v6332 = vadd.f32 %v5689, %v6094
      %v6333 = vadd.f32 %v5690, %v6099
      %v6334 = vadd.f32 %v5691, %v6112
      %v6335 = vadd.f32 %v5692, %v6117
      %v6336 = vadd.f32 %v5693, %v6130
      %v6337 = vadd.f32 %v5694, %v6135
      %v6338 = vadd.f32 %v5695, %v6148
      %v6339 = vadd.f32 %v5696, %v6153
      %v6340 = vadd.f32 %v5697, %v6166
      %v6341 = vadd.f32 %v5698, %v6171
      %v6342 = vadd.f32 %v5699, %v6184
      %v6343 = vadd.f32 %v5700, %v6189
      %v6344 = vadd.f32 %v5701, %v6202
      %v6345 = vadd.f32 %v5702, %v6207
      %v6346 = vadd.f32 %v5703, %v6220
      %v6347 = vadd.f32 %v5704, %v6225
      %v6348 = vadd.f32 %v5705, %v6238
      %v6349 = vadd.f32 %v5706, %v6243
      %v6350 = vadd.f32 %v5707, %v6256
      %v6351 = vadd.f32 %v5708, %v6261
      %v6352 = vadd.f32 %v5709, %v6274
      %v6353 = vadd.f32 %v5710, %v6279
      %v6354 = vadd.f32 %v5711, %v6292
      %v6355 = vadd.f32 %v5712, %v6297
      %v6356 = vadd.f32 %v5713, %v6310
      %v6357 = vadd.f32 %v5714, %v6315
      %v6358 = vld [vmem:[#allocation2 + $0x42] sm:$0xff]
      %v6359 = vld [vmem:[#allocation2 + $0x4a] sm:$0xff]
      %v6360 = vld [vmem:[#allocation2 + $0x52] sm:$0xff]
      %v6361 = vld [vmem:[#allocation2 + $0x5a] sm:$0xff]
      %v6362 = vld [vmem:[#allocation2 + $0x62] sm:$0xff]
      %v6363 = vld [vmem:[#allocation2 + $0x6a] sm:$0xff]
      %v6364 = vld [vmem:[#allocation2 + $0x72] sm:$0xff]
      %v6365 = vld [vmem:[#allocation2 + $0x7a] sm:$0xff]
      %v6366 = vld [vmem:[#allocation2 + $0x82] sm:$0xff]
      %v6367 = vld [vmem:[#allocation2 + $0x8a] sm:$0xff]
      %v6368 = vld [vmem:[#allocation2 + $0x92] sm:$0xff]
      %v6369 = vld [vmem:[#allocation2 + $0x9a] sm:$0xff]
      %v6370 = vld [vmem:[#allocation2 + $0xa2] sm:$0xff]
      %v6371 = vld [vmem:[#allocation2 + $0xaa] sm:$0xff]
      %v6372 = vld [vmem:[#allocation2 + $0xb2] sm:$0xff]
      %v6373 = vld [vmem:[#allocation2 + $0xba] sm:$0xff]
      %v6374 = vld [vmem:[#allocation2 + $0xc2] sm:$0xff]
      %v6375 = vld [vmem:[#allocation2 + $0xca] sm:$0xff]
      %v6376 = vld [vmem:[#allocation2 + $0xd2] sm:$0xff]
      %v6377 = vld [vmem:[#allocation2 + $0xda] sm:$0xff]
      %v6378 = vld [vmem:[#allocation2 + $0xe2] sm:$0xff]
      %v6379 = vld [vmem:[#allocation2 + $0xea] sm:$0xff]
      %v6380 = vld [vmem:[#allocation2 + $0xf2] sm:$0xff]
      %v6381 = vld [vmem:[#allocation2 + $0xfa] sm:$0xff]
      %v6382 = vld [vmem:[#allocation2 + $0x102] sm:$0xff]
      %v6383 = vld [vmem:[#allocation2 + $0x10a] sm:$0xff]
      %v6384 = vld [vmem:[#allocation2 + $0x112] sm:$0xff]
      %v6385 = vld [vmem:[#allocation2 + $0x11a] sm:$0xff]
      %v6386 = vld [vmem:[#allocation2 + $0x122] sm:$0xff]
      %v6387 = vld [vmem:[#allocation2 + $0x12a] sm:$0xff]
      %v6388 = vld [vmem:[#allocation2 + $0x132] sm:$0xff]
      %v6389 = vld [vmem:[#allocation2 + $0x13a] sm:$0xff]
      %v6390 = vld [vmem:[#allocation2 + $0x142] sm:$0xff]
      %v6391 = vld [vmem:[#allocation2 + $0x14a] sm:$0xff]
      %v6392 = vld [vmem:[#allocation2 + $0x152] sm:$0xff]
      %v6393 = vld [vmem:[#allocation2 + $0x15a] sm:$0xff]
      %v6394 = vld [vmem:[#allocation2 + $0x162] sm:$0xff]
      %v6395 = vld [vmem:[#allocation2 + $0x16a] sm:$0xff]
      %v6396 = vld [vmem:[#allocation2 + $0x172] sm:$0xff]
      %v6397 = vld [vmem:[#allocation2 + $0x17a] sm:$0xff]
      %v6398 = vld [vmem:[#allocation2 + $0x182] sm:$0xff]
      %v6399 = vld [vmem:[#allocation2 + $0x18a] sm:$0xff]
      %v6400 = vld [vmem:[#allocation2 + $0x192] sm:$0xff]
      %v6401 = vld [vmem:[#allocation2 + $0x19a] sm:$0xff]
      %v6402 = vld [vmem:[#allocation2 + $0x1a2] sm:$0xff]
      %v6403 = vld [vmem:[#allocation2 + $0x1aa] sm:$0xff]
      %v6404 = vld [vmem:[#allocation2 + $0x1b2] sm:$0xff]
      %v6405 = vld [vmem:[#allocation2 + $0x1ba] sm:$0xff]
      %v6406 = vld [vmem:[#allocation2 + $0x1c2] sm:$0xff]
      %v6407 = vld [vmem:[#allocation2 + $0x1ca] sm:$0xff]
      %v6408 = vld [vmem:[#allocation2 + $0x1d2] sm:$0xff]
      %v6409 = vld [vmem:[#allocation2 + $0x1da] sm:$0xff]
      %v6410 = vld [vmem:[#allocation2 + $0x1e2] sm:$0xff]
      %v6411 = vld [vmem:[#allocation2 + $0x1ea] sm:$0xff]
      %v6412 = vld [vmem:[#allocation2 + $0x1f2] sm:$0xff]
      %v6413 = vld [vmem:[#allocation2 + $0x1fa] sm:$0xff]
      %v6414 = vld [vmem:[#allocation2 + $0x202] sm:$0xff]
      %v6415 = vld [vmem:[#allocation2 + $0x20a] sm:$0xff]
      %v6416 = vld [vmem:[#allocation2 + $0x212] sm:$0xff]
      %v6417 = vld [vmem:[#allocation2 + $0x21a] sm:$0xff]
      %v6418 = vld [vmem:[#allocation2 + $0x222] sm:$0xff]
      %v6419 = vld [vmem:[#allocation2 + $0x22a] sm:$0xff]
      %v6420 = vld [vmem:[#allocation2 + $0x232] sm:$0xff]
      %v6421 = vld [vmem:[#allocation2 + $0x23a] sm:$0xff]
      %s6422 = scalar_lea.vmem %s3, 64
      %v6423 = vld [vmem:[%s6422] sm:$0xff]
      %v6425 = vsel %vm1059, %v6358, 0
      %v6428 = vsel %vm1059, %v6359, 0
      %v6431 = vsel %vm1059, %v6360, 0
      %v6434 = vsel %vm1059, %v6361, 0
      %v6437 = vsel %vm1059, %v6362, 0
      %v6440 = vsel %vm1059, %v6363, 0
      %v6443 = vsel %vm1059, %v6364, 0
      %v6446 = vsel %vm1059, %v6365, 0
      %v6449 = vsel %vm1059, %v6366, 0
      %v6452 = vsel %vm1059, %v6367, 0
      %v6455 = vsel %vm1059, %v6368, 0
      %v6458 = vsel %vm1059, %v6369, 0
      %v6461 = vsel %vm1059, %v6370, 0
      %v6464 = vsel %vm1059, %v6371, 0
      %v6467 = vsel %vm1059, %v6372, 0
      %v6470 = vsel %vm1059, %v6373, 0
      %v6473 = vsel %vm1059, %v6374, 0
      %v6476 = vsel %vm1059, %v6375, 0
      %v6479 = vsel %vm1059, %v6376, 0
      %v6482 = vsel %vm1059, %v6377, 0
      %v6485 = vsel %vm1059, %v6378, 0
      %v6488 = vsel %vm1059, %v6379, 0
      %v6491 = vsel %vm1059, %v6380, 0
      %v6494 = vsel %vm1059, %v6381, 0
      %v6497 = vsel %vm1059, %v6382, 0
      %v6500 = vsel %vm1059, %v6383, 0
      %v6503 = vsel %vm1059, %v6384, 0
      %v6506 = vsel %vm1059, %v6385, 0
      %v6509 = vsel %vm1059, %v6386, 0
      %v6512 = vsel %vm1059, %v6387, 0
      %v6515 = vsel %vm1059, %v6388, 0
      %v6518 = vsel %vm1059, %v6389, 0
      %v6521 = vsel %vm1059, %v6390, 0
      %v6524 = vsel %vm1059, %v6391, 0
      %v6527 = vsel %vm1059, %v6392, 0
      %v6530 = vsel %vm1059, %v6393, 0
      %v6533 = vsel %vm1059, %v6394, 0
      %v6536 = vsel %vm1059, %v6395, 0
      %v6539 = vsel %vm1059, %v6396, 0
      %v6542 = vsel %vm1059, %v6397, 0
      %v6545 = vsel %vm1059, %v6398, 0
      %v6548 = vsel %vm1059, %v6399, 0
      %v6551 = vsel %vm1059, %v6400, 0
      %v6554 = vsel %vm1059, %v6401, 0
      %v6557 = vsel %vm1059, %v6402, 0
      %v6560 = vsel %vm1059, %v6403, 0
      %v6563 = vsel %vm1059, %v6404, 0
      %v6566 = vsel %vm1059, %v6405, 0
      %v6569 = vsel %vm1059, %v6406, 0
      %v6572 = vsel %vm1059, %v6407, 0
      %v6575 = vsel %vm1059, %v6408, 0
      %v6578 = vsel %vm1059, %v6409, 0
      %v6581 = vsel %vm1059, %v6410, 0
      %v6584 = vsel %vm1059, %v6411, 0
      %v6587 = vsel %vm1059, %v6412, 0
      %v6590 = vsel %vm1059, %v6413, 0
      %v6593 = vsel %vm1059, %v6414, 0
      %v6596 = vsel %vm1059, %v6415, 0
      %v6599 = vsel %vm1059, %v6416, 0
      %v6602 = vsel %vm1059, %v6417, 0
      %v6605 = vsel %vm1059, %v6418, 0
      %v6608 = vsel %vm1059, %v6419, 0
      %v6611 = vsel %vm1059, %v6420, 0
      %v6614 = vsel %vm1059, %v6421, 0
      %6616 = vmatprep.subr.mxu0 0.0
      %6617 = vmatpush1.msra.mxu0 %v6423
      %6618 = vmatprep.subr.mxu0 0.0
      %6619 = vmatpush1.msra.mxu0 0.0
      %6620 = vmatprep.subr.mxu0 0.0
      %6621 = vmatpush1.msra.mxu0 0.0
      %6622 = vmatprep.subr.mxu0 0.0
      %6623 = vmatpush1.msra.mxu0 0.0
      %6624 = vmatprep.subr.mxu0 0.0
      %6625 = vmatpush1.msra.mxu0 0.0
      %6626 = vmatprep.subr.mxu0 0.0
      %6627 = vmatpush1.msra.mxu0 0.0
      %6628 = vmatprep.subr.mxu0 0.0
      %6629 = vmatpush1.msra.mxu0 0.0
      %6630 = vmatprep.subr.mxu0 0.0
      %6631 = vmatpush1.msra.mxu0 0.0
      %6632 = vmatprep.subr.mxu0 0.0
      %6633 = vmatpush1.msra.mxu0 0.0
      %6634 = vmatprep.subr.mxu0 0.0
      %6635 = vmatpush1.msra.mxu0 0.0
      %6636 = vmatprep.subr.mxu0 0.0
      %6637 = vmatpush1.msra.mxu0 0.0
      %6638 = vmatprep.subr.mxu0 0.0
      %6639 = vmatpush1.msra.mxu0 0.0
      %6640 = vmatprep.subr.mxu0 0.0
      %6641 = vmatpush1.msra.mxu0 0.0
      %6642 = vmatprep.subr.mxu0 0.0
      %6643 = vmatpush1.msra.mxu0 0.0
      %6644 = vmatprep.subr.mxu0 0.0
      %6645 = vmatpush1.msra.mxu0 0.0
      %6646 = vmatprep.subr.mxu0 0.0
      %6647 = vmatpush1.msra.mxu0 0.0
      %6648 = vmatprep.subr.mxu0 0.0
      %6649 = vmatpush1.msra.mxu0 0.0
      %6650 = vmatprep.subr.mxu0 0.0
      %6651 = vmatpush1.msra.mxu0 0.0
      %6652 = vmatprep.subr.mxu0 0.0
      %6653 = vmatpush1.msra.mxu0 0.0
      %6654 = vmatprep.subr.mxu0 0.0
      %6655 = vmatpush1.msra.mxu0 0.0
      %6656 = vmatprep.subr.mxu0 0.0
      %6657 = vmatpush1.msra.mxu0 0.0
      %6658 = vmatprep.subr.mxu0 0.0
      %6659 = vmatpush1.msra.mxu0 0.0
      %6660 = vmatprep.subr.mxu0 0.0
      %6661 = vmatpush1.msra.mxu0 0.0
      %6662 = vmatprep.subr.mxu0 0.0
      %6663 = vmatpush1.msra.mxu0 0.0
      %6664 = vmatprep.subr.mxu0 0.0
      %6665 = vmatpush1.msra.mxu0 0.0
      %6666 = vmatprep.subr.mxu0 0.0
      %6667 = vmatpush1.msra.mxu0 0.0
      %6668 = vmatprep.subr.mxu0 0.0
      %6669 = vmatpush1.msra.mxu0 0.0
      %6670 = vmatprep.subr.mxu0 0.0
      %6671 = vmatpush1.msra.mxu0 0.0
      %6672 = vmatprep.subr.mxu0 0.0
      %6673 = vmatpush1.msra.mxu0 0.0
      %6674 = vmatprep.subr.mxu0 0.0
      %6675 = vmatpush1.msra.mxu0 0.0
      %6676 = vmatprep.subr.mxu0 0.0
      %6677 = vmatpush1.msra.mxu0 0.0
      %6678 = vmatprep.subr.mxu0 0.0
      %6679 = vmatpush1.msra.mxu0 0.0
      %6680 = vmatprep.mubr.f32.mxu0 0.0
      %6681 = vmatmul.mubr.f32.gmra.mrb[0].mxu0 %v6425
      %v6682 = vpop.f32.mrb[0].mxu0
      %v6683 = vadd.f32 0.0, %v6682
      %v6684 = vpop.f32.mrb[0].mxu0
      %6685 = vmatprep.mubr.f32.mxu0 0.0
      %6686 = vmatmul.mubr.f32.gmra.mrb[0].mxu0 %v6428
      %v6687 = vpop.f32.mrb[0].mxu0
      %v6688 = vadd.f32 0.0, %v6687
      %v6689 = vpop.f32.mrb[0].mxu0
      %6690 = vmatprep.mubr.f32.mxu0 0.0
      %6691 = vmatmul.mubr.f32.gmra.mrb[0].mxu0 %v6431
      %v6692 = vpop.f32.mrb[0].mxu0
      %v6693 = vpop.f32.mrb[0].mxu0
      %6694 = vmatprep.mubr.f32.mxu0 0.0
      %6695 = vmatmul.mubr.f32.gmra.mrb[0].mxu0 %v6434
      %v6696 = vpop.f32.mrb[0].mxu0
      %v6697 = vpop.f32.mrb[0].mxu0
      %6698 = vmatprep.mubr.f32.mxu0 0.0
      %6699 = vmatmul.mubr.f32.gmra.mrb[0].mxu0 %v6437
      %v6700 = vpop.f32.mrb[0].mxu0
      %v6701 = vadd.f32 0.0, %v6700
      %v6702 = vpop.f32.mrb[0].mxu0
      %6703 = vmatprep.mubr.f32.mxu0 0.0
      %6704 = vmatmul.mubr.f32.gmra.mrb[0].mxu0 %v6440
      %v6705 = vpop.f32.mrb[0].mxu0
      %v6706 = vadd.f32 0.0, %v6705
      %v6707 = vpop.f32.mrb[0].mxu0
      %6708 = vmatprep.mubr.f32.mxu0 0.0
      %6709 = vmatmul.mubr.f32.gmra.mrb[0].mxu0 %v6443
      %v6710 = vpop.f32.mrb[0].mxu0
      %v6711 = vpop.f32.mrb[0].mxu0
      %6712 = vmatprep.mubr.f32.mxu0 0.0
      %6713 = vmatmul.mubr.f32.gmra.mrb[0].mxu0 %v6446
      %v6714 = vpop.f32.mrb[0].mxu0
      %v6715 = vpop.f32.mrb[0].mxu0
      %6716 = vmatprep.mubr.f32.mxu0 0.0
      %6717 = vmatmul.mubr.f32.gmra.mrb[0].mxu0 %v6449
      %v6718 = vpop.f32.mrb[0].mxu0
      %v6719 = vadd.f32 0.0, %v6718
      %v6720 = vpop.f32.mrb[0].mxu0
      %6721 = vmatprep.mubr.f32.mxu0 0.0
      %6722 = vmatmul.mubr.f32.gmra.mrb[0].mxu0 %v6452
      %v6723 = vpop.f32.mrb[0].mxu0
      %v6724 = vadd.f32 0.0, %v6723
      %v6725 = vpop.f32.mrb[0].mxu0
      %6726 = vmatprep.mubr.f32.mxu0 0.0
      %6727 = vmatmul.mubr.f32.gmra.mrb[0].mxu0 %v6455
      %v6728 = vpop.f32.mrb[0].mxu0
      %v6729 = vpop.f32.mrb[0].mxu0
      %6730 = vmatprep.mubr.f32.mxu0 0.0
      %6731 = vmatmul.mubr.f32.gmra.mrb[0].mxu0 %v6458
      %v6732 = vpop.f32.mrb[0].mxu0
      %v6733 = vpop.f32.mrb[0].mxu0
      %6734 = vmatprep.mubr.f32.mxu0 0.0
      %6735 = vmatmul.mubr.f32.gmra.mrb[0].mxu0 %v6461
      %v6736 = vpop.f32.mrb[0].mxu0
      %v6737 = vadd.f32 0.0, %v6736
      %v6738 = vpop.f32.mrb[0].mxu0
      %6739 = vmatprep.mubr.f32.mxu0 0.0
      %6740 = vmatmul.mubr.f32.gmra.mrb[0].mxu0 %v6464
      %v6741 = vpop.f32.mrb[0].mxu0
      %v6742 = vadd.f32 0.0, %v6741
      %v6743 = vpop.f32.mrb[0].mxu0
      %6744 = vmatprep.mubr.f32.mxu0 0.0
      %6745 = vmatmul.mubr.f32.gmra.mrb[0].mxu0 %v6467
      %v6746 = vpop.f32.mrb[0].mxu0
      %v6747 = vpop.f32.mrb[0].mxu0
      %6748 = vmatprep.mubr.f32.mxu0 0.0
      %6749 = vmatmul.mubr.f32.gmra.mrb[0].mxu0 %v6470
      %v6750 = vpop.f32.mrb[0].mxu0
      %v6751 = vpop.f32.mrb[0].mxu0
      %6752 = vmatprep.mubr.f32.mxu0 0.0
      %6753 = vmatmul.mubr.f32.gmra.mrb[0].mxu0 %v6473
      %v6754 = vpop.f32.mrb[0].mxu0
      %v6755 = vadd.f32 0.0, %v6754
      %v6756 = vpop.f32.mrb[0].mxu0
      %6757 = vmatprep.mubr.f32.mxu0 0.0
      %6758 = vmatmul.mubr.f32.gmra.mrb[0].mxu0 %v6476
      %v6759 = vpop.f32.mrb[0].mxu0
      %v6760 = vadd.f32 0.0, %v6759
      %v6761 = vpop.f32.mrb[0].mxu0
      %6762 = vmatprep.mubr.f32.mxu0 0.0
      %6763 = vmatmul.mubr.f32.gmra.mrb[0].mxu0 %v6479
      %v6764 = vpop.f32.mrb[0].mxu0
      %v6765 = vpop.f32.mrb[0].mxu0
      %6766 = vmatprep.mubr.f32.mxu0 0.0
      %6767 = vmatmul.mubr.f32.gmra.mrb[0].mxu0 %v6482
      %v6768 = vpop.f32.mrb[0].mxu0
      %v6769 = vpop.f32.mrb[0].mxu0
      %6770 = vmatprep.mubr.f32.mxu0 0.0
      %6771 = vmatmul.mubr.f32.gmra.mrb[0].mxu0 %v6485
      %v6772 = vpop.f32.mrb[0].mxu0
      %v6773 = vadd.f32 0.0, %v6772
      %v6774 = vpop.f32.mrb[0].mxu0
      %6775 = vmatprep.mubr.f32.mxu0 0.0
      %6776 = vmatmul.mubr.f32.gmra.mrb[0].mxu0 %v6488
      %v6777 = vpop.f32.mrb[0].mxu0
      %v6778 = vadd.f32 0.0, %v6777
      %v6779 = vpop.f32.mrb[0].mxu0
      %6780 = vmatprep.mubr.f32.mxu0 0.0
      %6781 = vmatmul.mubr.f32.gmra.mrb[0].mxu0 %v6491
      %v6782 = vpop.f32.mrb[0].mxu0
      %v6783 = vpop.f32.mrb[0].mxu0
      %6784 = vmatprep.mubr.f32.mxu0 0.0
      %6785 = vmatmul.mubr.f32.gmra.mrb[0].mxu0 %v6494
      %v6786 = vpop.f32.mrb[0].mxu0
      %v6787 = vpop.f32.mrb[0].mxu0
      %6788 = vmatprep.mubr.f32.mxu0 0.0
      %6789 = vmatmul.mubr.f32.gmra.mrb[0].mxu0 %v6497
      %v6790 = vpop.f32.mrb[0].mxu0
      %v6791 = vadd.f32 0.0, %v6790
      %v6792 = vpop.f32.mrb[0].mxu0
      %6793 = vmatprep.mubr.f32.mxu0 0.0
      %6794 = vmatmul.mubr.f32.gmra.mrb[0].mxu0 %v6500
      %v6795 = vpop.f32.mrb[0].mxu0
      %v6796 = vadd.f32 0.0, %v6795
      %v6797 = vpop.f32.mrb[0].mxu0
      %6798 = vmatprep.mubr.f32.mxu0 0.0
      %6799 = vmatmul.mubr.f32.gmra.mrb[0].mxu0 %v6503
      %v6800 = vpop.f32.mrb[0].mxu0
      %v6801 = vpop.f32.mrb[0].mxu0
      %6802 = vmatprep.mubr.f32.mxu0 0.0
      %6803 = vmatmul.mubr.f32.gmra.mrb[0].mxu0 %v6506
      %v6804 = vpop.f32.mrb[0].mxu0
      %v6805 = vpop.f32.mrb[0].mxu0
      %6806 = vmatprep.mubr.f32.mxu0 0.0
      %6807 = vmatmul.mubr.f32.gmra.mrb[0].mxu0 %v6509
      %v6808 = vpop.f32.mrb[0].mxu0
      %v6809 = vadd.f32 0.0, %v6808
      %v6810 = vpop.f32.mrb[0].mxu0
      %6811 = vmatprep.mubr.f32.mxu0 0.0
      %6812 = vmatmul.mubr.f32.gmra.mrb[0].mxu0 %v6512
      %v6813 = vpop.f32.mrb[0].mxu0
      %v6814 = vadd.f32 0.0, %v6813
      %v6815 = vpop.f32.mrb[0].mxu0
      %6816 = vmatprep.mubr.f32.mxu0 0.0
      %6817 = vmatmul.mubr.f32.gmra.mrb[0].mxu0 %v6515
      %v6818 = vpop.f32.mrb[0].mxu0
      %v6819 = vpop.f32.mrb[0].mxu0
      %6820 = vmatprep.mubr.f32.mxu0 0.0
      %6821 = vmatmul.mubr.f32.gmra.mrb[0].mxu0 %v6518
      %v6822 = vpop.f32.mrb[0].mxu0
      %v6823 = vpop.f32.mrb[0].mxu0
      %6824 = vmatprep.mubr.f32.mxu0 0.0
      %6825 = vmatmul.mubr.f32.gmra.mrb[0].mxu0 %v6521
      %v6826 = vpop.f32.mrb[0].mxu0
      %v6827 = vadd.f32 0.0, %v6826
      %v6828 = vpop.f32.mrb[0].mxu0
      %6829 = vmatprep.mubr.f32.mxu0 0.0
      %6830 = vmatmul.mubr.f32.gmra.mrb[0].mxu0 %v6524
      %v6831 = vpop.f32.mrb[0].mxu0
      %v6832 = vadd.f32 0.0, %v6831
      %v6833 = vpop.f32.mrb[0].mxu0
      %6834 = vmatprep.mubr.f32.mxu0 0.0
      %6835 = vmatmul.mubr.f32.gmra.mrb[0].mxu0 %v6527
      %v6836 = vpop.f32.mrb[0].mxu0
      %v6837 = vpop.f32.mrb[0].mxu0
      %6838 = vmatprep.mubr.f32.mxu0 0.0
      %6839 = vmatmul.mubr.f32.gmra.mrb[0].mxu0 %v6530
      %v6840 = vpop.f32.mrb[0].mxu0
      %v6841 = vpop.f32.mrb[0].mxu0
      %6842 = vmatprep.mubr.f32.mxu0 0.0
      %6843 = vmatmul.mubr.f32.gmra.mrb[0].mxu0 %v6533
      %v6844 = vpop.f32.mrb[0].mxu0
      %v6845 = vadd.f32 0.0, %v6844
      %v6846 = vpop.f32.mrb[0].mxu0
      %6847 = vmatprep.mubr.f32.mxu0 0.0
      %6848 = vmatmul.mubr.f32.gmra.mrb[0].mxu0 %v6536
      %v6849 = vpop.f32.mrb[0].mxu0
      %v6850 = vadd.f32 0.0, %v6849
      %v6851 = vpop.f32.mrb[0].mxu0
      %6852 = vmatprep.mubr.f32.mxu0 0.0
      %6853 = vmatmul.mubr.f32.gmra.mrb[0].mxu0 %v6539
      %v6854 = vpop.f32.mrb[0].mxu0
      %v6855 = vpop.f32.mrb[0].mxu0
      %6856 = vmatprep.mubr.f32.mxu0 0.0
      %6857 = vmatmul.mubr.f32.gmra.mrb[0].mxu0 %v6542
      %v6858 = vpop.f32.mrb[0].mxu0
      %v6859 = vpop.f32.mrb[0].mxu0
      %6860 = vmatprep.mubr.f32.mxu0 0.0
      %6861 = vmatmul.mubr.f32.gmra.mrb[0].mxu0 %v6545
      %v6862 = vpop.f32.mrb[0].mxu0
      %v6863 = vadd.f32 0.0, %v6862
      %v6864 = vpop.f32.mrb[0].mxu0
      %6865 = vmatprep.mubr.f32.mxu0 0.0
      %6866 = vmatmul.mubr.f32.gmra.mrb[0].mxu0 %v6548
      %v6867 = vpop.f32.mrb[0].mxu0
      %v6868 = vadd.f32 0.0, %v6867
      %v6869 = vpop.f32.mrb[0].mxu0
      %6870 = vmatprep.mubr.f32.mxu0 0.0
      %6871 = vmatmul.mubr.f32.gmra.mrb[0].mxu0 %v6551
      %v6872 = vpop.f32.mrb[0].mxu0
      %v6873 = vpop.f32.mrb[0].mxu0
      %6874 = vmatprep.mubr.f32.mxu0 0.0
      %6875 = vmatmul.mubr.f32.gmra.mrb[0].mxu0 %v6554
      %v6876 = vpop.f32.mrb[0].mxu0
      %v6877 = vpop.f32.mrb[0].mxu0
      %6878 = vmatprep.mubr.f32.mxu0 0.0
      %6879 = vmatmul.mubr.f32.gmra.mrb[0].mxu0 %v6557
      %v6880 = vpop.f32.mrb[0].mxu0
      %v6881 = vadd.f32 0.0, %v6880
      %v6882 = vpop.f32.mrb[0].mxu0
      %6883 = vmatprep.mubr.f32.mxu0 0.0
      %6884 = vmatmul.mubr.f32.gmra.mrb[0].mxu0 %v6560
      %v6885 = vpop.f32.mrb[0].mxu0
      %v6886 = vadd.f32 0.0, %v6885
      %v6887 = vpop.f32.mrb[0].mxu0
      %6888 = vmatprep.mubr.f32.mxu0 0.0
      %6889 = vmatmul.mubr.f32.gmra.mrb[0].mxu0 %v6563
      %v6890 = vpop.f32.mrb[0].mxu0
      %v6891 = vpop.f32.mrb[0].mxu0
      %6892 = vmatprep.mubr.f32.mxu0 0.0
      %6893 = vmatmul.mubr.f32.gmra.mrb[0].mxu0 %v6566
      %v6894 = vpop.f32.mrb[0].mxu0
      %v6895 = vpop.f32.mrb[0].mxu0
      %6896 = vmatprep.mubr.f32.mxu0 0.0
      %6897 = vmatmul.mubr.f32.gmra.mrb[0].mxu0 %v6569
      %v6898 = vpop.f32.mrb[0].mxu0
      %v6899 = vadd.f32 0.0, %v6898
      %v6900 = vpop.f32.mrb[0].mxu0
      %6901 = vmatprep.mubr.f32.mxu0 0.0
      %6902 = vmatmul.mubr.f32.gmra.mrb[0].mxu0 %v6572
      %v6903 = vpop.f32.mrb[0].mxu0
      %v6904 = vadd.f32 0.0, %v6903
      %v6905 = vpop.f32.mrb[0].mxu0
      %6906 = vmatprep.mubr.f32.mxu0 0.0
      %6907 = vmatmul.mubr.f32.gmra.mrb[0].mxu0 %v6575
      %v6908 = vpop.f32.mrb[0].mxu0
      %v6909 = vpop.f32.mrb[0].mxu0
      %6910 = vmatprep.mubr.f32.mxu0 0.0
      %6911 = vmatmul.mubr.f32.gmra.mrb[0].mxu0 %v6578
      %v6912 = vpop.f32.mrb[0].mxu0
      %v6913 = vpop.f32.mrb[0].mxu0
      %6914 = vmatprep.mubr.f32.mxu0 0.0
      %6915 = vmatmul.mubr.f32.gmra.mrb[0].mxu0 %v6581
      %v6916 = vpop.f32.mrb[0].mxu0
      %v6917 = vadd.f32 0.0, %v6916
      %v6918 = vpop.f32.mrb[0].mxu0
      %6919 = vmatprep.mubr.f32.mxu0 0.0
      %6920 = vmatmul.mubr.f32.gmra.mrb[0].mxu0 %v6584
      %v6921 = vpop.f32.mrb[0].mxu0
      %v6922 = vadd.f32 0.0, %v6921
      %v6923 = vpop.f32.mrb[0].mxu0
      %6924 = vmatprep.mubr.f32.mxu0 0.0
      %6925 = vmatmul.mubr.f32.gmra.mrb[0].mxu0 %v6587
      %v6926 = vpop.f32.mrb[0].mxu0
      %v6927 = vpop.f32.mrb[0].mxu0
      %6928 = vmatprep.mubr.f32.mxu0 0.0
      %6929 = vmatmul.mubr.f32.gmra.mrb[0].mxu0 %v6590
      %v6930 = vpop.f32.mrb[0].mxu0
      %v6931 = vpop.f32.mrb[0].mxu0
      %6932 = vmatprep.mubr.f32.mxu0 0.0
      %6933 = vmatmul.mubr.f32.gmra.mrb[0].mxu0 %v6593
      %v6934 = vpop.f32.mrb[0].mxu0
      %v6935 = vadd.f32 0.0, %v6934
      %v6936 = vpop.f32.mrb[0].mxu0
      %6937 = vmatprep.mubr.f32.mxu0 0.0
      %6938 = vmatmul.mubr.f32.gmra.mrb[0].mxu0 %v6596
      %v6939 = vpop.f32.mrb[0].mxu0
      %v6940 = vadd.f32 0.0, %v6939
      %v6941 = vpop.f32.mrb[0].mxu0
      %6942 = vmatprep.mubr.f32.mxu0 0.0
      %6943 = vmatmul.mubr.f32.gmra.mrb[0].mxu0 %v6599
      %v6944 = vpop.f32.mrb[0].mxu0
      %v6945 = vpop.f32.mrb[0].mxu0
      %6946 = vmatprep.mubr.f32.mxu0 0.0
      %6947 = vmatmul.mubr.f32.gmra.mrb[0].mxu0 %v6602
      %v6948 = vpop.f32.mrb[0].mxu0
      %v6949 = vpop.f32.mrb[0].mxu0
      %6950 = vmatprep.mubr.f32.mxu0 0.0
      %6951 = vmatmul.mubr.f32.gmra.mrb[0].mxu0 %v6605
      %v6952 = vpop.f32.mrb[0].mxu0
      %v6953 = vadd.f32 0.0, %v6952
      %v6954 = vpop.f32.mrb[0].mxu0
      %6955 = vmatprep.mubr.f32.mxu0 0.0
      %6956 = vmatmul.mubr.f32.gmra.mrb[0].mxu0 %v6608
      %v6957 = vpop.f32.mrb[0].mxu0
      %v6958 = vadd.f32 0.0, %v6957
      %v6959 = vpop.f32.mrb[0].mxu0
      %6960 = vmatprep.mubr.f32.mxu0 0.0
      %6961 = vmatmul.mubr.f32.gmra.mrb[0].mxu0 %v6611
      %v6962 = vpop.f32.mrb[0].mxu0
      %v6963 = vpop.f32.mrb[0].mxu0
      %6964 = vmatprep.mubr.f32.mxu0 0.0
      %6965 = vmatmul.mubr.f32.gmra.mrb[0].mxu0 %v6614
      %v6966 = vpop.f32.mrb[0].mxu0
      %v6967 = vpop.f32.mrb[0].mxu0
      %6968 = vdwg.mxu0
      %v6969 = vadd.f32 %v6326, %v6683
      %v6970 = vadd.f32 %v6327, %v6688
      %v6971 = vadd.f32 %v6328, %v6701
      %v6972 = vadd.f32 %v6329, %v6706
      %v6973 = vadd.f32 %v6330, %v6719
      %v6974 = vadd.f32 %v6331, %v6724
      %v6975 = vadd.f32 %v6332, %v6737
      %v6976 = vadd.f32 %v6333, %v6742
      %v6977 = vadd.f32 %v6334, %v6755
      %v6978 = vadd.f32 %v6335, %v6760
      %v6979 = vadd.f32 %v6336, %v6773
      %v6980 = vadd.f32 %v6337, %v6778
      %v6981 = vadd.f32 %v6338, %v6791
      %v6982 = vadd.f32 %v6339, %v6796
      %v6983 = vadd.f32 %v6340, %v6809
      %v6984 = vadd.f32 %v6341, %v6814
      %v6985 = vadd.f32 %v6342, %v6827
      %v6986 = vadd.f32 %v6343, %v6832
      %v6987 = vadd.f32 %v6344, %v6845
      %v6988 = vadd.f32 %v6345, %v6850
      %v6989 = vadd.f32 %v6346, %v6863
      %v6990 = vadd.f32 %v6347, %v6868
      %v6991 = vadd.f32 %v6348, %v6881
      %v6992 = vadd.f32 %v6349, %v6886
      %v6993 = vadd.f32 %v6350, %v6899
      %v6994 = vadd.f32 %v6351, %v6904
      %v6995 = vadd.f32 %v6352, %v6917
      %v6996 = vadd.f32 %v6353, %v6922
      %v6997 = vadd.f32 %v6354, %v6935
      %v6998 = vadd.f32 %v6355, %v6940
      %v6999 = vadd.f32 %v6356, %v6953
      %v7000 = vadd.f32 %v6357, %v6958
      %v7001 = vld [vmem:[%s4] sm:$0x1]
      %v7003 = vlaneseq
      %v7004 = vshrl.u32 %v7003, 7
      %v7005 = vsub.s32 0, %v7004
      %v7006 = vrot.slane %v7001, %v7005
      %v7008 = vadd.f32 %v6969, %v7006
      %v7009 = vadd.f32 %v6970, %v7006
      %v7010 = vadd.f32 %v6971, %v7006
      %v7011 = vadd.f32 %v6972, %v7006
      %v7012 = vadd.f32 %v6973, %v7006
      %v7013 = vadd.f32 %v6974, %v7006
      %v7014 = vadd.f32 %v6975, %v7006
      %v7015 = vadd.f32 %v6976, %v7006
      %v7016 = vadd.f32 %v6977, %v7006
      %v7017 = vadd.f32 %v6978, %v7006
      %v7018 = vadd.f32 %v6979, %v7006
      %v7019 = vadd.f32 %v6980, %v7006
      %v7020 = vadd.f32 %v6981, %v7006
      %v7021 = vadd.f32 %v6982, %v7006
      %v7022 = vadd.f32 %v6983, %v7006
      %v7023 = vadd.f32 %v6984, %v7006
      %v7024 = vadd.f32 %v6985, %v7006
      %v7025 = vadd.f32 %v6986, %v7006
      %v7026 = vadd.f32 %v6987, %v7006
      %v7027 = vadd.f32 %v6988, %v7006
      %v7028 = vadd.f32 %v6989, %v7006
      %v7029 = vadd.f32 %v6990, %v7006
      %v7030 = vadd.f32 %v6991, %v7006
      %v7031 = vadd.f32 %v6992, %v7006
      %v7032 = vadd.f32 %v6993, %v7006
      %v7033 = vadd.f32 %v6994, %v7006
      %v7034 = vadd.f32 %v6995, %v7006
      %v7035 = vadd.f32 %v6996, %v7006
      %v7036 = vadd.f32 %v6997, %v7006
      %v7037 = vadd.f32 %v6998, %v7006
      %v7038 = vadd.f32 %v6999, %v7006
      %v7039 = vadd.f32 %v7000, %v7006
      %v7040 = vmax.f32 %v7008, 0.0
      %v7041 = vmax.f32 %v7009, 0.0
      %v7042 = vmax.f32 %v7010, 0.0
      %v7043 = vmax.f32 %v7011, 0.0
      %v7044 = vmax.f32 %v7012, 0.0
      %v7045 = vmax.f32 %v7013, 0.0
      %v7046 = vmax.f32 %v7014, 0.0
      %v7047 = vmax.f32 %v7015, 0.0
      %v7048 = vmax.f32 %v7016, 0.0
      %v7049 = vmax.f32 %v7017, 0.0
      %v7050 = vmax.f32 %v7018, 0.0
      %v7051 = vmax.f32 %v7019, 0.0
      %v7052 = vmax.f32 %v7020, 0.0
      %v7053 = vmax.f32 %v7021, 0.0
      %v7054 = vmax.f32 %v7022, 0.0
      %v7055 = vmax.f32 %v7023, 0.0
      %v7056 = vmax.f32 %v7024, 0.0
      %v7057 = vmax.f32 %v7025, 0.0
      %v7058 = vmax.f32 %v7026, 0.0
      %v7059 = vmax.f32 %v7027, 0.0
      %v7060 = vmax.f32 %v7028, 0.0
      %v7061 = vmax.f32 %v7029, 0.0
      %v7062 = vmax.f32 %v7030, 0.0
      %v7063 = vmax.f32 %v7031, 0.0
      %v7064 = vmax.f32 %v7032, 0.0
      %v7065 = vmax.f32 %v7033, 0.0
      %v7066 = vmax.f32 %v7034, 0.0
      %v7067 = vmax.f32 %v7035, 0.0
      %v7068 = vmax.f32 %v7036, 0.0
      %v7069 = vmax.f32 %v7037, 0.0
      %v7070 = vmax.f32 %v7038, 0.0
      %v7071 = vmax.f32 %v7039, 0.0
      %vm7072 = vcmask 48128
      %7073 = vst.msk [vmem:[%s345] sm:$0xff] %vm7072, %v7040
      %7074 = vst.msk [vmem:[%s345 + $0x8] sm:$0xff] %vm7072, %v7041
      %7075 = vst.msk [vmem:[%s345 + $0x10] sm:$0xff] %vm7072, %v7042
      %7076 = vst.msk [vmem:[%s345 + $0x18] sm:$0xff] %vm7072, %v7043
      %7077 = vst.msk [vmem:[%s345 + $0x20] sm:$0xff] %vm7072, %v7044
      %7078 = vst.msk [vmem:[%s345 + $0x28] sm:$0xff] %vm7072, %v7045
      %7079 = vst.msk [vmem:[%s345 + $0x30] sm:$0xff] %vm7072, %v7046
      %7080 = vst.msk [vmem:[%s345 + $0x38] sm:$0xff] %vm7072, %v7047
      %7081 = vst.msk [vmem:[%s345 + $0x40] sm:$0xff] %vm7072, %v7048
      %7082 = vst.msk [vmem:[%s345 + $0x48] sm:$0xff] %vm7072, %v7049
      %7083 = vst.msk [vmem:[%s345 + $0x50] sm:$0xff] %vm7072, %v7050
      %7084 = vst.msk [vmem:[%s345 + $0x58] sm:$0xff] %vm7072, %v7051
      %7085 = vst.msk [vmem:[%s345 + $0x60] sm:$0xff] %vm7072, %v7052
      %7086 = vst.msk [vmem:[%s345 + $0x68] sm:$0xff] %vm7072, %v7053
      %7087 = vst.msk [vmem:[%s345 + $0x70] sm:$0xff] %vm7072, %v7054
      %7088 = vst.msk [vmem:[%s345 + $0x78] sm:$0xff] %vm7072, %v7055
      %7089 = vst.msk [vmem:[%s345 + $0x80] sm:$0xff] %vm7072, %v7056
      %7090 = vst.msk [vmem:[%s345 + $0x88] sm:$0xff] %vm7072, %v7057
      %7091 = vst.msk [vmem:[%s345 + $0x90] sm:$0xff] %vm7072, %v7058
      %7092 = vst.msk [vmem:[%s345 + $0x98] sm:$0xff] %vm7072, %v7059
      %7093 = vst.msk [vmem:[%s345 + $0xa0] sm:$0xff] %vm7072, %v7060
      %7094 = vst.msk [vmem:[%s345 + $0xa8] sm:$0xff] %vm7072, %v7061
      %7095 = vst.msk [vmem:[%s345 + $0xb0] sm:$0xff] %vm7072, %v7062
      %7096 = vst.msk [vmem:[%s345 + $0xb8] sm:$0xff] %vm7072, %v7063
      %7097 = vst.msk [vmem:[%s345 + $0xc0] sm:$0xff] %vm7072, %v7064
      %7098 = vst.msk [vmem:[%s345 + $0xc8] sm:$0xff] %vm7072, %v7065
      %7099 = vst.msk [vmem:[%s345 + $0xd0] sm:$0xff] %vm7072, %v7066
      %7100 = vst.msk [vmem:[%s345 + $0xd8] sm:$0xff] %vm7072, %v7067
      %7101 = vst.msk [vmem:[%s345 + $0xe0] sm:$0xff] %vm7072, %v7068
      %7102 = vst.msk [vmem:[%s345 + $0xe8] sm:$0xff] %vm7072, %v7069
      %7103 = vst.msk [vmem:[%s345 + $0xf0] sm:$0xff] %vm7072, %v7070
      %7104 = vst.msk [vmem:[%s345 + $0xf8] sm:$0xff] %vm7072, %v7071
      %s7105 = smul.u32 16, %s21
      %p7106 = scmp.lt.s32.totalorder %s20, 1
      %s7107 = scalar_select %p7106, %s20, 1
      %p7108 = scmp.lt.s32.totalorder %s7105, 15
      %s7109 = scalar_select %p7108, %s7105, 15
      %s7110 = smul.addr %s7109, 2
      %s7111 = smul.addr %s7107, 32
      %s7112 = sadd.s32 %s7110, %s7111
      %s7113 = smul.addr %s7112, 8
      %s7114 = scalar_lea.vmem %s5, %s7113
      // Predicated region
      $region41: #{double_conv_forward.1} parent=39 // pred_check
        %p7115 = pneg %p171
      $region42: #{double_conv_forward.1} parent=39 // pred_check_branch
        %7117 = sbr.rel (%p7115) target = $region44
      $region43: #{double_conv_forward.1} parent=39 // pred_region
        %s7118 = smul.u32 16, %s21
      $region44: #{double_conv_forward.1} parent=39 // pred_fallthru
        _
    $region40: #{double_conv_forward.1} parent=5 // pred_fallthru
      _
    %p7119 = scmp.le.s32.totalorder 2, %s11
    // Predicated region
    $region45: #{double_conv_forward.1} parent=5 // pred_check
      %p7120 = pneg %p7119
    $region46: #{double_conv_forward.1} parent=5 // pred_check_branch
      %7122 = sbr.rel (%p7120) target = $region48
    $region47: #{double_conv_forward.1} parent=5 // pred_region
      %s7123 = ssub.s32 %s11, 2
      // Predicated region
      $region49: #{double_conv_forward.1} parent=47 // pred_check
        %p7124 = pneg %p177
      $region50: #{double_conv_forward.1} parent=47 // pred_check_branch
        %7126 = sbr.rel (%p7124) target = $region52
      $region51: #{double_conv_forward.1} parent=47 // pred_region
        %s7127 = smul.u32 16, %s23
        %p7128 = scmp.lt.s32.totalorder %s22, 1
        %s7129 = scalar_select %p7128, %s22, 1
        %p7130 = scmp.lt.s32.totalorder %s7127, 15
        %s7131 = scalar_select %p7130, %s7127, 15
        %s7132 = smul.addr %s7131, 2
        %s7133 = smul.addr %s7129, 32
        %s7134 = sadd.s32 %s7132, %s7133
        %s7135 = smul.addr %s7134, 8
        %s7136 = scalar_lea.vmem %s5, %s7135
      $region52: #{double_conv_forward.1} parent=47 // pred_fallthru
        _
    $region48: #{double_conv_forward.1} parent=5 // pred_fallthru
      _
  $region6: #{double_conv_forward.1} parent=0 // loop_footer
    %s15 = sadd.s32 1, %s11
  $region7: #{double_conv_forward.1} parent=0 // loop_footer_branch
    %10 = sbr.rel target = $region3
  $region8: #{double_conv_forward.1} parent=0 // loop_exit
    _

</llo_original>
